<compile_context>
chip_gen: v6e
topology: v6e:2x2x1
jax: 0.10.0
libtpu: 0.0.40
codegen_flags: <defaults>
</compile_context>

<pallas_src>
import jax
import jax.numpy as jnp
import numpy as np
from jax import lax
from jax.experimental import pallas as pl
from jax.experimental.pallas import tpu as pltpu

LANES = 128


def _round_up(x, m):
    return ((x + m - 1) // m) * m


# ----------------------------------------------------------------------------
# Pallas kernels
# ----------------------------------------------------------------------------
def _conv_relu_pool_kernel(p_ref, w_ref, b_ref, o_ref):
    """p_ref: (4, tm, Pp) bf16 im2col patches (pool-window major),
    w_ref: (Pp, 128) bf16 weights, b_ref: (1, 128) f32 bias,
    o_ref: (tm, 128) bf16 = maxpool2x2(relu(conv))."""
    tm = o_ref.shape[0]
    pp = p_ref.shape[2]
    # (4, tm, Pp) -> (4*tm, Pp): tile-aligned no-op retiling -> one MXU matmul
    # instead of 4 small ones (amortizes push/drain cadence).
    p = p_ref[...].reshape(4 * tm, pp)
    y = jnp.dot(p, w_ref[...], preferred_element_type=jnp.float32)  # (4*tm, 128) f32
    # 2x2 max-pool: max over the 4 pool-window slabs (sublane-aligned slices).
    m = jnp.maximum(jnp.maximum(y[0 * tm:1 * tm], y[1 * tm:2 * tm]),
                    jnp.maximum(y[2 * tm:3 * tm], y[3 * tm:4 * tm]))
    # Bias + ReLU applied once, after the pool reduction.
    o_ref[...] = jnp.maximum(m + b_ref[...], 0.0).astype(o_ref.dtype)


def _mlp_kernel(x_ref, w1_ref, b1_ref, w2_ref, b2_ref, o_ref):
    """Fused fc1 -> relu -> fc2; all operands lane-padded to 128."""
    h = jnp.dot(x_ref[...], w1_ref[...], preferred_element_type=jnp.float32)
    h = jnp.maximum(h + b1_ref[...], 0.0)
    o_ref[...] = (jnp.dot(h.astype(w2_ref.dtype), w2_ref[...],
                          preferred_element_type=jnp.float32) + b2_ref[...])


# ----------------------------------------------------------------------------
# pallas_call wrappers
# ----------------------------------------------------------------------------
def conv_relu_pool(patches, w2d, bias2d, tm):
    four, Mp, Pp = patches.shape
    Cop = w2d.shape[1]
    return pl.pallas_call(
        _conv_relu_pool_kernel,
        out_shape=jax.ShapeDtypeStruct((Mp, Cop), jnp.bfloat16),
        grid=(Mp // tm,),
        in_specs=[
            pl.BlockSpec((4, tm, Pp), lambda i: (0, i, 0)),
            pl.BlockSpec((Pp, Cop), lambda i: (0, 0)),   # weights stay resident
            pl.BlockSpec((1, Cop), lambda i: (0, 0)),    # bias stays resident
        ],
        out_specs=pl.BlockSpec((tm, Cop), lambda i: (i, 0)),
        compiler_params=pltpu.CompilerParams(
            dimension_semantics=("parallel",)),
    )(patches, w2d, bias2d)


def mlp(x, w1, b1, w2, b2):
    N, D = x.shape
    Hp = w1.shape[1]
    Op = w2.shape[1]
    return pl.pallas_call(
        _mlp_kernel,
        out_shape=jax.ShapeDtypeStruct((N, Op), jnp.float32),
        grid=(1,),
        in_specs=[
            pl.BlockSpec((N, D), lambda i: (0, 0)),
            pl.BlockSpec((D, Hp), lambda i: (0, 0)),
            pl.BlockSpec((1, Hp), lambda i: (0, 0)),
            pl.BlockSpec((Hp, Op), lambda i: (0, 0)),
            pl.BlockSpec((1, Op), lambda i: (0, 0)),
        ],
        out_specs=pl.BlockSpec((N, Op), lambda i: (0, 0)),
    )(x, w1, b1, w2, b2)


# ----------------------------------------------------------------------------
# Plain-JAX glue: im2col (NHWC, pool-window grouped)
# ----------------------------------------------------------------------------
def im2col_pooled_nhwc(x_nhwc, K):
    """x: (N, H, W, Ci) -> patches (4, N*PH*PW, K*K*Ci), pool-window major.
    Feature order is (kh, kw, ci), matching the (K,K,Ci,Co) weight reshape."""
    N, H, W, Ci = x_nhwc.shape
    OH, OW = H - K + 1, W - K + 1
    PH, PW = OH // 2, OW // 2
    shifts = [x_nhwc[:, kh:kh + OH, kw:kw + OW, :]
              for kh in range(K) for kw in range(K)]
    p = jnp.stack(shifts, axis=3)                      # (N, OH, OW, K*K, Ci)
    F = K * K * Ci
    p = p.reshape(N, OH, OW, F)
    p = p.reshape(N, PH, 2, PW, 2, F)                  # split 2x2 pool windows
    p = p.transpose(2, 4, 0, 1, 3, 5)                  # (dh, dw, N, PH, PW, F)
    return p.reshape(4, N * PH * PW, F), (N, PH, PW)


def forward(x_nchw, params):
    """x: (N, 3, 64, 64) float32 NCHW -> (N, 2) float32 logits."""
    (w1, b1), (w2, b2), (w3, b3), (fw1, fb1), (fw2, fb2) = params
    x = jnp.transpose(x_nchw, (0, 2, 3, 1)).astype(jnp.bfloat16)  # NHWC bf16

    def layer(x_nhwc, w, b):
        Co, Ci, K, _ = w.shape
        patches, (N, PH, PW) = im2col_pooled_nhwc(x_nhwc, K)
        _, M, F = patches.shape
        Fp = _round_up(F, LANES)
        tm = min(512, _round_up(M, 64))   # multiple of 64 -> clean bf16 tiles
        Mp = _round_up(M, tm)
        patches = jnp.pad(patches, ((0, 0), (0, Mp - M), (0, Fp - F)))
        w2d = w.transpose(2, 3, 1, 0).reshape(F, Co).astype(jnp.bfloat16)
        w2d = jnp.pad(w2d, ((0, Fp - F), (0, LANES - Co)))
        b2d = jnp.pad(b.astype(jnp.float32).reshape(1, Co),
                      ((0, 0), (0, LANES - Co)))
        out = conv_relu_pool(patches, w2d, b2d, tm)          # (Mp, 128) bf16
        return out[:M].reshape(N, PH, PW, LANES)[..., :Co]   # NHWC, real channels

    x = layer(x, w1, b1)   # (N, 30, 30, 6)
    x = layer(x, w2, b2)   # (N, 13, 13, 16)
    x = layer(x, w3, b3)   # (N, 4, 4, 16)
    N = x.shape[0]
    # torch's x.view(-1, 16*4*4) flattens NCHW -> (c, h, w) order.
    feat = jnp.transpose(x, (0, 3, 1, 2)).reshape(N, 16 * 4 * 4)

    H1, O = fw1.shape[1], fw2.shape[1]
    Hp, Op = _round_up(H1, LANES), _round_up(O, LANES)
    w1p = jnp.pad(fw1.astype(jnp.bfloat16), ((0, 0), (0, Hp - H1)))
    b1p = jnp.pad(fb1.astype(jnp.float32).reshape(1, H1), ((0, 0), (0, Hp - H1)))
    w2p = jnp.pad(fw2.astype(jnp.bfloat16), ((0, Hp - H1), (0, Op - O)))
    b2p = jnp.pad(fb2.astype(jnp.float32).reshape(1, O), ((0, 0), (0, Op - O)))
    logits = mlp(feat.astype(jnp.bfloat16), w1p, b1p, w2p, b2p)   # (N, Op) f32
    return logits[:, :O]


# ----------------------------------------------------------------------------
# Pure-JAX f32 reference (mirrors the PyTorch forward exactly)
# ----------------------------------------------------------------------------
def reference_forward(x, params):
    (w1, b1), (w2, b2), (w3, b3), (fw1, fb1), (fw2, fb2) = params

    def conv(x, w, b):
        y = lax.conv_general_dilated(
            x, w, (1, 1), "VALID", dimension_numbers=("NCHW", "OIHW", "NCHW"))
        return y + b[None, :, None, None]

    def pool(x):
        return lax.reduce_window(x, -jnp.inf, lax.max,
                                 (1, 1, 2, 2), (1, 1, 2, 2), "VALID")

    x = pool(jax.nn.relu(conv(x, w1, b1)))
    x = pool(jax.nn.relu(conv(x, w2, b2)))
    x = pool(jax.nn.relu(conv(x, w3, b3)))
    x = x.reshape(x.shape[0], -1)
    x = jax.nn.relu(x @ fw1 + fb1)
    return x @ fw2 + fb2


# ----------------------------------------------------------------------------
def init_params(key):
    ks = jax.random.split(key, 10)
    s = 0.05
    conv1_w = s * jax.random.normal(ks[0], (6, 3, 5, 5), jnp.float32)
    conv1_b = s * jax.random.normal(ks[1], (6,), jnp.float32)
    conv2_w = s * jax.random.normal(ks[2], (16, 6, 5, 5), jnp.float32)
    conv2_b = s * jax.random.normal(ks[3], (16,), jnp.float32)
    conv3_w = s * jax.random.normal(ks[4], (16, 16, 6, 6), jnp.float32)
    conv3_b = s * jax.random.normal(ks[5], (16,), jnp.float32)
    fc1_w = s * jax.random.normal(ks[6], (16 * 4 * 4, 120), jnp.float32)
    fc1_b = s * jax.random.normal(ks[7], (120,), jnp.float32)
    fc2_w = s * jax.random.normal(ks[8], (120, 2), jnp.float32)
    fc2_b = s * jax.random.normal(ks[9], (2,), jnp.float32)
    return ((conv1_w, conv1_b), (conv2_w, conv2_b), (conv3_w, conv3_b),
            (fc1_w, fc1_b), (fc2_w, fc2_b))


if __name__ == "__main__":
    key = jax.random.PRNGKey(0)
    k_x, k_p = jax.random.split(key)
    params = init_params(k_p)
    x = jax.random.normal(k_x, (2, 3, 64, 64), jnp.float32)  # batch=2, NCHW

    out = jax.jit(forward)(x, params)
    out = jax.block_until_ready(out)
    assert out.shape == (2, 2), out.shape

    ref = jax.block_until_ready(reference_forward(x, params))
    # Loose tolerance is intentional: MXU inputs are bf16 (f32 accumulation),
    # reference is all-f32.
    np.testing.assert_allclose(np.asarray(out), np.asarray(ref),
                               rtol=5e-2, atol=3e-2)
    print("KERNEL_OK")
</pallas_src>

<mosaic_0001>
module attributes {stable_mosaic.version = 11 : i64} {
  func.func @_conv_relu_pool_kernel(%arg0: i32, %arg1: memref<4x512x128xbf16, #tpu.memory_space<vmem>>, %arg2: memref<128x128xbf16, #tpu.memory_space<vmem>>, %arg3: memref<1x128xf32, #tpu.memory_space<vmem>>, %arg4: memref<512x128xbf16, #tpu.memory_space<vmem>>) attributes {dimension_semantics = [#tpu.dimension_semantics<parallel>], iteration_bounds = array<i64: 4>, scalar_prefetch = 0 : i64, scratch_operands = 0 : i64, tpu.core_type = #tpu.core_type<tc>, window_params = [{transform_indices = @transform_0, window_bounds = array<i64: 4, 512, 128>}, {pipeline_mode = #tpu.pipeline_mode<synchronous>, transform_indices = @transform_1, window_bounds = array<i64: 128, 128>}, {pipeline_mode = #tpu.pipeline_mode<synchronous>, transform_indices = @transform_2, window_bounds = array<i64: 1, 128>}, {transform_indices = @transform_3, window_bounds = array<i64: 512, 128>}]} {
    %c0 = arith.constant 0 : index
    %c0_0 = arith.constant 0 : index
    %c0_1 = arith.constant 0 : index
    %0 = vector.load %arg1[%c0, %c0_0, %c0_1] : memref<4x512x128xbf16, #tpu.memory_space<vmem>>, vector<4x512x128xbf16>
    %1 = vector.shape_cast %0 : vector<4x512x128xbf16> to vector<2048x128xbf16>
    %c0_2 = arith.constant 0 : index
    %c0_3 = arith.constant 0 : index
    %2 = vector.load %arg2[%c0_2, %c0_3] : memref<128x128xbf16, #tpu.memory_space<vmem>>, vector<128x128xbf16>
    %cst = arith.constant dense<0.000000e+00> : vector<2048x128xf32>
    %3 = tpu.matmul %1, %2, %cst {dimension_numbers = #tpu.dot_dimension_numbers<[1], [0], [0], [1], [0, 0, 1, 1], [], []>} : vector<2048x128xbf16>, vector<128x128xbf16>, vector<2048x128xf32> -> vector<2048x128xf32>
    %4 = vector.extract_strided_slice %3 {offsets = [0, 0], sizes = [512, 128], strides = [1, 1]} : vector<2048x128xf32> to vector<512x128xf32>
    %5 = vector.extract_strided_slice %3 {offsets = [512, 0], sizes = [512, 128], strides = [1, 1]} : vector<2048x128xf32> to vector<512x128xf32>
    %6 = arith.maximumf %4, %5 : vector<512x128xf32>
    %7 = vector.extract_strided_slice %3 {offsets = [1024, 0], sizes = [512, 128], strides = [1, 1]} : vector<2048x128xf32> to vector<512x128xf32>
    %8 = vector.extract_strided_slice %3 {offsets = [1536, 0], sizes = [512, 128], strides = [1, 1]} : vector<2048x128xf32> to vector<512x128xf32>
    %9 = arith.maximumf %7, %8 : vector<512x128xf32>
    %10 = arith.maximumf %6, %9 : vector<512x128xf32>
    %c0_4 = arith.constant 0 : index
    %c0_5 = arith.constant 0 : index
    %11 = vector.load %arg3[%c0_4, %c0_5] : memref<1x128xf32, #tpu.memory_space<vmem>>, vector<1x128xf32>
    %12 = vector.broadcast %11 : vector<1x128xf32> to vector<512x128xf32>
    %13 = arith.addf %10, %12 : vector<512x128xf32>
    %cst_6 = arith.constant 0.000000e+00 : f32
    %14 = vector.broadcast %cst_6 : f32 to vector<512x128xf32>
    %15 = arith.maximumf %13, %14 : vector<512x128xf32>
    %16 = arith.truncf %15 : vector<512x128xf32> to vector<512x128xbf16>
    %c0_7 = arith.constant 0 : index
    %c0_8 = arith.constant 0 : index
    %17 = vector.load %arg4[%c0_7, %c0_8] : memref<512x128xbf16, #tpu.memory_space<vmem>>, vector<512x128xbf16>
    tpu.vector_store %arg4[%c0_7, %c0_8], %16 {strides = array<i32>} : memref<512x128xbf16, #tpu.memory_space<vmem>>, vector<512x128xbf16>,
    return
  }
  func.func @transform_0(%arg0: i32) -> (i32, i32, i32) {
    %c0_i32 = arith.constant 0 : i32
    %c0_i32_0 = arith.constant 0 : i32
    %c0_i32_1 = arith.constant 0 : i32
    return %c0_i32, %arg0, %c0_i32_0 : i32, i32, i32
  }
  func.func @transform_1(%arg0: i32) -> (i32, i32) {
    %c0_i32 = arith.constant 0 : i32
    %c0_i32_0 = arith.constant 0 : i32
    %c0_i32_1 = arith.constant 0 : i32
    return %c0_i32, %c0_i32_0 : i32, i32
  }
  func.func @transform_2(%arg0: i32) -> (i32, i32) {
    %c0_i32 = arith.constant 0 : i32
    %c0_i32_0 = arith.constant 0 : i32
    %c0_i32_1 = arith.constant 0 : i32
    return %c0_i32, %c0_i32_0 : i32, i32
  }
  func.func @transform_3(%arg0: i32) -> (i32, i32) {
    %c0_i32 = arith.constant 0 : i32
    %c0_i32_0 = arith.constant 0 : i32
    return %arg0, %c0_i32 : i32, i32
  }
}

module attributes {stable_mosaic.version = 11 : i64} {
  func.func @_conv_relu_pool_kernel(%arg0: i32, %arg1: memref<4x384x256xbf16, #tpu.memory_space<vmem>>, %arg2: memref<256x128xbf16, #tpu.memory_space<vmem>>, %arg3: memref<1x128xf32, #tpu.memory_space<vmem>>, %arg4: memref<384x128xbf16, #tpu.memory_space<vmem>>) attributes {dimension_semantics = [#tpu.dimension_semantics<parallel>], iteration_bounds = array<i64: 1>, scalar_prefetch = 0 : i64, scratch_operands = 0 : i64, tpu.core_type = #tpu.core_type<tc>, window_params = [{transform_indices = @transform_0, window_bounds = array<i64: 4, 384, 256>}, {pipeline_mode = #tpu.pipeline_mode<synchronous>, transform_indices = @transform_1, window_bounds = array<i64: 256, 128>}, {pipeline_mode = #tpu.pipeline_mode<synchronous>, transform_indices = @transform_2, window_bounds = array<i64: 1, 128>}, {transform_indices = @transform_3, window_bounds = array<i64: 384, 128>}]} {
    %c0 = arith.constant 0 : index
    %c0_0 = arith.constant 0 : index
    %c0_1 = arith.constant 0 : index
    %0 = vector.load %arg1[%c0, %c0_0, %c0_1] : memref<4x384x256xbf16, #tpu.memory_space<vmem>>, vector<4x384x256xbf16>
    %1 = vector.shape_cast %0 : vector<4x384x256xbf16> to vector<1536x256xbf16>
    %c0_2 = arith.constant 0 : index
    %c0_3 = arith.constant 0 : index
    %2 = vector.load %arg2[%c0_2, %c0_3] : memref<256x128xbf16, #tpu.memory_space<vmem>>, vector<256x128xbf16>
    %cst = arith.constant dense<0.000000e+00> : vector<1536x128xf32>
    %3 = tpu.matmul %1, %2, %cst {dimension_numbers = #tpu.dot_dimension_numbers<[1], [0], [0], [1], [0, 0, 1, 1], [], []>} : vector<1536x256xbf16>, vector<256x128xbf16>, vector<1536x128xf32> -> vector<1536x128xf32>
    %4 = vector.extract_strided_slice %3 {offsets = [0, 0], sizes = [384, 128], strides = [1, 1]} : vector<1536x128xf32> to vector<384x128xf32>
    %5 = vector.extract_strided_slice %3 {offsets = [384, 0], sizes = [384, 128], strides = [1, 1]} : vector<1536x128xf32> to vector<384x128xf32>
    %6 = arith.maximumf %4, %5 : vector<384x128xf32>
    %7 = vector.extract_strided_slice %3 {offsets = [768, 0], sizes = [384, 128], strides = [1, 1]} : vector<1536x128xf32> to vector<384x128xf32>
    %8 = vector.extract_strided_slice %3 {offsets = [1152, 0], sizes = [384, 128], strides = [1, 1]} : vector<1536x128xf32> to vector<384x128xf32>
    %9 = arith.maximumf %7, %8 : vector<384x128xf32>
    %10 = arith.maximumf %6, %9 : vector<384x128xf32>
    %c0_4 = arith.constant 0 : index
    %c0_5 = arith.constant 0 : index
    %11 = vector.load %arg3[%c0_4, %c0_5] : memref<1x128xf32, #tpu.memory_space<vmem>>, vector<1x128xf32>
    %12 = vector.broadcast %11 : vector<1x128xf32> to vector<384x128xf32>
    %13 = arith.addf %10, %12 : vector<384x128xf32>
    %cst_6 = arith.constant 0.000000e+00 : f32
    %14 = vector.broadcast %cst_6 : f32 to vector<384x128xf32>
    %15 = arith.maximumf %13, %14 : vector<384x128xf32>
    %16 = arith.truncf %15 : vector<384x128xf32> to vector<384x128xbf16>
    %c0_7 = arith.constant 0 : index
    %c0_8 = arith.constant 0 : index
    %17 = vector.load %arg4[%c0_7, %c0_8] : memref<384x128xbf16, #tpu.memory_space<vmem>>, vector<384x128xbf16>
    tpu.vector_store %arg4[%c0_7, %c0_8], %16 {strides = array<i32>} : memref<384x128xbf16, #tpu.memory_space<vmem>>, vector<384x128xbf16>,
    return
  }
  func.func @transform_0(%arg0: i32) -> (i32, i32, i32) {
    %c0_i32 = arith.constant 0 : i32
    %c0_i32_0 = arith.constant 0 : i32
    %c0_i32_1 = arith.constant 0 : i32
    return %c0_i32, %arg0, %c0_i32_0 : i32, i32, i32
  }
  func.func @transform_1(%arg0: i32) -> (i32, i32) {
    %c0_i32 = arith.constant 0 : i32
    %c0_i32_0 = arith.constant 0 : i32
    %c0_i32_1 = arith.constant 0 : i32
    return %c0_i32, %c0_i32_0 : i32, i32
  }
  func.func @transform_2(%arg0: i32) -> (i32, i32) {
    %c0_i32 = arith.constant 0 : i32
    %c0_i32_0 = arith.constant 0 : i32
    %c0_i32_1 = arith.constant 0 : i32
    return %c0_i32, %c0_i32_0 : i32, i32
  }
  func.func @transform_3(%arg0: i32) -> (i32, i32) {
    %c0_i32 = arith.constant 0 : i32
    %c0_i32_0 = arith.constant 0 : i32
    return %arg0, %c0_i32 : i32, i32
  }
}

module attributes {stable_mosaic.version = 11 : i64} {
  func.func @_conv_relu_pool_kernel(%arg0: i32, %arg1: memref<4x64x640xbf16, #tpu.memory_space<vmem>>, %arg2: memref<640x128xbf16, #tpu.memory_space<vmem>>, %arg3: memref<1x128xf32, #tpu.memory_space<vmem>>, %arg4: memref<64x128xbf16, #tpu.memory_space<vmem>>) attributes {dimension_semantics = [#tpu.dimension_semantics<parallel>], iteration_bounds = array<i64: 1>, scalar_prefetch = 0 : i64, scratch_operands = 0 : i64, tpu.core_type = #tpu.core_type<tc>, window_params = [{transform_indices = @transform_0, window_bounds = array<i64: 4, 64, 640>}, {pipeline_mode = #tpu.pipeline_mode<synchronous>, transform_indices = @transform_1, window_bounds = array<i64: 640, 128>}, {pipeline_mode = #tpu.pipeline_mode<synchronous>, transform_indices = @transform_2, window_bounds = array<i64: 1, 128>}, {transform_indices = @transform_3, window_bounds = array<i64: 64, 128>}]} {
    %c0 = arith.constant 0 : index
    %c0_0 = arith.constant 0 : index
    %c0_1 = arith.constant 0 : index
    %0 = vector.load %arg1[%c0, %c0_0, %c0_1] : memref<4x64x640xbf16, #tpu.memory_space<vmem>>, vector<4x64x640xbf16>
    %1 = vector.shape_cast %0 : vector<4x64x640xbf16> to vector<256x640xbf16>
    %c0_2 = arith.constant 0 : index
    %c0_3 = arith.constant 0 : index
    %2 = vector.load %arg2[%c0_2, %c0_3] : memref<640x128xbf16, #tpu.memory_space<vmem>>, vector<640x128xbf16>
    %cst = arith.constant dense<0.000000e+00> : vector<256x128xf32>
    %3 = tpu.matmul %1, %2, %cst {dimension_numbers = #tpu.dot_dimension_numbers<[1], [0], [0], [1], [0, 0, 1, 1], [], []>} : vector<256x640xbf16>, vector<640x128xbf16>, vector<256x128xf32> -> vector<256x128xf32>
    %4 = vector.extract_strided_slice %3 {offsets = [0, 0], sizes = [64, 128], strides = [1, 1]} : vector<256x128xf32> to vector<64x128xf32>
    %5 = vector.extract_strided_slice %3 {offsets = [64, 0], sizes = [64, 128], strides = [1, 1]} : vector<256x128xf32> to vector<64x128xf32>
    %6 = arith.maximumf %4, %5 : vector<64x128xf32>
    %7 = vector.extract_strided_slice %3 {offsets = [128, 0], sizes = [64, 128], strides = [1, 1]} : vector<256x128xf32> to vector<64x128xf32>
    %8 = vector.extract_strided_slice %3 {offsets = [192, 0], sizes = [64, 128], strides = [1, 1]} : vector<256x128xf32> to vector<64x128xf32>
    %9 = arith.maximumf %7, %8 : vector<64x128xf32>
    %10 = arith.maximumf %6, %9 : vector<64x128xf32>
    %c0_4 = arith.constant 0 : index
    %c0_5 = arith.constant 0 : index
    %11 = vector.load %arg3[%c0_4, %c0_5] : memref<1x128xf32, #tpu.memory_space<vmem>>, vector<1x128xf32>
    %12 = vector.broadcast %11 : vector<1x128xf32> to vector<64x128xf32>
    %13 = arith.addf %10, %12 : vector<64x128xf32>
    %cst_6 = arith.constant 0.000000e+00 : f32
    %14 = vector.broadcast %cst_6 : f32 to vector<64x128xf32>
    %15 = arith.maximumf %13, %14 : vector<64x128xf32>
    %16 = arith.truncf %15 : vector<64x128xf32> to vector<64x128xbf16>
    %c0_7 = arith.constant 0 : index
    %c0_8 = arith.constant 0 : index
    %17 = vector.load %arg4[%c0_7, %c0_8] : memref<64x128xbf16, #tpu.memory_space<vmem>>, vector<64x128xbf16>
    tpu.vector_store %arg4[%c0_7, %c0_8], %16 {strides = array<i32>} : memref<64x128xbf16, #tpu.memory_space<vmem>>, vector<64x128xbf16>,
    return
  }
  func.func @transform_0(%arg0: i32) -> (i32, i32, i32) {
    %c0_i32 = arith.constant 0 : i32
    %c0_i32_0 = arith.constant 0 : i32
    %c0_i32_1 = arith.constant 0 : i32
    return %c0_i32, %arg0, %c0_i32_0 : i32, i32, i32
  }
  func.func @transform_1(%arg0: i32) -> (i32, i32) {
    %c0_i32 = arith.constant 0 : i32
    %c0_i32_0 = arith.constant 0 : i32
    %c0_i32_1 = arith.constant 0 : i32
    return %c0_i32, %c0_i32_0 : i32, i32
  }
  func.func @transform_2(%arg0: i32) -> (i32, i32) {
    %c0_i32 = arith.constant 0 : i32
    %c0_i32_0 = arith.constant 0 : i32
    %c0_i32_1 = arith.constant 0 : i32
    return %c0_i32, %c0_i32_0 : i32, i32
  }
  func.func @transform_3(%arg0: i32) -> (i32, i32) {
    %c0_i32 = arith.constant 0 : i32
    %c0_i32_0 = arith.constant 0 : i32
    return %arg0, %c0_i32 : i32, i32
  }
}

module attributes {stable_mosaic.version = 11 : i64} {
  func.func @_mlp_kernel(%arg0: i32, %arg1: memref<2x256xbf16, #tpu.memory_space<vmem>>, %arg2: memref<256x128xbf16, #tpu.memory_space<vmem>>, %arg3: memref<1x128xf32, #tpu.memory_space<vmem>>, %arg4: memref<128x128xbf16, #tpu.memory_space<vmem>>, %arg5: memref<1x128xf32, #tpu.memory_space<vmem>>, %arg6: memref<2x128xf32, #tpu.memory_space<vmem>>) attributes {dimension_semantics = [#tpu.dimension_semantics<arbitrary>], iteration_bounds = array<i64: 1>, scalar_prefetch = 0 : i64, scratch_operands = 0 : i64, tpu.core_type = #tpu.core_type<tc>, window_params = [{pipeline_mode = #tpu.pipeline_mode<synchronous>, transform_indices = @transform_0, window_bounds = array<i64: 2, 256>}, {pipeline_mode = #tpu.pipeline_mode<synchronous>, transform_indices = @transform_1, window_bounds = array<i64: 256, 128>}, {pipeline_mode = #tpu.pipeline_mode<synchronous>, transform_indices = @transform_2, window_bounds = array<i64: 1, 128>}, {pipeline_mode = #tpu.pipeline_mode<synchronous>, transform_indices = @transform_3, window_bounds = array<i64: 128, 128>}, {pipeline_mode = #tpu.pipeline_mode<synchronous>, transform_indices = @transform_4, window_bounds = array<i64: 1, 128>}, {pipeline_mode = #tpu.pipeline_mode<synchronous>, transform_indices = @transform_5, window_bounds = array<i64: 2, 128>}]} {
    %c0 = arith.constant 0 : index
    %c0_0 = arith.constant 0 : index
    %0 = vector.load %arg1[%c0, %c0_0] : memref<2x256xbf16, #tpu.memory_space<vmem>>, vector<2x256xbf16>
    %c0_1 = arith.constant 0 : index
    %c0_2 = arith.constant 0 : index
    %1 = vector.load %arg2[%c0_1, %c0_2] : memref<256x128xbf16, #tpu.memory_space<vmem>>, vector<256x128xbf16>
    %cst = arith.constant dense<0.000000e+00> : vector<2x128xf32>
    %2 = tpu.matmul %0, %1, %cst {dimension_numbers = #tpu.dot_dimension_numbers<[1], [0], [0], [1], [0, 0, 1, 1], [], []>} : vector<2x256xbf16>, vector<256x128xbf16>, vector<2x128xf32> -> vector<2x128xf32>
    %c0_3 = arith.constant 0 : index
    %c0_4 = arith.constant 0 : index
    %3 = vector.load %arg3[%c0_3, %c0_4] : memref<1x128xf32, #tpu.memory_space<vmem>>, vector<1x128xf32>
    %4 = vector.broadcast %3 : vector<1x128xf32> to vector<2x128xf32>
    %5 = arith.addf %2, %4 : vector<2x128xf32>
    %cst_5 = arith.constant 0.000000e+00 : f32
    %6 = vector.broadcast %cst_5 : f32 to vector<2x128xf32>
    %7 = arith.maximumf %5, %6 : vector<2x128xf32>
    %8 = arith.truncf %7 : vector<2x128xf32> to vector<2x128xbf16>
    %c0_6 = arith.constant 0 : index
    %c0_7 = arith.constant 0 : index
    %9 = vector.load %arg4[%c0_6, %c0_7] : memref<128x128xbf16, #tpu.memory_space<vmem>>, vector<128x128xbf16>
    %cst_8 = arith.constant dense<0.000000e+00> : vector<2x128xf32>
    %10 = tpu.matmul %8, %9, %cst_8 {dimension_numbers = #tpu.dot_dimension_numbers<[1], [0], [0], [1], [0, 0, 1, 1], [], []>} : vector<2x128xbf16>, vector<128x128xbf16>, vector<2x128xf32> -> vector<2x128xf32>
    %c0_9 = arith.constant 0 : index
    %c0_10 = arith.constant 0 : index
    %11 = vector.load %arg5[%c0_9, %c0_10] : memref<1x128xf32, #tpu.memory_space<vmem>>, vector<1x128xf32>
    %12 = vector.broadcast %11 : vector<1x128xf32> to vector<2x128xf32>
    %13 = arith.addf %10, %12 : vector<2x128xf32>
    %c0_11 = arith.constant 0 : index
    %c0_12 = arith.constant 0 : index
    %14 = vector.load %arg6[%c0_11, %c0_12] : memref<2x128xf32, #tpu.memory_space<vmem>>, vector<2x128xf32>
    tpu.vector_store %arg6[%c0_11, %c0_12], %13 {strides = array<i32>} : memref<2x128xf32, #tpu.memory_space<vmem>>, vector<2x128xf32>,
    return
  }
  func.func @transform_0(%arg0: i32) -> (i32, i32) {
    %c0_i32 = arith.constant 0 : i32
    %c0_i32_0 = arith.constant 0 : i32
    %c0_i32_1 = arith.constant 0 : i32
    return %c0_i32, %c0_i32_0 : i32, i32
  }
  func.func @transform_1(%arg0: i32) -> (i32, i32) {
    %c0_i32 = arith.constant 0 : i32
    %c0_i32_0 = arith.constant 0 : i32
    %c0_i32_1 = arith.constant 0 : i32
    return %c0_i32, %c0_i32_0 : i32, i32
  }
  func.func @transform_2(%arg0: i32) -> (i32, i32) {
    %c0_i32 = arith.constant 0 : i32
    %c0_i32_0 = arith.constant 0 : i32
    %c0_i32_1 = arith.constant 0 : i32
    return %c0_i32, %c0_i32_0 : i32, i32
  }
  func.func @transform_3(%arg0: i32) -> (i32, i32) {
    %c0_i32 = arith.constant 0 : i32
    %c0_i32_0 = arith.constant 0 : i32
    %c0_i32_1 = arith.constant 0 : i32
    return %c0_i32, %c0_i32_0 : i32, i32
  }
  func.func @transform_4(%arg0: i32) -> (i32, i32) {
    %c0_i32 = arith.constant 0 : i32
    %c0_i32_0 = arith.constant 0 : i32
    %c0_i32_1 = arith.constant 0 : i32
    return %c0_i32, %c0_i32_0 : i32, i32
  }
  func.func @transform_5(%arg0: i32) -> (i32, i32) {
    %c0_i32 = arith.constant 0 : i32
    %c0_i32_0 = arith.constant 0 : i32
    %c0_i32_1 = arith.constant 0 : i32
    return %c0_i32, %c0_i32_0 : i32, i32
  }
}

</mosaic_0001>

<llo_original>
// kernel: forward.4
$region0: #{forward.4}
  #allocation0 [shape = 'u32[]', space=smem, size = 0x4, offset = 0x4, fixed_abs, tag = 'smem constant byte address 0x4 - core index']
  #allocation1 [shape = 'u32[144,128]{1,0:T(1,128)}', space=vmem, size = 0x12000, scoped, tag = 'internal scratch']
  %s0 = inlined_call_operand.vmem [shape: bf16[4,2048,128], index: 0, kind: input, shape index: {}]
  %s1 = inlined_call_operand.vmem [shape: bf16[128,128], index: 1, kind: input, shape index: {}]
  %s2 = inlined_call_operand.vmem [shape: f32[1,128], index: 2, kind: input, shape index: {}]
  %s3 = inlined_call_operand.vmem [shape: bf16[2048,128], index: 3, kind: output, shape index: {}]
  %s4 = sld [smem:[#allocation0]]
  $region86: #{forward.4} parent=0
    _
  %s6 = ssub.s32 1, %s4
  %s7 = scalar_select 0, %s6, %s4
  $region1: #{forward.4} parent=0
    #allocation2 [shape = 'u8[1048576]{0}', space=vmem, size = 0x100000, scoped, tag = 'input window, operand 0']
    loop: start=0, step=1, limit=6
    $region2: #{forward.4} parent=1 // loop_pre_header
      _
    $region3: #{forward.4} parent=1 // loop_header
      %s9 = sphi 0, %s13
      %p10 = scmp.ge.s32.totalorder %s9, 6
      %s19 = sphi 0, %s21
      %s22 = sphi 0, %s19
      %s23 = sphi 0, %s22
      %s39 = sphi 0, %s23
      %s43 = sphi 0, %s43
      %s45 = sphi 0, %s43
      %s46 = sphi 0, %s45
      %s60 = sphi 0, %s46
      %s64 = sphi 0, %s64
      %s66 = sphi 0, %s64
      %s67 = sphi 0, %s66
      %s81 = sphi 0, %s67
      %s87 = sphi 0, %s89
      %s90 = sphi 0, %s87
      %s91 = sphi 0, %s90
      %s107 = sphi 0, %s91
    $region4: #{forward.4} parent=1 // loop_header_branch
      %12 = sbr.rel (%p10) target = $region8
    $region5: #{forward.4} parent=1 // loop_body
      %s14 = ssub.s32 %s9, 1
      %s15 = ssub.s32 %s9, 2
      %s16 = sadd.s32 %s9, 1
      %s17 = ssub.s32 %s9, %s16
      %p18 = scmp.eq.s32.totalorder %s17, 0
      %s20 = sadd.s32 %s19, 1
      %s21 = scalar_select %p18, %s19, %s20
      %p24 = pneg %p18
      %p25 = scmp.eq.s32.totalorder %s9, 3
      %p26 = por %p24, %p25
      %p27 = scmp.ne.s32.totalorder %s19, %s22
      %p28 = scmp.eq.s32.totalorder %s9, 0
      %p29 = por %p27, %p28
      %p30 = scmp.ne.s32.totalorder %s19, %s22
      %p31 = scmp.eq.s32.totalorder %s14, 3
      %p32 = por %p30, %p31
      %p33 = scmp.ne.s32.totalorder %s22, %s23
      %p34 = scmp.eq.s32.totalorder %s14, 0
      %p35 = por %p33, %p34
      %p36 = scmp.ne.s32.totalorder %s22, %s23
      %p37 = scmp.eq.s32.totalorder %s15, 3
      %p38 = por %p36, %p37
      %p40 = scmp.ne.s32.totalorder %s23, %s39
      %p41 = scmp.eq.s32.totalorder %s15, 0
      %p42 = por %p40, %p41
      %s44 = sadd.s32 %s43, 1
      %p47 = scmp.eq.s32.totalorder %s9, 3
      %p48 = scmp.ne.s32.totalorder %s43, %s45
      %p49 = scmp.eq.s32.totalorder %s9, 0
      %p50 = por %p48, %p49
      %p51 = scmp.ne.s32.totalorder %s43, %s45
      %p52 = scmp.eq.s32.totalorder %s14, 3
      %p53 = por %p51, %p52
      %p54 = scmp.ne.s32.totalorder %s45, %s46
      %p55 = scmp.eq.s32.totalorder %s14, 0
      %p56 = por %p54, %p55
      %p57 = scmp.ne.s32.totalorder %s45, %s46
      %p58 = scmp.eq.s32.totalorder %s15, 3
      %p59 = por %p57, %p58
      %p61 = scmp.ne.s32.totalorder %s46, %s60
      %p62 = scmp.eq.s32.totalorder %s15, 0
      %p63 = por %p61, %p62
      %s65 = sadd.s32 %s64, 1
      %p68 = scmp.eq.s32.totalorder %s9, 3
      %p69 = scmp.ne.s32.totalorder %s64, %s66
      %p70 = scmp.eq.s32.totalorder %s9, 0
      %p71 = por %p69, %p70
      %p72 = scmp.ne.s32.totalorder %s64, %s66
      %p73 = scmp.eq.s32.totalorder %s14, 3
      %p74 = por %p72, %p73
      %p75 = scmp.ne.s32.totalorder %s66, %s67
      %p76 = scmp.eq.s32.totalorder %s14, 0
      %p77 = por %p75, %p76
      %p78 = scmp.ne.s32.totalorder %s66, %s67
      %p79 = scmp.eq.s32.totalorder %s15, 3
      %p80 = por %p78, %p79
      %p82 = scmp.ne.s32.totalorder %s67, %s81
      %p83 = scmp.eq.s32.totalorder %s15, 0
      %p84 = por %p82, %p83
      %s85 = ssub.s32 %s9, %s16
      %p86 = scmp.eq.s32.totalorder %s85, 0
      %s88 = sadd.s32 %s87, 1
      %s89 = scalar_select %p86, %s87, %s88
      %p92 = pneg %p86
      %p93 = scmp.eq.s32.totalorder %s9, 3
      %p94 = por %p92, %p93
      %p95 = scmp.ne.s32.totalorder %s87, %s90
      %p96 = scmp.eq.s32.totalorder %s9, 0
      %p97 = por %p95, %p96
      %p98 = scmp.ne.s32.totalorder %s87, %s90
      %p99 = scmp.eq.s32.totalorder %s14, 3
      %p100 = por %p98, %p99
      %p101 = scmp.ne.s32.totalorder %s90, %s91
      %p102 = scmp.eq.s32.totalorder %s14, 0
      %p103 = por %p101, %p102
      %p104 = scmp.ne.s32.totalorder %s90, %s91
      %p105 = scmp.eq.s32.totalorder %s15, 3
      %p106 = por %p104, %p105
      %p108 = scmp.ne.s32.totalorder %s91, %s107
      %p109 = scmp.eq.s32.totalorder %s15, 0
      %p110 = por %p108, %p109
      %p111 = scmp.le.s32.totalorder 1, %s9
      %p112 = scmp.lt.s32.totalorder %s9, 5
      %p113 = pnand %p111, %p112
      %p114 = pneg %p113
      // Predicated region
      $region9: #{forward.4} parent=5 // pred_check
        _
      $region10: #{forward.4} parent=5 // pred_check_branch
        %116 = sbr.rel (%p113) target = $region12
      $region11: #{forward.4} parent=5 // pred_region
        %s117 = ssub.s32 %s9, 1
        // Predicated region
        $region13: #{forward.4} parent=11 // pred_check
          %p118 = pneg %p56
        $region14: #{forward.4} parent=11 // pred_check_branch
          %120 = sbr.rel (%p118) target = $region16
        $region15: #{forward.4} parent=11 // pred_region
          _
        $region16: #{forward.4} parent=11 // pred_fallthru
          _
        // Predicated region
        $region17: #{forward.4} parent=11 // pred_check
          %p121 = pneg %p77
        $region18: #{forward.4} parent=11 // pred_check_branch
          %123 = sbr.rel (%p121) target = $region20
        $region19: #{forward.4} parent=11 // pred_region
          _
        $region20: #{forward.4} parent=11 // pred_fallthru
          _
      $region12: #{forward.4} parent=5 // pred_fallthru
        _
      %p124 = scmp.lt.s32.totalorder %s9, 4
      // Predicated region
      $region21: #{forward.4} parent=5 // pred_check
        %p125 = pneg %p124
      $region22: #{forward.4} parent=5 // pred_check_branch
        %127 = sbr.rel (%p125) target = $region24
      $region23: #{forward.4} parent=5 // pred_region
        // Predicated region
        $region25: #{forward.4} parent=23 // pred_check
          %p128 = pneg %p29
        $region26: #{forward.4} parent=23 // pred_check_branch
          %130 = sbr.rel (%p128) target = $region28
        $region27: #{forward.4} parent=23 // pred_region
          %s131 = sand.u32 %s19, 1
          %s132 = sand.u32 %s19, 1
          %s133 = smul.addr %s132, 1024
          %s134 = scalar_lea.vmem [#allocation2], %s133
          %s135 = smul.u32 64, %s9
          %s136 = smul.addr %s135, 4
          %s137 = scalar_lea.vmem %s0, %s136
          // Predicated region
          $region29: #{forward.4} parent=27 // pred_check
            _
          $region30: #{forward.4} parent=27 // pred_check_branch
            %139 = sbr.rel (0) target = $region32
          $region31: #{forward.4} parent=27 // pred_region
            // Predicated region
            $region33: #{forward.4} parent=31 // pred_check
              _
            $region34: #{forward.4} parent=31 // pred_check_branch
              %141 = sbr.rel target = $region36
            $region35: #{forward.4} parent=31 // pred_region
              // Predicated region
              $region48: #{forward.4} parent=35 // pred_check
                _
              $region49: #{forward.4} parent=35 // pred_check_branch
                %667 = sbr.rel (0) target = $region51
              $region50: #{forward.4} parent=35 // pred_region
                loop: start=0, step=1, limit=1
                $region52: #{forward.4} parent=50 // loop_pre_header
                  _
                $region53: #{forward.4} parent=50 // loop_header
                  %s669 = sphi 0, %s673
                  %p670 = scmp.ge.s32.totalorder %s669, 1
                  %s674 = sphi %s137, %s137
                  %s675 = sphi %s134, %s134
                $region54: #{forward.4} parent=50 // loop_header_branch
                  %672 = sbr.rel (%p670) target = $region58
                $region55: #{forward.4} parent=50 // loop_body
                  _
                $region56: #{forward.4} parent=50 // loop_footer
                  %s673 = sadd.s32 1, %s669
                $region57: #{forward.4} parent=50 // loop_footer_branch
                  %668 = sbr.rel target = $region53
                $region58: #{forward.4} parent=50 // loop_exit
                  _
                %s677 = ssub.s32 16, 1
                loop: start=0, step=1, limit=1
                $region59: #{forward.4} parent=50 // loop_pre_header
                  _
                $region60: #{forward.4} parent=50 // loop_header
                  %s679 = sphi 0, %s683
                  %p680 = scmp.ge.s32.totalorder %s679, 1
                  %s684 = sphi %s137, %s137
                  %s685 = sphi %s134, %s134
                $region61: #{forward.4} parent=50 // loop_header_branch
                  %682 = sbr.rel (%p680) target = $region65
                $region62: #{forward.4} parent=50 // loop_body
                  %v686 = vld [vmem:[%s684] sm:%s677]
                  %687 = vst [vmem:[%s685] sm:%s677] %v686
                  %v688 = vld [vmem:[%s684 + $0x4] sm:%s677]
                  %689 = vst [vmem:[%s685 + $0x4] sm:%s677] %v688
                  %v690 = vld [vmem:[%s684 + $0x8] sm:%s677]
                  %691 = vst [vmem:[%s685 + $0x8] sm:%s677] %v690
                  %v692 = vld [vmem:[%s684 + $0xc] sm:%s677]
                  %693 = vst [vmem:[%s685 + $0xc] sm:%s677] %v692
                  %v694 = vld [vmem:[%s684 + $0x10] sm:%s677]
                  %695 = vst [vmem:[%s685 + $0x10] sm:%s677] %v694
                  %v696 = vld [vmem:[%s684 + $0x14] sm:%s677]
                  %697 = vst [vmem:[%s685 + $0x14] sm:%s677] %v696
                  %v698 = vld [vmem:[%s684 + $0x18] sm:%s677]
                  %699 = vst [vmem:[%s685 + $0x18] sm:%s677] %v698
                  %v700 = vld [vmem:[%s684 + $0x1c] sm:%s677]
                  %701 = vst [vmem:[%s685 + $0x1c] sm:%s677] %v700
                  %v702 = vld [vmem:[%s684 + $0x20] sm:%s677]
                  %703 = vst [vmem:[%s685 + $0x20] sm:%s677] %v702
                  %v704 = vld [vmem:[%s684 + $0x24] sm:%s677]
                  %705 = vst [vmem:[%s685 + $0x24] sm:%s677] %v704
                  %v706 = vld [vmem:[%s684 + $0x28] sm:%s677]
                  %707 = vst [vmem:[%s685 + $0x28] sm:%s677] %v706
                  %v708 = vld [vmem:[%s684 + $0x2c] sm:%s677]
                  %709 = vst [vmem:[%s685 + $0x2c] sm:%s677] %v708
                  %v710 = vld [vmem:[%s684 + $0x30] sm:%s677]
                  %711 = vst [vmem:[%s685 + $0x30] sm:%s677] %v710
                  %v712 = vld [vmem:[%s684 + $0x34] sm:%s677]
                  %713 = vst [vmem:[%s685 + $0x34] sm:%s677] %v712
                  %v714 = vld [vmem:[%s684 + $0x38] sm:%s677]
                  %715 = vst [vmem:[%s685 + $0x38] sm:%s677] %v714
                  %v716 = vld [vmem:[%s684 + $0x3c] sm:%s677]
                  %717 = vst [vmem:[%s685 + $0x3c] sm:%s677] %v716
                  %v718 = vld [vmem:[%s684 + $0x40] sm:%s677]
                  %719 = vst [vmem:[%s685 + $0x40] sm:%s677] %v718
                  %v720 = vld [vmem:[%s684 + $0x44] sm:%s677]
                  %721 = vst [vmem:[%s685 + $0x44] sm:%s677] %v720
                  %v722 = vld [vmem:[%s684 + $0x48] sm:%s677]
                  %723 = vst [vmem:[%s685 + $0x48] sm:%s677] %v722
                  %v724 = vld [vmem:[%s684 + $0x4c] sm:%s677]
                  %725 = vst [vmem:[%s685 + $0x4c] sm:%s677] %v724
                  %v726 = vld [vmem:[%s684 + $0x50] sm:%s677]
                  %727 = vst [vmem:[%s685 + $0x50] sm:%s677] %v726
                  %v728 = vld [vmem:[%s684 + $0x54] sm:%s677]
                  %729 = vst [vmem:[%s685 + $0x54] sm:%s677] %v728
                  %v730 = vld [vmem:[%s684 + $0x58] sm:%s677]
                  %731 = vst [vmem:[%s685 + $0x58] sm:%s677] %v730
                  %v732 = vld [vmem:[%s684 + $0x5c] sm:%s677]
                  %733 = vst [vmem:[%s685 + $0x5c] sm:%s677] %v732
                  %v734 = vld [vmem:[%s684 + $0x60] sm:%s677]
                  %735 = vst [vmem:[%s685 + $0x60] sm:%s677] %v734
                  %v736 = vld [vmem:[%s684 + $0x64] sm:%s677]
                  %737 = vst [vmem:[%s685 + $0x64] sm:%s677] %v736
                  %v738 = vld [vmem:[%s684 + $0x68] sm:%s677]
                  %739 = vst [vmem:[%s685 + $0x68] sm:%s677] %v738
                  %v740 = vld [vmem:[%s684 + $0x6c] sm:%s677]
                  %741 = vst [vmem:[%s685 + $0x6c] sm:%s677] %v740
                  %v742 = vld [vmem:[%s684 + $0x70] sm:%s677]
                  %743 = vst [vmem:[%s685 + $0x70] sm:%s677] %v742
                  %v744 = vld [vmem:[%s684 + $0x74] sm:%s677]
                  %745 = vst [vmem:[%s685 + $0x74] sm:%s677] %v744
                  %v746 = vld [vmem:[%s684 + $0x78] sm:%s677]
                  %747 = vst [vmem:[%s685 + $0x78] sm:%s677] %v746
                  %v748 = vld [vmem:[%s684 + $0x7c] sm:%s677]
                  %749 = vst [vmem:[%s685 + $0x7c] sm:%s677] %v748
                  %v750 = vld [vmem:[%s684 + $0x80] sm:%s677]
                  %751 = vst [vmem:[%s685 + $0x80] sm:%s677] %v750
                  %v752 = vld [vmem:[%s684 + $0x84] sm:%s677]
                  %753 = vst [vmem:[%s685 + $0x84] sm:%s677] %v752
                  %v754 = vld [vmem:[%s684 + $0x88] sm:%s677]
                  %755 = vst [vmem:[%s685 + $0x88] sm:%s677] %v754
                  %v756 = vld [vmem:[%s684 + $0x8c] sm:%s677]
                  %757 = vst [vmem:[%s685 + $0x8c] sm:%s677] %v756
                  %v758 = vld [vmem:[%s684 + $0x90] sm:%s677]
                  %759 = vst [vmem:[%s685 + $0x90] sm:%s677] %v758
                  %v760 = vld [vmem:[%s684 + $0x94] sm:%s677]
                  %761 = vst [vmem:[%s685 + $0x94] sm:%s677] %v760
                  %v762 = vld [vmem:[%s684 + $0x98] sm:%s677]
                  %763 = vst [vmem:[%s685 + $0x98] sm:%s677] %v762
                  %v764 = vld [vmem:[%s684 + $0x9c] sm:%s677]
                  %765 = vst [vmem:[%s685 + $0x9c] sm:%s677] %v764
                  %v766 = vld [vmem:[%s684 + $0xa0] sm:%s677]
                  %767 = vst [vmem:[%s685 + $0xa0] sm:%s677] %v766
                  %v768 = vld [vmem:[%s684 + $0xa4] sm:%s677]
                  %769 = vst [vmem:[%s685 + $0xa4] sm:%s677] %v768
                  %v770 = vld [vmem:[%s684 + $0xa8] sm:%s677]
                  %771 = vst [vmem:[%s685 + $0xa8] sm:%s677] %v770
                  %v772 = vld [vmem:[%s684 + $0xac] sm:%s677]
                  %773 = vst [vmem:[%s685 + $0xac] sm:%s677] %v772
                  %v774 = vld [vmem:[%s684 + $0xb0] sm:%s677]
                  %775 = vst [vmem:[%s685 + $0xb0] sm:%s677] %v774
                  %v776 = vld [vmem:[%s684 + $0xb4] sm:%s677]
                  %777 = vst [vmem:[%s685 + $0xb4] sm:%s677] %v776
                  %v778 = vld [vmem:[%s684 + $0xb8] sm:%s677]
                  %779 = vst [vmem:[%s685 + $0xb8] sm:%s677] %v778
                  %v780 = vld [vmem:[%s684 + $0xbc] sm:%s677]
                  %781 = vst [vmem:[%s685 + $0xbc] sm:%s677] %v780
                  %v782 = vld [vmem:[%s684 + $0xc0] sm:%s677]
                  %783 = vst [vmem:[%s685 + $0xc0] sm:%s677] %v782
                  %v784 = vld [vmem:[%s684 + $0xc4] sm:%s677]
                  %785 = vst [vmem:[%s685 + $0xc4] sm:%s677] %v784
                  %v786 = vld [vmem:[%s684 + $0xc8] sm:%s677]
                  %787 = vst [vmem:[%s685 + $0xc8] sm:%s677] %v786
                  %v788 = vld [vmem:[%s684 + $0xcc] sm:%s677]
                  %789 = vst [vmem:[%s685 + $0xcc] sm:%s677] %v788
                  %v790 = vld [vmem:[%s684 + $0xd0] sm:%s677]
                  %791 = vst [vmem:[%s685 + $0xd0] sm:%s677] %v790
                  %v792 = vld [vmem:[%s684 + $0xd4] sm:%s677]
                  %793 = vst [vmem:[%s685 + $0xd4] sm:%s677] %v792
                  %v794 = vld [vmem:[%s684 + $0xd8] sm:%s677]
                  %795 = vst [vmem:[%s685 + $0xd8] sm:%s677] %v794
                  %v796 = vld [vmem:[%s684 + $0xdc] sm:%s677]
                  %797 = vst [vmem:[%s685 + $0xdc] sm:%s677] %v796
                  %v798 = vld [vmem:[%s684 + $0xe0] sm:%s677]
                  %799 = vst [vmem:[%s685 + $0xe0] sm:%s677] %v798
                  %v800 = vld [vmem:[%s684 + $0xe4] sm:%s677]
                  %801 = vst [vmem:[%s685 + $0xe4] sm:%s677] %v800
                  %v802 = vld [vmem:[%s684 + $0xe8] sm:%s677]
                  %803 = vst [vmem:[%s685 + $0xe8] sm:%s677] %v802
                  %v804 = vld [vmem:[%s684 + $0xec] sm:%s677]
                  %805 = vst [vmem:[%s685 + $0xec] sm:%s677] %v804
                  %v806 = vld [vmem:[%s684 + $0xf0] sm:%s677]
                  %807 = vst [vmem:[%s685 + $0xf0] sm:%s677] %v806
                  %v808 = vld [vmem:[%s684 + $0xf4] sm:%s677]
                  %809 = vst [vmem:[%s685 + $0xf4] sm:%s677] %v808
                  %v810 = vld [vmem:[%s684 + $0xf8] sm:%s677]
                  %811 = vst [vmem:[%s685 + $0xf8] sm:%s677] %v810
                  %v812 = vld [vmem:[%s684 + $0xfc] sm:%s677]
                  %813 = vst [vmem:[%s685 + $0xfc] sm:%s677] %v812
                  %v814 = vld [vmem:[%s684 + $0x400] sm:%s677]
                  %815 = vst [vmem:[%s685 + $0x100] sm:%s677] %v814
                  %v816 = vld [vmem:[%s684 + $0x404] sm:%s677]
                  %817 = vst [vmem:[%s685 + $0x104] sm:%s677] %v816
                  %v818 = vld [vmem:[%s684 + $0x408] sm:%s677]
                  %819 = vst [vmem:[%s685 + $0x108] sm:%s677] %v818
                  %v820 = vld [vmem:[%s684 + $0x40c] sm:%s677]
                  %821 = vst [vmem:[%s685 + $0x10c] sm:%s677] %v820
                  %v822 = vld [vmem:[%s684 + $0x410] sm:%s677]
                  %823 = vst [vmem:[%s685 + $0x110] sm:%s677] %v822
                  %v824 = vld [vmem:[%s684 + $0x414] sm:%s677]
                  %825 = vst [vmem:[%s685 + $0x114] sm:%s677] %v824
                  %v826 = vld [vmem:[%s684 + $0x418] sm:%s677]
                  %827 = vst [vmem:[%s685 + $0x118] sm:%s677] %v826
                  %v828 = vld [vmem:[%s684 + $0x41c] sm:%s677]
                  %829 = vst [vmem:[%s685 + $0x11c] sm:%s677] %v828
                  %v830 = vld [vmem:[%s684 + $0x420] sm:%s677]
                  %831 = vst [vmem:[%s685 + $0x120] sm:%s677] %v830
                  %v832 = vld [vmem:[%s684 + $0x424] sm:%s677]
                  %833 = vst [vmem:[%s685 + $0x124] sm:%s677] %v832
                  %v834 = vld [vmem:[%s684 + $0x428] sm:%s677]
                  %835 = vst [vmem:[%s685 + $0x128] sm:%s677] %v834
                  %v836 = vld [vmem:[%s684 + $0x42c] sm:%s677]
                  %837 = vst [vmem:[%s685 + $0x12c] sm:%s677] %v836
                  %v838 = vld [vmem:[%s684 + $0x430] sm:%s677]
                  %839 = vst [vmem:[%s685 + $0x130] sm:%s677] %v838
                  %v840 = vld [vmem:[%s684 + $0x434] sm:%s677]
                  %841 = vst [vmem:[%s685 + $0x134] sm:%s677] %v840
                  %v842 = vld [vmem:[%s684 + $0x438] sm:%s677]
                  %843 = vst [vmem:[%s685 + $0x138] sm:%s677] %v842
                  %v844 = vld [vmem:[%s684 + $0x43c] sm:%s677]
                  %845 = vst [vmem:[%s685 + $0x13c] sm:%s677] %v844
                  %v846 = vld [vmem:[%s684 + $0x440] sm:%s677]
                  %847 = vst [vmem:[%s685 + $0x140] sm:%s677] %v846
                  %v848 = vld [vmem:[%s684 + $0x444] sm:%s677]
                  %849 = vst [vmem:[%s685 + $0x144] sm:%s677] %v848
                  %v850 = vld [vmem:[%s684 + $0x448] sm:%s677]
                  %851 = vst [vmem:[%s685 + $0x148] sm:%s677] %v850
                  %v852 = vld [vmem:[%s684 + $0x44c] sm:%s677]
                  %853 = vst [vmem:[%s685 + $0x14c] sm:%s677] %v852
                  %v854 = vld [vmem:[%s684 + $0x450] sm:%s677]
                  %855 = vst [vmem:[%s685 + $0x150] sm:%s677] %v854
                  %v856 = vld [vmem:[%s684 + $0x454] sm:%s677]
                  %857 = vst [vmem:[%s685 + $0x154] sm:%s677] %v856
                  %v858 = vld [vmem:[%s684 + $0x458] sm:%s677]
                  %859 = vst [vmem:[%s685 + $0x158] sm:%s677] %v858
                  %v860 = vld [vmem:[%s684 + $0x45c] sm:%s677]
                  %861 = vst [vmem:[%s685 + $0x15c] sm:%s677] %v860
                  %v862 = vld [vmem:[%s684 + $0x460] sm:%s677]
                  %863 = vst [vmem:[%s685 + $0x160] sm:%s677] %v862
                  %v864 = vld [vmem:[%s684 + $0x464] sm:%s677]
                  %865 = vst [vmem:[%s685 + $0x164] sm:%s677] %v864
                  %v866 = vld [vmem:[%s684 + $0x468] sm:%s677]
                  %867 = vst [vmem:[%s685 + $0x168] sm:%s677] %v866
                  %v868 = vld [vmem:[%s684 + $0x46c] sm:%s677]
                  %869 = vst [vmem:[%s685 + $0x16c] sm:%s677] %v868
                  %v870 = vld [vmem:[%s684 + $0x470] sm:%s677]
                  %871 = vst [vmem:[%s685 + $0x170] sm:%s677] %v870
                  %v872 = vld [vmem:[%s684 + $0x474] sm:%s677]
                  %873 = vst [vmem:[%s685 + $0x174] sm:%s677] %v872
                  %v874 = vld [vmem:[%s684 + $0x478] sm:%s677]
                  %875 = vst [vmem:[%s685 + $0x178] sm:%s677] %v874
                  %v876 = vld [vmem:[%s684 + $0x47c] sm:%s677]
                  %877 = vst [vmem:[%s685 + $0x17c] sm:%s677] %v876
                  %v878 = vld [vmem:[%s684 + $0x480] sm:%s677]
                  %879 = vst [vmem:[%s685 + $0x180] sm:%s677] %v878
                  %v880 = vld [vmem:[%s684 + $0x484] sm:%s677]
                  %881 = vst [vmem:[%s685 + $0x184] sm:%s677] %v880
                  %v882 = vld [vmem:[%s684 + $0x488] sm:%s677]
                  %883 = vst [vmem:[%s685 + $0x188] sm:%s677] %v882
                  %v884 = vld [vmem:[%s684 + $0x48c] sm:%s677]
                  %885 = vst [vmem:[%s685 + $0x18c] sm:%s677] %v884
                  %v886 = vld [vmem:[%s684 + $0x490] sm:%s677]
                  %887 = vst [vmem:[%s685 + $0x190] sm:%s677] %v886
                  %v888 = vld [vmem:[%s684 + $0x494] sm:%s677]
                  %889 = vst [vmem:[%s685 + $0x194] sm:%s677] %v888
                  %v890 = vld [vmem:[%s684 + $0x498] sm:%s677]
                  %891 = vst [vmem:[%s685 + $0x198] sm:%s677] %v890
                  %v892 = vld [vmem:[%s684 + $0x49c] sm:%s677]
                  %893 = vst [vmem:[%s685 + $0x19c] sm:%s677] %v892
                  %v894 = vld [vmem:[%s684 + $0x4a0] sm:%s677]
                  %895 = vst [vmem:[%s685 + $0x1a0] sm:%s677] %v894
                  %v896 = vld [vmem:[%s684 + $0x4a4] sm:%s677]
                  %897 = vst [vmem:[%s685 + $0x1a4] sm:%s677] %v896
                  %v898 = vld [vmem:[%s684 + $0x4a8] sm:%s677]
                  %899 = vst [vmem:[%s685 + $0x1a8] sm:%s677] %v898
                  %v900 = vld [vmem:[%s684 + $0x4ac] sm:%s677]
                  %901 = vst [vmem:[%s685 + $0x1ac] sm:%s677] %v900
                  %v902 = vld [vmem:[%s684 + $0x4b0] sm:%s677]
                  %903 = vst [vmem:[%s685 + $0x1b0] sm:%s677] %v902
                  %v904 = vld [vmem:[%s684 + $0x4b4] sm:%s677]
                  %905 = vst [vmem:[%s685 + $0x1b4] sm:%s677] %v904
                  %v906 = vld [vmem:[%s684 + $0x4b8] sm:%s677]
                  %907 = vst [vmem:[%s685 + $0x1b8] sm:%s677] %v906
                  %v908 = vld [vmem:[%s684 + $0x4bc] sm:%s677]
                  %909 = vst [vmem:[%s685 + $0x1bc] sm:%s677] %v908
                  %v910 = vld [vmem:[%s684 + $0x4c0] sm:%s677]
                  %911 = vst [vmem:[%s685 + $0x1c0] sm:%s677] %v910
                  %v912 = vld [vmem:[%s684 + $0x4c4] sm:%s677]
                  %913 = vst [vmem:[%s685 + $0x1c4] sm:%s677] %v912
                  %v914 = vld [vmem:[%s684 + $0x4c8] sm:%s677]
                  %915 = vst [vmem:[%s685 + $0x1c8] sm:%s677] %v914
                  %v916 = vld [vmem:[%s684 + $0x4cc] sm:%s677]
                  %917 = vst [vmem:[%s685 + $0x1cc] sm:%s677] %v916
                  %v918 = vld [vmem:[%s684 + $0x4d0] sm:%s677]
                  %919 = vst [vmem:[%s685 + $0x1d0] sm:%s677] %v918
                  %v920 = vld [vmem:[%s684 + $0x4d4] sm:%s677]
                  %921 = vst [vmem:[%s685 + $0x1d4] sm:%s677] %v920
                  %v922 = vld [vmem:[%s684 + $0x4d8] sm:%s677]
                  %923 = vst [vmem:[%s685 + $0x1d8] sm:%s677] %v922
                  %v924 = vld [vmem:[%s684 + $0x4dc] sm:%s677]
                  %925 = vst [vmem:[%s685 + $0x1dc] sm:%s677] %v924
                  %v926 = vld [vmem:[%s684 + $0x4e0] sm:%s677]
                  %927 = vst [vmem:[%s685 + $0x1e0] sm:%s677] %v926
                  %v928 = vld [vmem:[%s684 + $0x4e4] sm:%s677]
                  %929 = vst [vmem:[%s685 + $0x1e4] sm:%s677] %v928
                  %v930 = vld [vmem:[%s684 + $0x4e8] sm:%s677]
                  %931 = vst [vmem:[%s685 + $0x1e8] sm:%s677] %v930
                  %v932 = vld [vmem:[%s684 + $0x4ec] sm:%s677]
                  %933 = vst [vmem:[%s685 + $0x1ec] sm:%s677] %v932
                  %v934 = vld [vmem:[%s684 + $0x4f0] sm:%s677]
                  %935 = vst [vmem:[%s685 + $0x1f0] sm:%s677] %v934
                  %v936 = vld [vmem:[%s684 + $0x4f4] sm:%s677]
                  %937 = vst [vmem:[%s685 + $0x1f4] sm:%s677] %v936
                  %v938 = vld [vmem:[%s684 + $0x4f8] sm:%s677]
                  %939 = vst [vmem:[%s685 + $0x1f8] sm:%s677] %v938
                  %v940 = vld [vmem:[%s684 + $0x4fc] sm:%s677]
                  %941 = vst [vmem:[%s685 + $0x1fc] sm:%s677] %v940
                  %v942 = vld [vmem:[%s684 + $0x800] sm:%s677]
                  %943 = vst [vmem:[%s685 + $0x200] sm:%s677] %v942
                  %v944 = vld [vmem:[%s684 + $0x804] sm:%s677]
                  %945 = vst [vmem:[%s685 + $0x204] sm:%s677] %v944
                  %v946 = vld [vmem:[%s684 + $0x808] sm:%s677]
                  %947 = vst [vmem:[%s685 + $0x208] sm:%s677] %v946
                  %v948 = vld [vmem:[%s684 + $0x80c] sm:%s677]
                  %949 = vst [vmem:[%s685 + $0x20c] sm:%s677] %v948
                  %v950 = vld [vmem:[%s684 + $0x810] sm:%s677]
                  %951 = vst [vmem:[%s685 + $0x210] sm:%s677] %v950
                  %v952 = vld [vmem:[%s684 + $0x814] sm:%s677]
                  %953 = vst [vmem:[%s685 + $0x214] sm:%s677] %v952
                  %v954 = vld [vmem:[%s684 + $0x818] sm:%s677]
                  %955 = vst [vmem:[%s685 + $0x218] sm:%s677] %v954
                  %v956 = vld [vmem:[%s684 + $0x81c] sm:%s677]
                  %957 = vst [vmem:[%s685 + $0x21c] sm:%s677] %v956
                  %v958 = vld [vmem:[%s684 + $0x820] sm:%s677]
                  %959 = vst [vmem:[%s685 + $0x220] sm:%s677] %v958
                  %v960 = vld [vmem:[%s684 + $0x824] sm:%s677]
                  %961 = vst [vmem:[%s685 + $0x224] sm:%s677] %v960
                  %v962 = vld [vmem:[%s684 + $0x828] sm:%s677]
                  %963 = vst [vmem:[%s685 + $0x228] sm:%s677] %v962
                  %v964 = vld [vmem:[%s684 + $0x82c] sm:%s677]
                  %965 = vst [vmem:[%s685 + $0x22c] sm:%s677] %v964
                  %v966 = vld [vmem:[%s684 + $0x830] sm:%s677]
                  %967 = vst [vmem:[%s685 + $0x230] sm:%s677] %v966
                  %v968 = vld [vmem:[%s684 + $0x834] sm:%s677]
                  %969 = vst [vmem:[%s685 + $0x234] sm:%s677] %v968
                  %v970 = vld [vmem:[%s684 + $0x838] sm:%s677]
                  %971 = vst [vmem:[%s685 + $0x238] sm:%s677] %v970
                  %v972 = vld [vmem:[%s684 + $0x83c] sm:%s677]
                  %973 = vst [vmem:[%s685 + $0x23c] sm:%s677] %v972
                  %v974 = vld [vmem:[%s684 + $0x840] sm:%s677]
                  %975 = vst [vmem:[%s685 + $0x240] sm:%s677] %v974
                  %v976 = vld [vmem:[%s684 + $0x844] sm:%s677]
                  %977 = vst [vmem:[%s685 + $0x244] sm:%s677] %v976
                  %v978 = vld [vmem:[%s684 + $0x848] sm:%s677]
                  %979 = vst [vmem:[%s685 + $0x248] sm:%s677] %v978
                  %v980 = vld [vmem:[%s684 + $0x84c] sm:%s677]
                  %981 = vst [vmem:[%s685 + $0x24c] sm:%s677] %v980
                  %v982 = vld [vmem:[%s684 + $0x850] sm:%s677]
                  %983 = vst [vmem:[%s685 + $0x250] sm:%s677] %v982
                  %v984 = vld [vmem:[%s684 + $0x854] sm:%s677]
                  %985 = vst [vmem:[%s685 + $0x254] sm:%s677] %v984
                  %v986 = vld [vmem:[%s684 + $0x858] sm:%s677]
                  %987 = vst [vmem:[%s685 + $0x258] sm:%s677] %v986
                  %v988 = vld [vmem:[%s684 + $0x85c] sm:%s677]
                  %989 = vst [vmem:[%s685 + $0x25c] sm:%s677] %v988
                  %v990 = vld [vmem:[%s684 + $0x860] sm:%s677]
                  %991 = vst [vmem:[%s685 + $0x260] sm:%s677] %v990
                  %v992 = vld [vmem:[%s684 + $0x864] sm:%s677]
                  %993 = vst [vmem:[%s685 + $0x264] sm:%s677] %v992
                  %v994 = vld [vmem:[%s684 + $0x868] sm:%s677]
                  %995 = vst [vmem:[%s685 + $0x268] sm:%s677] %v994
                  %v996 = vld [vmem:[%s684 + $0x86c] sm:%s677]
                  %997 = vst [vmem:[%s685 + $0x26c] sm:%s677] %v996
                  %v998 = vld [vmem:[%s684 + $0x870] sm:%s677]
                  %999 = vst [vmem:[%s685 + $0x270] sm:%s677] %v998
                  %v1000 = vld [vmem:[%s684 + $0x874] sm:%s677]
                  %1001 = vst [vmem:[%s685 + $0x274] sm:%s677] %v1000
                  %v1002 = vld [vmem:[%s684 + $0x878] sm:%s677]
                  %1003 = vst [vmem:[%s685 + $0x278] sm:%s677] %v1002
                  %v1004 = vld [vmem:[%s684 + $0x87c] sm:%s677]
                  %1005 = vst [vmem:[%s685 + $0x27c] sm:%s677] %v1004
                  %v1006 = vld [vmem:[%s684 + $0x880] sm:%s677]
                  %1007 = vst [vmem:[%s685 + $0x280] sm:%s677] %v1006
                  %v1008 = vld [vmem:[%s684 + $0x884] sm:%s677]
                  %1009 = vst [vmem:[%s685 + $0x284] sm:%s677] %v1008
                  %v1010 = vld [vmem:[%s684 + $0x888] sm:%s677]
                  %1011 = vst [vmem:[%s685 + $0x288] sm:%s677] %v1010
                  %v1012 = vld [vmem:[%s684 + $0x88c] sm:%s677]
                  %1013 = vst [vmem:[%s685 + $0x28c] sm:%s677] %v1012
                  %v1014 = vld [vmem:[%s684 + $0x890] sm:%s677]
                  %1015 = vst [vmem:[%s685 + $0x290] sm:%s677] %v1014
                  %v1016 = vld [vmem:[%s684 + $0x894] sm:%s677]
                  %1017 = vst [vmem:[%s685 + $0x294] sm:%s677] %v1016
                  %v1018 = vld [vmem:[%s684 + $0x898] sm:%s677]
                  %1019 = vst [vmem:[%s685 + $0x298] sm:%s677] %v1018
                  %v1020 = vld [vmem:[%s684 + $0x89c] sm:%s677]
                  %1021 = vst [vmem:[%s685 + $0x29c] sm:%s677] %v1020
                  %v1022 = vld [vmem:[%s684 + $0x8a0] sm:%s677]
                  %1023 = vst [vmem:[%s685 + $0x2a0] sm:%s677] %v1022
                  %v1024 = vld [vmem:[%s684 + $0x8a4] sm:%s677]
                  %1025 = vst [vmem:[%s685 + $0x2a4] sm:%s677] %v1024
                  %v1026 = vld [vmem:[%s684 + $0x8a8] sm:%s677]
                  %1027 = vst [vmem:[%s685 + $0x2a8] sm:%s677] %v1026
                  %v1028 = vld [vmem:[%s684 + $0x8ac] sm:%s677]
                  %1029 = vst [vmem:[%s685 + $0x2ac] sm:%s677] %v1028
                  %v1030 = vld [vmem:[%s684 + $0x8b0] sm:%s677]
                  %1031 = vst [vmem:[%s685 + $0x2b0] sm:%s677] %v1030
                  %v1032 = vld [vmem:[%s684 + $0x8b4] sm:%s677]
                  %1033 = vst [vmem:[%s685 + $0x2b4] sm:%s677] %v1032
                  %v1034 = vld [vmem:[%s684 + $0x8b8] sm:%s677]
                  %1035 = vst [vmem:[%s685 + $0x2b8] sm:%s677] %v1034
                  %v1036 = vld [vmem:[%s684 + $0x8bc] sm:%s677]
                  %1037 = vst [vmem:[%s685 + $0x2bc] sm:%s677] %v1036
                  %v1038 = vld [vmem:[%s684 + $0x8c0] sm:%s677]
                  %1039 = vst [vmem:[%s685 + $0x2c0] sm:%s677] %v1038
                  %v1040 = vld [vmem:[%s684 + $0x8c4] sm:%s677]
                  %1041 = vst [vmem:[%s685 + $0x2c4] sm:%s677] %v1040
                  %v1042 = vld [vmem:[%s684 + $0x8c8] sm:%s677]
                  %1043 = vst [vmem:[%s685 + $0x2c8] sm:%s677] %v1042
                  %v1044 = vld [vmem:[%s684 + $0x8cc] sm:%s677]
                  %1045 = vst [vmem:[%s685 + $0x2cc] sm:%s677] %v1044
                  %v1046 = vld [vmem:[%s684 + $0x8d0] sm:%s677]
                  %1047 = vst [vmem:[%s685 + $0x2d0] sm:%s677] %v1046
                  %v1048 = vld [vmem:[%s684 + $0x8d4] sm:%s677]
                  %1049 = vst [vmem:[%s685 + $0x2d4] sm:%s677] %v1048
                  %v1050 = vld [vmem:[%s684 + $0x8d8] sm:%s677]
                  %1051 = vst [vmem:[%s685 + $0x2d8] sm:%s677] %v1050
                  %v1052 = vld [vmem:[%s684 + $0x8dc] sm:%s677]
                  %1053 = vst [vmem:[%s685 + $0x2dc] sm:%s677] %v1052
                  %v1054 = vld [vmem:[%s684 + $0x8e0] sm:%s677]
                  %1055 = vst [vmem:[%s685 + $0x2e0] sm:%s677] %v1054
                  %v1056 = vld [vmem:[%s684 + $0x8e4] sm:%s677]
                  %1057 = vst [vmem:[%s685 + $0x2e4] sm:%s677] %v1056
                  %v1058 = vld [vmem:[%s684 + $0x8e8] sm:%s677]
                  %1059 = vst [vmem:[%s685 + $0x2e8] sm:%s677] %v1058
                  %v1060 = vld [vmem:[%s684 + $0x8ec] sm:%s677]
                  %1061 = vst [vmem:[%s685 + $0x2ec] sm:%s677] %v1060
                  %v1062 = vld [vmem:[%s684 + $0x8f0] sm:%s677]
                  %1063 = vst [vmem:[%s685 + $0x2f0] sm:%s677] %v1062
                  %v1064 = vld [vmem:[%s684 + $0x8f4] sm:%s677]
                  %1065 = vst [vmem:[%s685 + $0x2f4] sm:%s677] %v1064
                  %v1066 = vld [vmem:[%s684 + $0x8f8] sm:%s677]
                  %1067 = vst [vmem:[%s685 + $0x2f8] sm:%s677] %v1066
                  %v1068 = vld [vmem:[%s684 + $0x8fc] sm:%s677]
                  %1069 = vst [vmem:[%s685 + $0x2fc] sm:%s677] %v1068
                  %v1070 = vld [vmem:[%s684 + $0xc00] sm:%s677]
                  %1071 = vst [vmem:[%s685 + $0x300] sm:%s677] %v1070
                  %v1072 = vld [vmem:[%s684 + $0xc04] sm:%s677]
                  %1073 = vst [vmem:[%s685 + $0x304] sm:%s677] %v1072
                  %v1074 = vld [vmem:[%s684 + $0xc08] sm:%s677]
                  %1075 = vst [vmem:[%s685 + $0x308] sm:%s677] %v1074
                  %v1076 = vld [vmem:[%s684 + $0xc0c] sm:%s677]
                  %1077 = vst [vmem:[%s685 + $0x30c] sm:%s677] %v1076
                  %v1078 = vld [vmem:[%s684 + $0xc10] sm:%s677]
                  %1079 = vst [vmem:[%s685 + $0x310] sm:%s677] %v1078
                  %v1080 = vld [vmem:[%s684 + $0xc14] sm:%s677]
                  %1081 = vst [vmem:[%s685 + $0x314] sm:%s677] %v1080
                  %v1082 = vld [vmem:[%s684 + $0xc18] sm:%s677]
                  %1083 = vst [vmem:[%s685 + $0x318] sm:%s677] %v1082
                  %v1084 = vld [vmem:[%s684 + $0xc1c] sm:%s677]
                  %1085 = vst [vmem:[%s685 + $0x31c] sm:%s677] %v1084
                  %v1086 = vld [vmem:[%s684 + $0xc20] sm:%s677]
                  %1087 = vst [vmem:[%s685 + $0x320] sm:%s677] %v1086
                  %v1088 = vld [vmem:[%s684 + $0xc24] sm:%s677]
                  %1089 = vst [vmem:[%s685 + $0x324] sm:%s677] %v1088
                  %v1090 = vld [vmem:[%s684 + $0xc28] sm:%s677]
                  %1091 = vst [vmem:[%s685 + $0x328] sm:%s677] %v1090
                  %v1092 = vld [vmem:[%s684 + $0xc2c] sm:%s677]
                  %1093 = vst [vmem:[%s685 + $0x32c] sm:%s677] %v1092
                  %v1094 = vld [vmem:[%s684 + $0xc30] sm:%s677]
                  %1095 = vst [vmem:[%s685 + $0x330] sm:%s677] %v1094
                  %v1096 = vld [vmem:[%s684 + $0xc34] sm:%s677]
                  %1097 = vst [vmem:[%s685 + $0x334] sm:%s677] %v1096
                  %v1098 = vld [vmem:[%s684 + $0xc38] sm:%s677]
                  %1099 = vst [vmem:[%s685 + $0x338] sm:%s677] %v1098
                  %v1100 = vld [vmem:[%s684 + $0xc3c] sm:%s677]
                  %1101 = vst [vmem:[%s685 + $0x33c] sm:%s677] %v1100
                  %v1102 = vld [vmem:[%s684 + $0xc40] sm:%s677]
                  %1103 = vst [vmem:[%s685 + $0x340] sm:%s677] %v1102
                  %v1104 = vld [vmem:[%s684 + $0xc44] sm:%s677]
                  %1105 = vst [vmem:[%s685 + $0x344] sm:%s677] %v1104
                  %v1106 = vld [vmem:[%s684 + $0xc48] sm:%s677]
                  %1107 = vst [vmem:[%s685 + $0x348] sm:%s677] %v1106
                  %v1108 = vld [vmem:[%s684 + $0xc4c] sm:%s677]
                  %1109 = vst [vmem:[%s685 + $0x34c] sm:%s677] %v1108
                  %v1110 = vld [vmem:[%s684 + $0xc50] sm:%s677]
                  %1111 = vst [vmem:[%s685 + $0x350] sm:%s677] %v1110
                  %v1112 = vld [vmem:[%s684 + $0xc54] sm:%s677]
                  %1113 = vst [vmem:[%s685 + $0x354] sm:%s677] %v1112
                  %v1114 = vld [vmem:[%s684 + $0xc58] sm:%s677]
                  %1115 = vst [vmem:[%s685 + $0x358] sm:%s677] %v1114
                  %v1116 = vld [vmem:[%s684 + $0xc5c] sm:%s677]
                  %1117 = vst [vmem:[%s685 + $0x35c] sm:%s677] %v1116
                  %v1118 = vld [vmem:[%s684 + $0xc60] sm:%s677]
                  %1119 = vst [vmem:[%s685 + $0x360] sm:%s677] %v1118
                  %v1120 = vld [vmem:[%s684 + $0xc64] sm:%s677]
                  %1121 = vst [vmem:[%s685 + $0x364] sm:%s677] %v1120
                  %v1122 = vld [vmem:[%s684 + $0xc68] sm:%s677]
                  %1123 = vst [vmem:[%s685 + $0x368] sm:%s677] %v1122
                  %v1124 = vld [vmem:[%s684 + $0xc6c] sm:%s677]
                  %1125 = vst [vmem:[%s685 + $0x36c] sm:%s677] %v1124
                  %v1126 = vld [vmem:[%s684 + $0xc70] sm:%s677]
                  %1127 = vst [vmem:[%s685 + $0x370] sm:%s677] %v1126
                  %v1128 = vld [vmem:[%s684 + $0xc74] sm:%s677]
                  %1129 = vst [vmem:[%s685 + $0x374] sm:%s677] %v1128
                  %v1130 = vld [vmem:[%s684 + $0xc78] sm:%s677]
                  %1131 = vst [vmem:[%s685 + $0x378] sm:%s677] %v1130
                  %v1132 = vld [vmem:[%s684 + $0xc7c] sm:%s677]
                  %1133 = vst [vmem:[%s685 + $0x37c] sm:%s677] %v1132
                  %v1134 = vld [vmem:[%s684 + $0xc80] sm:%s677]
                  %1135 = vst [vmem:[%s685 + $0x380] sm:%s677] %v1134
                  %v1136 = vld [vmem:[%s684 + $0xc84] sm:%s677]
                  %1137 = vst [vmem:[%s685 + $0x384] sm:%s677] %v1136
                  %v1138 = vld [vmem:[%s684 + $0xc88] sm:%s677]
                  %1139 = vst [vmem:[%s685 + $0x388] sm:%s677] %v1138
                  %v1140 = vld [vmem:[%s684 + $0xc8c] sm:%s677]
                  %1141 = vst [vmem:[%s685 + $0x38c] sm:%s677] %v1140
                  %v1142 = vld [vmem:[%s684 + $0xc90] sm:%s677]
                  %1143 = vst [vmem:[%s685 + $0x390] sm:%s677] %v1142
                  %v1144 = vld [vmem:[%s684 + $0xc94] sm:%s677]
                  %1145 = vst [vmem:[%s685 + $0x394] sm:%s677] %v1144
                  %v1146 = vld [vmem:[%s684 + $0xc98] sm:%s677]
                  %1147 = vst [vmem:[%s685 + $0x398] sm:%s677] %v1146
                  %v1148 = vld [vmem:[%s684 + $0xc9c] sm:%s677]
                  %1149 = vst [vmem:[%s685 + $0x39c] sm:%s677] %v1148
                  %v1150 = vld [vmem:[%s684 + $0xca0] sm:%s677]
                  %1151 = vst [vmem:[%s685 + $0x3a0] sm:%s677] %v1150
                  %v1152 = vld [vmem:[%s684 + $0xca4] sm:%s677]
                  %1153 = vst [vmem:[%s685 + $0x3a4] sm:%s677] %v1152
                  %v1154 = vld [vmem:[%s684 + $0xca8] sm:%s677]
                  %1155 = vst [vmem:[%s685 + $0x3a8] sm:%s677] %v1154
                  %v1156 = vld [vmem:[%s684 + $0xcac] sm:%s677]
                  %1157 = vst [vmem:[%s685 + $0x3ac] sm:%s677] %v1156
                  %v1158 = vld [vmem:[%s684 + $0xcb0] sm:%s677]
                  %1159 = vst [vmem:[%s685 + $0x3b0] sm:%s677] %v1158
                  %v1160 = vld [vmem:[%s684 + $0xcb4] sm:%s677]
                  %1161 = vst [vmem:[%s685 + $0x3b4] sm:%s677] %v1160
                  %v1162 = vld [vmem:[%s684 + $0xcb8] sm:%s677]
                  %1163 = vst [vmem:[%s685 + $0x3b8] sm:%s677] %v1162
                  %v1164 = vld [vmem:[%s684 + $0xcbc] sm:%s677]
                  %1165 = vst [vmem:[%s685 + $0x3bc] sm:%s677] %v1164
                  %v1166 = vld [vmem:[%s684 + $0xcc0] sm:%s677]
                  %1167 = vst [vmem:[%s685 + $0x3c0] sm:%s677] %v1166
                  %v1168 = vld [vmem:[%s684 + $0xcc4] sm:%s677]
                  %1169 = vst [vmem:[%s685 + $0x3c4] sm:%s677] %v1168
                  %v1170 = vld [vmem:[%s684 + $0xcc8] sm:%s677]
                  %1171 = vst [vmem:[%s685 + $0x3c8] sm:%s677] %v1170
                  %v1172 = vld [vmem:[%s684 + $0xccc] sm:%s677]
                  %1173 = vst [vmem:[%s685 + $0x3cc] sm:%s677] %v1172
                  %v1174 = vld [vmem:[%s684 + $0xcd0] sm:%s677]
                  %1175 = vst [vmem:[%s685 + $0x3d0] sm:%s677] %v1174
                  %v1176 = vld [vmem:[%s684 + $0xcd4] sm:%s677]
                  %1177 = vst [vmem:[%s685 + $0x3d4] sm:%s677] %v1176
                  %v1178 = vld [vmem:[%s684 + $0xcd8] sm:%s677]
                  %1179 = vst [vmem:[%s685 + $0x3d8] sm:%s677] %v1178
                  %v1180 = vld [vmem:[%s684 + $0xcdc] sm:%s677]
                  %1181 = vst [vmem:[%s685 + $0x3dc] sm:%s677] %v1180
                  %v1182 = vld [vmem:[%s684 + $0xce0] sm:%s677]
                  %1183 = vst [vmem:[%s685 + $0x3e0] sm:%s677] %v1182
                  %v1184 = vld [vmem:[%s684 + $0xce4] sm:%s677]
                  %1185 = vst [vmem:[%s685 + $0x3e4] sm:%s677] %v1184
                  %v1186 = vld [vmem:[%s684 + $0xce8] sm:%s677]
                  %1187 = vst [vmem:[%s685 + $0x3e8] sm:%s677] %v1186
                  %v1188 = vld [vmem:[%s684 + $0xcec] sm:%s677]
                  %1189 = vst [vmem:[%s685 + $0x3ec] sm:%s677] %v1188
                  %v1190 = vld [vmem:[%s684 + $0xcf0] sm:%s677]
                  %1191 = vst [vmem:[%s685 + $0x3f0] sm:%s677] %v1190
                  %v1192 = vld [vmem:[%s684 + $0xcf4] sm:%s677]
                  %1193 = vst [vmem:[%s685 + $0x3f4] sm:%s677] %v1192
                  %v1194 = vld [vmem:[%s684 + $0xcf8] sm:%s677]
                  %1195 = vst [vmem:[%s685 + $0x3f8] sm:%s677] %v1194
                  %v1196 = vld [vmem:[%s684 + $0xcfc] sm:%s677]
                  %1197 = vst [vmem:[%s685 + $0x3fc] sm:%s677] %v1196
                $region63: #{forward.4} parent=50 // loop_footer
                  %s683 = sadd.s32 1, %s679
                $region64: #{forward.4} parent=50 // loop_footer_branch
                  %678 = sbr.rel target = $region60
                $region65: #{forward.4} parent=50 // loop_exit
                  _
              $region51: #{forward.4} parent=35 // pred_fallthru
                _
            $region36: #{forward.4} parent=31 // pred_fallthru
              _
            // Predicated region
            $region37: #{forward.4} parent=31 // pred_check
              _
            $region38: #{forward.4} parent=31 // pred_check_branch
              %143 = sbr.rel (0) target = $region40
            $region39: #{forward.4} parent=31 // pred_region
              %s145 = ssub.s32 16, 1
              loop: start=0, step=1, limit=1
              $region41: #{forward.4} parent=39 // loop_pre_header
                _
              $region42: #{forward.4} parent=39 // loop_header
                %s147 = sphi 0, %s151
                %p148 = scmp.ge.s32.totalorder %s147, 1
                %s152 = sphi %s137, %s137
                %s153 = sphi %s134, %s134
              $region43: #{forward.4} parent=39 // loop_header_branch
                %150 = sbr.rel (%p148) target = $region47
              $region44: #{forward.4} parent=39 // loop_body
                %v154 = vld [vmem:[%s152] sm:%s145]
                %155 = vst [vmem:[%s153] sm:%s145] %v154
                %v156 = vld [vmem:[%s152 + $0x4] sm:%s145]
                %157 = vst [vmem:[%s153 + $0x4] sm:%s145] %v156
                %v158 = vld [vmem:[%s152 + $0x8] sm:%s145]
                %159 = vst [vmem:[%s153 + $0x8] sm:%s145] %v158
                %v160 = vld [vmem:[%s152 + $0xc] sm:%s145]
                %161 = vst [vmem:[%s153 + $0xc] sm:%s145] %v160
                %v162 = vld [vmem:[%s152 + $0x10] sm:%s145]
                %163 = vst [vmem:[%s153 + $0x10] sm:%s145] %v162
                %v164 = vld [vmem:[%s152 + $0x14] sm:%s145]
                %165 = vst [vmem:[%s153 + $0x14] sm:%s145] %v164
                %v166 = vld [vmem:[%s152 + $0x18] sm:%s145]
                %167 = vst [vmem:[%s153 + $0x18] sm:%s145] %v166
                %v168 = vld [vmem:[%s152 + $0x1c] sm:%s145]
                %169 = vst [vmem:[%s153 + $0x1c] sm:%s145] %v168
                %v170 = vld [vmem:[%s152 + $0x20] sm:%s145]
                %171 = vst [vmem:[%s153 + $0x20] sm:%s145] %v170
                %v172 = vld [vmem:[%s152 + $0x24] sm:%s145]
                %173 = vst [vmem:[%s153 + $0x24] sm:%s145] %v172
                %v174 = vld [vmem:[%s152 + $0x28] sm:%s145]
                %175 = vst [vmem:[%s153 + $0x28] sm:%s145] %v174
                %v176 = vld [vmem:[%s152 + $0x2c] sm:%s145]
                %177 = vst [vmem:[%s153 + $0x2c] sm:%s145] %v176
                %v178 = vld [vmem:[%s152 + $0x30] sm:%s145]
                %179 = vst [vmem:[%s153 + $0x30] sm:%s145] %v178
                %v180 = vld [vmem:[%s152 + $0x34] sm:%s145]
                %181 = vst [vmem:[%s153 + $0x34] sm:%s145] %v180
                %v182 = vld [vmem:[%s152 + $0x38] sm:%s145]
                %183 = vst [vmem:[%s153 + $0x38] sm:%s145] %v182
                %v184 = vld [vmem:[%s152 + $0x3c] sm:%s145]
                %185 = vst [vmem:[%s153 + $0x3c] sm:%s145] %v184
                %v186 = vld [vmem:[%s152 + $0x40] sm:%s145]
                %187 = vst [vmem:[%s153 + $0x40] sm:%s145] %v186
                %v188 = vld [vmem:[%s152 + $0x44] sm:%s145]
                %189 = vst [vmem:[%s153 + $0x44] sm:%s145] %v188
                %v190 = vld [vmem:[%s152 + $0x48] sm:%s145]
                %191 = vst [vmem:[%s153 + $0x48] sm:%s145] %v190
                %v192 = vld [vmem:[%s152 + $0x4c] sm:%s145]
                %193 = vst [vmem:[%s153 + $0x4c] sm:%s145] %v192
                %v194 = vld [vmem:[%s152 + $0x50] sm:%s145]
                %195 = vst [vmem:[%s153 + $0x50] sm:%s145] %v194
                %v196 = vld [vmem:[%s152 + $0x54] sm:%s145]
                %197 = vst [vmem:[%s153 + $0x54] sm:%s145] %v196
                %v198 = vld [vmem:[%s152 + $0x58] sm:%s145]
                %199 = vst [vmem:[%s153 + $0x58] sm:%s145] %v198
                %v200 = vld [vmem:[%s152 + $0x5c] sm:%s145]
                %201 = vst [vmem:[%s153 + $0x5c] sm:%s145] %v200
                %v202 = vld [vmem:[%s152 + $0x60] sm:%s145]
                %203 = vst [vmem:[%s153 + $0x60] sm:%s145] %v202
                %v204 = vld [vmem:[%s152 + $0x64] sm:%s145]
                %205 = vst [vmem:[%s153 + $0x64] sm:%s145] %v204
                %v206 = vld [vmem:[%s152 + $0x68] sm:%s145]
                %207 = vst [vmem:[%s153 + $0x68] sm:%s145] %v206
                %v208 = vld [vmem:[%s152 + $0x6c] sm:%s145]
                %209 = vst [vmem:[%s153 + $0x6c] sm:%s145] %v208
                %v210 = vld [vmem:[%s152 + $0x70] sm:%s145]
                %211 = vst [vmem:[%s153 + $0x70] sm:%s145] %v210
                %v212 = vld [vmem:[%s152 + $0x74] sm:%s145]
                %213 = vst [vmem:[%s153 + $0x74] sm:%s145] %v212
                %v214 = vld [vmem:[%s152 + $0x78] sm:%s145]
                %215 = vst [vmem:[%s153 + $0x78] sm:%s145] %v214
                %v216 = vld [vmem:[%s152 + $0x7c] sm:%s145]
                %217 = vst [vmem:[%s153 + $0x7c] sm:%s145] %v216
                %v218 = vld [vmem:[%s152 + $0x80] sm:%s145]
                %219 = vst [vmem:[%s153 + $0x80] sm:%s145] %v218
                %v220 = vld [vmem:[%s152 + $0x84] sm:%s145]
                %221 = vst [vmem:[%s153 + $0x84] sm:%s145] %v220
                %v222 = vld [vmem:[%s152 + $0x88] sm:%s145]
                %223 = vst [vmem:[%s153 + $0x88] sm:%s145] %v222
                %v224 = vld [vmem:[%s152 + $0x8c] sm:%s145]
                %225 = vst [vmem:[%s153 + $0x8c] sm:%s145] %v224
                %v226 = vld [vmem:[%s152 + $0x90] sm:%s145]
                %227 = vst [vmem:[%s153 + $0x90] sm:%s145] %v226
                %v228 = vld [vmem:[%s152 + $0x94] sm:%s145]
                %229 = vst [vmem:[%s153 + $0x94] sm:%s145] %v228
                %v230 = vld [vmem:[%s152 + $0x98] sm:%s145]
                %231 = vst [vmem:[%s153 + $0x98] sm:%s145] %v230
                %v232 = vld [vmem:[%s152 + $0x9c] sm:%s145]
                %233 = vst [vmem:[%s153 + $0x9c] sm:%s145] %v232
                %v234 = vld [vmem:[%s152 + $0xa0] sm:%s145]
                %235 = vst [vmem:[%s153 + $0xa0] sm:%s145] %v234
                %v236 = vld [vmem:[%s152 + $0xa4] sm:%s145]
                %237 = vst [vmem:[%s153 + $0xa4] sm:%s145] %v236
                %v238 = vld [vmem:[%s152 + $0xa8] sm:%s145]
                %239 = vst [vmem:[%s153 + $0xa8] sm:%s145] %v238
                %v240 = vld [vmem:[%s152 + $0xac] sm:%s145]
                %241 = vst [vmem:[%s153 + $0xac] sm:%s145] %v240
                %v242 = vld [vmem:[%s152 + $0xb0] sm:%s145]
                %243 = vst [vmem:[%s153 + $0xb0] sm:%s145] %v242
                %v244 = vld [vmem:[%s152 + $0xb4] sm:%s145]
                %245 = vst [vmem:[%s153 + $0xb4] sm:%s145] %v244
                %v246 = vld [vmem:[%s152 + $0xb8] sm:%s145]
                %247 = vst [vmem:[%s153 + $0xb8] sm:%s145] %v246
                %v248 = vld [vmem:[%s152 + $0xbc] sm:%s145]
                %249 = vst [vmem:[%s153 + $0xbc] sm:%s145] %v248
                %v250 = vld [vmem:[%s152 + $0xc0] sm:%s145]
                %251 = vst [vmem:[%s153 + $0xc0] sm:%s145] %v250
                %v252 = vld [vmem:[%s152 + $0xc4] sm:%s145]
                %253 = vst [vmem:[%s153 + $0xc4] sm:%s145] %v252
                %v254 = vld [vmem:[%s152 + $0xc8] sm:%s145]
                %255 = vst [vmem:[%s153 + $0xc8] sm:%s145] %v254
                %v256 = vld [vmem:[%s152 + $0xcc] sm:%s145]
                %257 = vst [vmem:[%s153 + $0xcc] sm:%s145] %v256
                %v258 = vld [vmem:[%s152 + $0xd0] sm:%s145]
                %259 = vst [vmem:[%s153 + $0xd0] sm:%s145] %v258
                %v260 = vld [vmem:[%s152 + $0xd4] sm:%s145]
                %261 = vst [vmem:[%s153 + $0xd4] sm:%s145] %v260
                %v262 = vld [vmem:[%s152 + $0xd8] sm:%s145]
                %263 = vst [vmem:[%s153 + $0xd8] sm:%s145] %v262
                %v264 = vld [vmem:[%s152 + $0xdc] sm:%s145]
                %265 = vst [vmem:[%s153 + $0xdc] sm:%s145] %v264
                %v266 = vld [vmem:[%s152 + $0xe0] sm:%s145]
                %267 = vst [vmem:[%s153 + $0xe0] sm:%s145] %v266
                %v268 = vld [vmem:[%s152 + $0xe4] sm:%s145]
                %269 = vst [vmem:[%s153 + $0xe4] sm:%s145] %v268
                %v270 = vld [vmem:[%s152 + $0xe8] sm:%s145]
                %271 = vst [vmem:[%s153 + $0xe8] sm:%s145] %v270
                %v272 = vld [vmem:[%s152 + $0xec] sm:%s145]
                %273 = vst [vmem:[%s153 + $0xec] sm:%s145] %v272
                %v274 = vld [vmem:[%s152 + $0xf0] sm:%s145]
                %275 = vst [vmem:[%s153 + $0xf0] sm:%s145] %v274
                %v276 = vld [vmem:[%s152 + $0xf4] sm:%s145]
                %277 = vst [vmem:[%s153 + $0xf4] sm:%s145] %v276
                %v278 = vld [vmem:[%s152 + $0xf8] sm:%s145]
                %279 = vst [vmem:[%s153 + $0xf8] sm:%s145] %v278
                %v280 = vld [vmem:[%s152 + $0xfc] sm:%s145]
                %281 = vst [vmem:[%s153 + $0xfc] sm:%s145] %v280
                %v282 = vld [vmem:[%s152 + $0x400] sm:%s145]
                %283 = vst [vmem:[%s153 + $0x100] sm:%s145] %v282
                %v284 = vld [vmem:[%s152 + $0x404] sm:%s145]
                %285 = vst [vmem:[%s153 + $0x104] sm:%s145] %v284
                %v286 = vld [vmem:[%s152 + $0x408] sm:%s145]
                %287 = vst [vmem:[%s153 + $0x108] sm:%s145] %v286
                %v288 = vld [vmem:[%s152 + $0x40c] sm:%s145]
                %289 = vst [vmem:[%s153 + $0x10c] sm:%s145] %v288
                %v290 = vld [vmem:[%s152 + $0x410] sm:%s145]
                %291 = vst [vmem:[%s153 + $0x110] sm:%s145] %v290
                %v292 = vld [vmem:[%s152 + $0x414] sm:%s145]
                %293 = vst [vmem:[%s153 + $0x114] sm:%s145] %v292
                %v294 = vld [vmem:[%s152 + $0x418] sm:%s145]
                %295 = vst [vmem:[%s153 + $0x118] sm:%s145] %v294
                %v296 = vld [vmem:[%s152 + $0x41c] sm:%s145]
                %297 = vst [vmem:[%s153 + $0x11c] sm:%s145] %v296
                %v298 = vld [vmem:[%s152 + $0x420] sm:%s145]
                %299 = vst [vmem:[%s153 + $0x120] sm:%s145] %v298
                %v300 = vld [vmem:[%s152 + $0x424] sm:%s145]
                %301 = vst [vmem:[%s153 + $0x124] sm:%s145] %v300
                %v302 = vld [vmem:[%s152 + $0x428] sm:%s145]
                %303 = vst [vmem:[%s153 + $0x128] sm:%s145] %v302
                %v304 = vld [vmem:[%s152 + $0x42c] sm:%s145]
                %305 = vst [vmem:[%s153 + $0x12c] sm:%s145] %v304
                %v306 = vld [vmem:[%s152 + $0x430] sm:%s145]
                %307 = vst [vmem:[%s153 + $0x130] sm:%s145] %v306
                %v308 = vld [vmem:[%s152 + $0x434] sm:%s145]
                %309 = vst [vmem:[%s153 + $0x134] sm:%s145] %v308
                %v310 = vld [vmem:[%s152 + $0x438] sm:%s145]
                %311 = vst [vmem:[%s153 + $0x138] sm:%s145] %v310
                %v312 = vld [vmem:[%s152 + $0x43c] sm:%s145]
                %313 = vst [vmem:[%s153 + $0x13c] sm:%s145] %v312
                %v314 = vld [vmem:[%s152 + $0x440] sm:%s145]
                %315 = vst [vmem:[%s153 + $0x140] sm:%s145] %v314
                %v316 = vld [vmem:[%s152 + $0x444] sm:%s145]
                %317 = vst [vmem:[%s153 + $0x144] sm:%s145] %v316
                %v318 = vld [vmem:[%s152 + $0x448] sm:%s145]
                %319 = vst [vmem:[%s153 + $0x148] sm:%s145] %v318
                %v320 = vld [vmem:[%s152 + $0x44c] sm:%s145]
                %321 = vst [vmem:[%s153 + $0x14c] sm:%s145] %v320
                %v322 = vld [vmem:[%s152 + $0x450] sm:%s145]
                %323 = vst [vmem:[%s153 + $0x150] sm:%s145] %v322
                %v324 = vld [vmem:[%s152 + $0x454] sm:%s145]
                %325 = vst [vmem:[%s153 + $0x154] sm:%s145] %v324
                %v326 = vld [vmem:[%s152 + $0x458] sm:%s145]
                %327 = vst [vmem:[%s153 + $0x158] sm:%s145] %v326
                %v328 = vld [vmem:[%s152 + $0x45c] sm:%s145]
                %329 = vst [vmem:[%s153 + $0x15c] sm:%s145] %v328
                %v330 = vld [vmem:[%s152 + $0x460] sm:%s145]
                %331 = vst [vmem:[%s153 + $0x160] sm:%s145] %v330
                %v332 = vld [vmem:[%s152 + $0x464] sm:%s145]
                %333 = vst [vmem:[%s153 + $0x164] sm:%s145] %v332
                %v334 = vld [vmem:[%s152 + $0x468] sm:%s145]
                %335 = vst [vmem:[%s153 + $0x168] sm:%s145] %v334
                %v336 = vld [vmem:[%s152 + $0x46c] sm:%s145]
                %337 = vst [vmem:[%s153 + $0x16c] sm:%s145] %v336
                %v338 = vld [vmem:[%s152 + $0x470] sm:%s145]
                %339 = vst [vmem:[%s153 + $0x170] sm:%s145] %v338
                %v340 = vld [vmem:[%s152 + $0x474] sm:%s145]
                %341 = vst [vmem:[%s153 + $0x174] sm:%s145] %v340
                %v342 = vld [vmem:[%s152 + $0x478] sm:%s145]
                %343 = vst [vmem:[%s153 + $0x178] sm:%s145] %v342
                %v344 = vld [vmem:[%s152 + $0x47c] sm:%s145]
                %345 = vst [vmem:[%s153 + $0x17c] sm:%s145] %v344
                %v346 = vld [vmem:[%s152 + $0x480] sm:%s145]
                %347 = vst [vmem:[%s153 + $0x180] sm:%s145] %v346
                %v348 = vld [vmem:[%s152 + $0x484] sm:%s145]
                %349 = vst [vmem:[%s153 + $0x184] sm:%s145] %v348
                %v350 = vld [vmem:[%s152 + $0x488] sm:%s145]
                %351 = vst [vmem:[%s153 + $0x188] sm:%s145] %v350
                %v352 = vld [vmem:[%s152 + $0x48c] sm:%s145]
                %353 = vst [vmem:[%s153 + $0x18c] sm:%s145] %v352
                %v354 = vld [vmem:[%s152 + $0x490] sm:%s145]
                %355 = vst [vmem:[%s153 + $0x190] sm:%s145] %v354
                %v356 = vld [vmem:[%s152 + $0x494] sm:%s145]
                %357 = vst [vmem:[%s153 + $0x194] sm:%s145] %v356
                %v358 = vld [vmem:[%s152 + $0x498] sm:%s145]
                %359 = vst [vmem:[%s153 + $0x198] sm:%s145] %v358
                %v360 = vld [vmem:[%s152 + $0x49c] sm:%s145]
                %361 = vst [vmem:[%s153 + $0x19c] sm:%s145] %v360
                %v362 = vld [vmem:[%s152 + $0x4a0] sm:%s145]
                %363 = vst [vmem:[%s153 + $0x1a0] sm:%s145] %v362
                %v364 = vld [vmem:[%s152 + $0x4a4] sm:%s145]
                %365 = vst [vmem:[%s153 + $0x1a4] sm:%s145] %v364
                %v366 = vld [vmem:[%s152 + $0x4a8] sm:%s145]
                %367 = vst [vmem:[%s153 + $0x1a8] sm:%s145] %v366
                %v368 = vld [vmem:[%s152 + $0x4ac] sm:%s145]
                %369 = vst [vmem:[%s153 + $0x1ac] sm:%s145] %v368
                %v370 = vld [vmem:[%s152 + $0x4b0] sm:%s145]
                %371 = vst [vmem:[%s153 + $0x1b0] sm:%s145] %v370
                %v372 = vld [vmem:[%s152 + $0x4b4] sm:%s145]
                %373 = vst [vmem:[%s153 + $0x1b4] sm:%s145] %v372
                %v374 = vld [vmem:[%s152 + $0x4b8] sm:%s145]
                %375 = vst [vmem:[%s153 + $0x1b8] sm:%s145] %v374
                %v376 = vld [vmem:[%s152 + $0x4bc] sm:%s145]
                %377 = vst [vmem:[%s153 + $0x1bc] sm:%s145] %v376
                %v378 = vld [vmem:[%s152 + $0x4c0] sm:%s145]
                %379 = vst [vmem:[%s153 + $0x1c0] sm:%s145] %v378
                %v380 = vld [vmem:[%s152 + $0x4c4] sm:%s145]
                %381 = vst [vmem:[%s153 + $0x1c4] sm:%s145] %v380
                %v382 = vld [vmem:[%s152 + $0x4c8] sm:%s145]
                %383 = vst [vmem:[%s153 + $0x1c8] sm:%s145] %v382
                %v384 = vld [vmem:[%s152 + $0x4cc] sm:%s145]
                %385 = vst [vmem:[%s153 + $0x1cc] sm:%s145] %v384
                %v386 = vld [vmem:[%s152 + $0x4d0] sm:%s145]
                %387 = vst [vmem:[%s153 + $0x1d0] sm:%s145] %v386
                %v388 = vld [vmem:[%s152 + $0x4d4] sm:%s145]
                %389 = vst [vmem:[%s153 + $0x1d4] sm:%s145] %v388
                %v390 = vld [vmem:[%s152 + $0x4d8] sm:%s145]
                %391 = vst [vmem:[%s153 + $0x1d8] sm:%s145] %v390
                %v392 = vld [vmem:[%s152 + $0x4dc] sm:%s145]
                %393 = vst [vmem:[%s153 + $0x1dc] sm:%s145] %v392
                %v394 = vld [vmem:[%s152 + $0x4e0] sm:%s145]
                %395 = vst [vmem:[%s153 + $0x1e0] sm:%s145] %v394
                %v396 = vld [vmem:[%s152 + $0x4e4] sm:%s145]
                %397 = vst [vmem:[%s153 + $0x1e4] sm:%s145] %v396
                %v398 = vld [vmem:[%s152 + $0x4e8] sm:%s145]
                %399 = vst [vmem:[%s153 + $0x1e8] sm:%s145] %v398
                %v400 = vld [vmem:[%s152 + $0x4ec] sm:%s145]
                %401 = vst [vmem:[%s153 + $0x1ec] sm:%s145] %v400
                %v402 = vld [vmem:[%s152 + $0x4f0] sm:%s145]
                %403 = vst [vmem:[%s153 + $0x1f0] sm:%s145] %v402
                %v404 = vld [vmem:[%s152 + $0x4f4] sm:%s145]
                %405 = vst [vmem:[%s153 + $0x1f4] sm:%s145] %v404
                %v406 = vld [vmem:[%s152 + $0x4f8] sm:%s145]
                %407 = vst [vmem:[%s153 + $0x1f8] sm:%s145] %v406
                %v408 = vld [vmem:[%s152 + $0x4fc] sm:%s145]
                %409 = vst [vmem:[%s153 + $0x1fc] sm:%s145] %v408
                %v410 = vld [vmem:[%s152 + $0x800] sm:%s145]
                %411 = vst [vmem:[%s153 + $0x200] sm:%s145] %v410
                %v412 = vld [vmem:[%s152 + $0x804] sm:%s145]
                %413 = vst [vmem:[%s153 + $0x204] sm:%s145] %v412
                %v414 = vld [vmem:[%s152 + $0x808] sm:%s145]
                %415 = vst [vmem:[%s153 + $0x208] sm:%s145] %v414
                %v416 = vld [vmem:[%s152 + $0x80c] sm:%s145]
                %417 = vst [vmem:[%s153 + $0x20c] sm:%s145] %v416
                %v418 = vld [vmem:[%s152 + $0x810] sm:%s145]
                %419 = vst [vmem:[%s153 + $0x210] sm:%s145] %v418
                %v420 = vld [vmem:[%s152 + $0x814] sm:%s145]
                %421 = vst [vmem:[%s153 + $0x214] sm:%s145] %v420
                %v422 = vld [vmem:[%s152 + $0x818] sm:%s145]
                %423 = vst [vmem:[%s153 + $0x218] sm:%s145] %v422
                %v424 = vld [vmem:[%s152 + $0x81c] sm:%s145]
                %425 = vst [vmem:[%s153 + $0x21c] sm:%s145] %v424
                %v426 = vld [vmem:[%s152 + $0x820] sm:%s145]
                %427 = vst [vmem:[%s153 + $0x220] sm:%s145] %v426
                %v428 = vld [vmem:[%s152 + $0x824] sm:%s145]
                %429 = vst [vmem:[%s153 + $0x224] sm:%s145] %v428
                %v430 = vld [vmem:[%s152 + $0x828] sm:%s145]
                %431 = vst [vmem:[%s153 + $0x228] sm:%s145] %v430
                %v432 = vld [vmem:[%s152 + $0x82c] sm:%s145]
                %433 = vst [vmem:[%s153 + $0x22c] sm:%s145] %v432
                %v434 = vld [vmem:[%s152 + $0x830] sm:%s145]
                %435 = vst [vmem:[%s153 + $0x230] sm:%s145] %v434
                %v436 = vld [vmem:[%s152 + $0x834] sm:%s145]
                %437 = vst [vmem:[%s153 + $0x234] sm:%s145] %v436
                %v438 = vld [vmem:[%s152 + $0x838] sm:%s145]
                %439 = vst [vmem:[%s153 + $0x238] sm:%s145] %v438
                %v440 = vld [vmem:[%s152 + $0x83c] sm:%s145]
                %441 = vst [vmem:[%s153 + $0x23c] sm:%s145] %v440
                %v442 = vld [vmem:[%s152 + $0x840] sm:%s145]
                %443 = vst [vmem:[%s153 + $0x240] sm:%s145] %v442
                %v444 = vld [vmem:[%s152 + $0x844] sm:%s145]
                %445 = vst [vmem:[%s153 + $0x244] sm:%s145] %v444
                %v446 = vld [vmem:[%s152 + $0x848] sm:%s145]
                %447 = vst [vmem:[%s153 + $0x248] sm:%s145] %v446
                %v448 = vld [vmem:[%s152 + $0x84c] sm:%s145]
                %449 = vst [vmem:[%s153 + $0x24c] sm:%s145] %v448
                %v450 = vld [vmem:[%s152 + $0x850] sm:%s145]
                %451 = vst [vmem:[%s153 + $0x250] sm:%s145] %v450
                %v452 = vld [vmem:[%s152 + $0x854] sm:%s145]
                %453 = vst [vmem:[%s153 + $0x254] sm:%s145] %v452
                %v454 = vld [vmem:[%s152 + $0x858] sm:%s145]
                %455 = vst [vmem:[%s153 + $0x258] sm:%s145] %v454
                %v456 = vld [vmem:[%s152 + $0x85c] sm:%s145]
                %457 = vst [vmem:[%s153 + $0x25c] sm:%s145] %v456
                %v458 = vld [vmem:[%s152 + $0x860] sm:%s145]
                %459 = vst [vmem:[%s153 + $0x260] sm:%s145] %v458
                %v460 = vld [vmem:[%s152 + $0x864] sm:%s145]
                %461 = vst [vmem:[%s153 + $0x264] sm:%s145] %v460
                %v462 = vld [vmem:[%s152 + $0x868] sm:%s145]
                %463 = vst [vmem:[%s153 + $0x268] sm:%s145] %v462
                %v464 = vld [vmem:[%s152 + $0x86c] sm:%s145]
                %465 = vst [vmem:[%s153 + $0x26c] sm:%s145] %v464
                %v466 = vld [vmem:[%s152 + $0x870] sm:%s145]
                %467 = vst [vmem:[%s153 + $0x270] sm:%s145] %v466
                %v468 = vld [vmem:[%s152 + $0x874] sm:%s145]
                %469 = vst [vmem:[%s153 + $0x274] sm:%s145] %v468
                %v470 = vld [vmem:[%s152 + $0x878] sm:%s145]
                %471 = vst [vmem:[%s153 + $0x278] sm:%s145] %v470
                %v472 = vld [vmem:[%s152 + $0x87c] sm:%s145]
                %473 = vst [vmem:[%s153 + $0x27c] sm:%s145] %v472
                %v474 = vld [vmem:[%s152 + $0x880] sm:%s145]
                %475 = vst [vmem:[%s153 + $0x280] sm:%s145] %v474
                %v476 = vld [vmem:[%s152 + $0x884] sm:%s145]
                %477 = vst [vmem:[%s153 + $0x284] sm:%s145] %v476
                %v478 = vld [vmem:[%s152 + $0x888] sm:%s145]
                %479 = vst [vmem:[%s153 + $0x288] sm:%s145] %v478
                %v480 = vld [vmem:[%s152 + $0x88c] sm:%s145]
                %481 = vst [vmem:[%s153 + $0x28c] sm:%s145] %v480
                %v482 = vld [vmem:[%s152 + $0x890] sm:%s145]
                %483 = vst [vmem:[%s153 + $0x290] sm:%s145] %v482
                %v484 = vld [vmem:[%s152 + $0x894] sm:%s145]
                %485 = vst [vmem:[%s153 + $0x294] sm:%s145] %v484
                %v486 = vld [vmem:[%s152 + $0x898] sm:%s145]
                %487 = vst [vmem:[%s153 + $0x298] sm:%s145] %v486
                %v488 = vld [vmem:[%s152 + $0x89c] sm:%s145]
                %489 = vst [vmem:[%s153 + $0x29c] sm:%s145] %v488
                %v490 = vld [vmem:[%s152 + $0x8a0] sm:%s145]
                %491 = vst [vmem:[%s153 + $0x2a0] sm:%s145] %v490
                %v492 = vld [vmem:[%s152 + $0x8a4] sm:%s145]
                %493 = vst [vmem:[%s153 + $0x2a4] sm:%s145] %v492
                %v494 = vld [vmem:[%s152 + $0x8a8] sm:%s145]
                %495 = vst [vmem:[%s153 + $0x2a8] sm:%s145] %v494
                %v496 = vld [vmem:[%s152 + $0x8ac] sm:%s145]
                %497 = vst [vmem:[%s153 + $0x2ac] sm:%s145] %v496
                %v498 = vld [vmem:[%s152 + $0x8b0] sm:%s145]
                %499 = vst [vmem:[%s153 + $0x2b0] sm:%s145] %v498
                %v500 = vld [vmem:[%s152 + $0x8b4] sm:%s145]
                %501 = vst [vmem:[%s153 + $0x2b4] sm:%s145] %v500
                %v502 = vld [vmem:[%s152 + $0x8b8] sm:%s145]
                %503 = vst [vmem:[%s153 + $0x2b8] sm:%s145] %v502
                %v504 = vld [vmem:[%s152 + $0x8bc] sm:%s145]
                %505 = vst [vmem:[%s153 + $0x2bc] sm:%s145] %v504
                %v506 = vld [vmem:[%s152 + $0x8c0] sm:%s145]
                %507 = vst [vmem:[%s153 + $0x2c0] sm:%s145] %v506
                %v508 = vld [vmem:[%s152 + $0x8c4] sm:%s145]
                %509 = vst [vmem:[%s153 + $0x2c4] sm:%s145] %v508
                %v510 = vld [vmem:[%s152 + $0x8c8] sm:%s145]
                %511 = vst [vmem:[%s153 + $0x2c8] sm:%s145] %v510
                %v512 = vld [vmem:[%s152 + $0x8cc] sm:%s145]
                %513 = vst [vmem:[%s153 + $0x2cc] sm:%s145] %v512
                %v514 = vld [vmem:[%s152 + $0x8d0] sm:%s145]
                %515 = vst [vmem:[%s153 + $0x2d0] sm:%s145] %v514
                %v516 = vld [vmem:[%s152 + $0x8d4] sm:%s145]
                %517 = vst [vmem:[%s153 + $0x2d4] sm:%s145] %v516
                %v518 = vld [vmem:[%s152 + $0x8d8] sm:%s145]
                %519 = vst [vmem:[%s153 + $0x2d8] sm:%s145] %v518
                %v520 = vld [vmem:[%s152 + $0x8dc] sm:%s145]
                %521 = vst [vmem:[%s153 + $0x2dc] sm:%s145] %v520
                %v522 = vld [vmem:[%s152 + $0x8e0] sm:%s145]
                %523 = vst [vmem:[%s153 + $0x2e0] sm:%s145] %v522
                %v524 = vld [vmem:[%s152 + $0x8e4] sm:%s145]
                %525 = vst [vmem:[%s153 + $0x2e4] sm:%s145] %v524
                %v526 = vld [vmem:[%s152 + $0x8e8] sm:%s145]
                %527 = vst [vmem:[%s153 + $0x2e8] sm:%s145] %v526
                %v528 = vld [vmem:[%s152 + $0x8ec] sm:%s145]
                %529 = vst [vmem:[%s153 + $0x2ec] sm:%s145] %v528
                %v530 = vld [vmem:[%s152 + $0x8f0] sm:%s145]
                %531 = vst [vmem:[%s153 + $0x2f0] sm:%s145] %v530
                %v532 = vld [vmem:[%s152 + $0x8f4] sm:%s145]
                %533 = vst [vmem:[%s153 + $0x2f4] sm:%s145] %v532
                %v534 = vld [vmem:[%s152 + $0x8f8] sm:%s145]
                %535 = vst [vmem:[%s153 + $0x2f8] sm:%s145] %v534
                %v536 = vld [vmem:[%s152 + $0x8fc] sm:%s145]
                %537 = vst [vmem:[%s153 + $0x2fc] sm:%s145] %v536
                %v538 = vld [vmem:[%s152 + $0xc00] sm:%s145]
                %539 = vst [vmem:[%s153 + $0x300] sm:%s145] %v538
                %v540 = vld [vmem:[%s152 + $0xc04] sm:%s145]
                %541 = vst [vmem:[%s153 + $0x304] sm:%s145] %v540
                %v542 = vld [vmem:[%s152 + $0xc08] sm:%s145]
                %543 = vst [vmem:[%s153 + $0x308] sm:%s145] %v542
                %v544 = vld [vmem:[%s152 + $0xc0c] sm:%s145]
                %545 = vst [vmem:[%s153 + $0x30c] sm:%s145] %v544
                %v546 = vld [vmem:[%s152 + $0xc10] sm:%s145]
                %547 = vst [vmem:[%s153 + $0x310] sm:%s145] %v546
                %v548 = vld [vmem:[%s152 + $0xc14] sm:%s145]
                %549 = vst [vmem:[%s153 + $0x314] sm:%s145] %v548
                %v550 = vld [vmem:[%s152 + $0xc18] sm:%s145]
                %551 = vst [vmem:[%s153 + $0x318] sm:%s145] %v550
                %v552 = vld [vmem:[%s152 + $0xc1c] sm:%s145]
                %553 = vst [vmem:[%s153 + $0x31c] sm:%s145] %v552
                %v554 = vld [vmem:[%s152 + $0xc20] sm:%s145]
                %555 = vst [vmem:[%s153 + $0x320] sm:%s145] %v554
                %v556 = vld [vmem:[%s152 + $0xc24] sm:%s145]
                %557 = vst [vmem:[%s153 + $0x324] sm:%s145] %v556
                %v558 = vld [vmem:[%s152 + $0xc28] sm:%s145]
                %559 = vst [vmem:[%s153 + $0x328] sm:%s145] %v558
                %v560 = vld [vmem:[%s152 + $0xc2c] sm:%s145]
                %561 = vst [vmem:[%s153 + $0x32c] sm:%s145] %v560
                %v562 = vld [vmem:[%s152 + $0xc30] sm:%s145]
                %563 = vst [vmem:[%s153 + $0x330] sm:%s145] %v562
                %v564 = vld [vmem:[%s152 + $0xc34] sm:%s145]
                %565 = vst [vmem:[%s153 + $0x334] sm:%s145] %v564
                %v566 = vld [vmem:[%s152 + $0xc38] sm:%s145]
                %567 = vst [vmem:[%s153 + $0x338] sm:%s145] %v566
                %v568 = vld [vmem:[%s152 + $0xc3c] sm:%s145]
                %569 = vst [vmem:[%s153 + $0x33c] sm:%s145] %v568
                %v570 = vld [vmem:[%s152 + $0xc40] sm:%s145]
                %571 = vst [vmem:[%s153 + $0x340] sm:%s145] %v570
                %v572 = vld [vmem:[%s152 + $0xc44] sm:%s145]
                %573 = vst [vmem:[%s153 + $0x344] sm:%s145] %v572
                %v574 = vld [vmem:[%s152 + $0xc48] sm:%s145]
                %575 = vst [vmem:[%s153 + $0x348] sm:%s145] %v574
                %v576 = vld [vmem:[%s152 + $0xc4c] sm:%s145]
                %577 = vst [vmem:[%s153 + $0x34c] sm:%s145] %v576
                %v578 = vld [vmem:[%s152 + $0xc50] sm:%s145]
                %579 = vst [vmem:[%s153 + $0x350] sm:%s145] %v578
                %v580 = vld [vmem:[%s152 + $0xc54] sm:%s145]
                %581 = vst [vmem:[%s153 + $0x354] sm:%s145] %v580
                %v582 = vld [vmem:[%s152 + $0xc58] sm:%s145]
                %583 = vst [vmem:[%s153 + $0x358] sm:%s145] %v582
                %v584 = vld [vmem:[%s152 + $0xc5c] sm:%s145]
                %585 = vst [vmem:[%s153 + $0x35c] sm:%s145] %v584
                %v586 = vld [vmem:[%s152 + $0xc60] sm:%s145]
                %587 = vst [vmem:[%s153 + $0x360] sm:%s145] %v586
                %v588 = vld [vmem:[%s152 + $0xc64] sm:%s145]
                %589 = vst [vmem:[%s153 + $0x364] sm:%s145] %v588
                %v590 = vld [vmem:[%s152 + $0xc68] sm:%s145]
                %591 = vst [vmem:[%s153 + $0x368] sm:%s145] %v590
                %v592 = vld [vmem:[%s152 + $0xc6c] sm:%s145]
                %593 = vst [vmem:[%s153 + $0x36c] sm:%s145] %v592
                %v594 = vld [vmem:[%s152 + $0xc70] sm:%s145]
                %595 = vst [vmem:[%s153 + $0x370] sm:%s145] %v594
                %v596 = vld [vmem:[%s152 + $0xc74] sm:%s145]
                %597 = vst [vmem:[%s153 + $0x374] sm:%s145] %v596
                %v598 = vld [vmem:[%s152 + $0xc78] sm:%s145]
                %599 = vst [vmem:[%s153 + $0x378] sm:%s145] %v598
                %v600 = vld [vmem:[%s152 + $0xc7c] sm:%s145]
                %601 = vst [vmem:[%s153 + $0x37c] sm:%s145] %v600
                %v602 = vld [vmem:[%s152 + $0xc80] sm:%s145]
                %603 = vst [vmem:[%s153 + $0x380] sm:%s145] %v602
                %v604 = vld [vmem:[%s152 + $0xc84] sm:%s145]
                %605 = vst [vmem:[%s153 + $0x384] sm:%s145] %v604
                %v606 = vld [vmem:[%s152 + $0xc88] sm:%s145]
                %607 = vst [vmem:[%s153 + $0x388] sm:%s145] %v606
                %v608 = vld [vmem:[%s152 + $0xc8c] sm:%s145]
                %609 = vst [vmem:[%s153 + $0x38c] sm:%s145] %v608
                %v610 = vld [vmem:[%s152 + $0xc90] sm:%s145]
                %611 = vst [vmem:[%s153 + $0x390] sm:%s145] %v610
                %v612 = vld [vmem:[%s152 + $0xc94] sm:%s145]
                %613 = vst [vmem:[%s153 + $0x394] sm:%s145] %v612
                %v614 = vld [vmem:[%s152 + $0xc98] sm:%s145]
                %615 = vst [vmem:[%s153 + $0x398] sm:%s145] %v614
                %v616 = vld [vmem:[%s152 + $0xc9c] sm:%s145]
                %617 = vst [vmem:[%s153 + $0x39c] sm:%s145] %v616
                %v618 = vld [vmem:[%s152 + $0xca0] sm:%s145]
                %619 = vst [vmem:[%s153 + $0x3a0] sm:%s145] %v618
                %v620 = vld [vmem:[%s152 + $0xca4] sm:%s145]
                %621 = vst [vmem:[%s153 + $0x3a4] sm:%s145] %v620
                %v622 = vld [vmem:[%s152 + $0xca8] sm:%s145]
                %623 = vst [vmem:[%s153 + $0x3a8] sm:%s145] %v622
                %v624 = vld [vmem:[%s152 + $0xcac] sm:%s145]
                %625 = vst [vmem:[%s153 + $0x3ac] sm:%s145] %v624
                %v626 = vld [vmem:[%s152 + $0xcb0] sm:%s145]
                %627 = vst [vmem:[%s153 + $0x3b0] sm:%s145] %v626
                %v628 = vld [vmem:[%s152 + $0xcb4] sm:%s145]
                %629 = vst [vmem:[%s153 + $0x3b4] sm:%s145] %v628
                %v630 = vld [vmem:[%s152 + $0xcb8] sm:%s145]
                %631 = vst [vmem:[%s153 + $0x3b8] sm:%s145] %v630
                %v632 = vld [vmem:[%s152 + $0xcbc] sm:%s145]
                %633 = vst [vmem:[%s153 + $0x3bc] sm:%s145] %v632
                %v634 = vld [vmem:[%s152 + $0xcc0] sm:%s145]
                %635 = vst [vmem:[%s153 + $0x3c0] sm:%s145] %v634
                %v636 = vld [vmem:[%s152 + $0xcc4] sm:%s145]
                %637 = vst [vmem:[%s153 + $0x3c4] sm:%s145] %v636
                %v638 = vld [vmem:[%s152 + $0xcc8] sm:%s145]
                %639 = vst [vmem:[%s153 + $0x3c8] sm:%s145] %v638
                %v640 = vld [vmem:[%s152 + $0xccc] sm:%s145]
                %641 = vst [vmem:[%s153 + $0x3cc] sm:%s145] %v640
                %v642 = vld [vmem:[%s152 + $0xcd0] sm:%s145]
                %643 = vst [vmem:[%s153 + $0x3d0] sm:%s145] %v642
                %v644 = vld [vmem:[%s152 + $0xcd4] sm:%s145]
                %645 = vst [vmem:[%s153 + $0x3d4] sm:%s145] %v644
                %v646 = vld [vmem:[%s152 + $0xcd8] sm:%s145]
                %647 = vst [vmem:[%s153 + $0x3d8] sm:%s145] %v646
                %v648 = vld [vmem:[%s152 + $0xcdc] sm:%s145]
                %649 = vst [vmem:[%s153 + $0x3dc] sm:%s145] %v648
                %v650 = vld [vmem:[%s152 + $0xce0] sm:%s145]
                %651 = vst [vmem:[%s153 + $0x3e0] sm:%s145] %v650
                %v652 = vld [vmem:[%s152 + $0xce4] sm:%s145]
                %653 = vst [vmem:[%s153 + $0x3e4] sm:%s145] %v652
                %v654 = vld [vmem:[%s152 + $0xce8] sm:%s145]
                %655 = vst [vmem:[%s153 + $0x3e8] sm:%s145] %v654
                %v656 = vld [vmem:[%s152 + $0xcec] sm:%s145]
                %657 = vst [vmem:[%s153 + $0x3ec] sm:%s145] %v656
                %v658 = vld [vmem:[%s152 + $0xcf0] sm:%s145]
                %659 = vst [vmem:[%s153 + $0x3f0] sm:%s145] %v658
                %v660 = vld [vmem:[%s152 + $0xcf4] sm:%s145]
                %661 = vst [vmem:[%s153 + $0x3f4] sm:%s145] %v660
                %v662 = vld [vmem:[%s152 + $0xcf8] sm:%s145]
                %663 = vst [vmem:[%s153 + $0x3f8] sm:%s145] %v662
                %v664 = vld [vmem:[%s152 + $0xcfc] sm:%s145]
                %665 = vst [vmem:[%s153 + $0x3fc] sm:%s145] %v664
              $region45: #{forward.4} parent=39 // loop_footer
                %s151 = sadd.s32 1, %s147
              $region46: #{forward.4} parent=39 // loop_footer_branch
                %146 = sbr.rel target = $region42
              $region47: #{forward.4} parent=39 // loop_exit
                _
            $region40: #{forward.4} parent=31 // pred_fallthru
              _
          $region32: #{forward.4} parent=27 // pred_fallthru
            _
          %1198 = vnop
        $region28: #{forward.4} parent=23 // pred_fallthru
          _
      $region24: #{forward.4} parent=5 // pred_fallthru
        _
      %p1199 = scmp.le.s32.totalorder 1, %s9
      %p1200 = scmp.lt.s32.totalorder %s9, 5
      %p1201 = pnand %p1199, %p1200
      %p1202 = pneg %p1201
      // Predicated region
      $region66: #{forward.4} parent=5 // pred_check
        _
      $region67: #{forward.4} parent=5 // pred_check_branch
        %1204 = sbr.rel (%p1201) target = $region69
      $region68: #{forward.4} parent=5 // pred_region
        %s1205 = ssub.s32 %s9, 1
        %s1206 = sand.u32 %s22, 1
        %s1207 = sand.u32 %s22, 1
        %s1208 = smul.addr %s1207, 1024
        %s1209 = scalar_lea.vmem [#allocation2], %s1208
        // Predicated region
        $region70: #{forward.4} parent=68 // pred_check
          %p1210 = pneg %p35
        $region71: #{forward.4} parent=68 // pred_check_branch
          %1212 = sbr.rel (%p1210) target = $region73
        $region72: #{forward.4} parent=68 // pred_region
          _
        $region73: #{forward.4} parent=68 // pred_fallthru
          _
        %s1213 = sand.u32 %s22, 1
        %s1214 = sand.u32 %s22, 1
        %s1215 = smul.addr %s1214, 1024
        %s1216 = scalar_lea.vmem [#allocation2], %s1215
        %p1217 = pneg %p35
        %p1218 = pneg %p32
        %p1219 = pneg %p56
        %p1220 = pneg %p53
        %p1221 = pneg %p77
        %p1222 = pneg %p74
        %p1223 = pneg %p103
        %p1224 = pneg %p100
        %s1225 = smul.u32 64, %s14
        %p1226 = scmp.lt.s32.totalorder %s1225, 255
        %s1227 = scalar_select %p1226, %s1225, 255
        %s1228 = smul.addr %s1227, 4
        %s1229 = scalar_lea.vmem %s3, %s1228
        %s1230 = smul.u32 64, %s14
        %s1231 = smul.u32 64, %s14
        %p1232 = scmp.lt.s32.totalorder %s1231, 255
        %s1233 = scalar_select %p1232, %s1231, 255
        %s1234 = smul.addr %s1233, 4
        %s1235 = scalar_lea.vmem %s3, %s1234
        %s1236 = smul.u32 64, %s14
        %v1238 = vld [vmem:[%s1209] sm:$0xf]
        %v1239 = vld [vmem:[%s1209 + $0x4] sm:$0xf]
        %v1240 = vld [vmem:[%s1209 + $0x8] sm:$0xf]
        %v1241 = vld [vmem:[%s1209 + $0xc] sm:$0xf]
        %v1242 = vld [vmem:[%s1209 + $0x10] sm:$0xf]
        %v1243 = vld [vmem:[%s1209 + $0x14] sm:$0xf]
        %v1244 = vld [vmem:[%s1209 + $0x18] sm:$0xf]
        %v1245 = vld [vmem:[%s1209 + $0x1c] sm:$0xf]
        %v1246 = vld [vmem:[%s1209 + $0x20] sm:$0xf]
        %v1247 = vld [vmem:[%s1209 + $0x24] sm:$0xf]
        %v1248 = vld [vmem:[%s1209 + $0x28] sm:$0xf]
        %v1249 = vld [vmem:[%s1209 + $0x2c] sm:$0xf]
        %v1250 = vld [vmem:[%s1209 + $0x30] sm:$0xf]
        %v1251 = vld [vmem:[%s1209 + $0x34] sm:$0xf]
        %v1252 = vld [vmem:[%s1209 + $0x38] sm:$0xf]
        %v1253 = vld [vmem:[%s1209 + $0x3c] sm:$0xf]
        %v1254 = vld [vmem:[%s1209 + $0x40] sm:$0xf]
        %v1255 = vld [vmem:[%s1209 + $0x44] sm:$0xf]
        %v1256 = vld [vmem:[%s1209 + $0x48] sm:$0xf]
        %v1257 = vld [vmem:[%s1209 + $0x4c] sm:$0xf]
        %v1258 = vld [vmem:[%s1209 + $0x50] sm:$0xf]
        %v1259 = vld [vmem:[%s1209 + $0x54] sm:$0xf]
        %v1260 = vld [vmem:[%s1209 + $0x58] sm:$0xf]
        %v1261 = vld [vmem:[%s1209 + $0x5c] sm:$0xf]
        %v1262 = vld [vmem:[%s1209 + $0x60] sm:$0xf]
        %v1263 = vld [vmem:[%s1209 + $0x64] sm:$0xf]
        %v1264 = vld [vmem:[%s1209 + $0x68] sm:$0xf]
        %v1265 = vld [vmem:[%s1209 + $0x6c] sm:$0xf]
        %v1266 = vld [vmem:[%s1209 + $0x70] sm:$0xf]
        %v1267 = vld [vmem:[%s1209 + $0x74] sm:$0xf]
        %v1268 = vld [vmem:[%s1209 + $0x78] sm:$0xf]
        %v1269 = vld [vmem:[%s1209 + $0x7c] sm:$0xf]
        %v1270 = vld [vmem:[%s1209 + $0x80] sm:$0xf]
        %v1271 = vld [vmem:[%s1209 + $0x84] sm:$0xf]
        %v1272 = vld [vmem:[%s1209 + $0x88] sm:$0xf]
        %v1273 = vld [vmem:[%s1209 + $0x8c] sm:$0xf]
        %v1274 = vld [vmem:[%s1209 + $0x90] sm:$0xf]
        %v1275 = vld [vmem:[%s1209 + $0x94] sm:$0xf]
        %v1276 = vld [vmem:[%s1209 + $0x98] sm:$0xf]
        %v1277 = vld [vmem:[%s1209 + $0x9c] sm:$0xf]
        %v1278 = vld [vmem:[%s1209 + $0xa0] sm:$0xf]
        %v1279 = vld [vmem:[%s1209 + $0xa4] sm:$0xf]
        %v1280 = vld [vmem:[%s1209 + $0xa8] sm:$0xf]
        %v1281 = vld [vmem:[%s1209 + $0xac] sm:$0xf]
        %v1282 = vld [vmem:[%s1209 + $0xb0] sm:$0xf]
        %v1283 = vld [vmem:[%s1209 + $0xb4] sm:$0xf]
        %v1284 = vld [vmem:[%s1209 + $0xb8] sm:$0xf]
        %v1285 = vld [vmem:[%s1209 + $0xbc] sm:$0xf]
        %v1286 = vld [vmem:[%s1209 + $0xc0] sm:$0xf]
        %v1287 = vld [vmem:[%s1209 + $0xc4] sm:$0xf]
        %v1288 = vld [vmem:[%s1209 + $0xc8] sm:$0xf]
        %v1289 = vld [vmem:[%s1209 + $0xcc] sm:$0xf]
        %v1290 = vld [vmem:[%s1209 + $0xd0] sm:$0xf]
        %v1291 = vld [vmem:[%s1209 + $0xd4] sm:$0xf]
        %v1292 = vld [vmem:[%s1209 + $0xd8] sm:$0xf]
        %v1293 = vld [vmem:[%s1209 + $0xdc] sm:$0xf]
        %v1294 = vld [vmem:[%s1209 + $0xe0] sm:$0xf]
        %v1295 = vld [vmem:[%s1209 + $0xe4] sm:$0xf]
        %v1296 = vld [vmem:[%s1209 + $0xe8] sm:$0xf]
        %v1297 = vld [vmem:[%s1209 + $0xec] sm:$0xf]
        %v1298 = vld [vmem:[%s1209 + $0xf0] sm:$0xf]
        %v1299 = vld [vmem:[%s1209 + $0xf4] sm:$0xf]
        %v1300 = vld [vmem:[%s1209 + $0xf8] sm:$0xf]
        %v1301 = vld [vmem:[%s1209 + $0xfc] sm:$0xf]
        %v1302 = vld [vmem:[%s1209 + $0x100] sm:$0xf]
        %v1303 = vld [vmem:[%s1209 + $0x104] sm:$0xf]
        %v1304 = vld [vmem:[%s1209 + $0x108] sm:$0xf]
        %v1305 = vld [vmem:[%s1209 + $0x10c] sm:$0xf]
        %v1306 = vld [vmem:[%s1209 + $0x110] sm:$0xf]
        %v1307 = vld [vmem:[%s1209 + $0x114] sm:$0xf]
        %v1308 = vld [vmem:[%s1209 + $0x118] sm:$0xf]
        %v1309 = vld [vmem:[%s1209 + $0x11c] sm:$0xf]
        %v1310 = vld [vmem:[%s1209 + $0x120] sm:$0xf]
        %v1311 = vld [vmem:[%s1209 + $0x124] sm:$0xf]
        %v1312 = vld [vmem:[%s1209 + $0x128] sm:$0xf]
        %v1313 = vld [vmem:[%s1209 + $0x12c] sm:$0xf]
        %v1314 = vld [vmem:[%s1209 + $0x130] sm:$0xf]
        %v1315 = vld [vmem:[%s1209 + $0x134] sm:$0xf]
        %v1316 = vld [vmem:[%s1209 + $0x138] sm:$0xf]
        %v1317 = vld [vmem:[%s1209 + $0x13c] sm:$0xf]
        %v1318 = vld [vmem:[%s1209 + $0x140] sm:$0xf]
        %v1319 = vld [vmem:[%s1209 + $0x144] sm:$0xf]
        %v1320 = vld [vmem:[%s1209 + $0x148] sm:$0xf]
        %v1321 = vld [vmem:[%s1209 + $0x14c] sm:$0xf]
        %v1322 = vld [vmem:[%s1209 + $0x150] sm:$0xf]
        %v1323 = vld [vmem:[%s1209 + $0x154] sm:$0xf]
        %v1324 = vld [vmem:[%s1209 + $0x158] sm:$0xf]
        %v1325 = vld [vmem:[%s1209 + $0x15c] sm:$0xf]
        %v1326 = vld [vmem:[%s1209 + $0x160] sm:$0xf]
        %v1327 = vld [vmem:[%s1209 + $0x164] sm:$0xf]
        %v1328 = vld [vmem:[%s1209 + $0x168] sm:$0xf]
        %v1329 = vld [vmem:[%s1209 + $0x16c] sm:$0xf]
        %v1330 = vld [vmem:[%s1209 + $0x170] sm:$0xf]
        %v1331 = vld [vmem:[%s1209 + $0x174] sm:$0xf]
        %v1332 = vld [vmem:[%s1209 + $0x178] sm:$0xf]
        %v1333 = vld [vmem:[%s1209 + $0x17c] sm:$0xf]
        %v1334 = vld [vmem:[%s1209 + $0x180] sm:$0xf]
        %v1335 = vld [vmem:[%s1209 + $0x184] sm:$0xf]
        %v1336 = vld [vmem:[%s1209 + $0x188] sm:$0xf]
        %v1337 = vld [vmem:[%s1209 + $0x18c] sm:$0xf]
        %v1338 = vld [vmem:[%s1209 + $0x190] sm:$0xf]
        %v1339 = vld [vmem:[%s1209 + $0x194] sm:$0xf]
        %v1340 = vld [vmem:[%s1209 + $0x198] sm:$0xf]
        %v1341 = vld [vmem:[%s1209 + $0x19c] sm:$0xf]
        %v1342 = vld [vmem:[%s1209 + $0x1a0] sm:$0xf]
        %v1343 = vld [vmem:[%s1209 + $0x1a4] sm:$0xf]
        %v1344 = vld [vmem:[%s1209 + $0x1a8] sm:$0xf]
        %v1345 = vld [vmem:[%s1209 + $0x1ac] sm:$0xf]
        %v1346 = vld [vmem:[%s1209 + $0x1b0] sm:$0xf]
        %v1347 = vld [vmem:[%s1209 + $0x1b4] sm:$0xf]
        %v1348 = vld [vmem:[%s1209 + $0x1b8] sm:$0xf]
        %v1349 = vld [vmem:[%s1209 + $0x1bc] sm:$0xf]
        %v1350 = vld [vmem:[%s1209 + $0x1c0] sm:$0xf]
        %v1351 = vld [vmem:[%s1209 + $0x1c4] sm:$0xf]
        %v1352 = vld [vmem:[%s1209 + $0x1c8] sm:$0xf]
        %v1353 = vld [vmem:[%s1209 + $0x1cc] sm:$0xf]
        %v1354 = vld [vmem:[%s1209 + $0x1d0] sm:$0xf]
        %v1355 = vld [vmem:[%s1209 + $0x1d4] sm:$0xf]
        %v1356 = vld [vmem:[%s1209 + $0x1d8] sm:$0xf]
        %v1357 = vld [vmem:[%s1209 + $0x1dc] sm:$0xf]
        %v1358 = vld [vmem:[%s1209 + $0x1e0] sm:$0xf]
        %v1359 = vld [vmem:[%s1209 + $0x1e4] sm:$0xf]
        %v1360 = vld [vmem:[%s1209 + $0x1e8] sm:$0xf]
        %v1361 = vld [vmem:[%s1209 + $0x1ec] sm:$0xf]
        %v1362 = vld [vmem:[%s1209 + $0x1f0] sm:$0xf]
        %v1363 = vld [vmem:[%s1209 + $0x1f4] sm:$0xf]
        %v1364 = vld [vmem:[%s1209 + $0x1f8] sm:$0xf]
        %v1365 = vld [vmem:[%s1209 + $0x1fc] sm:$0xf]
        %v1366 = vld [vmem:[%s1209 + $0x200] sm:$0xf]
        %v1367 = vld [vmem:[%s1209 + $0x204] sm:$0xf]
        %v1368 = vld [vmem:[%s1209 + $0x208] sm:$0xf]
        %v1369 = vld [vmem:[%s1209 + $0x20c] sm:$0xf]
        %v1370 = vld [vmem:[%s1209 + $0x210] sm:$0xf]
        %v1371 = vld [vmem:[%s1209 + $0x214] sm:$0xf]
        %v1372 = vld [vmem:[%s1209 + $0x218] sm:$0xf]
        %v1373 = vld [vmem:[%s1209 + $0x21c] sm:$0xf]
        %v1374 = vld [vmem:[%s1209 + $0x220] sm:$0xf]
        %v1375 = vld [vmem:[%s1209 + $0x224] sm:$0xf]
        %v1376 = vld [vmem:[%s1209 + $0x228] sm:$0xf]
        %v1377 = vld [vmem:[%s1209 + $0x22c] sm:$0xf]
        %v1378 = vld [vmem:[%s1209 + $0x230] sm:$0xf]
        %v1379 = vld [vmem:[%s1209 + $0x234] sm:$0xf]
        %v1380 = vld [vmem:[%s1209 + $0x238] sm:$0xf]
        %v1381 = vld [vmem:[%s1209 + $0x23c] sm:$0xf]
        %v1382 = vld [vmem:[%s1209 + $0x240] sm:$0xf]
        %v1383 = vld [vmem:[%s1209 + $0x244] sm:$0xf]
        %v1384 = vld [vmem:[%s1209 + $0x248] sm:$0xf]
        %v1385 = vld [vmem:[%s1209 + $0x24c] sm:$0xf]
        %v1386 = vld [vmem:[%s1209 + $0x250] sm:$0xf]
        %v1387 = vld [vmem:[%s1209 + $0x254] sm:$0xf]
        %v1388 = vld [vmem:[%s1209 + $0x258] sm:$0xf]
        %v1389 = vld [vmem:[%s1209 + $0x25c] sm:$0xf]
        %v1390 = vld [vmem:[%s1209 + $0x260] sm:$0xf]
        %v1391 = vld [vmem:[%s1209 + $0x264] sm:$0xf]
        %v1392 = vld [vmem:[%s1209 + $0x268] sm:$0xf]
        %v1393 = vld [vmem:[%s1209 + $0x26c] sm:$0xf]
        %v1394 = vld [vmem:[%s1209 + $0x270] sm:$0xf]
        %v1395 = vld [vmem:[%s1209 + $0x274] sm:$0xf]
        %v1396 = vld [vmem:[%s1209 + $0x278] sm:$0xf]
        %v1397 = vld [vmem:[%s1209 + $0x27c] sm:$0xf]
        %v1398 = vld [vmem:[%s1209 + $0x280] sm:$0xf]
        %v1399 = vld [vmem:[%s1209 + $0x284] sm:$0xf]
        %v1400 = vld [vmem:[%s1209 + $0x288] sm:$0xf]
        %v1401 = vld [vmem:[%s1209 + $0x28c] sm:$0xf]
        %v1402 = vld [vmem:[%s1209 + $0x290] sm:$0xf]
        %v1403 = vld [vmem:[%s1209 + $0x294] sm:$0xf]
        %v1404 = vld [vmem:[%s1209 + $0x298] sm:$0xf]
        %v1405 = vld [vmem:[%s1209 + $0x29c] sm:$0xf]
        %v1406 = vld [vmem:[%s1209 + $0x2a0] sm:$0xf]
        %v1407 = vld [vmem:[%s1209 + $0x2a4] sm:$0xf]
        %v1408 = vld [vmem:[%s1209 + $0x2a8] sm:$0xf]
        %v1409 = vld [vmem:[%s1209 + $0x2ac] sm:$0xf]
        %v1410 = vld [vmem:[%s1209 + $0x2b0] sm:$0xf]
        %v1411 = vld [vmem:[%s1209 + $0x2b4] sm:$0xf]
        %v1412 = vld [vmem:[%s1209 + $0x2b8] sm:$0xf]
        %v1413 = vld [vmem:[%s1209 + $0x2bc] sm:$0xf]
        %v1414 = vld [vmem:[%s1209 + $0x2c0] sm:$0xf]
        %v1415 = vld [vmem:[%s1209 + $0x2c4] sm:$0xf]
        %v1416 = vld [vmem:[%s1209 + $0x2c8] sm:$0xf]
        %v1417 = vld [vmem:[%s1209 + $0x2cc] sm:$0xf]
        %v1418 = vld [vmem:[%s1209 + $0x2d0] sm:$0xf]
        %v1419 = vld [vmem:[%s1209 + $0x2d4] sm:$0xf]
        %v1420 = vld [vmem:[%s1209 + $0x2d8] sm:$0xf]
        %v1421 = vld [vmem:[%s1209 + $0x2dc] sm:$0xf]
        %v1422 = vld [vmem:[%s1209 + $0x2e0] sm:$0xf]
        %v1423 = vld [vmem:[%s1209 + $0x2e4] sm:$0xf]
        %v1424 = vld [vmem:[%s1209 + $0x2e8] sm:$0xf]
        %v1425 = vld [vmem:[%s1209 + $0x2ec] sm:$0xf]
        %v1426 = vld [vmem:[%s1209 + $0x2f0] sm:$0xf]
        %v1427 = vld [vmem:[%s1209 + $0x2f4] sm:$0xf]
        %v1428 = vld [vmem:[%s1209 + $0x2f8] sm:$0xf]
        %v1429 = vld [vmem:[%s1209 + $0x2fc] sm:$0xf]
        %v1430 = vld [vmem:[%s1209 + $0x300] sm:$0xf]
        %v1431 = vld [vmem:[%s1209 + $0x304] sm:$0xf]
        %v1432 = vld [vmem:[%s1209 + $0x308] sm:$0xf]
        %v1433 = vld [vmem:[%s1209 + $0x30c] sm:$0xf]
        %v1434 = vld [vmem:[%s1209 + $0x310] sm:$0xf]
        %v1435 = vld [vmem:[%s1209 + $0x314] sm:$0xf]
        %v1436 = vld [vmem:[%s1209 + $0x318] sm:$0xf]
        %v1437 = vld [vmem:[%s1209 + $0x31c] sm:$0xf]
        %v1438 = vld [vmem:[%s1209 + $0x320] sm:$0xf]
        %v1439 = vld [vmem:[%s1209 + $0x324] sm:$0xf]
        %v1440 = vld [vmem:[%s1209 + $0x328] sm:$0xf]
        %v1441 = vld [vmem:[%s1209 + $0x32c] sm:$0xf]
        %v1442 = vld [vmem:[%s1209 + $0x330] sm:$0xf]
        %v1443 = vld [vmem:[%s1209 + $0x334] sm:$0xf]
        %v1444 = vld [vmem:[%s1209 + $0x338] sm:$0xf]
        %v1445 = vld [vmem:[%s1209 + $0x33c] sm:$0xf]
        %v1446 = vld [vmem:[%s1209 + $0x340] sm:$0xf]
        %v1447 = vld [vmem:[%s1209 + $0x344] sm:$0xf]
        %v1448 = vld [vmem:[%s1209 + $0x348] sm:$0xf]
        %v1449 = vld [vmem:[%s1209 + $0x34c] sm:$0xf]
        %v1450 = vld [vmem:[%s1209 + $0x350] sm:$0xf]
        %v1451 = vld [vmem:[%s1209 + $0x354] sm:$0xf]
        %v1452 = vld [vmem:[%s1209 + $0x358] sm:$0xf]
        %v1453 = vld [vmem:[%s1209 + $0x35c] sm:$0xf]
        %v1454 = vld [vmem:[%s1209 + $0x360] sm:$0xf]
        %v1455 = vld [vmem:[%s1209 + $0x364] sm:$0xf]
        %v1456 = vld [vmem:[%s1209 + $0x368] sm:$0xf]
        %v1457 = vld [vmem:[%s1209 + $0x36c] sm:$0xf]
        %v1458 = vld [vmem:[%s1209 + $0x370] sm:$0xf]
        %v1459 = vld [vmem:[%s1209 + $0x374] sm:$0xf]
        %v1460 = vld [vmem:[%s1209 + $0x378] sm:$0xf]
        %v1461 = vld [vmem:[%s1209 + $0x37c] sm:$0xf]
        %v1462 = vld [vmem:[%s1209 + $0x380] sm:$0xf]
        %v1463 = vld [vmem:[%s1209 + $0x384] sm:$0xf]
        %v1464 = vld [vmem:[%s1209 + $0x388] sm:$0xf]
        %v1465 = vld [vmem:[%s1209 + $0x38c] sm:$0xf]
        %v1466 = vld [vmem:[%s1209 + $0x390] sm:$0xf]
        %v1467 = vld [vmem:[%s1209 + $0x394] sm:$0xf]
        %v1468 = vld [vmem:[%s1209 + $0x398] sm:$0xf]
        %v1469 = vld [vmem:[%s1209 + $0x39c] sm:$0xf]
        %v1470 = vld [vmem:[%s1209 + $0x3a0] sm:$0xf]
        %v1471 = vld [vmem:[%s1209 + $0x3a4] sm:$0xf]
        %v1472 = vld [vmem:[%s1209 + $0x3a8] sm:$0xf]
        %v1473 = vld [vmem:[%s1209 + $0x3ac] sm:$0xf]
        %v1474 = vld [vmem:[%s1209 + $0x3b0] sm:$0xf]
        %v1475 = vld [vmem:[%s1209 + $0x3b4] sm:$0xf]
        %v1476 = vld [vmem:[%s1209 + $0x3b8] sm:$0xf]
        %v1477 = vld [vmem:[%s1209 + $0x3bc] sm:$0xf]
        %v1478 = vld [vmem:[%s1209 + $0x3c0] sm:$0xf]
        %v1479 = vld [vmem:[%s1209 + $0x3c4] sm:$0xf]
        %v1480 = vld [vmem:[%s1209 + $0x3c8] sm:$0xf]
        %v1481 = vld [vmem:[%s1209 + $0x3cc] sm:$0xf]
        %v1482 = vld [vmem:[%s1209 + $0x3d0] sm:$0xf]
        %v1483 = vld [vmem:[%s1209 + $0x3d4] sm:$0xf]
        %v1484 = vld [vmem:[%s1209 + $0x3d8] sm:$0xf]
        %v1485 = vld [vmem:[%s1209 + $0x3dc] sm:$0xf]
        %v1486 = vld [vmem:[%s1209 + $0x3e0] sm:$0xf]
        %v1487 = vld [vmem:[%s1209 + $0x3e4] sm:$0xf]
        %v1488 = vld [vmem:[%s1209 + $0x3e8] sm:$0xf]
        %v1489 = vld [vmem:[%s1209 + $0x3ec] sm:$0xf]
        %v1490 = vld [vmem:[%s1209 + $0x3f0] sm:$0xf]
        %v1491 = vld [vmem:[%s1209 + $0x3f4] sm:$0xf]
        %v1492 = vld [vmem:[%s1209 + $0x3f8] sm:$0xf]
        %v1493 = vld [vmem:[%s1209 + $0x3fc] sm:$0xf]
        %v1494 = vld [vmem:[%s1] sm:$0xf]
        %v1495 = vld [vmem:[%s1 + $0x4] sm:$0xf]
        %v1496 = vld [vmem:[%s1 + $0x8] sm:$0xf]
        %v1497 = vld [vmem:[%s1 + $0xc] sm:$0xf]
        %v1498 = vld [vmem:[%s1 + $0x10] sm:$0xf]
        %v1499 = vld [vmem:[%s1 + $0x14] sm:$0xf]
        %v1500 = vld [vmem:[%s1 + $0x18] sm:$0xf]
        %v1501 = vld [vmem:[%s1 + $0x1c] sm:$0xf]
        %v1502 = vld [vmem:[%s1 + $0x20] sm:$0xf]
        %v1503 = vld [vmem:[%s1 + $0x24] sm:$0xf]
        %v1504 = vld [vmem:[%s1 + $0x28] sm:$0xf]
        %v1505 = vld [vmem:[%s1 + $0x2c] sm:$0xf]
        %v1506 = vld [vmem:[%s1 + $0x30] sm:$0xf]
        %v1507 = vld [vmem:[%s1 + $0x34] sm:$0xf]
        %v1508 = vld [vmem:[%s1 + $0x38] sm:$0xf]
        %v1509 = vld [vmem:[%s1 + $0x3c] sm:$0xf]
        %v1766 = vunpack.c.l.b16 %v1238
        %v1767 = vunpack.c.l.b16 %v1239
        %v1768 = vunpack.c.l.b16 %v1240
        %v1769 = vunpack.c.l.b16 %v1241
        %v1770 = vunpack.c.l.b16 %v1242
        %v1771 = vunpack.c.l.b16 %v1243
        %v1772 = vunpack.c.l.b16 %v1244
        %v1773 = vunpack.c.l.b16 %v1245
        %v1774 = vunpack.c.l.b16 %v1246
        %v1775 = vunpack.c.l.b16 %v1247
        %v1776 = vunpack.c.l.b16 %v1248
        %v1777 = vunpack.c.l.b16 %v1249
        %v1778 = vunpack.c.l.b16 %v1250
        %v1779 = vunpack.c.l.b16 %v1251
        %v1780 = vunpack.c.l.b16 %v1252
        %v1781 = vunpack.c.l.b16 %v1253
        %v1782 = vunpack.c.l.b16 %v1254
        %v1783 = vunpack.c.l.b16 %v1255
        %v1784 = vunpack.c.l.b16 %v1256
        %v1785 = vunpack.c.l.b16 %v1257
        %v1786 = vunpack.c.l.b16 %v1258
        %v1787 = vunpack.c.l.b16 %v1259
        %v1788 = vunpack.c.l.b16 %v1260
        %v1789 = vunpack.c.l.b16 %v1261
        %v1790 = vunpack.c.l.b16 %v1262
        %v1791 = vunpack.c.l.b16 %v1263
        %v1792 = vunpack.c.l.b16 %v1264
        %v1793 = vunpack.c.l.b16 %v1265
        %v1794 = vunpack.c.l.b16 %v1266
        %v1795 = vunpack.c.l.b16 %v1267
        %v1796 = vunpack.c.l.b16 %v1268
        %v1797 = vunpack.c.l.b16 %v1269
        %v1798 = vunpack.c.l.b16 %v1270
        %v1799 = vunpack.c.l.b16 %v1271
        %v1800 = vunpack.c.l.b16 %v1272
        %v1801 = vunpack.c.l.b16 %v1273
        %v1802 = vunpack.c.l.b16 %v1274
        %v1803 = vunpack.c.l.b16 %v1275
        %v1804 = vunpack.c.l.b16 %v1276
        %v1805 = vunpack.c.l.b16 %v1277
        %v1806 = vunpack.c.l.b16 %v1278
        %v1807 = vunpack.c.l.b16 %v1279
        %v1808 = vunpack.c.l.b16 %v1280
        %v1809 = vunpack.c.l.b16 %v1281
        %v1810 = vunpack.c.l.b16 %v1282
        %v1811 = vunpack.c.l.b16 %v1283
        %v1812 = vunpack.c.l.b16 %v1284
        %v1813 = vunpack.c.l.b16 %v1285
        %v1814 = vunpack.c.l.b16 %v1286
        %v1815 = vunpack.c.l.b16 %v1287
        %v1816 = vunpack.c.l.b16 %v1288
        %v1817 = vunpack.c.l.b16 %v1289
        %v1818 = vunpack.c.l.b16 %v1290
        %v1819 = vunpack.c.l.b16 %v1291
        %v1820 = vunpack.c.l.b16 %v1292
        %v1821 = vunpack.c.l.b16 %v1293
        %v1822 = vunpack.c.l.b16 %v1294
        %v1823 = vunpack.c.l.b16 %v1295
        %v1824 = vunpack.c.l.b16 %v1296
        %v1825 = vunpack.c.l.b16 %v1297
        %v1826 = vunpack.c.l.b16 %v1298
        %v1827 = vunpack.c.l.b16 %v1299
        %v1828 = vunpack.c.l.b16 %v1300
        %v1829 = vunpack.c.l.b16 %v1301
        %v1830 = vunpack.c.l.b16 %v1302
        %v1831 = vunpack.c.l.b16 %v1303
        %v1832 = vunpack.c.l.b16 %v1304
        %v1833 = vunpack.c.l.b16 %v1305
        %v1834 = vunpack.c.l.b16 %v1306
        %v1835 = vunpack.c.l.b16 %v1307
        %v1836 = vunpack.c.l.b16 %v1308
        %v1837 = vunpack.c.l.b16 %v1309
        %v1838 = vunpack.c.l.b16 %v1310
        %v1839 = vunpack.c.l.b16 %v1311
        %v1840 = vunpack.c.l.b16 %v1312
        %v1841 = vunpack.c.l.b16 %v1313
        %v1842 = vunpack.c.l.b16 %v1314
        %v1843 = vunpack.c.l.b16 %v1315
        %v1844 = vunpack.c.l.b16 %v1316
        %v1845 = vunpack.c.l.b16 %v1317
        %v1846 = vunpack.c.l.b16 %v1318
        %v1847 = vunpack.c.l.b16 %v1319
        %v1848 = vunpack.c.l.b16 %v1320
        %v1849 = vunpack.c.l.b16 %v1321
        %v1850 = vunpack.c.l.b16 %v1322
        %v1851 = vunpack.c.l.b16 %v1323
        %v1852 = vunpack.c.l.b16 %v1324
        %v1853 = vunpack.c.l.b16 %v1325
        %v1854 = vunpack.c.l.b16 %v1326
        %v1855 = vunpack.c.l.b16 %v1327
        %v1856 = vunpack.c.l.b16 %v1328
        %v1857 = vunpack.c.l.b16 %v1329
        %v1858 = vunpack.c.l.b16 %v1330
        %v1859 = vunpack.c.l.b16 %v1331
        %v1860 = vunpack.c.l.b16 %v1332
        %v1861 = vunpack.c.l.b16 %v1333
        %v1862 = vunpack.c.l.b16 %v1334
        %v1863 = vunpack.c.l.b16 %v1335
        %v1864 = vunpack.c.l.b16 %v1336
        %v1865 = vunpack.c.l.b16 %v1337
        %v1866 = vunpack.c.l.b16 %v1338
        %v1867 = vunpack.c.l.b16 %v1339
        %v1868 = vunpack.c.l.b16 %v1340
        %v1869 = vunpack.c.l.b16 %v1341
        %v1870 = vunpack.c.l.b16 %v1342
        %v1871 = vunpack.c.l.b16 %v1343
        %v1872 = vunpack.c.l.b16 %v1344
        %v1873 = vunpack.c.l.b16 %v1345
        %v1874 = vunpack.c.l.b16 %v1346
        %v1875 = vunpack.c.l.b16 %v1347
        %v1876 = vunpack.c.l.b16 %v1348
        %v1877 = vunpack.c.l.b16 %v1349
        %v1878 = vunpack.c.l.b16 %v1350
        %v1879 = vunpack.c.l.b16 %v1351
        %v1880 = vunpack.c.l.b16 %v1352
        %v1881 = vunpack.c.l.b16 %v1353
        %v1882 = vunpack.c.l.b16 %v1354
        %v1883 = vunpack.c.l.b16 %v1355
        %v1884 = vunpack.c.l.b16 %v1356
        %v1885 = vunpack.c.l.b16 %v1357
        %v1886 = vunpack.c.l.b16 %v1358
        %v1887 = vunpack.c.l.b16 %v1359
        %v1888 = vunpack.c.l.b16 %v1360
        %v1889 = vunpack.c.l.b16 %v1361
        %v1890 = vunpack.c.l.b16 %v1362
        %v1891 = vunpack.c.l.b16 %v1363
        %v1892 = vunpack.c.l.b16 %v1364
        %v1893 = vunpack.c.l.b16 %v1365
        %v1894 = vunpack.c.l.b16 %v1366
        %v1895 = vunpack.c.l.b16 %v1367
        %v1896 = vunpack.c.l.b16 %v1368
        %v1897 = vunpack.c.l.b16 %v1369
        %v1898 = vunpack.c.l.b16 %v1370
        %v1899 = vunpack.c.l.b16 %v1371
        %v1900 = vunpack.c.l.b16 %v1372
        %v1901 = vunpack.c.l.b16 %v1373
        %v1902 = vunpack.c.l.b16 %v1374
        %v1903 = vunpack.c.l.b16 %v1375
        %v1904 = vunpack.c.l.b16 %v1376
        %v1905 = vunpack.c.l.b16 %v1377
        %v1906 = vunpack.c.l.b16 %v1378
        %v1907 = vunpack.c.l.b16 %v1379
        %v1908 = vunpack.c.l.b16 %v1380
        %v1909 = vunpack.c.l.b16 %v1381
        %v1910 = vunpack.c.l.b16 %v1382
        %v1911 = vunpack.c.l.b16 %v1383
        %v1912 = vunpack.c.l.b16 %v1384
        %v1913 = vunpack.c.l.b16 %v1385
        %v1914 = vunpack.c.l.b16 %v1386
        %v1915 = vunpack.c.l.b16 %v1387
        %v1916 = vunpack.c.l.b16 %v1388
        %v1917 = vunpack.c.l.b16 %v1389
        %v1918 = vunpack.c.l.b16 %v1390
        %v1919 = vunpack.c.l.b16 %v1391
        %v1920 = vunpack.c.l.b16 %v1392
        %v1921 = vunpack.c.l.b16 %v1393
        %v1922 = vunpack.c.l.b16 %v1394
        %v1923 = vunpack.c.l.b16 %v1395
        %v1924 = vunpack.c.l.b16 %v1396
        %v1925 = vunpack.c.l.b16 %v1397
        %v1926 = vunpack.c.l.b16 %v1398
        %v1927 = vunpack.c.l.b16 %v1399
        %v1928 = vunpack.c.l.b16 %v1400
        %v1929 = vunpack.c.l.b16 %v1401
        %v1930 = vunpack.c.l.b16 %v1402
        %v1931 = vunpack.c.l.b16 %v1403
        %v1932 = vunpack.c.l.b16 %v1404
        %v1933 = vunpack.c.l.b16 %v1405
        %v1934 = vunpack.c.l.b16 %v1406
        %v1935 = vunpack.c.l.b16 %v1407
        %v1936 = vunpack.c.l.b16 %v1408
        %v1937 = vunpack.c.l.b16 %v1409
        %v1938 = vunpack.c.l.b16 %v1410
        %v1939 = vunpack.c.l.b16 %v1411
        %v1940 = vunpack.c.l.b16 %v1412
        %v1941 = vunpack.c.l.b16 %v1413
        %v1942 = vunpack.c.l.b16 %v1414
        %v1943 = vunpack.c.l.b16 %v1415
        %v1944 = vunpack.c.l.b16 %v1416
        %v1945 = vunpack.c.l.b16 %v1417
        %v1946 = vunpack.c.l.b16 %v1418
        %v1947 = vunpack.c.l.b16 %v1419
        %v1948 = vunpack.c.l.b16 %v1420
        %v1949 = vunpack.c.l.b16 %v1421
        %v1950 = vunpack.c.l.b16 %v1422
        %v1951 = vunpack.c.l.b16 %v1423
        %v1952 = vunpack.c.l.b16 %v1424
        %v1953 = vunpack.c.l.b16 %v1425
        %v1954 = vunpack.c.l.b16 %v1426
        %v1955 = vunpack.c.l.b16 %v1427
        %v1956 = vunpack.c.l.b16 %v1428
        %v1957 = vunpack.c.l.b16 %v1429
        %v1958 = vunpack.c.l.b16 %v1430
        %v1959 = vunpack.c.l.b16 %v1431
        %v1960 = vunpack.c.l.b16 %v1432
        %v1961 = vunpack.c.l.b16 %v1433
        %v1962 = vunpack.c.l.b16 %v1434
        %v1963 = vunpack.c.l.b16 %v1435
        %v1964 = vunpack.c.l.b16 %v1436
        %v1965 = vunpack.c.l.b16 %v1437
        %v1966 = vunpack.c.l.b16 %v1438
        %v1967 = vunpack.c.l.b16 %v1439
        %v1968 = vunpack.c.l.b16 %v1440
        %v1969 = vunpack.c.l.b16 %v1441
        %v1970 = vunpack.c.l.b16 %v1442
        %v1971 = vunpack.c.l.b16 %v1443
        %v1972 = vunpack.c.l.b16 %v1444
        %v1973 = vunpack.c.l.b16 %v1445
        %v1974 = vunpack.c.l.b16 %v1446
        %v1975 = vunpack.c.l.b16 %v1447
        %v1976 = vunpack.c.l.b16 %v1448
        %v1977 = vunpack.c.l.b16 %v1449
        %v1978 = vunpack.c.l.b16 %v1450
        %v1979 = vunpack.c.l.b16 %v1451
        %v1980 = vunpack.c.l.b16 %v1452
        %v1981 = vunpack.c.l.b16 %v1453
        %v1982 = vunpack.c.l.b16 %v1454
        %v1983 = vunpack.c.l.b16 %v1455
        %v1984 = vunpack.c.l.b16 %v1456
        %v1985 = vunpack.c.l.b16 %v1457
        %v1986 = vunpack.c.l.b16 %v1458
        %v1987 = vunpack.c.l.b16 %v1459
        %v1988 = vunpack.c.l.b16 %v1460
        %v1989 = vunpack.c.l.b16 %v1461
        %v1990 = vunpack.c.l.b16 %v1462
        %v1991 = vunpack.c.l.b16 %v1463
        %v1992 = vunpack.c.l.b16 %v1464
        %v1993 = vunpack.c.l.b16 %v1465
        %v1994 = vunpack.c.l.b16 %v1466
        %v1995 = vunpack.c.l.b16 %v1467
        %v1996 = vunpack.c.l.b16 %v1468
        %v1997 = vunpack.c.l.b16 %v1469
        %v1998 = vunpack.c.l.b16 %v1470
        %v1999 = vunpack.c.l.b16 %v1471
        %v2000 = vunpack.c.l.b16 %v1472
        %v2001 = vunpack.c.l.b16 %v1473
        %v2002 = vunpack.c.l.b16 %v1474
        %v2003 = vunpack.c.l.b16 %v1475
        %v2004 = vunpack.c.l.b16 %v1476
        %v2005 = vunpack.c.l.b16 %v1477
        %v2006 = vunpack.c.l.b16 %v1478
        %v2007 = vunpack.c.l.b16 %v1479
        %v2008 = vunpack.c.l.b16 %v1480
        %v2009 = vunpack.c.l.b16 %v1481
        %v2010 = vunpack.c.l.b16 %v1482
        %v2011 = vunpack.c.l.b16 %v1483
        %v2012 = vunpack.c.l.b16 %v1484
        %v2013 = vunpack.c.l.b16 %v1485
        %v2014 = vunpack.c.l.b16 %v1486
        %v2015 = vunpack.c.l.b16 %v1487
        %v2016 = vunpack.c.l.b16 %v1488
        %v2017 = vunpack.c.l.b16 %v1489
        %v2018 = vunpack.c.l.b16 %v1490
        %v2019 = vunpack.c.l.b16 %v1491
        %v2020 = vunpack.c.l.b16 %v1492
        %v2021 = vunpack.c.l.b16 %v1493
        %v2022 = vpack.c.b16 %v1767, %v1766
        %v2023 = vpack.c.b16 %v1769, %v1768
        %v2024 = vpack.c.b16 %v1771, %v1770
        %v2025 = vpack.c.b16 %v1773, %v1772
        %v2026 = vpack.c.b16 %v1775, %v1774
        %v2027 = vpack.c.b16 %v1777, %v1776
        %v2028 = vpack.c.b16 %v1779, %v1778
        %v2029 = vpack.c.b16 %v1781, %v1780
        %v2030 = vpack.c.b16 %v1783, %v1782
        %v2031 = vpack.c.b16 %v1785, %v1784
        %v2032 = vpack.c.b16 %v1787, %v1786
        %v2033 = vpack.c.b16 %v1789, %v1788
        %v2034 = vpack.c.b16 %v1791, %v1790
        %v2035 = vpack.c.b16 %v1793, %v1792
        %v2036 = vpack.c.b16 %v1795, %v1794
        %v2037 = vpack.c.b16 %v1797, %v1796
        %v2038 = vpack.c.b16 %v1799, %v1798
        %v2039 = vpack.c.b16 %v1801, %v1800
        %v2040 = vpack.c.b16 %v1803, %v1802
        %v2041 = vpack.c.b16 %v1805, %v1804
        %v2042 = vpack.c.b16 %v1807, %v1806
        %v2043 = vpack.c.b16 %v1809, %v1808
        %v2044 = vpack.c.b16 %v1811, %v1810
        %v2045 = vpack.c.b16 %v1813, %v1812
        %v2046 = vpack.c.b16 %v1815, %v1814
        %v2047 = vpack.c.b16 %v1817, %v1816
        %v2048 = vpack.c.b16 %v1819, %v1818
        %v2049 = vpack.c.b16 %v1821, %v1820
        %v2050 = vpack.c.b16 %v1823, %v1822
        %v2051 = vpack.c.b16 %v1825, %v1824
        %v2052 = vpack.c.b16 %v1827, %v1826
        %v2053 = vpack.c.b16 %v1829, %v1828
        %v2054 = vpack.c.b16 %v1831, %v1830
        %v2055 = vpack.c.b16 %v1833, %v1832
        %v2056 = vpack.c.b16 %v1835, %v1834
        %v2057 = vpack.c.b16 %v1837, %v1836
        %v2058 = vpack.c.b16 %v1839, %v1838
        %v2059 = vpack.c.b16 %v1841, %v1840
        %v2060 = vpack.c.b16 %v1843, %v1842
        %v2061 = vpack.c.b16 %v1845, %v1844
        %v2062 = vpack.c.b16 %v1847, %v1846
        %v2063 = vpack.c.b16 %v1849, %v1848
        %v2064 = vpack.c.b16 %v1851, %v1850
        %v2065 = vpack.c.b16 %v1853, %v1852
        %v2066 = vpack.c.b16 %v1855, %v1854
        %v2067 = vpack.c.b16 %v1857, %v1856
        %v2068 = vpack.c.b16 %v1859, %v1858
        %v2069 = vpack.c.b16 %v1861, %v1860
        %v2070 = vpack.c.b16 %v1863, %v1862
        %v2071 = vpack.c.b16 %v1865, %v1864
        %v2072 = vpack.c.b16 %v1867, %v1866
        %v2073 = vpack.c.b16 %v1869, %v1868
        %v2074 = vpack.c.b16 %v1871, %v1870
        %v2075 = vpack.c.b16 %v1873, %v1872
        %v2076 = vpack.c.b16 %v1875, %v1874
        %v2077 = vpack.c.b16 %v1877, %v1876
        %v2078 = vpack.c.b16 %v1879, %v1878
        %v2079 = vpack.c.b16 %v1881, %v1880
        %v2080 = vpack.c.b16 %v1883, %v1882
        %v2081 = vpack.c.b16 %v1885, %v1884
        %v2082 = vpack.c.b16 %v1887, %v1886
        %v2083 = vpack.c.b16 %v1889, %v1888
        %v2084 = vpack.c.b16 %v1891, %v1890
        %v2085 = vpack.c.b16 %v1893, %v1892
        %v2086 = vpack.c.b16 %v1895, %v1894
        %v2087 = vpack.c.b16 %v1897, %v1896
        %v2088 = vpack.c.b16 %v1899, %v1898
        %v2089 = vpack.c.b16 %v1901, %v1900
        %v2090 = vpack.c.b16 %v1903, %v1902
        %v2091 = vpack.c.b16 %v1905, %v1904
        %v2092 = vpack.c.b16 %v1907, %v1906
        %v2093 = vpack.c.b16 %v1909, %v1908
        %v2094 = vpack.c.b16 %v1911, %v1910
        %v2095 = vpack.c.b16 %v1913, %v1912
        %v2096 = vpack.c.b16 %v1915, %v1914
        %v2097 = vpack.c.b16 %v1917, %v1916
        %v2098 = vpack.c.b16 %v1919, %v1918
        %v2099 = vpack.c.b16 %v1921, %v1920
        %v2100 = vpack.c.b16 %v1923, %v1922
        %v2101 = vpack.c.b16 %v1925, %v1924
        %v2102 = vpack.c.b16 %v1927, %v1926
        %v2103 = vpack.c.b16 %v1929, %v1928
        %v2104 = vpack.c.b16 %v1931, %v1930
        %v2105 = vpack.c.b16 %v1933, %v1932
        %v2106 = vpack.c.b16 %v1935, %v1934
        %v2107 = vpack.c.b16 %v1937, %v1936
        %v2108 = vpack.c.b16 %v1939, %v1938
        %v2109 = vpack.c.b16 %v1941, %v1940
        %v2110 = vpack.c.b16 %v1943, %v1942
        %v2111 = vpack.c.b16 %v1945, %v1944
        %v2112 = vpack.c.b16 %v1947, %v1946
        %v2113 = vpack.c.b16 %v1949, %v1948
        %v2114 = vpack.c.b16 %v1951, %v1950
        %v2115 = vpack.c.b16 %v1953, %v1952
        %v2116 = vpack.c.b16 %v1955, %v1954
        %v2117 = vpack.c.b16 %v1957, %v1956
        %v2118 = vpack.c.b16 %v1959, %v1958
        %v2119 = vpack.c.b16 %v1961, %v1960
        %v2120 = vpack.c.b16 %v1963, %v1962
        %v2121 = vpack.c.b16 %v1965, %v1964
        %v2122 = vpack.c.b16 %v1967, %v1966
        %v2123 = vpack.c.b16 %v1969, %v1968
        %v2124 = vpack.c.b16 %v1971, %v1970
        %v2125 = vpack.c.b16 %v1973, %v1972
        %v2126 = vpack.c.b16 %v1975, %v1974
        %v2127 = vpack.c.b16 %v1977, %v1976
        %v2128 = vpack.c.b16 %v1979, %v1978
        %v2129 = vpack.c.b16 %v1981, %v1980
        %v2130 = vpack.c.b16 %v1983, %v1982
        %v2131 = vpack.c.b16 %v1985, %v1984
        %v2132 = vpack.c.b16 %v1987, %v1986
        %v2133 = vpack.c.b16 %v1989, %v1988
        %v2134 = vpack.c.b16 %v1991, %v1990
        %v2135 = vpack.c.b16 %v1993, %v1992
        %v2136 = vpack.c.b16 %v1995, %v1994
        %v2137 = vpack.c.b16 %v1997, %v1996
        %v2138 = vpack.c.b16 %v1999, %v1998
        %v2139 = vpack.c.b16 %v2001, %v2000
        %v2140 = vpack.c.b16 %v2003, %v2002
        %v2141 = vpack.c.b16 %v2005, %v2004
        %v2142 = vpack.c.b16 %v2007, %v2006
        %v2143 = vpack.c.b16 %v2009, %v2008
        %v2144 = vpack.c.b16 %v2011, %v2010
        %v2145 = vpack.c.b16 %v2013, %v2012
        %v2146 = vpack.c.b16 %v2015, %v2014
        %v2147 = vpack.c.b16 %v2017, %v2016
        %v2148 = vpack.c.b16 %v2019, %v2018
        %v2149 = vpack.c.b16 %v2021, %v2020
        %v2294 = vunpack.c.l.b16 %v1494
        %v2295 = vunpack.c.l.b16 %v1495
        %v2296 = vunpack.c.l.b16 %v1496
        %v2297 = vunpack.c.l.b16 %v1497
        %v2298 = vunpack.c.l.b16 %v1498
        %v2299 = vunpack.c.l.b16 %v1499
        %v2300 = vunpack.c.l.b16 %v1500
        %v2301 = vunpack.c.l.b16 %v1501
        %v2302 = vunpack.c.l.b16 %v1502
        %v2303 = vunpack.c.l.b16 %v1503
        %v2304 = vunpack.c.l.b16 %v1504
        %v2305 = vunpack.c.l.b16 %v1505
        %v2306 = vunpack.c.l.b16 %v1506
        %v2307 = vunpack.c.l.b16 %v1507
        %v2308 = vunpack.c.l.b16 %v1508
        %v2309 = vunpack.c.l.b16 %v1509
        %v2310 = vpack.c.b16 %v2295, %v2294
        %v2311 = vpack.c.b16 %v2297, %v2296
        %v2312 = vpack.c.b16 %v2299, %v2298
        %v2313 = vpack.c.b16 %v2301, %v2300
        %v2314 = vpack.c.b16 %v2303, %v2302
        %v2315 = vpack.c.b16 %v2305, %v2304
        %v2316 = vpack.c.b16 %v2307, %v2306
        %v2317 = vpack.c.b16 %v2309, %v2308
        %2326 = vmatprep.subr.bf16.mxu0 0
        %2327 = vmatpush1.bf16.msra.mxu0 %v2317
        %2328 = vmatprep.subr.bf16.mxu0 0
        %2329 = vmatpush1.bf16.msra.mxu0 %v2316
        %2330 = vmatprep.subr.bf16.mxu0 0
        %2331 = vmatpush1.bf16.msra.mxu0 %v2315
        %2332 = vmatprep.subr.bf16.mxu0 0
        %2333 = vmatpush1.bf16.msra.mxu0 %v2314
        %2334 = vmatprep.subr.bf16.mxu0 0
        %2335 = vmatpush1.bf16.msra.mxu0 %v2313
        %2336 = vmatprep.subr.bf16.mxu0 0
        %2337 = vmatpush1.bf16.msra.mxu0 %v2312
        %2338 = vmatprep.subr.bf16.mxu0 0
        %2339 = vmatpush1.bf16.msra.mxu0 %v2311
        %2340 = vmatprep.subr.bf16.mxu0 0
        %2341 = vmatpush1.bf16.msra.mxu0 %v2310
        %2342 = vmatprep.subr.bf16.mxu0 0
        %2343 = vmatpush2.bf16.msra.mxu0 0
        %2344 = vmatprep.subr.bf16.mxu0 0
        %2345 = vmatpush2.bf16.msra.mxu0 0
        %2346 = vmatprep.subr.bf16.mxu0 0
        %2347 = vmatpush2.bf16.msra.mxu0 0
        %2348 = vmatprep.subr.bf16.mxu0 0
        %2349 = vmatpush2.bf16.msra.mxu0 0
        %2350 = vmatprep.subr.bf16.mxu0 0
        %2351 = vmatpush2.bf16.msra.mxu0 0
        %2352 = vmatprep.subr.bf16.mxu0 0
        %2353 = vmatpush2.bf16.msra.mxu0 0
        %2354 = vmatprep.subr.bf16.mxu0 0
        %2355 = vmatpush2.bf16.msra.mxu0 0
        %2356 = vmatprep.subr.bf16.mxu0 0
        %2357 = vmatpush2.bf16.msra.mxu0 0
        %2358 = vmatprep.mubr.bf16.mxu0 0
        %2359 = vmatmul.mubr.bf16.gmra.mxu0 %v2022
        %v2360 = vpop.f32.mrf.mxu0
        %v2361 = vadd.f32 0.0, %v2360
        %v2362 = vpop.f32.mrf.mxu0
        %v2363 = vpop.f32.mrf.mxu0
        %v2364 = vadd.f32 0.0, %v2363
        %v2365 = vpop.f32.mrf.mxu0
        %2366 = vmatprep.mubr.bf16.mxu0 0
        %2367 = vmatmul.mubr.bf16.gmra.mxu0 %v2023
        %v2368 = vpop.f32.mrf.mxu0
        %v2369 = vadd.f32 0.0, %v2368
        %v2370 = vpop.f32.mrf.mxu0
        %v2371 = vpop.f32.mrf.mxu0
        %v2372 = vadd.f32 0.0, %v2371
        %v2373 = vpop.f32.mrf.mxu0
        %2374 = vmatprep.mubr.bf16.mxu0 0
        %2375 = vmatmul.mubr.bf16.gmra.mxu0 %v2024
        %v2376 = vpop.f32.mrf.mxu0
        %v2377 = vadd.f32 0.0, %v2376
        %v2378 = vpop.f32.mrf.mxu0
        %v2379 = vpop.f32.mrf.mxu0
        %v2380 = vadd.f32 0.0, %v2379
        %v2381 = vpop.f32.mrf.mxu0
        %2382 = vmatprep.mubr.bf16.mxu0 0
        %2383 = vmatmul.mubr.bf16.gmra.mxu0 %v2025
        %v2384 = vpop.f32.mrf.mxu0
        %v2385 = vadd.f32 0.0, %v2384
        %v2386 = vpop.f32.mrf.mxu0
        %v2387 = vpop.f32.mrf.mxu0
        %v2388 = vadd.f32 0.0, %v2387
        %v2389 = vpop.f32.mrf.mxu0
        %2390 = vmatprep.mubr.bf16.mxu0 0
        %2391 = vmatmul.mubr.bf16.gmra.mxu0 %v2026
        %v2392 = vpop.f32.mrf.mxu0
        %v2393 = vadd.f32 0.0, %v2392
        %v2394 = vpop.f32.mrf.mxu0
        %v2395 = vpop.f32.mrf.mxu0
        %v2396 = vadd.f32 0.0, %v2395
        %v2397 = vpop.f32.mrf.mxu0
        %2398 = vmatprep.mubr.bf16.mxu0 0
        %2399 = vmatmul.mubr.bf16.gmra.mxu0 %v2027
        %v2400 = vpop.f32.mrf.mxu0
        %v2401 = vadd.f32 0.0, %v2400
        %v2402 = vpop.f32.mrf.mxu0
        %v2403 = vpop.f32.mrf.mxu0
        %v2404 = vadd.f32 0.0, %v2403
        %v2405 = vpop.f32.mrf.mxu0
        %2406 = vmatprep.mubr.bf16.mxu0 0
        %2407 = vmatmul.mubr.bf16.gmra.mxu0 %v2028
        %v2408 = vpop.f32.mrf.mxu0
        %v2409 = vadd.f32 0.0, %v2408
        %v2410 = vpop.f32.mrf.mxu0
        %v2411 = vpop.f32.mrf.mxu0
        %v2412 = vadd.f32 0.0, %v2411
        %v2413 = vpop.f32.mrf.mxu0
        %2414 = vmatprep.mubr.bf16.mxu0 0
        %2415 = vmatmul.mubr.bf16.gmra.mxu0 %v2029
        %v2416 = vpop.f32.mrf.mxu0
        %v2417 = vadd.f32 0.0, %v2416
        %v2418 = vpop.f32.mrf.mxu0
        %v2419 = vpop.f32.mrf.mxu0
        %v2420 = vadd.f32 0.0, %v2419
        %v2421 = vpop.f32.mrf.mxu0
        %2422 = vmatprep.mubr.bf16.mxu0 0
        %2423 = vmatmul.mubr.bf16.gmra.mxu0 %v2030
        %v2424 = vpop.f32.mrf.mxu0
        %v2425 = vadd.f32 0.0, %v2424
        %v2426 = vpop.f32.mrf.mxu0
        %v2427 = vpop.f32.mrf.mxu0
        %v2428 = vadd.f32 0.0, %v2427
        %v2429 = vpop.f32.mrf.mxu0
        %2430 = vmatprep.mubr.bf16.mxu0 0
        %2431 = vmatmul.mubr.bf16.gmra.mxu0 %v2031
        %v2432 = vpop.f32.mrf.mxu0
        %v2433 = vadd.f32 0.0, %v2432
        %v2434 = vpop.f32.mrf.mxu0
        %v2435 = vpop.f32.mrf.mxu0
        %v2436 = vadd.f32 0.0, %v2435
        %v2437 = vpop.f32.mrf.mxu0
        %2438 = vmatprep.mubr.bf16.mxu0 0
        %2439 = vmatmul.mubr.bf16.gmra.mxu0 %v2032
        %v2440 = vpop.f32.mrf.mxu0
        %v2441 = vadd.f32 0.0, %v2440
        %v2442 = vpop.f32.mrf.mxu0
        %v2443 = vpop.f32.mrf.mxu0
        %v2444 = vadd.f32 0.0, %v2443
        %v2445 = vpop.f32.mrf.mxu0
        %2446 = vmatprep.mubr.bf16.mxu0 0
        %2447 = vmatmul.mubr.bf16.gmra.mxu0 %v2033
        %v2448 = vpop.f32.mrf.mxu0
        %v2449 = vadd.f32 0.0, %v2448
        %v2450 = vpop.f32.mrf.mxu0
        %v2451 = vpop.f32.mrf.mxu0
        %v2452 = vadd.f32 0.0, %v2451
        %v2453 = vpop.f32.mrf.mxu0
        %2454 = vmatprep.mubr.bf16.mxu0 0
        %2455 = vmatmul.mubr.bf16.gmra.mxu0 %v2034
        %v2456 = vpop.f32.mrf.mxu0
        %v2457 = vadd.f32 0.0, %v2456
        %v2458 = vpop.f32.mrf.mxu0
        %v2459 = vpop.f32.mrf.mxu0
        %v2460 = vadd.f32 0.0, %v2459
        %v2461 = vpop.f32.mrf.mxu0
        %2462 = vmatprep.mubr.bf16.mxu0 0
        %2463 = vmatmul.mubr.bf16.gmra.mxu0 %v2035
        %v2464 = vpop.f32.mrf.mxu0
        %v2465 = vadd.f32 0.0, %v2464
        %v2466 = vpop.f32.mrf.mxu0
        %v2467 = vpop.f32.mrf.mxu0
        %v2468 = vadd.f32 0.0, %v2467
        %v2469 = vpop.f32.mrf.mxu0
        %2470 = vmatprep.mubr.bf16.mxu0 0
        %2471 = vmatmul.mubr.bf16.gmra.mxu0 %v2036
        %v2472 = vpop.f32.mrf.mxu0
        %v2473 = vadd.f32 0.0, %v2472
        %v2474 = vpop.f32.mrf.mxu0
        %v2475 = vpop.f32.mrf.mxu0
        %v2476 = vadd.f32 0.0, %v2475
        %v2477 = vpop.f32.mrf.mxu0
        %2478 = vmatprep.mubr.bf16.mxu0 0
        %2479 = vmatmul.mubr.bf16.gmra.mxu0 %v2037
        %v2480 = vpop.f32.mrf.mxu0
        %v2481 = vadd.f32 0.0, %v2480
        %v2482 = vpop.f32.mrf.mxu0
        %v2483 = vpop.f32.mrf.mxu0
        %v2484 = vadd.f32 0.0, %v2483
        %v2485 = vpop.f32.mrf.mxu0
        %2486 = vmatprep.mubr.bf16.mxu0 0
        %2487 = vmatmul.mubr.bf16.gmra.mxu0 %v2038
        %v2488 = vpop.f32.mrf.mxu0
        %v2489 = vadd.f32 0.0, %v2488
        %v2490 = vpop.f32.mrf.mxu0
        %v2491 = vpop.f32.mrf.mxu0
        %v2492 = vadd.f32 0.0, %v2491
        %v2493 = vpop.f32.mrf.mxu0
        %2494 = vmatprep.mubr.bf16.mxu0 0
        %2495 = vmatmul.mubr.bf16.gmra.mxu0 %v2039
        %v2496 = vpop.f32.mrf.mxu0
        %v2497 = vadd.f32 0.0, %v2496
        %v2498 = vpop.f32.mrf.mxu0
        %v2499 = vpop.f32.mrf.mxu0
        %v2500 = vadd.f32 0.0, %v2499
        %v2501 = vpop.f32.mrf.mxu0
        %2502 = vmatprep.mubr.bf16.mxu0 0
        %2503 = vmatmul.mubr.bf16.gmra.mxu0 %v2040
        %v2504 = vpop.f32.mrf.mxu0
        %v2505 = vadd.f32 0.0, %v2504
        %v2506 = vpop.f32.mrf.mxu0
        %v2507 = vpop.f32.mrf.mxu0
        %v2508 = vadd.f32 0.0, %v2507
        %v2509 = vpop.f32.mrf.mxu0
        %2510 = vmatprep.mubr.bf16.mxu0 0
        %2511 = vmatmul.mubr.bf16.gmra.mxu0 %v2041
        %v2512 = vpop.f32.mrf.mxu0
        %v2513 = vadd.f32 0.0, %v2512
        %v2514 = vpop.f32.mrf.mxu0
        %v2515 = vpop.f32.mrf.mxu0
        %v2516 = vadd.f32 0.0, %v2515
        %v2517 = vpop.f32.mrf.mxu0
        %2518 = vmatprep.mubr.bf16.mxu0 0
        %2519 = vmatmul.mubr.bf16.gmra.mxu0 %v2042
        %v2520 = vpop.f32.mrf.mxu0
        %v2521 = vadd.f32 0.0, %v2520
        %v2522 = vpop.f32.mrf.mxu0
        %v2523 = vpop.f32.mrf.mxu0
        %v2524 = vadd.f32 0.0, %v2523
        %v2525 = vpop.f32.mrf.mxu0
        %2526 = vmatprep.mubr.bf16.mxu0 0
        %2527 = vmatmul.mubr.bf16.gmra.mxu0 %v2043
        %v2528 = vpop.f32.mrf.mxu0
        %v2529 = vadd.f32 0.0, %v2528
        %v2530 = vpop.f32.mrf.mxu0
        %v2531 = vpop.f32.mrf.mxu0
        %v2532 = vadd.f32 0.0, %v2531
        %v2533 = vpop.f32.mrf.mxu0
        %2534 = vmatprep.mubr.bf16.mxu0 0
        %2535 = vmatmul.mubr.bf16.gmra.mxu0 %v2044
        %v2536 = vpop.f32.mrf.mxu0
        %v2537 = vadd.f32 0.0, %v2536
        %v2538 = vpop.f32.mrf.mxu0
        %v2539 = vpop.f32.mrf.mxu0
        %v2540 = vadd.f32 0.0, %v2539
        %v2541 = vpop.f32.mrf.mxu0
        %2542 = vmatprep.mubr.bf16.mxu0 0
        %2543 = vmatmul.mubr.bf16.gmra.mxu0 %v2045
        %v2544 = vpop.f32.mrf.mxu0
        %v2545 = vadd.f32 0.0, %v2544
        %v2546 = vpop.f32.mrf.mxu0
        %v2547 = vpop.f32.mrf.mxu0
        %v2548 = vadd.f32 0.0, %v2547
        %v2549 = vpop.f32.mrf.mxu0
        %2550 = vmatprep.mubr.bf16.mxu0 0
        %2551 = vmatmul.mubr.bf16.gmra.mxu0 %v2046
        %v2552 = vpop.f32.mrf.mxu0
        %v2553 = vadd.f32 0.0, %v2552
        %v2554 = vpop.f32.mrf.mxu0
        %v2555 = vpop.f32.mrf.mxu0
        %v2556 = vadd.f32 0.0, %v2555
        %v2557 = vpop.f32.mrf.mxu0
        %2558 = vmatprep.mubr.bf16.mxu0 0
        %2559 = vmatmul.mubr.bf16.gmra.mxu0 %v2047
        %v2560 = vpop.f32.mrf.mxu0
        %v2561 = vadd.f32 0.0, %v2560
        %v2562 = vpop.f32.mrf.mxu0
        %v2563 = vpop.f32.mrf.mxu0
        %v2564 = vadd.f32 0.0, %v2563
        %v2565 = vpop.f32.mrf.mxu0
        %2566 = vmatprep.mubr.bf16.mxu0 0
        %2567 = vmatmul.mubr.bf16.gmra.mxu0 %v2048
        %v2568 = vpop.f32.mrf.mxu0
        %v2569 = vadd.f32 0.0, %v2568
        %v2570 = vpop.f32.mrf.mxu0
        %v2571 = vpop.f32.mrf.mxu0
        %v2572 = vadd.f32 0.0, %v2571
        %v2573 = vpop.f32.mrf.mxu0
        %2574 = vmatprep.mubr.bf16.mxu0 0
        %2575 = vmatmul.mubr.bf16.gmra.mxu0 %v2049
        %v2576 = vpop.f32.mrf.mxu0
        %v2577 = vadd.f32 0.0, %v2576
        %v2578 = vpop.f32.mrf.mxu0
        %v2579 = vpop.f32.mrf.mxu0
        %v2580 = vadd.f32 0.0, %v2579
        %v2581 = vpop.f32.mrf.mxu0
        %2582 = vmatprep.mubr.bf16.mxu0 0
        %2583 = vmatmul.mubr.bf16.gmra.mxu0 %v2050
        %v2584 = vpop.f32.mrf.mxu0
        %v2585 = vadd.f32 0.0, %v2584
        %v2586 = vpop.f32.mrf.mxu0
        %v2587 = vpop.f32.mrf.mxu0
        %v2588 = vadd.f32 0.0, %v2587
        %v2589 = vpop.f32.mrf.mxu0
        %2590 = vmatprep.mubr.bf16.mxu0 0
        %2591 = vmatmul.mubr.bf16.gmra.mxu0 %v2051
        %v2592 = vpop.f32.mrf.mxu0
        %v2593 = vadd.f32 0.0, %v2592
        %v2594 = vpop.f32.mrf.mxu0
        %v2595 = vpop.f32.mrf.mxu0
        %v2596 = vadd.f32 0.0, %v2595
        %v2597 = vpop.f32.mrf.mxu0
        %2598 = vmatprep.mubr.bf16.mxu0 0
        %2599 = vmatmul.mubr.bf16.gmra.mxu0 %v2052
        %v2600 = vpop.f32.mrf.mxu0
        %v2601 = vadd.f32 0.0, %v2600
        %v2602 = vpop.f32.mrf.mxu0
        %v2603 = vpop.f32.mrf.mxu0
        %v2604 = vadd.f32 0.0, %v2603
        %v2605 = vpop.f32.mrf.mxu0
        %2606 = vmatprep.mubr.bf16.mxu0 0
        %2607 = vmatmul.mubr.bf16.gmra.mxu0 %v2053
        %v2608 = vpop.f32.mrf.mxu0
        %v2609 = vadd.f32 0.0, %v2608
        %v2610 = vpop.f32.mrf.mxu0
        %v2611 = vpop.f32.mrf.mxu0
        %v2612 = vadd.f32 0.0, %v2611
        %v2613 = vpop.f32.mrf.mxu0
        %2614 = vmatprep.mubr.bf16.mxu0 0
        %2615 = vmatmul.mubr.bf16.gmra.mxu0 %v2054
        %v2616 = vpop.f32.mrf.mxu0
        %v2617 = vadd.f32 0.0, %v2616
        %v2618 = vpop.f32.mrf.mxu0
        %v2619 = vpop.f32.mrf.mxu0
        %v2620 = vadd.f32 0.0, %v2619
        %v2621 = vpop.f32.mrf.mxu0
        %2622 = vmatprep.mubr.bf16.mxu0 0
        %2623 = vmatmul.mubr.bf16.gmra.mxu0 %v2055
        %v2624 = vpop.f32.mrf.mxu0
        %v2625 = vadd.f32 0.0, %v2624
        %v2626 = vpop.f32.mrf.mxu0
        %v2627 = vpop.f32.mrf.mxu0
        %v2628 = vadd.f32 0.0, %v2627
        %v2629 = vpop.f32.mrf.mxu0
        %2630 = vmatprep.mubr.bf16.mxu0 0
        %2631 = vmatmul.mubr.bf16.gmra.mxu0 %v2056
        %v2632 = vpop.f32.mrf.mxu0
        %v2633 = vadd.f32 0.0, %v2632
        %v2634 = vpop.f32.mrf.mxu0
        %v2635 = vpop.f32.mrf.mxu0
        %v2636 = vadd.f32 0.0, %v2635
        %v2637 = vpop.f32.mrf.mxu0
        %2638 = vmatprep.mubr.bf16.mxu0 0
        %2639 = vmatmul.mubr.bf16.gmra.mxu0 %v2057
        %v2640 = vpop.f32.mrf.mxu0
        %v2641 = vadd.f32 0.0, %v2640
        %v2642 = vpop.f32.mrf.mxu0
        %v2643 = vpop.f32.mrf.mxu0
        %v2644 = vadd.f32 0.0, %v2643
        %v2645 = vpop.f32.mrf.mxu0
        %2646 = vmatprep.mubr.bf16.mxu0 0
        %2647 = vmatmul.mubr.bf16.gmra.mxu0 %v2058
        %v2648 = vpop.f32.mrf.mxu0
        %v2649 = vadd.f32 0.0, %v2648
        %v2650 = vpop.f32.mrf.mxu0
        %v2651 = vpop.f32.mrf.mxu0
        %v2652 = vadd.f32 0.0, %v2651
        %v2653 = vpop.f32.mrf.mxu0
        %2654 = vmatprep.mubr.bf16.mxu0 0
        %2655 = vmatmul.mubr.bf16.gmra.mxu0 %v2059
        %v2656 = vpop.f32.mrf.mxu0
        %v2657 = vadd.f32 0.0, %v2656
        %v2658 = vpop.f32.mrf.mxu0
        %v2659 = vpop.f32.mrf.mxu0
        %v2660 = vadd.f32 0.0, %v2659
        %v2661 = vpop.f32.mrf.mxu0
        %2662 = vmatprep.mubr.bf16.mxu0 0
        %2663 = vmatmul.mubr.bf16.gmra.mxu0 %v2060
        %v2664 = vpop.f32.mrf.mxu0
        %v2665 = vadd.f32 0.0, %v2664
        %v2666 = vpop.f32.mrf.mxu0
        %v2667 = vpop.f32.mrf.mxu0
        %v2668 = vadd.f32 0.0, %v2667
        %v2669 = vpop.f32.mrf.mxu0
        %2670 = vmatprep.mubr.bf16.mxu0 0
        %2671 = vmatmul.mubr.bf16.gmra.mxu0 %v2061
        %v2672 = vpop.f32.mrf.mxu0
        %v2673 = vadd.f32 0.0, %v2672
        %v2674 = vpop.f32.mrf.mxu0
        %v2675 = vpop.f32.mrf.mxu0
        %v2676 = vadd.f32 0.0, %v2675
        %v2677 = vpop.f32.mrf.mxu0
        %2678 = vmatprep.mubr.bf16.mxu0 0
        %2679 = vmatmul.mubr.bf16.gmra.mxu0 %v2062
        %v2680 = vpop.f32.mrf.mxu0
        %v2681 = vadd.f32 0.0, %v2680
        %v2682 = vpop.f32.mrf.mxu0
        %v2683 = vpop.f32.mrf.mxu0
        %v2684 = vadd.f32 0.0, %v2683
        %v2685 = vpop.f32.mrf.mxu0
        %2686 = vmatprep.mubr.bf16.mxu0 0
        %2687 = vmatmul.mubr.bf16.gmra.mxu0 %v2063
        %v2688 = vpop.f32.mrf.mxu0
        %v2689 = vadd.f32 0.0, %v2688
        %v2690 = vpop.f32.mrf.mxu0
        %v2691 = vpop.f32.mrf.mxu0
        %v2692 = vadd.f32 0.0, %v2691
        %v2693 = vpop.f32.mrf.mxu0
        %2694 = vmatprep.mubr.bf16.mxu0 0
        %2695 = vmatmul.mubr.bf16.gmra.mxu0 %v2064
        %v2696 = vpop.f32.mrf.mxu0
        %v2697 = vadd.f32 0.0, %v2696
        %v2698 = vpop.f32.mrf.mxu0
        %v2699 = vpop.f32.mrf.mxu0
        %v2700 = vadd.f32 0.0, %v2699
        %v2701 = vpop.f32.mrf.mxu0
        %2702 = vmatprep.mubr.bf16.mxu0 0
        %2703 = vmatmul.mubr.bf16.gmra.mxu0 %v2065
        %v2704 = vpop.f32.mrf.mxu0
        %v2705 = vadd.f32 0.0, %v2704
        %v2706 = vpop.f32.mrf.mxu0
        %v2707 = vpop.f32.mrf.mxu0
        %v2708 = vadd.f32 0.0, %v2707
        %v2709 = vpop.f32.mrf.mxu0
        %2710 = vmatprep.mubr.bf16.mxu0 0
        %2711 = vmatmul.mubr.bf16.gmra.mxu0 %v2066
        %v2712 = vpop.f32.mrf.mxu0
        %v2713 = vadd.f32 0.0, %v2712
        %v2714 = vpop.f32.mrf.mxu0
        %v2715 = vpop.f32.mrf.mxu0
        %v2716 = vadd.f32 0.0, %v2715
        %v2717 = vpop.f32.mrf.mxu0
        %2718 = vmatprep.mubr.bf16.mxu0 0
        %2719 = vmatmul.mubr.bf16.gmra.mxu0 %v2067
        %v2720 = vpop.f32.mrf.mxu0
        %v2721 = vadd.f32 0.0, %v2720
        %v2722 = vpop.f32.mrf.mxu0
        %v2723 = vpop.f32.mrf.mxu0
        %v2724 = vadd.f32 0.0, %v2723
        %v2725 = vpop.f32.mrf.mxu0
        %2726 = vmatprep.mubr.bf16.mxu0 0
        %2727 = vmatmul.mubr.bf16.gmra.mxu0 %v2068
        %v2728 = vpop.f32.mrf.mxu0
        %v2729 = vadd.f32 0.0, %v2728
        %v2730 = vpop.f32.mrf.mxu0
        %v2731 = vpop.f32.mrf.mxu0
        %v2732 = vadd.f32 0.0, %v2731
        %v2733 = vpop.f32.mrf.mxu0
        %2734 = vmatprep.mubr.bf16.mxu0 0
        %2735 = vmatmul.mubr.bf16.gmra.mxu0 %v2069
        %v2736 = vpop.f32.mrf.mxu0
        %v2737 = vadd.f32 0.0, %v2736
        %v2738 = vpop.f32.mrf.mxu0
        %v2739 = vpop.f32.mrf.mxu0
        %v2740 = vadd.f32 0.0, %v2739
        %v2741 = vpop.f32.mrf.mxu0
        %2742 = vmatprep.mubr.bf16.mxu0 0
        %2743 = vmatmul.mubr.bf16.gmra.mxu0 %v2070
        %v2744 = vpop.f32.mrf.mxu0
        %v2745 = vadd.f32 0.0, %v2744
        %v2746 = vpop.f32.mrf.mxu0
        %v2747 = vpop.f32.mrf.mxu0
        %v2748 = vadd.f32 0.0, %v2747
        %v2749 = vpop.f32.mrf.mxu0
        %2750 = vmatprep.mubr.bf16.mxu0 0
        %2751 = vmatmul.mubr.bf16.gmra.mxu0 %v2071
        %v2752 = vpop.f32.mrf.mxu0
        %v2753 = vadd.f32 0.0, %v2752
        %v2754 = vpop.f32.mrf.mxu0
        %v2755 = vpop.f32.mrf.mxu0
        %v2756 = vadd.f32 0.0, %v2755
        %v2757 = vpop.f32.mrf.mxu0
        %2758 = vmatprep.mubr.bf16.mxu0 0
        %2759 = vmatmul.mubr.bf16.gmra.mxu0 %v2072
        %v2760 = vpop.f32.mrf.mxu0
        %v2761 = vadd.f32 0.0, %v2760
        %v2762 = vpop.f32.mrf.mxu0
        %v2763 = vpop.f32.mrf.mxu0
        %v2764 = vadd.f32 0.0, %v2763
        %v2765 = vpop.f32.mrf.mxu0
        %2766 = vmatprep.mubr.bf16.mxu0 0
        %2767 = vmatmul.mubr.bf16.gmra.mxu0 %v2073
        %v2768 = vpop.f32.mrf.mxu0
        %v2769 = vadd.f32 0.0, %v2768
        %v2770 = vpop.f32.mrf.mxu0
        %v2771 = vpop.f32.mrf.mxu0
        %v2772 = vadd.f32 0.0, %v2771
        %v2773 = vpop.f32.mrf.mxu0
        %2774 = vmatprep.mubr.bf16.mxu0 0
        %2775 = vmatmul.mubr.bf16.gmra.mxu0 %v2074
        %v2776 = vpop.f32.mrf.mxu0
        %v2777 = vadd.f32 0.0, %v2776
        %v2778 = vpop.f32.mrf.mxu0
        %v2779 = vpop.f32.mrf.mxu0
        %v2780 = vadd.f32 0.0, %v2779
        %v2781 = vpop.f32.mrf.mxu0
        %2782 = vmatprep.mubr.bf16.mxu0 0
        %2783 = vmatmul.mubr.bf16.gmra.mxu0 %v2075
        %v2784 = vpop.f32.mrf.mxu0
        %v2785 = vadd.f32 0.0, %v2784
        %v2786 = vpop.f32.mrf.mxu0
        %v2787 = vpop.f32.mrf.mxu0
        %v2788 = vadd.f32 0.0, %v2787
        %v2789 = vpop.f32.mrf.mxu0
        %2790 = vmatprep.mubr.bf16.mxu0 0
        %2791 = vmatmul.mubr.bf16.gmra.mxu0 %v2076
        %v2792 = vpop.f32.mrf.mxu0
        %v2793 = vadd.f32 0.0, %v2792
        %v2794 = vpop.f32.mrf.mxu0
        %v2795 = vpop.f32.mrf.mxu0
        %v2796 = vadd.f32 0.0, %v2795
        %v2797 = vpop.f32.mrf.mxu0
        %2798 = vmatprep.mubr.bf16.mxu0 0
        %2799 = vmatmul.mubr.bf16.gmra.mxu0 %v2077
        %v2800 = vpop.f32.mrf.mxu0
        %v2801 = vadd.f32 0.0, %v2800
        %v2802 = vpop.f32.mrf.mxu0
        %v2803 = vpop.f32.mrf.mxu0
        %v2804 = vadd.f32 0.0, %v2803
        %v2805 = vpop.f32.mrf.mxu0
        %2806 = vmatprep.mubr.bf16.mxu0 0
        %2807 = vmatmul.mubr.bf16.gmra.mxu0 %v2078
        %v2808 = vpop.f32.mrf.mxu0
        %v2809 = vadd.f32 0.0, %v2808
        %v2810 = vpop.f32.mrf.mxu0
        %v2811 = vpop.f32.mrf.mxu0
        %v2812 = vadd.f32 0.0, %v2811
        %v2813 = vpop.f32.mrf.mxu0
        %2814 = vmatprep.mubr.bf16.mxu0 0
        %2815 = vmatmul.mubr.bf16.gmra.mxu0 %v2079
        %v2816 = vpop.f32.mrf.mxu0
        %v2817 = vadd.f32 0.0, %v2816
        %v2818 = vpop.f32.mrf.mxu0
        %v2819 = vpop.f32.mrf.mxu0
        %v2820 = vadd.f32 0.0, %v2819
        %v2821 = vpop.f32.mrf.mxu0
        %2822 = vmatprep.mubr.bf16.mxu0 0
        %2823 = vmatmul.mubr.bf16.gmra.mxu0 %v2080
        %v2824 = vpop.f32.mrf.mxu0
        %v2825 = vadd.f32 0.0, %v2824
        %v2826 = vpop.f32.mrf.mxu0
        %v2827 = vpop.f32.mrf.mxu0
        %v2828 = vadd.f32 0.0, %v2827
        %v2829 = vpop.f32.mrf.mxu0
        %2830 = vmatprep.mubr.bf16.mxu0 0
        %2831 = vmatmul.mubr.bf16.gmra.mxu0 %v2081
        %v2832 = vpop.f32.mrf.mxu0
        %v2833 = vadd.f32 0.0, %v2832
        %v2834 = vpop.f32.mrf.mxu0
        %v2835 = vpop.f32.mrf.mxu0
        %v2836 = vadd.f32 0.0, %v2835
        %v2837 = vpop.f32.mrf.mxu0
        %2838 = vmatprep.mubr.bf16.mxu0 0
        %2839 = vmatmul.mubr.bf16.gmra.mxu0 %v2082
        %v2840 = vpop.f32.mrf.mxu0
        %v2841 = vadd.f32 0.0, %v2840
        %v2842 = vpop.f32.mrf.mxu0
        %v2843 = vpop.f32.mrf.mxu0
        %v2844 = vadd.f32 0.0, %v2843
        %v2845 = vpop.f32.mrf.mxu0
        %2846 = vmatprep.mubr.bf16.mxu0 0
        %2847 = vmatmul.mubr.bf16.gmra.mxu0 %v2083
        %v2848 = vpop.f32.mrf.mxu0
        %v2849 = vadd.f32 0.0, %v2848
        %v2850 = vpop.f32.mrf.mxu0
        %v2851 = vpop.f32.mrf.mxu0
        %v2852 = vadd.f32 0.0, %v2851
        %v2853 = vpop.f32.mrf.mxu0
        %2854 = vmatprep.mubr.bf16.mxu0 0
        %2855 = vmatmul.mubr.bf16.gmra.mxu0 %v2084
        %v2856 = vpop.f32.mrf.mxu0
        %v2857 = vadd.f32 0.0, %v2856
        %v2858 = vpop.f32.mrf.mxu0
        %v2859 = vpop.f32.mrf.mxu0
        %v2860 = vadd.f32 0.0, %v2859
        %v2861 = vpop.f32.mrf.mxu0
        %2862 = vmatprep.mubr.bf16.mxu0 0
        %2863 = vmatmul.mubr.bf16.gmra.mxu0 %v2085
        %v2864 = vpop.f32.mrf.mxu0
        %v2865 = vadd.f32 0.0, %v2864
        %v2866 = vpop.f32.mrf.mxu0
        %v2867 = vpop.f32.mrf.mxu0
        %v2868 = vadd.f32 0.0, %v2867
        %v2869 = vpop.f32.mrf.mxu0
        %2870 = vmatprep.mubr.bf16.mxu0 0
        %2871 = vmatmul.mubr.bf16.gmra.mxu0 %v2086
        %v2872 = vpop.f32.mrf.mxu0
        %v2873 = vadd.f32 0.0, %v2872
        %v2874 = vpop.f32.mrf.mxu0
        %v2875 = vpop.f32.mrf.mxu0
        %v2876 = vadd.f32 0.0, %v2875
        %v2877 = vpop.f32.mrf.mxu0
        %2878 = vmatprep.mubr.bf16.mxu0 0
        %2879 = vmatmul.mubr.bf16.gmra.mxu0 %v2087
        %v2880 = vpop.f32.mrf.mxu0
        %v2881 = vadd.f32 0.0, %v2880
        %v2882 = vpop.f32.mrf.mxu0
        %v2883 = vpop.f32.mrf.mxu0
        %v2884 = vadd.f32 0.0, %v2883
        %v2885 = vpop.f32.mrf.mxu0
        %2886 = vmatprep.mubr.bf16.mxu0 0
        %2887 = vmatmul.mubr.bf16.gmra.mxu0 %v2088
        %v2888 = vpop.f32.mrf.mxu0
        %v2889 = vadd.f32 0.0, %v2888
        %v2890 = vpop.f32.mrf.mxu0
        %v2891 = vpop.f32.mrf.mxu0
        %v2892 = vadd.f32 0.0, %v2891
        %v2893 = vpop.f32.mrf.mxu0
        %2894 = vmatprep.mubr.bf16.mxu0 0
        %2895 = vmatmul.mubr.bf16.gmra.mxu0 %v2089
        %v2896 = vpop.f32.mrf.mxu0
        %v2897 = vadd.f32 0.0, %v2896
        %v2898 = vpop.f32.mrf.mxu0
        %v2899 = vpop.f32.mrf.mxu0
        %v2900 = vadd.f32 0.0, %v2899
        %v2901 = vpop.f32.mrf.mxu0
        %2902 = vmatprep.mubr.bf16.mxu0 0
        %2903 = vmatmul.mubr.bf16.gmra.mxu0 %v2090
        %v2904 = vpop.f32.mrf.mxu0
        %v2905 = vadd.f32 0.0, %v2904
        %v2906 = vpop.f32.mrf.mxu0
        %v2907 = vpop.f32.mrf.mxu0
        %v2908 = vadd.f32 0.0, %v2907
        %v2909 = vpop.f32.mrf.mxu0
        %2910 = vmatprep.mubr.bf16.mxu0 0
        %2911 = vmatmul.mubr.bf16.gmra.mxu0 %v2091
        %v2912 = vpop.f32.mrf.mxu0
        %v2913 = vadd.f32 0.0, %v2912
        %v2914 = vpop.f32.mrf.mxu0
        %v2915 = vpop.f32.mrf.mxu0
        %v2916 = vadd.f32 0.0, %v2915
        %v2917 = vpop.f32.mrf.mxu0
        %2918 = vmatprep.mubr.bf16.mxu0 0
        %2919 = vmatmul.mubr.bf16.gmra.mxu0 %v2092
        %v2920 = vpop.f32.mrf.mxu0
        %v2921 = vadd.f32 0.0, %v2920
        %v2922 = vpop.f32.mrf.mxu0
        %v2923 = vpop.f32.mrf.mxu0
        %v2924 = vadd.f32 0.0, %v2923
        %v2925 = vpop.f32.mrf.mxu0
        %2926 = vmatprep.mubr.bf16.mxu0 0
        %2927 = vmatmul.mubr.bf16.gmra.mxu0 %v2093
        %v2928 = vpop.f32.mrf.mxu0
        %v2929 = vadd.f32 0.0, %v2928
        %v2930 = vpop.f32.mrf.mxu0
        %v2931 = vpop.f32.mrf.mxu0
        %v2932 = vadd.f32 0.0, %v2931
        %v2933 = vpop.f32.mrf.mxu0
        %2934 = vmatprep.mubr.bf16.mxu0 0
        %2935 = vmatmul.mubr.bf16.gmra.mxu0 %v2094
        %v2936 = vpop.f32.mrf.mxu0
        %v2937 = vadd.f32 0.0, %v2936
        %v2938 = vpop.f32.mrf.mxu0
        %v2939 = vpop.f32.mrf.mxu0
        %v2940 = vadd.f32 0.0, %v2939
        %v2941 = vpop.f32.mrf.mxu0
        %2942 = vmatprep.mubr.bf16.mxu0 0
        %2943 = vmatmul.mubr.bf16.gmra.mxu0 %v2095
        %v2944 = vpop.f32.mrf.mxu0
        %v2945 = vadd.f32 0.0, %v2944
        %v2946 = vpop.f32.mrf.mxu0
        %v2947 = vpop.f32.mrf.mxu0
        %v2948 = vadd.f32 0.0, %v2947
        %v2949 = vpop.f32.mrf.mxu0
        %2950 = vmatprep.mubr.bf16.mxu0 0
        %2951 = vmatmul.mubr.bf16.gmra.mxu0 %v2096
        %v2952 = vpop.f32.mrf.mxu0
        %v2953 = vadd.f32 0.0, %v2952
        %v2954 = vpop.f32.mrf.mxu0
        %v2955 = vpop.f32.mrf.mxu0
        %v2956 = vadd.f32 0.0, %v2955
        %v2957 = vpop.f32.mrf.mxu0
        %2958 = vmatprep.mubr.bf16.mxu0 0
        %2959 = vmatmul.mubr.bf16.gmra.mxu0 %v2097
        %v2960 = vpop.f32.mrf.mxu0
        %v2961 = vadd.f32 0.0, %v2960
        %v2962 = vpop.f32.mrf.mxu0
        %v2963 = vpop.f32.mrf.mxu0
        %v2964 = vadd.f32 0.0, %v2963
        %v2965 = vpop.f32.mrf.mxu0
        %2966 = vmatprep.mubr.bf16.mxu0 0
        %2967 = vmatmul.mubr.bf16.gmra.mxu0 %v2098
        %v2968 = vpop.f32.mrf.mxu0
        %v2969 = vadd.f32 0.0, %v2968
        %v2970 = vpop.f32.mrf.mxu0
        %v2971 = vpop.f32.mrf.mxu0
        %v2972 = vadd.f32 0.0, %v2971
        %v2973 = vpop.f32.mrf.mxu0
        %2974 = vmatprep.mubr.bf16.mxu0 0
        %2975 = vmatmul.mubr.bf16.gmra.mxu0 %v2099
        %v2976 = vpop.f32.mrf.mxu0
        %v2977 = vadd.f32 0.0, %v2976
        %v2978 = vpop.f32.mrf.mxu0
        %v2979 = vpop.f32.mrf.mxu0
        %v2980 = vadd.f32 0.0, %v2979
        %v2981 = vpop.f32.mrf.mxu0
        %2982 = vmatprep.mubr.bf16.mxu0 0
        %2983 = vmatmul.mubr.bf16.gmra.mxu0 %v2100
        %v2984 = vpop.f32.mrf.mxu0
        %v2985 = vadd.f32 0.0, %v2984
        %v2986 = vpop.f32.mrf.mxu0
        %v2987 = vpop.f32.mrf.mxu0
        %v2988 = vadd.f32 0.0, %v2987
        %v2989 = vpop.f32.mrf.mxu0
        %2990 = vmatprep.mubr.bf16.mxu0 0
        %2991 = vmatmul.mubr.bf16.gmra.mxu0 %v2101
        %v2992 = vpop.f32.mrf.mxu0
        %v2993 = vadd.f32 0.0, %v2992
        %v2994 = vpop.f32.mrf.mxu0
        %v2995 = vpop.f32.mrf.mxu0
        %v2996 = vadd.f32 0.0, %v2995
        %v2997 = vpop.f32.mrf.mxu0
        %2998 = vmatprep.mubr.bf16.mxu0 0
        %2999 = vmatmul.mubr.bf16.gmra.mxu0 %v2102
        %v3000 = vpop.f32.mrf.mxu0
        %v3001 = vadd.f32 0.0, %v3000
        %v3002 = vpop.f32.mrf.mxu0
        %v3003 = vpop.f32.mrf.mxu0
        %v3004 = vadd.f32 0.0, %v3003
        %v3005 = vpop.f32.mrf.mxu0
        %3006 = vmatprep.mubr.bf16.mxu0 0
        %3007 = vmatmul.mubr.bf16.gmra.mxu0 %v2103
        %v3008 = vpop.f32.mrf.mxu0
        %v3009 = vadd.f32 0.0, %v3008
        %v3010 = vpop.f32.mrf.mxu0
        %v3011 = vpop.f32.mrf.mxu0
        %v3012 = vadd.f32 0.0, %v3011
        %v3013 = vpop.f32.mrf.mxu0
        %3014 = vmatprep.mubr.bf16.mxu0 0
        %3015 = vmatmul.mubr.bf16.gmra.mxu0 %v2104
        %v3016 = vpop.f32.mrf.mxu0
        %v3017 = vadd.f32 0.0, %v3016
        %v3018 = vpop.f32.mrf.mxu0
        %v3019 = vpop.f32.mrf.mxu0
        %v3020 = vadd.f32 0.0, %v3019
        %v3021 = vpop.f32.mrf.mxu0
        %3022 = vmatprep.mubr.bf16.mxu0 0
        %3023 = vmatmul.mubr.bf16.gmra.mxu0 %v2105
        %v3024 = vpop.f32.mrf.mxu0
        %v3025 = vadd.f32 0.0, %v3024
        %v3026 = vpop.f32.mrf.mxu0
        %v3027 = vpop.f32.mrf.mxu0
        %v3028 = vadd.f32 0.0, %v3027
        %v3029 = vpop.f32.mrf.mxu0
        %3030 = vmatprep.mubr.bf16.mxu0 0
        %3031 = vmatmul.mubr.bf16.gmra.mxu0 %v2106
        %v3032 = vpop.f32.mrf.mxu0
        %v3033 = vadd.f32 0.0, %v3032
        %v3034 = vpop.f32.mrf.mxu0
        %v3035 = vpop.f32.mrf.mxu0
        %v3036 = vadd.f32 0.0, %v3035
        %v3037 = vpop.f32.mrf.mxu0
        %3038 = vmatprep.mubr.bf16.mxu0 0
        %3039 = vmatmul.mubr.bf16.gmra.mxu0 %v2107
        %v3040 = vpop.f32.mrf.mxu0
        %v3041 = vadd.f32 0.0, %v3040
        %v3042 = vpop.f32.mrf.mxu0
        %v3043 = vpop.f32.mrf.mxu0
        %v3044 = vadd.f32 0.0, %v3043
        %v3045 = vpop.f32.mrf.mxu0
        %3046 = vmatprep.mubr.bf16.mxu0 0
        %3047 = vmatmul.mubr.bf16.gmra.mxu0 %v2108
        %v3048 = vpop.f32.mrf.mxu0
        %v3049 = vadd.f32 0.0, %v3048
        %v3050 = vpop.f32.mrf.mxu0
        %v3051 = vpop.f32.mrf.mxu0
        %v3052 = vadd.f32 0.0, %v3051
        %v3053 = vpop.f32.mrf.mxu0
        %3054 = vmatprep.mubr.bf16.mxu0 0
        %3055 = vmatmul.mubr.bf16.gmra.mxu0 %v2109
        %v3056 = vpop.f32.mrf.mxu0
        %v3057 = vadd.f32 0.0, %v3056
        %v3058 = vpop.f32.mrf.mxu0
        %v3059 = vpop.f32.mrf.mxu0
        %v3060 = vadd.f32 0.0, %v3059
        %v3061 = vpop.f32.mrf.mxu0
        %3062 = vmatprep.mubr.bf16.mxu0 0
        %3063 = vmatmul.mubr.bf16.gmra.mxu0 %v2110
        %v3064 = vpop.f32.mrf.mxu0
        %v3065 = vadd.f32 0.0, %v3064
        %v3066 = vpop.f32.mrf.mxu0
        %v3067 = vpop.f32.mrf.mxu0
        %v3068 = vadd.f32 0.0, %v3067
        %v3069 = vpop.f32.mrf.mxu0
        %3070 = vmatprep.mubr.bf16.mxu0 0
        %3071 = vmatmul.mubr.bf16.gmra.mxu0 %v2111
        %v3072 = vpop.f32.mrf.mxu0
        %v3073 = vadd.f32 0.0, %v3072
        %v3074 = vpop.f32.mrf.mxu0
        %v3075 = vpop.f32.mrf.mxu0
        %v3076 = vadd.f32 0.0, %v3075
        %v3077 = vpop.f32.mrf.mxu0
        %3078 = vmatprep.mubr.bf16.mxu0 0
        %3079 = vmatmul.mubr.bf16.gmra.mxu0 %v2112
        %v3080 = vpop.f32.mrf.mxu0
        %v3081 = vadd.f32 0.0, %v3080
        %v3082 = vpop.f32.mrf.mxu0
        %v3083 = vpop.f32.mrf.mxu0
        %v3084 = vadd.f32 0.0, %v3083
        %v3085 = vpop.f32.mrf.mxu0
        %3086 = vmatprep.mubr.bf16.mxu0 0
        %3087 = vmatmul.mubr.bf16.gmra.mxu0 %v2113
        %v3088 = vpop.f32.mrf.mxu0
        %v3089 = vadd.f32 0.0, %v3088
        %v3090 = vpop.f32.mrf.mxu0
        %v3091 = vpop.f32.mrf.mxu0
        %v3092 = vadd.f32 0.0, %v3091
        %v3093 = vpop.f32.mrf.mxu0
        %3094 = vmatprep.mubr.bf16.mxu0 0
        %3095 = vmatmul.mubr.bf16.gmra.mxu0 %v2114
        %v3096 = vpop.f32.mrf.mxu0
        %v3097 = vadd.f32 0.0, %v3096
        %v3098 = vpop.f32.mrf.mxu0
        %v3099 = vpop.f32.mrf.mxu0
        %v3100 = vadd.f32 0.0, %v3099
        %v3101 = vpop.f32.mrf.mxu0
        %3102 = vmatprep.mubr.bf16.mxu0 0
        %3103 = vmatmul.mubr.bf16.gmra.mxu0 %v2115
        %v3104 = vpop.f32.mrf.mxu0
        %v3105 = vadd.f32 0.0, %v3104
        %v3106 = vpop.f32.mrf.mxu0
        %v3107 = vpop.f32.mrf.mxu0
        %v3108 = vadd.f32 0.0, %v3107
        %v3109 = vpop.f32.mrf.mxu0
        %3110 = vmatprep.mubr.bf16.mxu0 0
        %3111 = vmatmul.mubr.bf16.gmra.mxu0 %v2116
        %v3112 = vpop.f32.mrf.mxu0
        %v3113 = vadd.f32 0.0, %v3112
        %v3114 = vpop.f32.mrf.mxu0
        %v3115 = vpop.f32.mrf.mxu0
        %v3116 = vadd.f32 0.0, %v3115
        %v3117 = vpop.f32.mrf.mxu0
        %3118 = vmatprep.mubr.bf16.mxu0 0
        %3119 = vmatmul.mubr.bf16.gmra.mxu0 %v2117
        %v3120 = vpop.f32.mrf.mxu0
        %v3121 = vadd.f32 0.0, %v3120
        %v3122 = vpop.f32.mrf.mxu0
        %v3123 = vpop.f32.mrf.mxu0
        %v3124 = vadd.f32 0.0, %v3123
        %v3125 = vpop.f32.mrf.mxu0
        %3126 = vmatprep.mubr.bf16.mxu0 0
        %3127 = vmatmul.mubr.bf16.gmra.mxu0 %v2118
        %v3128 = vpop.f32.mrf.mxu0
        %v3129 = vadd.f32 0.0, %v3128
        %v3130 = vpop.f32.mrf.mxu0
        %v3131 = vpop.f32.mrf.mxu0
        %v3132 = vadd.f32 0.0, %v3131
        %v3133 = vpop.f32.mrf.mxu0
        %3134 = vmatprep.mubr.bf16.mxu0 0
        %3135 = vmatmul.mubr.bf16.gmra.mxu0 %v2119
        %v3136 = vpop.f32.mrf.mxu0
        %v3137 = vadd.f32 0.0, %v3136
        %v3138 = vpop.f32.mrf.mxu0
        %v3139 = vpop.f32.mrf.mxu0
        %v3140 = vadd.f32 0.0, %v3139
        %v3141 = vpop.f32.mrf.mxu0
        %3142 = vmatprep.mubr.bf16.mxu0 0
        %3143 = vmatmul.mubr.bf16.gmra.mxu0 %v2120
        %v3144 = vpop.f32.mrf.mxu0
        %v3145 = vadd.f32 0.0, %v3144
        %v3146 = vpop.f32.mrf.mxu0
        %v3147 = vpop.f32.mrf.mxu0
        %v3148 = vadd.f32 0.0, %v3147
        %v3149 = vpop.f32.mrf.mxu0
        %3150 = vmatprep.mubr.bf16.mxu0 0
        %3151 = vmatmul.mubr.bf16.gmra.mxu0 %v2121
        %v3152 = vpop.f32.mrf.mxu0
        %v3153 = vadd.f32 0.0, %v3152
        %v3154 = vpop.f32.mrf.mxu0
        %v3155 = vpop.f32.mrf.mxu0
        %v3156 = vadd.f32 0.0, %v3155
        %v3157 = vpop.f32.mrf.mxu0
        %3158 = vmatprep.mubr.bf16.mxu0 0
        %3159 = vmatmul.mubr.bf16.gmra.mxu0 %v2122
        %v3160 = vpop.f32.mrf.mxu0
        %v3161 = vadd.f32 0.0, %v3160
        %v3162 = vpop.f32.mrf.mxu0
        %v3163 = vpop.f32.mrf.mxu0
        %v3164 = vadd.f32 0.0, %v3163
        %v3165 = vpop.f32.mrf.mxu0
        %3166 = vmatprep.mubr.bf16.mxu0 0
        %3167 = vmatmul.mubr.bf16.gmra.mxu0 %v2123
        %v3168 = vpop.f32.mrf.mxu0
        %v3169 = vadd.f32 0.0, %v3168
        %v3170 = vpop.f32.mrf.mxu0
        %v3171 = vpop.f32.mrf.mxu0
        %v3172 = vadd.f32 0.0, %v3171
        %v3173 = vpop.f32.mrf.mxu0
        %3174 = vmatprep.mubr.bf16.mxu0 0
        %3175 = vmatmul.mubr.bf16.gmra.mxu0 %v2124
        %v3176 = vpop.f32.mrf.mxu0
        %v3177 = vadd.f32 0.0, %v3176
        %v3178 = vpop.f32.mrf.mxu0
        %v3179 = vpop.f32.mrf.mxu0
        %v3180 = vadd.f32 0.0, %v3179
        %v3181 = vpop.f32.mrf.mxu0
        %3182 = vmatprep.mubr.bf16.mxu0 0
        %3183 = vmatmul.mubr.bf16.gmra.mxu0 %v2125
        %v3184 = vpop.f32.mrf.mxu0
        %v3185 = vadd.f32 0.0, %v3184
        %v3186 = vpop.f32.mrf.mxu0
        %v3187 = vpop.f32.mrf.mxu0
        %v3188 = vadd.f32 0.0, %v3187
        %v3189 = vpop.f32.mrf.mxu0
        %3190 = vmatprep.mubr.bf16.mxu0 0
        %3191 = vmatmul.mubr.bf16.gmra.mxu0 %v2126
        %v3192 = vpop.f32.mrf.mxu0
        %v3193 = vadd.f32 0.0, %v3192
        %v3194 = vpop.f32.mrf.mxu0
        %v3195 = vpop.f32.mrf.mxu0
        %v3196 = vadd.f32 0.0, %v3195
        %v3197 = vpop.f32.mrf.mxu0
        %3198 = vmatprep.mubr.bf16.mxu0 0
        %3199 = vmatmul.mubr.bf16.gmra.mxu0 %v2127
        %v3200 = vpop.f32.mrf.mxu0
        %v3201 = vadd.f32 0.0, %v3200
        %v3202 = vpop.f32.mrf.mxu0
        %v3203 = vpop.f32.mrf.mxu0
        %v3204 = vadd.f32 0.0, %v3203
        %v3205 = vpop.f32.mrf.mxu0
        %3206 = vmatprep.mubr.bf16.mxu0 0
        %3207 = vmatmul.mubr.bf16.gmra.mxu0 %v2128
        %v3208 = vpop.f32.mrf.mxu0
        %v3209 = vadd.f32 0.0, %v3208
        %v3210 = vpop.f32.mrf.mxu0
        %v3211 = vpop.f32.mrf.mxu0
        %v3212 = vadd.f32 0.0, %v3211
        %v3213 = vpop.f32.mrf.mxu0
        %3214 = vmatprep.mubr.bf16.mxu0 0
        %3215 = vmatmul.mubr.bf16.gmra.mxu0 %v2129
        %v3216 = vpop.f32.mrf.mxu0
        %v3217 = vadd.f32 0.0, %v3216
        %v3218 = vpop.f32.mrf.mxu0
        %v3219 = vpop.f32.mrf.mxu0
        %v3220 = vadd.f32 0.0, %v3219
        %v3221 = vpop.f32.mrf.mxu0
        %3222 = vmatprep.mubr.bf16.mxu0 0
        %3223 = vmatmul.mubr.bf16.gmra.mxu0 %v2130
        %v3224 = vpop.f32.mrf.mxu0
        %v3225 = vadd.f32 0.0, %v3224
        %v3226 = vpop.f32.mrf.mxu0
        %v3227 = vpop.f32.mrf.mxu0
        %v3228 = vadd.f32 0.0, %v3227
        %v3229 = vpop.f32.mrf.mxu0
        %3230 = vmatprep.mubr.bf16.mxu0 0
        %3231 = vmatmul.mubr.bf16.gmra.mxu0 %v2131
        %v3232 = vpop.f32.mrf.mxu0
        %v3233 = vadd.f32 0.0, %v3232
        %v3234 = vpop.f32.mrf.mxu0
        %v3235 = vpop.f32.mrf.mxu0
        %v3236 = vadd.f32 0.0, %v3235
        %v3237 = vpop.f32.mrf.mxu0
        %3238 = vmatprep.mubr.bf16.mxu0 0
        %3239 = vmatmul.mubr.bf16.gmra.mxu0 %v2132
        %v3240 = vpop.f32.mrf.mxu0
        %v3241 = vadd.f32 0.0, %v3240
        %v3242 = vpop.f32.mrf.mxu0
        %v3243 = vpop.f32.mrf.mxu0
        %v3244 = vadd.f32 0.0, %v3243
        %v3245 = vpop.f32.mrf.mxu0
        %3246 = vmatprep.mubr.bf16.mxu0 0
        %3247 = vmatmul.mubr.bf16.gmra.mxu0 %v2133
        %v3248 = vpop.f32.mrf.mxu0
        %v3249 = vadd.f32 0.0, %v3248
        %v3250 = vpop.f32.mrf.mxu0
        %v3251 = vpop.f32.mrf.mxu0
        %v3252 = vadd.f32 0.0, %v3251
        %v3253 = vpop.f32.mrf.mxu0
        %3254 = vmatprep.mubr.bf16.mxu0 0
        %3255 = vmatmul.mubr.bf16.gmra.mxu0 %v2134
        %v3256 = vpop.f32.mrf.mxu0
        %v3257 = vadd.f32 0.0, %v3256
        %v3258 = vpop.f32.mrf.mxu0
        %v3259 = vpop.f32.mrf.mxu0
        %v3260 = vadd.f32 0.0, %v3259
        %v3261 = vpop.f32.mrf.mxu0
        %3262 = vmatprep.mubr.bf16.mxu0 0
        %3263 = vmatmul.mubr.bf16.gmra.mxu0 %v2135
        %v3264 = vpop.f32.mrf.mxu0
        %v3265 = vadd.f32 0.0, %v3264
        %v3266 = vpop.f32.mrf.mxu0
        %v3267 = vpop.f32.mrf.mxu0
        %v3268 = vadd.f32 0.0, %v3267
        %v3269 = vpop.f32.mrf.mxu0
        %3270 = vmatprep.mubr.bf16.mxu0 0
        %3271 = vmatmul.mubr.bf16.gmra.mxu0 %v2136
        %v3272 = vpop.f32.mrf.mxu0
        %v3273 = vadd.f32 0.0, %v3272
        %v3274 = vpop.f32.mrf.mxu0
        %v3275 = vpop.f32.mrf.mxu0
        %v3276 = vadd.f32 0.0, %v3275
        %v3277 = vpop.f32.mrf.mxu0
        %3278 = vmatprep.mubr.bf16.mxu0 0
        %3279 = vmatmul.mubr.bf16.gmra.mxu0 %v2137
        %v3280 = vpop.f32.mrf.mxu0
        %v3281 = vadd.f32 0.0, %v3280
        %v3282 = vpop.f32.mrf.mxu0
        %v3283 = vpop.f32.mrf.mxu0
        %v3284 = vadd.f32 0.0, %v3283
        %v3285 = vpop.f32.mrf.mxu0
        %3286 = vmatprep.mubr.bf16.mxu0 0
        %3287 = vmatmul.mubr.bf16.gmra.mxu0 %v2138
        %v3288 = vpop.f32.mrf.mxu0
        %v3289 = vadd.f32 0.0, %v3288
        %v3290 = vpop.f32.mrf.mxu0
        %v3291 = vpop.f32.mrf.mxu0
        %v3292 = vadd.f32 0.0, %v3291
        %v3293 = vpop.f32.mrf.mxu0
        %3294 = vmatprep.mubr.bf16.mxu0 0
        %3295 = vmatmul.mubr.bf16.gmra.mxu0 %v2139
        %v3296 = vpop.f32.mrf.mxu0
        %v3297 = vadd.f32 0.0, %v3296
        %v3298 = vpop.f32.mrf.mxu0
        %v3299 = vpop.f32.mrf.mxu0
        %v3300 = vadd.f32 0.0, %v3299
        %v3301 = vpop.f32.mrf.mxu0
        %3302 = vmatprep.mubr.bf16.mxu0 0
        %3303 = vmatmul.mubr.bf16.gmra.mxu0 %v2140
        %v3304 = vpop.f32.mrf.mxu0
        %v3305 = vadd.f32 0.0, %v3304
        %v3306 = vpop.f32.mrf.mxu0
        %v3307 = vpop.f32.mrf.mxu0
        %v3308 = vadd.f32 0.0, %v3307
        %v3309 = vpop.f32.mrf.mxu0
        %3310 = vmatprep.mubr.bf16.mxu0 0
        %3311 = vmatmul.mubr.bf16.gmra.mxu0 %v2141
        %v3312 = vpop.f32.mrf.mxu0
        %v3313 = vadd.f32 0.0, %v3312
        %v3314 = vpop.f32.mrf.mxu0
        %v3315 = vpop.f32.mrf.mxu0
        %v3316 = vadd.f32 0.0, %v3315
        %v3317 = vpop.f32.mrf.mxu0
        %3318 = vmatprep.mubr.bf16.mxu0 0
        %3319 = vmatmul.mubr.bf16.gmra.mxu0 %v2142
        %v3320 = vpop.f32.mrf.mxu0
        %v3321 = vadd.f32 0.0, %v3320
        %v3322 = vpop.f32.mrf.mxu0
        %v3323 = vpop.f32.mrf.mxu0
        %v3324 = vadd.f32 0.0, %v3323
        %v3325 = vpop.f32.mrf.mxu0
        %3326 = vmatprep.mubr.bf16.mxu0 0
        %3327 = vmatmul.mubr.bf16.gmra.mxu0 %v2143
        %v3328 = vpop.f32.mrf.mxu0
        %v3329 = vadd.f32 0.0, %v3328
        %v3330 = vpop.f32.mrf.mxu0
        %v3331 = vpop.f32.mrf.mxu0
        %v3332 = vadd.f32 0.0, %v3331
        %v3333 = vpop.f32.mrf.mxu0
        %3334 = vmatprep.mubr.bf16.mxu0 0
        %3335 = vmatmul.mubr.bf16.gmra.mxu0 %v2144
        %v3336 = vpop.f32.mrf.mxu0
        %v3337 = vadd.f32 0.0, %v3336
        %v3338 = vpop.f32.mrf.mxu0
        %v3339 = vpop.f32.mrf.mxu0
        %v3340 = vadd.f32 0.0, %v3339
        %v3341 = vpop.f32.mrf.mxu0
        %3342 = vmatprep.mubr.bf16.mxu0 0
        %3343 = vmatmul.mubr.bf16.gmra.mxu0 %v2145
        %v3344 = vpop.f32.mrf.mxu0
        %v3345 = vadd.f32 0.0, %v3344
        %v3346 = vpop.f32.mrf.mxu0
        %v3347 = vpop.f32.mrf.mxu0
        %v3348 = vadd.f32 0.0, %v3347
        %v3349 = vpop.f32.mrf.mxu0
        %3350 = vmatprep.mubr.bf16.mxu0 0
        %3351 = vmatmul.mubr.bf16.gmra.mxu0 %v2146
        %v3352 = vpop.f32.mrf.mxu0
        %v3353 = vadd.f32 0.0, %v3352
        %v3354 = vpop.f32.mrf.mxu0
        %v3355 = vpop.f32.mrf.mxu0
        %v3356 = vadd.f32 0.0, %v3355
        %v3357 = vpop.f32.mrf.mxu0
        %3358 = vmatprep.mubr.bf16.mxu0 0
        %3359 = vmatmul.mubr.bf16.gmra.mxu0 %v2147
        %v3360 = vpop.f32.mrf.mxu0
        %v3361 = vadd.f32 0.0, %v3360
        %v3362 = vpop.f32.mrf.mxu0
        %v3363 = vpop.f32.mrf.mxu0
        %v3364 = vadd.f32 0.0, %v3363
        %v3365 = vpop.f32.mrf.mxu0
        %3366 = vmatprep.mubr.bf16.mxu0 0
        %3367 = vmatmul.mubr.bf16.gmra.mxu0 %v2148
        %v3368 = vpop.f32.mrf.mxu0
        %v3369 = vadd.f32 0.0, %v3368
        %v3370 = vpop.f32.mrf.mxu0
        %v3371 = vpop.f32.mrf.mxu0
        %v3372 = vadd.f32 0.0, %v3371
        %v3373 = vpop.f32.mrf.mxu0
        %3374 = vmatprep.mubr.bf16.mxu0 0
        %3375 = vmatmul.mubr.bf16.gmra.mxu0 %v2149
        %v3376 = vpop.f32.mrf.mxu0
        %v3377 = vadd.f32 0.0, %v3376
        %v3378 = vpop.f32.mrf.mxu0
        %v3379 = vpop.f32.mrf.mxu0
        %v3380 = vadd.f32 0.0, %v3379
        %v3381 = vpop.f32.mrf.mxu0
        %3382 = vdwg.mxu0
        %v3383 = vmax.f32 %v2361, %v2617
        %v3384 = vmax.f32 %v2364, %v2620
        %v3385 = vmax.f32 %v2369, %v2625
        %v3386 = vmax.f32 %v2372, %v2628
        %v3387 = vmax.f32 %v2377, %v2633
        %v3388 = vmax.f32 %v2380, %v2636
        %v3389 = vmax.f32 %v2385, %v2641
        %v3390 = vmax.f32 %v2388, %v2644
        %v3391 = vmax.f32 %v2393, %v2649
        %v3392 = vmax.f32 %v2396, %v2652
        %v3393 = vmax.f32 %v2401, %v2657
        %v3394 = vmax.f32 %v2404, %v2660
        %v3395 = vmax.f32 %v2409, %v2665
        %v3396 = vmax.f32 %v2412, %v2668
        %v3397 = vmax.f32 %v2417, %v2673
        %v3398 = vmax.f32 %v2420, %v2676
        %v3399 = vmax.f32 %v2425, %v2681
        %v3400 = vmax.f32 %v2428, %v2684
        %v3401 = vmax.f32 %v2433, %v2689
        %v3402 = vmax.f32 %v2436, %v2692
        %v3403 = vmax.f32 %v2441, %v2697
        %v3404 = vmax.f32 %v2444, %v2700
        %v3405 = vmax.f32 %v2449, %v2705
        %v3406 = vmax.f32 %v2452, %v2708
        %v3407 = vmax.f32 %v2457, %v2713
        %v3408 = vmax.f32 %v2460, %v2716
        %v3409 = vmax.f32 %v2465, %v2721
        %v3410 = vmax.f32 %v2468, %v2724
        %v3411 = vmax.f32 %v2473, %v2729
        %v3412 = vmax.f32 %v2476, %v2732
        %v3413 = vmax.f32 %v2481, %v2737
        %v3414 = vmax.f32 %v2484, %v2740
        %v3415 = vmax.f32 %v2489, %v2745
        %v3416 = vmax.f32 %v2492, %v2748
        %v3417 = vmax.f32 %v2497, %v2753
        %v3418 = vmax.f32 %v2500, %v2756
        %v3419 = vmax.f32 %v2505, %v2761
        %v3420 = vmax.f32 %v2508, %v2764
        %v3421 = vmax.f32 %v2513, %v2769
        %v3422 = vmax.f32 %v2516, %v2772
        %v3423 = vmax.f32 %v2521, %v2777
        %v3424 = vmax.f32 %v2524, %v2780
        %v3425 = vmax.f32 %v2529, %v2785
        %v3426 = vmax.f32 %v2532, %v2788
        %v3427 = vmax.f32 %v2537, %v2793
        %v3428 = vmax.f32 %v2540, %v2796
        %v3429 = vmax.f32 %v2545, %v2801
        %v3430 = vmax.f32 %v2548, %v2804
        %v3431 = vmax.f32 %v2553, %v2809
        %v3432 = vmax.f32 %v2556, %v2812
        %v3433 = vmax.f32 %v2561, %v2817
        %v3434 = vmax.f32 %v2564, %v2820
        %v3435 = vmax.f32 %v2569, %v2825
        %v3436 = vmax.f32 %v2572, %v2828
        %v3437 = vmax.f32 %v2577, %v2833
        %v3438 = vmax.f32 %v2580, %v2836
        %v3439 = vmax.f32 %v2585, %v2841
        %v3440 = vmax.f32 %v2588, %v2844
        %v3441 = vmax.f32 %v2593, %v2849
        %v3442 = vmax.f32 %v2596, %v2852
        %v3443 = vmax.f32 %v2601, %v2857
        %v3444 = vmax.f32 %v2604, %v2860
        %v3445 = vmax.f32 %v2609, %v2865
        %v3446 = vmax.f32 %v2612, %v2868
        %v3447 = vmax.f32 %v2873, %v3129
        %v3448 = vmax.f32 %v2876, %v3132
        %v3449 = vmax.f32 %v2881, %v3137
        %v3450 = vmax.f32 %v2884, %v3140
        %v3451 = vmax.f32 %v2889, %v3145
        %v3452 = vmax.f32 %v2892, %v3148
        %v3453 = vmax.f32 %v2897, %v3153
        %v3454 = vmax.f32 %v2900, %v3156
        %v3455 = vmax.f32 %v2905, %v3161
        %v3456 = vmax.f32 %v2908, %v3164
        %v3457 = vmax.f32 %v2913, %v3169
        %v3458 = vmax.f32 %v2916, %v3172
        %v3459 = vmax.f32 %v2921, %v3177
        %v3460 = vmax.f32 %v2924, %v3180
        %v3461 = vmax.f32 %v2929, %v3185
        %v3462 = vmax.f32 %v2932, %v3188
        %v3463 = vmax.f32 %v2937, %v3193
        %v3464 = vmax.f32 %v2940, %v3196
        %v3465 = vmax.f32 %v2945, %v3201
        %v3466 = vmax.f32 %v2948, %v3204
        %v3467 = vmax.f32 %v2953, %v3209
        %v3468 = vmax.f32 %v2956, %v3212
        %v3469 = vmax.f32 %v2961, %v3217
        %v3470 = vmax.f32 %v2964, %v3220
        %v3471 = vmax.f32 %v2969, %v3225
        %v3472 = vmax.f32 %v2972, %v3228
        %v3473 = vmax.f32 %v2977, %v3233
        %v3474 = vmax.f32 %v2980, %v3236
        %v3475 = vmax.f32 %v2985, %v3241
        %v3476 = vmax.f32 %v2988, %v3244
        %v3477 = vmax.f32 %v2993, %v3249
        %v3478 = vmax.f32 %v2996, %v3252
        %v3479 = vmax.f32 %v3001, %v3257
        %v3480 = vmax.f32 %v3004, %v3260
        %v3481 = vmax.f32 %v3009, %v3265
        %v3482 = vmax.f32 %v3012, %v3268
        %v3483 = vmax.f32 %v3017, %v3273
        %v3484 = vmax.f32 %v3020, %v3276
        %v3485 = vmax.f32 %v3025, %v3281
        %v3486 = vmax.f32 %v3028, %v3284
        %v3487 = vmax.f32 %v3033, %v3289
        %v3488 = vmax.f32 %v3036, %v3292
        %v3489 = vmax.f32 %v3041, %v3297
        %v3490 = vmax.f32 %v3044, %v3300
        %v3491 = vmax.f32 %v3049, %v3305
        %v3492 = vmax.f32 %v3052, %v3308
        %v3493 = vmax.f32 %v3057, %v3313
        %v3494 = vmax.f32 %v3060, %v3316
        %v3495 = vmax.f32 %v3065, %v3321
        %v3496 = vmax.f32 %v3068, %v3324
        %v3497 = vmax.f32 %v3073, %v3329
        %v3498 = vmax.f32 %v3076, %v3332
        %v3499 = vmax.f32 %v3081, %v3337
        %v3500 = vmax.f32 %v3084, %v3340
        %v3501 = vmax.f32 %v3089, %v3345
        %v3502 = vmax.f32 %v3092, %v3348
        %v3503 = vmax.f32 %v3097, %v3353
        %v3504 = vmax.f32 %v3100, %v3356
        %v3505 = vmax.f32 %v3105, %v3361
        %v3506 = vmax.f32 %v3108, %v3364
        %v3507 = vmax.f32 %v3113, %v3369
        %v3508 = vmax.f32 %v3116, %v3372
        %v3509 = vmax.f32 %v3121, %v3377
        %v3510 = vmax.f32 %v3124, %v3380
        %v3511 = vmax.f32 %v3383, %v3447
        %v3512 = vmax.f32 %v3384, %v3448
        %v3513 = vmax.f32 %v3385, %v3449
        %v3514 = vmax.f32 %v3386, %v3450
        %v3515 = vmax.f32 %v3387, %v3451
        %v3516 = vmax.f32 %v3388, %v3452
        %v3517 = vmax.f32 %v3389, %v3453
        %v3518 = vmax.f32 %v3390, %v3454
        %v3519 = vmax.f32 %v3391, %v3455
        %v3520 = vmax.f32 %v3392, %v3456
        %v3521 = vmax.f32 %v3393, %v3457
        %v3522 = vmax.f32 %v3394, %v3458
        %v3523 = vmax.f32 %v3395, %v3459
        %v3524 = vmax.f32 %v3396, %v3460
        %v3525 = vmax.f32 %v3397, %v3461
        %v3526 = vmax.f32 %v3398, %v3462
        %v3527 = vmax.f32 %v3399, %v3463
        %v3528 = vmax.f32 %v3400, %v3464
        %v3529 = vmax.f32 %v3401, %v3465
        %v3530 = vmax.f32 %v3402, %v3466
        %v3531 = vmax.f32 %v3403, %v3467
        %v3532 = vmax.f32 %v3404, %v3468
        %v3533 = vmax.f32 %v3405, %v3469
        %v3534 = vmax.f32 %v3406, %v3470
        %v3535 = vmax.f32 %v3407, %v3471
        %v3536 = vmax.f32 %v3408, %v3472
        %v3537 = vmax.f32 %v3409, %v3473
        %v3538 = vmax.f32 %v3410, %v3474
        %v3539 = vmax.f32 %v3411, %v3475
        %v3540 = vmax.f32 %v3412, %v3476
        %v3541 = vmax.f32 %v3413, %v3477
        %v3542 = vmax.f32 %v3414, %v3478
        %v3543 = vmax.f32 %v3415, %v3479
        %v3544 = vmax.f32 %v3416, %v3480
        %v3545 = vmax.f32 %v3417, %v3481
        %v3546 = vmax.f32 %v3418, %v3482
        %v3547 = vmax.f32 %v3419, %v3483
        %v3548 = vmax.f32 %v3420, %v3484
        %v3549 = vmax.f32 %v3421, %v3485
        %v3550 = vmax.f32 %v3422, %v3486
        %v3551 = vmax.f32 %v3423, %v3487
        %v3552 = vmax.f32 %v3424, %v3488
        %v3553 = vmax.f32 %v3425, %v3489
        %v3554 = vmax.f32 %v3426, %v3490
        %v3555 = vmax.f32 %v3427, %v3491
        %v3556 = vmax.f32 %v3428, %v3492
        %v3557 = vmax.f32 %v3429, %v3493
        %v3558 = vmax.f32 %v3430, %v3494
        %v3559 = vmax.f32 %v3431, %v3495
        %v3560 = vmax.f32 %v3432, %v3496
        %v3561 = vmax.f32 %v3433, %v3497
        %v3562 = vmax.f32 %v3434, %v3498
        %v3563 = vmax.f32 %v3435, %v3499
        %v3564 = vmax.f32 %v3436, %v3500
        %v3565 = vmax.f32 %v3437, %v3501
        %v3566 = vmax.f32 %v3438, %v3502
        %v3567 = vmax.f32 %v3439, %v3503
        %v3568 = vmax.f32 %v3440, %v3504
        %v3569 = vmax.f32 %v3441, %v3505
        %v3570 = vmax.f32 %v3442, %v3506
        %v3571 = vmax.f32 %v3443, %v3507
        %v3572 = vmax.f32 %v3444, %v3508
        %v3573 = vmax.f32 %v3445, %v3509
        %v3574 = vmax.f32 %v3446, %v3510
        %v3575 = vld [vmem:[%s2] sm:$0x1]
        %v3577 = vlaneseq
        %v3578 = vshrl.u32 %v3577, 7
        %v3579 = vsub.s32 0, %v3578
        %v3580 = vrot.slane %v3575, %v3579
        %v3582 = vadd.f32 %v3511, %v3580
        %v3583 = vadd.f32 %v3512, %v3580
        %v3584 = vadd.f32 %v3513, %v3580
        %v3585 = vadd.f32 %v3514, %v3580
        %v3586 = vadd.f32 %v3515, %v3580
        %v3587 = vadd.f32 %v3516, %v3580
        %v3588 = vadd.f32 %v3517, %v3580
        %v3589 = vadd.f32 %v3518, %v3580
        %v3590 = vadd.f32 %v3519, %v3580
        %v3591 = vadd.f32 %v3520, %v3580
        %v3592 = vadd.f32 %v3521, %v3580
        %v3593 = vadd.f32 %v3522, %v3580
        %v3594 = vadd.f32 %v3523, %v3580
        %v3595 = vadd.f32 %v3524, %v3580
        %v3596 = vadd.f32 %v3525, %v3580
        %v3597 = vadd.f32 %v3526, %v3580
        %v3598 = vadd.f32 %v3527, %v3580
        %v3599 = vadd.f32 %v3528, %v3580
        %v3600 = vadd.f32 %v3529, %v3580
        %v3601 = vadd.f32 %v3530, %v3580
        %v3602 = vadd.f32 %v3531, %v3580
        %v3603 = vadd.f32 %v3532, %v3580
        %v3604 = vadd.f32 %v3533, %v3580
        %v3605 = vadd.f32 %v3534, %v3580
        %v3606 = vadd.f32 %v3535, %v3580
        %v3607 = vadd.f32 %v3536, %v3580
        %v3608 = vadd.f32 %v3537, %v3580
        %v3609 = vadd.f32 %v3538, %v3580
        %v3610 = vadd.f32 %v3539, %v3580
        %v3611 = vadd.f32 %v3540, %v3580
        %v3612 = vadd.f32 %v3541, %v3580
        %v3613 = vadd.f32 %v3542, %v3580
        %v3614 = vadd.f32 %v3543, %v3580
        %v3615 = vadd.f32 %v3544, %v3580
        %v3616 = vadd.f32 %v3545, %v3580
        %v3617 = vadd.f32 %v3546, %v3580
        %v3618 = vadd.f32 %v3547, %v3580
        %v3619 = vadd.f32 %v3548, %v3580
        %v3620 = vadd.f32 %v3549, %v3580
        %v3621 = vadd.f32 %v3550, %v3580
        %v3622 = vadd.f32 %v3551, %v3580
        %v3623 = vadd.f32 %v3552, %v3580
        %v3624 = vadd.f32 %v3553, %v3580
        %v3625 = vadd.f32 %v3554, %v3580
        %v3626 = vadd.f32 %v3555, %v3580
        %v3627 = vadd.f32 %v3556, %v3580
        %v3628 = vadd.f32 %v3557, %v3580
        %v3629 = vadd.f32 %v3558, %v3580
        %v3630 = vadd.f32 %v3559, %v3580
        %v3631 = vadd.f32 %v3560, %v3580
        %v3632 = vadd.f32 %v3561, %v3580
        %v3633 = vadd.f32 %v3562, %v3580
        %v3634 = vadd.f32 %v3563, %v3580
        %v3635 = vadd.f32 %v3564, %v3580
        %v3636 = vadd.f32 %v3565, %v3580
        %v3637 = vadd.f32 %v3566, %v3580
        %v3638 = vadd.f32 %v3567, %v3580
        %v3639 = vadd.f32 %v3568, %v3580
        %v3640 = vadd.f32 %v3569, %v3580
        %v3641 = vadd.f32 %v3570, %v3580
        %v3642 = vadd.f32 %v3571, %v3580
        %v3643 = vadd.f32 %v3572, %v3580
        %v3644 = vadd.f32 %v3573, %v3580
        %v3645 = vadd.f32 %v3574, %v3580
        %v3646 = vmax.f32 %v3582, 0.0
        %v3647 = vmax.f32 %v3583, 0.0
        %v3648 = vmax.f32 %v3584, 0.0
        %v3649 = vmax.f32 %v3585, 0.0
        %v3650 = vmax.f32 %v3586, 0.0
        %v3651 = vmax.f32 %v3587, 0.0
        %v3652 = vmax.f32 %v3588, 0.0
        %v3653 = vmax.f32 %v3589, 0.0
        %v3654 = vmax.f32 %v3590, 0.0
        %v3655 = vmax.f32 %v3591, 0.0
        %v3656 = vmax.f32 %v3592, 0.0
        %v3657 = vmax.f32 %v3593, 0.0
        %v3658 = vmax.f32 %v3594, 0.0
        %v3659 = vmax.f32 %v3595, 0.0
        %v3660 = vmax.f32 %v3596, 0.0
        %v3661 = vmax.f32 %v3597, 0.0
        %v3662 = vmax.f32 %v3598, 0.0
        %v3663 = vmax.f32 %v3599, 0.0
        %v3664 = vmax.f32 %v3600, 0.0
        %v3665 = vmax.f32 %v3601, 0.0
        %v3666 = vmax.f32 %v3602, 0.0
        %v3667 = vmax.f32 %v3603, 0.0
        %v3668 = vmax.f32 %v3604, 0.0
        %v3669 = vmax.f32 %v3605, 0.0
        %v3670 = vmax.f32 %v3606, 0.0
        %v3671 = vmax.f32 %v3607, 0.0
        %v3672 = vmax.f32 %v3608, 0.0
        %v3673 = vmax.f32 %v3609, 0.0
        %v3674 = vmax.f32 %v3610, 0.0
        %v3675 = vmax.f32 %v3611, 0.0
        %v3676 = vmax.f32 %v3612, 0.0
        %v3677 = vmax.f32 %v3613, 0.0
        %v3678 = vmax.f32 %v3614, 0.0
        %v3679 = vmax.f32 %v3615, 0.0
        %v3680 = vmax.f32 %v3616, 0.0
        %v3681 = vmax.f32 %v3617, 0.0
        %v3682 = vmax.f32 %v3618, 0.0
        %v3683 = vmax.f32 %v3619, 0.0
        %v3684 = vmax.f32 %v3620, 0.0
        %v3685 = vmax.f32 %v3621, 0.0
        %v3686 = vmax.f32 %v3622, 0.0
        %v3687 = vmax.f32 %v3623, 0.0
        %v3688 = vmax.f32 %v3624, 0.0
        %v3689 = vmax.f32 %v3625, 0.0
        %v3690 = vmax.f32 %v3626, 0.0
        %v3691 = vmax.f32 %v3627, 0.0
        %v3692 = vmax.f32 %v3628, 0.0
        %v3693 = vmax.f32 %v3629, 0.0
        %v3694 = vmax.f32 %v3630, 0.0
        %v3695 = vmax.f32 %v3631, 0.0
        %v3696 = vmax.f32 %v3632, 0.0
        %v3697 = vmax.f32 %v3633, 0.0
        %v3698 = vmax.f32 %v3634, 0.0
        %v3699 = vmax.f32 %v3635, 0.0
        %v3700 = vmax.f32 %v3636, 0.0
        %v3701 = vmax.f32 %v3637, 0.0
        %v3702 = vmax.f32 %v3638, 0.0
        %v3703 = vmax.f32 %v3639, 0.0
        %v3704 = vmax.f32 %v3640, 0.0
        %v3705 = vmax.f32 %v3641, 0.0
        %v3706 = vmax.f32 %v3642, 0.0
        %v3707 = vmax.f32 %v3643, 0.0
        %v3708 = vmax.f32 %v3644, 0.0
        %v3709 = vmax.f32 %v3645, 0.0
        %v3710 = vpack.c.bf16 %v3647, %v3646
        %v3711 = vpack.c.bf16 %v3649, %v3648
        %v3712 = vpack.c.bf16 %v3651, %v3650
        %v3713 = vpack.c.bf16 %v3653, %v3652
        %v3714 = vpack.c.bf16 %v3655, %v3654
        %v3715 = vpack.c.bf16 %v3657, %v3656
        %v3716 = vpack.c.bf16 %v3659, %v3658
        %v3717 = vpack.c.bf16 %v3661, %v3660
        %v3718 = vpack.c.bf16 %v3663, %v3662
        %v3719 = vpack.c.bf16 %v3665, %v3664
        %v3720 = vpack.c.bf16 %v3667, %v3666
        %v3721 = vpack.c.bf16 %v3669, %v3668
        %v3722 = vpack.c.bf16 %v3671, %v3670
        %v3723 = vpack.c.bf16 %v3673, %v3672
        %v3724 = vpack.c.bf16 %v3675, %v3674
        %v3725 = vpack.c.bf16 %v3677, %v3676
        %v3726 = vpack.c.bf16 %v3679, %v3678
        %v3727 = vpack.c.bf16 %v3681, %v3680
        %v3728 = vpack.c.bf16 %v3683, %v3682
        %v3729 = vpack.c.bf16 %v3685, %v3684
        %v3730 = vpack.c.bf16 %v3687, %v3686
        %v3731 = vpack.c.bf16 %v3689, %v3688
        %v3732 = vpack.c.bf16 %v3691, %v3690
        %v3733 = vpack.c.bf16 %v3693, %v3692
        %v3734 = vpack.c.bf16 %v3695, %v3694
        %v3735 = vpack.c.bf16 %v3697, %v3696
        %v3736 = vpack.c.bf16 %v3699, %v3698
        %v3737 = vpack.c.bf16 %v3701, %v3700
        %v3738 = vpack.c.bf16 %v3703, %v3702
        %v3739 = vpack.c.bf16 %v3705, %v3704
        %v3740 = vpack.c.bf16 %v3707, %v3706
        %v3741 = vpack.c.bf16 %v3709, %v3708
        %v3774 = vunpack.c.l.b16 %v3710
        %v3775 = vunpack.c.h.b16 %v3710
        %v3776 = vunpack.c.l.b16 %v3711
        %v3777 = vunpack.c.h.b16 %v3711
        %v3778 = vunpack.c.l.b16 %v3712
        %v3779 = vunpack.c.h.b16 %v3712
        %v3780 = vunpack.c.l.b16 %v3713
        %v3781 = vunpack.c.h.b16 %v3713
        %v3782 = vunpack.c.l.b16 %v3714
        %v3783 = vunpack.c.h.b16 %v3714
        %v3784 = vunpack.c.l.b16 %v3715
        %v3785 = vunpack.c.h.b16 %v3715
        %v3786 = vunpack.c.l.b16 %v3716
        %v3787 = vunpack.c.h.b16 %v3716
        %v3788 = vunpack.c.l.b16 %v3717
        %v3789 = vunpack.c.h.b16 %v3717
        %v3790 = vunpack.c.l.b16 %v3718
        %v3791 = vunpack.c.h.b16 %v3718
        %v3792 = vunpack.c.l.b16 %v3719
        %v3793 = vunpack.c.h.b16 %v3719
        %v3794 = vunpack.c.l.b16 %v3720
        %v3795 = vunpack.c.h.b16 %v3720
        %v3796 = vunpack.c.l.b16 %v3721
        %v3797 = vunpack.c.h.b16 %v3721
        %v3798 = vunpack.c.l.b16 %v3722
        %v3799 = vunpack.c.h.b16 %v3722
        %v3800 = vunpack.c.l.b16 %v3723
        %v3801 = vunpack.c.h.b16 %v3723
        %v3802 = vunpack.c.l.b16 %v3724
        %v3803 = vunpack.c.h.b16 %v3724
        %v3804 = vunpack.c.l.b16 %v3725
        %v3805 = vunpack.c.h.b16 %v3725
        %v3806 = vunpack.c.l.b16 %v3726
        %v3807 = vunpack.c.h.b16 %v3726
        %v3808 = vunpack.c.l.b16 %v3727
        %v3809 = vunpack.c.h.b16 %v3727
        %v3810 = vunpack.c.l.b16 %v3728
        %v3811 = vunpack.c.h.b16 %v3728
        %v3812 = vunpack.c.l.b16 %v3729
        %v3813 = vunpack.c.h.b16 %v3729
        %v3814 = vunpack.c.l.b16 %v3730
        %v3815 = vunpack.c.h.b16 %v3730
        %v3816 = vunpack.c.l.b16 %v3731
        %v3817 = vunpack.c.h.b16 %v3731
        %v3818 = vunpack.c.l.b16 %v3732
        %v3819 = vunpack.c.h.b16 %v3732
        %v3820 = vunpack.c.l.b16 %v3733
        %v3821 = vunpack.c.h.b16 %v3733
        %v3822 = vunpack.c.l.b16 %v3734
        %v3823 = vunpack.c.h.b16 %v3734
        %v3824 = vunpack.c.l.b16 %v3735
        %v3825 = vunpack.c.h.b16 %v3735
        %v3826 = vunpack.c.l.b16 %v3736
        %v3827 = vunpack.c.h.b16 %v3736
        %v3828 = vunpack.c.l.b16 %v3737
        %v3829 = vunpack.c.h.b16 %v3737
        %v3830 = vunpack.c.l.b16 %v3738
        %v3831 = vunpack.c.h.b16 %v3738
        %v3832 = vunpack.c.l.b16 %v3739
        %v3833 = vunpack.c.h.b16 %v3739
        %v3834 = vunpack.c.l.b16 %v3740
        %v3835 = vunpack.c.h.b16 %v3740
        %v3836 = vunpack.c.l.b16 %v3741
        %v3837 = vunpack.c.h.b16 %v3741
        %v3838 = vpack.c.b16 %v3774, %v3774
        %v3839 = vpack.c.b16 %v3775, %v3775
        %v3840 = vpack.c.b16 %v3776, %v3776
        %v3841 = vpack.c.b16 %v3777, %v3777
        %v3842 = vpack.c.b16 %v3778, %v3778
        %v3843 = vpack.c.b16 %v3779, %v3779
        %v3844 = vpack.c.b16 %v3780, %v3780
        %v3845 = vpack.c.b16 %v3781, %v3781
        %v3846 = vpack.c.b16 %v3782, %v3782
        %v3847 = vpack.c.b16 %v3783, %v3783
        %v3848 = vpack.c.b16 %v3784, %v3784
        %v3849 = vpack.c.b16 %v3785, %v3785
        %v3850 = vpack.c.b16 %v3786, %v3786
        %v3851 = vpack.c.b16 %v3787, %v3787
        %v3852 = vpack.c.b16 %v3788, %v3788
        %v3853 = vpack.c.b16 %v3789, %v3789
        %v3854 = vpack.c.b16 %v3790, %v3790
        %v3855 = vpack.c.b16 %v3791, %v3791
        %v3856 = vpack.c.b16 %v3792, %v3792
        %v3857 = vpack.c.b16 %v3793, %v3793
        %v3858 = vpack.c.b16 %v3794, %v3794
        %v3859 = vpack.c.b16 %v3795, %v3795
        %v3860 = vpack.c.b16 %v3796, %v3796
        %v3861 = vpack.c.b16 %v3797, %v3797
        %v3862 = vpack.c.b16 %v3798, %v3798
        %v3863 = vpack.c.b16 %v3799, %v3799
        %v3864 = vpack.c.b16 %v3800, %v3800
        %v3865 = vpack.c.b16 %v3801, %v3801
        %v3866 = vpack.c.b16 %v3802, %v3802
        %v3867 = vpack.c.b16 %v3803, %v3803
        %v3868 = vpack.c.b16 %v3804, %v3804
        %v3869 = vpack.c.b16 %v3805, %v3805
        %v3870 = vpack.c.b16 %v3806, %v3806
        %v3871 = vpack.c.b16 %v3807, %v3807
        %v3872 = vpack.c.b16 %v3808, %v3808
        %v3873 = vpack.c.b16 %v3809, %v3809
        %v3874 = vpack.c.b16 %v3810, %v3810
        %v3875 = vpack.c.b16 %v3811, %v3811
        %v3876 = vpack.c.b16 %v3812, %v3812
        %v3877 = vpack.c.b16 %v3813, %v3813
        %v3878 = vpack.c.b16 %v3814, %v3814
        %v3879 = vpack.c.b16 %v3815, %v3815
        %v3880 = vpack.c.b16 %v3816, %v3816
        %v3881 = vpack.c.b16 %v3817, %v3817
        %v3882 = vpack.c.b16 %v3818, %v3818
        %v3883 = vpack.c.b16 %v3819, %v3819
        %v3884 = vpack.c.b16 %v3820, %v3820
        %v3885 = vpack.c.b16 %v3821, %v3821
        %v3886 = vpack.c.b16 %v3822, %v3822
        %v3887 = vpack.c.b16 %v3823, %v3823
        %v3888 = vpack.c.b16 %v3824, %v3824
        %v3889 = vpack.c.b16 %v3825, %v3825
        %v3890 = vpack.c.b16 %v3826, %v3826
        %v3891 = vpack.c.b16 %v3827, %v3827
        %v3892 = vpack.c.b16 %v3828, %v3828
        %v3893 = vpack.c.b16 %v3829, %v3829
        %v3894 = vpack.c.b16 %v3830, %v3830
        %v3895 = vpack.c.b16 %v3831, %v3831
        %v3896 = vpack.c.b16 %v3832, %v3832
        %v3897 = vpack.c.b16 %v3833, %v3833
        %v3898 = vpack.c.b16 %v3834, %v3834
        %v3899 = vpack.c.b16 %v3835, %v3835
        %v3900 = vpack.c.b16 %v3836, %v3836
        %v3901 = vpack.c.b16 %v3837, %v3837
        %3966 = vst [vmem:[%s1235] sm:$0xf] %v3838
        %3967 = vst [vmem:[%s1235 + $0x4] sm:$0xf] %v3839
        %3968 = vst [vmem:[%s1235 + $0x8] sm:$0xf] %v3840
        %3969 = vst [vmem:[%s1235 + $0xc] sm:$0xf] %v3841
        %3970 = vst [vmem:[%s1235 + $0x10] sm:$0xf] %v3842
        %3971 = vst [vmem:[%s1235 + $0x14] sm:$0xf] %v3843
        %3972 = vst [vmem:[%s1235 + $0x18] sm:$0xf] %v3844
        %3973 = vst [vmem:[%s1235 + $0x1c] sm:$0xf] %v3845
        %3974 = vst [vmem:[%s1235 + $0x20] sm:$0xf] %v3846
        %3975 = vst [vmem:[%s1235 + $0x24] sm:$0xf] %v3847
        %3976 = vst [vmem:[%s1235 + $0x28] sm:$0xf] %v3848
        %3977 = vst [vmem:[%s1235 + $0x2c] sm:$0xf] %v3849
        %3978 = vst [vmem:[%s1235 + $0x30] sm:$0xf] %v3850
        %3979 = vst [vmem:[%s1235 + $0x34] sm:$0xf] %v3851
        %3980 = vst [vmem:[%s1235 + $0x38] sm:$0xf] %v3852
        %3981 = vst [vmem:[%s1235 + $0x3c] sm:$0xf] %v3853
        %3982 = vst [vmem:[%s1235 + $0x40] sm:$0xf] %v3854
        %3983 = vst [vmem:[%s1235 + $0x44] sm:$0xf] %v3855
        %3984 = vst [vmem:[%s1235 + $0x48] sm:$0xf] %v3856
        %3985 = vst [vmem:[%s1235 + $0x4c] sm:$0xf] %v3857
        %3986 = vst [vmem:[%s1235 + $0x50] sm:$0xf] %v3858
        %3987 = vst [vmem:[%s1235 + $0x54] sm:$0xf] %v3859
        %3988 = vst [vmem:[%s1235 + $0x58] sm:$0xf] %v3860
        %3989 = vst [vmem:[%s1235 + $0x5c] sm:$0xf] %v3861
        %3990 = vst [vmem:[%s1235 + $0x60] sm:$0xf] %v3862
        %3991 = vst [vmem:[%s1235 + $0x64] sm:$0xf] %v3863
        %3992 = vst [vmem:[%s1235 + $0x68] sm:$0xf] %v3864
        %3993 = vst [vmem:[%s1235 + $0x6c] sm:$0xf] %v3865
        %3994 = vst [vmem:[%s1235 + $0x70] sm:$0xf] %v3866
        %3995 = vst [vmem:[%s1235 + $0x74] sm:$0xf] %v3867
        %3996 = vst [vmem:[%s1235 + $0x78] sm:$0xf] %v3868
        %3997 = vst [vmem:[%s1235 + $0x7c] sm:$0xf] %v3869
        %3998 = vst [vmem:[%s1235 + $0x80] sm:$0xf] %v3870
        %3999 = vst [vmem:[%s1235 + $0x84] sm:$0xf] %v3871
        %4000 = vst [vmem:[%s1235 + $0x88] sm:$0xf] %v3872
        %4001 = vst [vmem:[%s1235 + $0x8c] sm:$0xf] %v3873
        %4002 = vst [vmem:[%s1235 + $0x90] sm:$0xf] %v3874
        %4003 = vst [vmem:[%s1235 + $0x94] sm:$0xf] %v3875
        %4004 = vst [vmem:[%s1235 + $0x98] sm:$0xf] %v3876
        %4005 = vst [vmem:[%s1235 + $0x9c] sm:$0xf] %v3877
        %4006 = vst [vmem:[%s1235 + $0xa0] sm:$0xf] %v3878
        %4007 = vst [vmem:[%s1235 + $0xa4] sm:$0xf] %v3879
        %4008 = vst [vmem:[%s1235 + $0xa8] sm:$0xf] %v3880
        %4009 = vst [vmem:[%s1235 + $0xac] sm:$0xf] %v3881
        %4010 = vst [vmem:[%s1235 + $0xb0] sm:$0xf] %v3882
        %4011 = vst [vmem:[%s1235 + $0xb4] sm:$0xf] %v3883
        %4012 = vst [vmem:[%s1235 + $0xb8] sm:$0xf] %v3884
        %4013 = vst [vmem:[%s1235 + $0xbc] sm:$0xf] %v3885
        %4014 = vst [vmem:[%s1235 + $0xc0] sm:$0xf] %v3886
        %4015 = vst [vmem:[%s1235 + $0xc4] sm:$0xf] %v3887
        %4016 = vst [vmem:[%s1235 + $0xc8] sm:$0xf] %v3888
        %4017 = vst [vmem:[%s1235 + $0xcc] sm:$0xf] %v3889
        %4018 = vst [vmem:[%s1235 + $0xd0] sm:$0xf] %v3890
        %4019 = vst [vmem:[%s1235 + $0xd4] sm:$0xf] %v3891
        %4020 = vst [vmem:[%s1235 + $0xd8] sm:$0xf] %v3892
        %4021 = vst [vmem:[%s1235 + $0xdc] sm:$0xf] %v3893
        %4022 = vst [vmem:[%s1235 + $0xe0] sm:$0xf] %v3894
        %4023 = vst [vmem:[%s1235 + $0xe4] sm:$0xf] %v3895
        %4024 = vst [vmem:[%s1235 + $0xe8] sm:$0xf] %v3896
        %4025 = vst [vmem:[%s1235 + $0xec] sm:$0xf] %v3897
        %4026 = vst [vmem:[%s1235 + $0xf0] sm:$0xf] %v3898
        %4027 = vst [vmem:[%s1235 + $0xf4] sm:$0xf] %v3899
        %4028 = vst [vmem:[%s1235 + $0xf8] sm:$0xf] %v3900
        %4029 = vst [vmem:[%s1235 + $0xfc] sm:$0xf] %v3901
        %s4030 = smul.u32 64, %s14
        %p4031 = scmp.lt.s32.totalorder %s4030, 255
        %s4032 = scalar_select %p4031, %s4030, 255
        %s4033 = smul.addr %s4032, 4
        %s4034 = scalar_lea.vmem %s3, %s4033
        // Predicated region
        $region74: #{forward.4} parent=68 // pred_check
          %p4035 = pneg %p100
        $region75: #{forward.4} parent=68 // pred_check_branch
          %4037 = sbr.rel (%p4035) target = $region77
        $region76: #{forward.4} parent=68 // pred_region
          %s4038 = smul.u32 64, %s14
        $region77: #{forward.4} parent=68 // pred_fallthru
          _
      $region69: #{forward.4} parent=5 // pred_fallthru
        _
      %p4039 = scmp.le.s32.totalorder 2, %s9
      // Predicated region
      $region78: #{forward.4} parent=5 // pred_check
        %p4040 = pneg %p4039
      $region79: #{forward.4} parent=5 // pred_check_branch
        %4042 = sbr.rel (%p4040) target = $region81
      $region80: #{forward.4} parent=5 // pred_region
        %s4043 = ssub.s32 %s9, 2
        // Predicated region
        $region82: #{forward.4} parent=80 // pred_check
          %p4044 = pneg %p106
        $region83: #{forward.4} parent=80 // pred_check_branch
          %4046 = sbr.rel (%p4044) target = $region85
        $region84: #{forward.4} parent=80 // pred_region
          %s4047 = smul.u32 64, %s15
          %p4048 = scmp.lt.s32.totalorder %s4047, 255
          %s4049 = scalar_select %p4048, %s4047, 255
          %s4050 = smul.addr %s4049, 4
          %s4051 = scalar_lea.vmem %s3, %s4050
        $region85: #{forward.4} parent=80 // pred_fallthru
          _
      $region81: #{forward.4} parent=5 // pred_fallthru
        _
    $region6: #{forward.4} parent=1 // loop_footer
      %s13 = sadd.s32 1, %s9
    $region7: #{forward.4} parent=1 // loop_footer_branch
      %8 = sbr.rel target = $region3
    $region8: #{forward.4} parent=1 // loop_exit
      _

// kernel: forward.5
$region0: #{forward.5}
  #allocation0 [shape = 'u32[]', space=smem, size = 0x4, offset = 0x4, fixed_abs, tag = 'smem constant byte address 0x4 - core index']
  #allocation1 [shape = 'u32[144,128]{1,0:T(1,128)}', space=vmem, size = 0x12000, scoped, tag = 'internal scratch']
  %s0 = inlined_call_operand.vmem [shape: bf16[4,384,256], index: 0, kind: input, shape index: {}]
  %s1 = inlined_call_operand.vmem [shape: bf16[256,128], index: 1, kind: input, shape index: {}]
  %s2 = inlined_call_operand.vmem [shape: f32[1,128], index: 2, kind: input, shape index: {}]
  %s3 = inlined_call_operand.vmem [shape: bf16[384,128], index: 3, kind: output, shape index: {}]
  %s4 = sld [smem:[#allocation0]]
  $region22: #{forward.5} parent=0
    _
  %s6 = ssub.s32 1, %s4
  %s7 = scalar_select 0, %s6, %s4
  // Predicated region
  $region2: #{forward.5} parent=0 // pred_check
    _
  $region3: #{forward.5} parent=0 // pred_check_branch
    %9 = sbr.rel (0) target = $region5
  $region4: #{forward.5} parent=0 // pred_region
    _
  $region5: #{forward.5} parent=0 // pred_fallthru
    _
  // Predicated region
  $region6: #{forward.5} parent=0 // pred_check
    _
  $region7: #{forward.5} parent=0 // pred_check_branch
    %11 = sbr.rel (0) target = $region9
  $region8: #{forward.5} parent=0 // pred_region
    _
  $region9: #{forward.5} parent=0 // pred_fallthru
    _
  // Predicated region
  $region10: #{forward.5} parent=0 // pred_check
    _
  $region11: #{forward.5} parent=0 // pred_check_branch
    %13 = sbr.rel (0) target = $region13
  $region12: #{forward.5} parent=0 // pred_region
    _
  $region13: #{forward.5} parent=0 // pred_fallthru
    _
  %v15 = vld [vmem:[%s0] sm:$0xff]
  %v16 = vld [vmem:[%s0 + $0x8] sm:$0xff]
  %v17 = vld [vmem:[%s0 + $0x10] sm:$0xff]
  %v18 = vld [vmem:[%s0 + $0x18] sm:$0xff]
  %v19 = vld [vmem:[%s0 + $0x20] sm:$0xff]
  %v20 = vld [vmem:[%s0 + $0x28] sm:$0xff]
  %v21 = vld [vmem:[%s0 + $0x30] sm:$0xff]
  %v22 = vld [vmem:[%s0 + $0x38] sm:$0xff]
  %v23 = vld [vmem:[%s0 + $0x40] sm:$0xff]
  %v24 = vld [vmem:[%s0 + $0x48] sm:$0xff]
  %v25 = vld [vmem:[%s0 + $0x50] sm:$0xff]
  %v26 = vld [vmem:[%s0 + $0x58] sm:$0xff]
  %v27 = vld [vmem:[%s0 + $0x60] sm:$0xff]
  %v28 = vld [vmem:[%s0 + $0x68] sm:$0xff]
  %v29 = vld [vmem:[%s0 + $0x70] sm:$0xff]
  %v30 = vld [vmem:[%s0 + $0x78] sm:$0xff]
  %v31 = vld [vmem:[%s0 + $0x80] sm:$0xff]
  %v32 = vld [vmem:[%s0 + $0x88] sm:$0xff]
  %v33 = vld [vmem:[%s0 + $0x90] sm:$0xff]
  %v34 = vld [vmem:[%s0 + $0x98] sm:$0xff]
  %v35 = vld [vmem:[%s0 + $0xa0] sm:$0xff]
  %v36 = vld [vmem:[%s0 + $0xa8] sm:$0xff]
  %v37 = vld [vmem:[%s0 + $0xb0] sm:$0xff]
  %v38 = vld [vmem:[%s0 + $0xb8] sm:$0xff]
  %v39 = vld [vmem:[%s0 + $0xc0] sm:$0xff]
  %v40 = vld [vmem:[%s0 + $0xc8] sm:$0xff]
  %v41 = vld [vmem:[%s0 + $0xd0] sm:$0xff]
  %v42 = vld [vmem:[%s0 + $0xd8] sm:$0xff]
  %v43 = vld [vmem:[%s0 + $0xe0] sm:$0xff]
  %v44 = vld [vmem:[%s0 + $0xe8] sm:$0xff]
  %v45 = vld [vmem:[%s0 + $0xf0] sm:$0xff]
  %v46 = vld [vmem:[%s0 + $0xf8] sm:$0xff]
  %v47 = vld [vmem:[%s0 + $0x100] sm:$0xff]
  %v48 = vld [vmem:[%s0 + $0x108] sm:$0xff]
  %v49 = vld [vmem:[%s0 + $0x110] sm:$0xff]
  %v50 = vld [vmem:[%s0 + $0x118] sm:$0xff]
  %v51 = vld [vmem:[%s0 + $0x120] sm:$0xff]
  %v52 = vld [vmem:[%s0 + $0x128] sm:$0xff]
  %v53 = vld [vmem:[%s0 + $0x130] sm:$0xff]
  %v54 = vld [vmem:[%s0 + $0x138] sm:$0xff]
  %v55 = vld [vmem:[%s0 + $0x140] sm:$0xff]
  %v56 = vld [vmem:[%s0 + $0x148] sm:$0xff]
  %v57 = vld [vmem:[%s0 + $0x150] sm:$0xff]
  %v58 = vld [vmem:[%s0 + $0x158] sm:$0xff]
  %v59 = vld [vmem:[%s0 + $0x160] sm:$0xff]
  %v60 = vld [vmem:[%s0 + $0x168] sm:$0xff]
  %v61 = vld [vmem:[%s0 + $0x170] sm:$0xff]
  %v62 = vld [vmem:[%s0 + $0x178] sm:$0xff]
  %v63 = vld [vmem:[%s0 + $0x180] sm:$0xff]
  %v64 = vld [vmem:[%s0 + $0x188] sm:$0xff]
  %v65 = vld [vmem:[%s0 + $0x190] sm:$0xff]
  %v66 = vld [vmem:[%s0 + $0x198] sm:$0xff]
  %v67 = vld [vmem:[%s0 + $0x1a0] sm:$0xff]
  %v68 = vld [vmem:[%s0 + $0x1a8] sm:$0xff]
  %v69 = vld [vmem:[%s0 + $0x1b0] sm:$0xff]
  %v70 = vld [vmem:[%s0 + $0x1b8] sm:$0xff]
  %v71 = vld [vmem:[%s0 + $0x1c0] sm:$0xff]
  %v72 = vld [vmem:[%s0 + $0x1c8] sm:$0xff]
  %v73 = vld [vmem:[%s0 + $0x1d0] sm:$0xff]
  %v74 = vld [vmem:[%s0 + $0x1d8] sm:$0xff]
  %v75 = vld [vmem:[%s0 + $0x1e0] sm:$0xff]
  %v76 = vld [vmem:[%s0 + $0x1e8] sm:$0xff]
  %v77 = vld [vmem:[%s0 + $0x1f0] sm:$0xff]
  %v78 = vld [vmem:[%s0 + $0x1f8] sm:$0xff]
  %v79 = vld [vmem:[%s0 + $0x200] sm:$0xff]
  %v80 = vld [vmem:[%s0 + $0x208] sm:$0xff]
  %v81 = vld [vmem:[%s0 + $0x210] sm:$0xff]
  %v82 = vld [vmem:[%s0 + $0x218] sm:$0xff]
  %v83 = vld [vmem:[%s0 + $0x220] sm:$0xff]
  %v84 = vld [vmem:[%s0 + $0x228] sm:$0xff]
  %v85 = vld [vmem:[%s0 + $0x230] sm:$0xff]
  %v86 = vld [vmem:[%s0 + $0x238] sm:$0xff]
  %v87 = vld [vmem:[%s0 + $0x240] sm:$0xff]
  %v88 = vld [vmem:[%s0 + $0x248] sm:$0xff]
  %v89 = vld [vmem:[%s0 + $0x250] sm:$0xff]
  %v90 = vld [vmem:[%s0 + $0x258] sm:$0xff]
  %v91 = vld [vmem:[%s0 + $0x260] sm:$0xff]
  %v92 = vld [vmem:[%s0 + $0x268] sm:$0xff]
  %v93 = vld [vmem:[%s0 + $0x270] sm:$0xff]
  %v94 = vld [vmem:[%s0 + $0x278] sm:$0xff]
  %v95 = vld [vmem:[%s0 + $0x280] sm:$0xff]
  %v96 = vld [vmem:[%s0 + $0x288] sm:$0xff]
  %v97 = vld [vmem:[%s0 + $0x290] sm:$0xff]
  %v98 = vld [vmem:[%s0 + $0x298] sm:$0xff]
  %v99 = vld [vmem:[%s0 + $0x2a0] sm:$0xff]
  %v100 = vld [vmem:[%s0 + $0x2a8] sm:$0xff]
  %v101 = vld [vmem:[%s0 + $0x2b0] sm:$0xff]
  %v102 = vld [vmem:[%s0 + $0x2b8] sm:$0xff]
  %v103 = vld [vmem:[%s0 + $0x2c0] sm:$0xff]
  %v104 = vld [vmem:[%s0 + $0x2c8] sm:$0xff]
  %v105 = vld [vmem:[%s0 + $0x2d0] sm:$0xff]
  %v106 = vld [vmem:[%s0 + $0x2d8] sm:$0xff]
  %v107 = vld [vmem:[%s0 + $0x2e0] sm:$0xff]
  %v108 = vld [vmem:[%s0 + $0x2e8] sm:$0xff]
  %v109 = vld [vmem:[%s0 + $0x2f0] sm:$0xff]
  %v110 = vld [vmem:[%s0 + $0x2f8] sm:$0xff]
  %v111 = vld [vmem:[%s0 + $0x300] sm:$0xff]
  %v112 = vld [vmem:[%s0 + $0x308] sm:$0xff]
  %v113 = vld [vmem:[%s0 + $0x310] sm:$0xff]
  %v114 = vld [vmem:[%s0 + $0x318] sm:$0xff]
  %v115 = vld [vmem:[%s0 + $0x320] sm:$0xff]
  %v116 = vld [vmem:[%s0 + $0x328] sm:$0xff]
  %v117 = vld [vmem:[%s0 + $0x330] sm:$0xff]
  %v118 = vld [vmem:[%s0 + $0x338] sm:$0xff]
  %v119 = vld [vmem:[%s0 + $0x340] sm:$0xff]
  %v120 = vld [vmem:[%s0 + $0x348] sm:$0xff]
  %v121 = vld [vmem:[%s0 + $0x350] sm:$0xff]
  %v122 = vld [vmem:[%s0 + $0x358] sm:$0xff]
  %v123 = vld [vmem:[%s0 + $0x360] sm:$0xff]
  %v124 = vld [vmem:[%s0 + $0x368] sm:$0xff]
  %v125 = vld [vmem:[%s0 + $0x370] sm:$0xff]
  %v126 = vld [vmem:[%s0 + $0x378] sm:$0xff]
  %v127 = vld [vmem:[%s0 + $0x380] sm:$0xff]
  %v128 = vld [vmem:[%s0 + $0x388] sm:$0xff]
  %v129 = vld [vmem:[%s0 + $0x390] sm:$0xff]
  %v130 = vld [vmem:[%s0 + $0x398] sm:$0xff]
  %v131 = vld [vmem:[%s0 + $0x3a0] sm:$0xff]
  %v132 = vld [vmem:[%s0 + $0x3a8] sm:$0xff]
  %v133 = vld [vmem:[%s0 + $0x3b0] sm:$0xff]
  %v134 = vld [vmem:[%s0 + $0x3b8] sm:$0xff]
  %v135 = vld [vmem:[%s0 + $0x3c0] sm:$0xff]
  %v136 = vld [vmem:[%s0 + $0x3c8] sm:$0xff]
  %v137 = vld [vmem:[%s0 + $0x3d0] sm:$0xff]
  %v138 = vld [vmem:[%s0 + $0x3d8] sm:$0xff]
  %v139 = vld [vmem:[%s0 + $0x3e0] sm:$0xff]
  %v140 = vld [vmem:[%s0 + $0x3e8] sm:$0xff]
  %v141 = vld [vmem:[%s0 + $0x3f0] sm:$0xff]
  %v142 = vld [vmem:[%s0 + $0x3f8] sm:$0xff]
  %v143 = vld [vmem:[%s0 + $0x400] sm:$0xff]
  %v144 = vld [vmem:[%s0 + $0x408] sm:$0xff]
  %v145 = vld [vmem:[%s0 + $0x410] sm:$0xff]
  %v146 = vld [vmem:[%s0 + $0x418] sm:$0xff]
  %v147 = vld [vmem:[%s0 + $0x420] sm:$0xff]
  %v148 = vld [vmem:[%s0 + $0x428] sm:$0xff]
  %v149 = vld [vmem:[%s0 + $0x430] sm:$0xff]
  %v150 = vld [vmem:[%s0 + $0x438] sm:$0xff]
  %v151 = vld [vmem:[%s0 + $0x440] sm:$0xff]
  %v152 = vld [vmem:[%s0 + $0x448] sm:$0xff]
  %v153 = vld [vmem:[%s0 + $0x450] sm:$0xff]
  %v154 = vld [vmem:[%s0 + $0x458] sm:$0xff]
  %v155 = vld [vmem:[%s0 + $0x460] sm:$0xff]
  %v156 = vld [vmem:[%s0 + $0x468] sm:$0xff]
  %v157 = vld [vmem:[%s0 + $0x470] sm:$0xff]
  %v158 = vld [vmem:[%s0 + $0x478] sm:$0xff]
  %v159 = vld [vmem:[%s0 + $0x480] sm:$0xff]
  %v160 = vld [vmem:[%s0 + $0x488] sm:$0xff]
  %v161 = vld [vmem:[%s0 + $0x490] sm:$0xff]
  %v162 = vld [vmem:[%s0 + $0x498] sm:$0xff]
  %v163 = vld [vmem:[%s0 + $0x4a0] sm:$0xff]
  %v164 = vld [vmem:[%s0 + $0x4a8] sm:$0xff]
  %v165 = vld [vmem:[%s0 + $0x4b0] sm:$0xff]
  %v166 = vld [vmem:[%s0 + $0x4b8] sm:$0xff]
  %v167 = vld [vmem:[%s0 + $0x4c0] sm:$0xff]
  %v168 = vld [vmem:[%s0 + $0x4c8] sm:$0xff]
  %v169 = vld [vmem:[%s0 + $0x4d0] sm:$0xff]
  %v170 = vld [vmem:[%s0 + $0x4d8] sm:$0xff]
  %v171 = vld [vmem:[%s0 + $0x4e0] sm:$0xff]
  %v172 = vld [vmem:[%s0 + $0x4e8] sm:$0xff]
  %v173 = vld [vmem:[%s0 + $0x4f0] sm:$0xff]
  %v174 = vld [vmem:[%s0 + $0x4f8] sm:$0xff]
  %v175 = vld [vmem:[%s0 + $0x500] sm:$0xff]
  %v176 = vld [vmem:[%s0 + $0x508] sm:$0xff]
  %v177 = vld [vmem:[%s0 + $0x510] sm:$0xff]
  %v178 = vld [vmem:[%s0 + $0x518] sm:$0xff]
  %v179 = vld [vmem:[%s0 + $0x520] sm:$0xff]
  %v180 = vld [vmem:[%s0 + $0x528] sm:$0xff]
  %v181 = vld [vmem:[%s0 + $0x530] sm:$0xff]
  %v182 = vld [vmem:[%s0 + $0x538] sm:$0xff]
  %v183 = vld [vmem:[%s0 + $0x540] sm:$0xff]
  %v184 = vld [vmem:[%s0 + $0x548] sm:$0xff]
  %v185 = vld [vmem:[%s0 + $0x550] sm:$0xff]
  %v186 = vld [vmem:[%s0 + $0x558] sm:$0xff]
  %v187 = vld [vmem:[%s0 + $0x560] sm:$0xff]
  %v188 = vld [vmem:[%s0 + $0x568] sm:$0xff]
  %v189 = vld [vmem:[%s0 + $0x570] sm:$0xff]
  %v190 = vld [vmem:[%s0 + $0x578] sm:$0xff]
  %v191 = vld [vmem:[%s0 + $0x580] sm:$0xff]
  %v192 = vld [vmem:[%s0 + $0x588] sm:$0xff]
  %v193 = vld [vmem:[%s0 + $0x590] sm:$0xff]
  %v194 = vld [vmem:[%s0 + $0x598] sm:$0xff]
  %v195 = vld [vmem:[%s0 + $0x5a0] sm:$0xff]
  %v196 = vld [vmem:[%s0 + $0x5a8] sm:$0xff]
  %v197 = vld [vmem:[%s0 + $0x5b0] sm:$0xff]
  %v198 = vld [vmem:[%s0 + $0x5b8] sm:$0xff]
  %v199 = vld [vmem:[%s0 + $0x5c0] sm:$0xff]
  %v200 = vld [vmem:[%s0 + $0x5c8] sm:$0xff]
  %v201 = vld [vmem:[%s0 + $0x5d0] sm:$0xff]
  %v202 = vld [vmem:[%s0 + $0x5d8] sm:$0xff]
  %v203 = vld [vmem:[%s0 + $0x5e0] sm:$0xff]
  %v204 = vld [vmem:[%s0 + $0x5e8] sm:$0xff]
  %v205 = vld [vmem:[%s0 + $0x5f0] sm:$0xff]
  %v206 = vld [vmem:[%s0 + $0x5f8] sm:$0xff]
  %v207 = vld [vmem:[%s1] sm:$0xf]
  %v208 = vld [vmem:[%s1 + $0x4] sm:$0xf]
  %v209 = vld [vmem:[%s1 + $0x8] sm:$0xf]
  %v210 = vld [vmem:[%s1 + $0xc] sm:$0xf]
  %v211 = vld [vmem:[%s1 + $0x10] sm:$0xf]
  %v212 = vld [vmem:[%s1 + $0x14] sm:$0xf]
  %v213 = vld [vmem:[%s1 + $0x18] sm:$0xf]
  %v214 = vld [vmem:[%s1 + $0x1c] sm:$0xf]
  %v215 = vld [vmem:[%s1 + $0x20] sm:$0xf]
  %v216 = vld [vmem:[%s1 + $0x24] sm:$0xf]
  %v217 = vld [vmem:[%s1 + $0x28] sm:$0xf]
  %v218 = vld [vmem:[%s1 + $0x2c] sm:$0xf]
  %v219 = vld [vmem:[%s1 + $0x30] sm:$0xf]
  %v220 = vld [vmem:[%s1 + $0x34] sm:$0xf]
  %v221 = vld [vmem:[%s1 + $0x38] sm:$0xf]
  %v222 = vld [vmem:[%s1 + $0x3c] sm:$0xf]
  %v223 = vld [vmem:[%s1 + $0x40] sm:$0xf]
  %v224 = vld [vmem:[%s1 + $0x44] sm:$0xf]
  %v225 = vld [vmem:[%s1 + $0x48] sm:$0xf]
  %v226 = vld [vmem:[%s1 + $0x4c] sm:$0xf]
  %v227 = vld [vmem:[%s1 + $0x50] sm:$0xf]
  %v228 = vld [vmem:[%s1 + $0x54] sm:$0xf]
  %v229 = vld [vmem:[%s1 + $0x58] sm:$0xf]
  %v230 = vld [vmem:[%s1 + $0x5c] sm:$0xf]
  %v231 = vld [vmem:[%s1 + $0x60] sm:$0xf]
  %v232 = vld [vmem:[%s1 + $0x64] sm:$0xf]
  %v233 = vld [vmem:[%s1 + $0x68] sm:$0xf]
  %v234 = vld [vmem:[%s1 + $0x6c] sm:$0xf]
  %v235 = vld [vmem:[%s1 + $0x70] sm:$0xf]
  %v236 = vld [vmem:[%s1 + $0x74] sm:$0xf]
  %v237 = vld [vmem:[%s1 + $0x78] sm:$0xf]
  %v238 = vld [vmem:[%s1 + $0x7c] sm:$0xf]
  %v431 = vunpack.c.l.b16 %v15
  %v432 = vunpack.c.h.b16 %v15
  %v433 = vunpack.c.l.b16 %v16
  %v434 = vunpack.c.h.b16 %v16
  %v435 = vunpack.c.l.b16 %v17
  %v436 = vunpack.c.h.b16 %v17
  %v437 = vunpack.c.l.b16 %v18
  %v438 = vunpack.c.h.b16 %v18
  %v439 = vunpack.c.l.b16 %v19
  %v440 = vunpack.c.h.b16 %v19
  %v441 = vunpack.c.l.b16 %v20
  %v442 = vunpack.c.h.b16 %v20
  %v443 = vunpack.c.l.b16 %v21
  %v444 = vunpack.c.h.b16 %v21
  %v445 = vunpack.c.l.b16 %v22
  %v446 = vunpack.c.h.b16 %v22
  %v447 = vunpack.c.l.b16 %v23
  %v448 = vunpack.c.h.b16 %v23
  %v449 = vunpack.c.l.b16 %v24
  %v450 = vunpack.c.h.b16 %v24
  %v451 = vunpack.c.l.b16 %v25
  %v452 = vunpack.c.h.b16 %v25
  %v453 = vunpack.c.l.b16 %v26
  %v454 = vunpack.c.h.b16 %v26
  %v455 = vunpack.c.l.b16 %v27
  %v456 = vunpack.c.h.b16 %v27
  %v457 = vunpack.c.l.b16 %v28
  %v458 = vunpack.c.h.b16 %v28
  %v459 = vunpack.c.l.b16 %v29
  %v460 = vunpack.c.h.b16 %v29
  %v461 = vunpack.c.l.b16 %v30
  %v462 = vunpack.c.h.b16 %v30
  %v463 = vunpack.c.l.b16 %v31
  %v464 = vunpack.c.h.b16 %v31
  %v465 = vunpack.c.l.b16 %v32
  %v466 = vunpack.c.h.b16 %v32
  %v467 = vunpack.c.l.b16 %v33
  %v468 = vunpack.c.h.b16 %v33
  %v469 = vunpack.c.l.b16 %v34
  %v470 = vunpack.c.h.b16 %v34
  %v471 = vunpack.c.l.b16 %v35
  %v472 = vunpack.c.h.b16 %v35
  %v473 = vunpack.c.l.b16 %v36
  %v474 = vunpack.c.h.b16 %v36
  %v475 = vunpack.c.l.b16 %v37
  %v476 = vunpack.c.h.b16 %v37
  %v477 = vunpack.c.l.b16 %v38
  %v478 = vunpack.c.h.b16 %v38
  %v479 = vunpack.c.l.b16 %v39
  %v480 = vunpack.c.h.b16 %v39
  %v481 = vunpack.c.l.b16 %v40
  %v482 = vunpack.c.h.b16 %v40
  %v483 = vunpack.c.l.b16 %v41
  %v484 = vunpack.c.h.b16 %v41
  %v485 = vunpack.c.l.b16 %v42
  %v486 = vunpack.c.h.b16 %v42
  %v487 = vunpack.c.l.b16 %v43
  %v488 = vunpack.c.h.b16 %v43
  %v489 = vunpack.c.l.b16 %v44
  %v490 = vunpack.c.h.b16 %v44
  %v491 = vunpack.c.l.b16 %v45
  %v492 = vunpack.c.h.b16 %v45
  %v493 = vunpack.c.l.b16 %v46
  %v494 = vunpack.c.h.b16 %v46
  %v495 = vunpack.c.l.b16 %v47
  %v496 = vunpack.c.h.b16 %v47
  %v497 = vunpack.c.l.b16 %v48
  %v498 = vunpack.c.h.b16 %v48
  %v499 = vunpack.c.l.b16 %v49
  %v500 = vunpack.c.h.b16 %v49
  %v501 = vunpack.c.l.b16 %v50
  %v502 = vunpack.c.h.b16 %v50
  %v503 = vunpack.c.l.b16 %v51
  %v504 = vunpack.c.h.b16 %v51
  %v505 = vunpack.c.l.b16 %v52
  %v506 = vunpack.c.h.b16 %v52
  %v507 = vunpack.c.l.b16 %v53
  %v508 = vunpack.c.h.b16 %v53
  %v509 = vunpack.c.l.b16 %v54
  %v510 = vunpack.c.h.b16 %v54
  %v511 = vunpack.c.l.b16 %v55
  %v512 = vunpack.c.h.b16 %v55
  %v513 = vunpack.c.l.b16 %v56
  %v514 = vunpack.c.h.b16 %v56
  %v515 = vunpack.c.l.b16 %v57
  %v516 = vunpack.c.h.b16 %v57
  %v517 = vunpack.c.l.b16 %v58
  %v518 = vunpack.c.h.b16 %v58
  %v519 = vunpack.c.l.b16 %v59
  %v520 = vunpack.c.h.b16 %v59
  %v521 = vunpack.c.l.b16 %v60
  %v522 = vunpack.c.h.b16 %v60
  %v523 = vunpack.c.l.b16 %v61
  %v524 = vunpack.c.h.b16 %v61
  %v525 = vunpack.c.l.b16 %v62
  %v526 = vunpack.c.h.b16 %v62
  %v527 = vunpack.c.l.b16 %v63
  %v528 = vunpack.c.h.b16 %v63
  %v529 = vunpack.c.l.b16 %v64
  %v530 = vunpack.c.h.b16 %v64
  %v531 = vunpack.c.l.b16 %v65
  %v532 = vunpack.c.h.b16 %v65
  %v533 = vunpack.c.l.b16 %v66
  %v534 = vunpack.c.h.b16 %v66
  %v535 = vunpack.c.l.b16 %v67
  %v536 = vunpack.c.h.b16 %v67
  %v537 = vunpack.c.l.b16 %v68
  %v538 = vunpack.c.h.b16 %v68
  %v539 = vunpack.c.l.b16 %v69
  %v540 = vunpack.c.h.b16 %v69
  %v541 = vunpack.c.l.b16 %v70
  %v542 = vunpack.c.h.b16 %v70
  %v543 = vunpack.c.l.b16 %v71
  %v544 = vunpack.c.h.b16 %v71
  %v545 = vunpack.c.l.b16 %v72
  %v546 = vunpack.c.h.b16 %v72
  %v547 = vunpack.c.l.b16 %v73
  %v548 = vunpack.c.h.b16 %v73
  %v549 = vunpack.c.l.b16 %v74
  %v550 = vunpack.c.h.b16 %v74
  %v551 = vunpack.c.l.b16 %v75
  %v552 = vunpack.c.h.b16 %v75
  %v553 = vunpack.c.l.b16 %v76
  %v554 = vunpack.c.h.b16 %v76
  %v555 = vunpack.c.l.b16 %v77
  %v556 = vunpack.c.h.b16 %v77
  %v557 = vunpack.c.l.b16 %v78
  %v558 = vunpack.c.h.b16 %v78
  %v559 = vunpack.c.l.b16 %v79
  %v560 = vunpack.c.h.b16 %v79
  %v561 = vunpack.c.l.b16 %v80
  %v562 = vunpack.c.h.b16 %v80
  %v563 = vunpack.c.l.b16 %v81
  %v564 = vunpack.c.h.b16 %v81
  %v565 = vunpack.c.l.b16 %v82
  %v566 = vunpack.c.h.b16 %v82
  %v567 = vunpack.c.l.b16 %v83
  %v568 = vunpack.c.h.b16 %v83
  %v569 = vunpack.c.l.b16 %v84
  %v570 = vunpack.c.h.b16 %v84
  %v571 = vunpack.c.l.b16 %v85
  %v572 = vunpack.c.h.b16 %v85
  %v573 = vunpack.c.l.b16 %v86
  %v574 = vunpack.c.h.b16 %v86
  %v575 = vunpack.c.l.b16 %v87
  %v576 = vunpack.c.h.b16 %v87
  %v577 = vunpack.c.l.b16 %v88
  %v578 = vunpack.c.h.b16 %v88
  %v579 = vunpack.c.l.b16 %v89
  %v580 = vunpack.c.h.b16 %v89
  %v581 = vunpack.c.l.b16 %v90
  %v582 = vunpack.c.h.b16 %v90
  %v583 = vunpack.c.l.b16 %v91
  %v584 = vunpack.c.h.b16 %v91
  %v585 = vunpack.c.l.b16 %v92
  %v586 = vunpack.c.h.b16 %v92
  %v587 = vunpack.c.l.b16 %v93
  %v588 = vunpack.c.h.b16 %v93
  %v589 = vunpack.c.l.b16 %v94
  %v590 = vunpack.c.h.b16 %v94
  %v591 = vunpack.c.l.b16 %v95
  %v592 = vunpack.c.h.b16 %v95
  %v593 = vunpack.c.l.b16 %v96
  %v594 = vunpack.c.h.b16 %v96
  %v595 = vunpack.c.l.b16 %v97
  %v596 = vunpack.c.h.b16 %v97
  %v597 = vunpack.c.l.b16 %v98
  %v598 = vunpack.c.h.b16 %v98
  %v599 = vunpack.c.l.b16 %v99
  %v600 = vunpack.c.h.b16 %v99
  %v601 = vunpack.c.l.b16 %v100
  %v602 = vunpack.c.h.b16 %v100
  %v603 = vunpack.c.l.b16 %v101
  %v604 = vunpack.c.h.b16 %v101
  %v605 = vunpack.c.l.b16 %v102
  %v606 = vunpack.c.h.b16 %v102
  %v607 = vunpack.c.l.b16 %v103
  %v608 = vunpack.c.h.b16 %v103
  %v609 = vunpack.c.l.b16 %v104
  %v610 = vunpack.c.h.b16 %v104
  %v611 = vunpack.c.l.b16 %v105
  %v612 = vunpack.c.h.b16 %v105
  %v613 = vunpack.c.l.b16 %v106
  %v614 = vunpack.c.h.b16 %v106
  %v615 = vunpack.c.l.b16 %v107
  %v616 = vunpack.c.h.b16 %v107
  %v617 = vunpack.c.l.b16 %v108
  %v618 = vunpack.c.h.b16 %v108
  %v619 = vunpack.c.l.b16 %v109
  %v620 = vunpack.c.h.b16 %v109
  %v621 = vunpack.c.l.b16 %v110
  %v622 = vunpack.c.h.b16 %v110
  %v623 = vunpack.c.l.b16 %v111
  %v624 = vunpack.c.h.b16 %v111
  %v625 = vunpack.c.l.b16 %v112
  %v626 = vunpack.c.h.b16 %v112
  %v627 = vunpack.c.l.b16 %v113
  %v628 = vunpack.c.h.b16 %v113
  %v629 = vunpack.c.l.b16 %v114
  %v630 = vunpack.c.h.b16 %v114
  %v631 = vunpack.c.l.b16 %v115
  %v632 = vunpack.c.h.b16 %v115
  %v633 = vunpack.c.l.b16 %v116
  %v634 = vunpack.c.h.b16 %v116
  %v635 = vunpack.c.l.b16 %v117
  %v636 = vunpack.c.h.b16 %v117
  %v637 = vunpack.c.l.b16 %v118
  %v638 = vunpack.c.h.b16 %v118
  %v639 = vunpack.c.l.b16 %v119
  %v640 = vunpack.c.h.b16 %v119
  %v641 = vunpack.c.l.b16 %v120
  %v642 = vunpack.c.h.b16 %v120
  %v643 = vunpack.c.l.b16 %v121
  %v644 = vunpack.c.h.b16 %v121
  %v645 = vunpack.c.l.b16 %v122
  %v646 = vunpack.c.h.b16 %v122
  %v647 = vunpack.c.l.b16 %v123
  %v648 = vunpack.c.h.b16 %v123
  %v649 = vunpack.c.l.b16 %v124
  %v650 = vunpack.c.h.b16 %v124
  %v651 = vunpack.c.l.b16 %v125
  %v652 = vunpack.c.h.b16 %v125
  %v653 = vunpack.c.l.b16 %v126
  %v654 = vunpack.c.h.b16 %v126
  %v655 = vunpack.c.l.b16 %v127
  %v656 = vunpack.c.h.b16 %v127
  %v657 = vunpack.c.l.b16 %v128
  %v658 = vunpack.c.h.b16 %v128
  %v659 = vunpack.c.l.b16 %v129
  %v660 = vunpack.c.h.b16 %v129
  %v661 = vunpack.c.l.b16 %v130
  %v662 = vunpack.c.h.b16 %v130
  %v663 = vunpack.c.l.b16 %v131
  %v664 = vunpack.c.h.b16 %v131
  %v665 = vunpack.c.l.b16 %v132
  %v666 = vunpack.c.h.b16 %v132
  %v667 = vunpack.c.l.b16 %v133
  %v668 = vunpack.c.h.b16 %v133
  %v669 = vunpack.c.l.b16 %v134
  %v670 = vunpack.c.h.b16 %v134
  %v671 = vunpack.c.l.b16 %v135
  %v672 = vunpack.c.h.b16 %v135
  %v673 = vunpack.c.l.b16 %v136
  %v674 = vunpack.c.h.b16 %v136
  %v675 = vunpack.c.l.b16 %v137
  %v676 = vunpack.c.h.b16 %v137
  %v677 = vunpack.c.l.b16 %v138
  %v678 = vunpack.c.h.b16 %v138
  %v679 = vunpack.c.l.b16 %v139
  %v680 = vunpack.c.h.b16 %v139
  %v681 = vunpack.c.l.b16 %v140
  %v682 = vunpack.c.h.b16 %v140
  %v683 = vunpack.c.l.b16 %v141
  %v684 = vunpack.c.h.b16 %v141
  %v685 = vunpack.c.l.b16 %v142
  %v686 = vunpack.c.h.b16 %v142
  %v687 = vunpack.c.l.b16 %v143
  %v688 = vunpack.c.h.b16 %v143
  %v689 = vunpack.c.l.b16 %v144
  %v690 = vunpack.c.h.b16 %v144
  %v691 = vunpack.c.l.b16 %v145
  %v692 = vunpack.c.h.b16 %v145
  %v693 = vunpack.c.l.b16 %v146
  %v694 = vunpack.c.h.b16 %v146
  %v695 = vunpack.c.l.b16 %v147
  %v696 = vunpack.c.h.b16 %v147
  %v697 = vunpack.c.l.b16 %v148
  %v698 = vunpack.c.h.b16 %v148
  %v699 = vunpack.c.l.b16 %v149
  %v700 = vunpack.c.h.b16 %v149
  %v701 = vunpack.c.l.b16 %v150
  %v702 = vunpack.c.h.b16 %v150
  %v703 = vunpack.c.l.b16 %v151
  %v704 = vunpack.c.h.b16 %v151
  %v705 = vunpack.c.l.b16 %v152
  %v706 = vunpack.c.h.b16 %v152
  %v707 = vunpack.c.l.b16 %v153
  %v708 = vunpack.c.h.b16 %v153
  %v709 = vunpack.c.l.b16 %v154
  %v710 = vunpack.c.h.b16 %v154
  %v711 = vunpack.c.l.b16 %v155
  %v712 = vunpack.c.h.b16 %v155
  %v713 = vunpack.c.l.b16 %v156
  %v714 = vunpack.c.h.b16 %v156
  %v715 = vunpack.c.l.b16 %v157
  %v716 = vunpack.c.h.b16 %v157
  %v717 = vunpack.c.l.b16 %v158
  %v718 = vunpack.c.h.b16 %v158
  %v719 = vunpack.c.l.b16 %v159
  %v720 = vunpack.c.h.b16 %v159
  %v721 = vunpack.c.l.b16 %v160
  %v722 = vunpack.c.h.b16 %v160
  %v723 = vunpack.c.l.b16 %v161
  %v724 = vunpack.c.h.b16 %v161
  %v725 = vunpack.c.l.b16 %v162
  %v726 = vunpack.c.h.b16 %v162
  %v727 = vunpack.c.l.b16 %v163
  %v728 = vunpack.c.h.b16 %v163
  %v729 = vunpack.c.l.b16 %v164
  %v730 = vunpack.c.h.b16 %v164
  %v731 = vunpack.c.l.b16 %v165
  %v732 = vunpack.c.h.b16 %v165
  %v733 = vunpack.c.l.b16 %v166
  %v734 = vunpack.c.h.b16 %v166
  %v735 = vunpack.c.l.b16 %v167
  %v736 = vunpack.c.h.b16 %v167
  %v737 = vunpack.c.l.b16 %v168
  %v738 = vunpack.c.h.b16 %v168
  %v739 = vunpack.c.l.b16 %v169
  %v740 = vunpack.c.h.b16 %v169
  %v741 = vunpack.c.l.b16 %v170
  %v742 = vunpack.c.h.b16 %v170
  %v743 = vunpack.c.l.b16 %v171
  %v744 = vunpack.c.h.b16 %v171
  %v745 = vunpack.c.l.b16 %v172
  %v746 = vunpack.c.h.b16 %v172
  %v747 = vunpack.c.l.b16 %v173
  %v748 = vunpack.c.h.b16 %v173
  %v749 = vunpack.c.l.b16 %v174
  %v750 = vunpack.c.h.b16 %v174
  %v751 = vunpack.c.l.b16 %v175
  %v752 = vunpack.c.h.b16 %v175
  %v753 = vunpack.c.l.b16 %v176
  %v754 = vunpack.c.h.b16 %v176
  %v755 = vunpack.c.l.b16 %v177
  %v756 = vunpack.c.h.b16 %v177
  %v757 = vunpack.c.l.b16 %v178
  %v758 = vunpack.c.h.b16 %v178
  %v759 = vunpack.c.l.b16 %v179
  %v760 = vunpack.c.h.b16 %v179
  %v761 = vunpack.c.l.b16 %v180
  %v762 = vunpack.c.h.b16 %v180
  %v763 = vunpack.c.l.b16 %v181
  %v764 = vunpack.c.h.b16 %v181
  %v765 = vunpack.c.l.b16 %v182
  %v766 = vunpack.c.h.b16 %v182
  %v767 = vunpack.c.l.b16 %v183
  %v768 = vunpack.c.h.b16 %v183
  %v769 = vunpack.c.l.b16 %v184
  %v770 = vunpack.c.h.b16 %v184
  %v771 = vunpack.c.l.b16 %v185
  %v772 = vunpack.c.h.b16 %v185
  %v773 = vunpack.c.l.b16 %v186
  %v774 = vunpack.c.h.b16 %v186
  %v775 = vunpack.c.l.b16 %v187
  %v776 = vunpack.c.h.b16 %v187
  %v777 = vunpack.c.l.b16 %v188
  %v778 = vunpack.c.h.b16 %v188
  %v779 = vunpack.c.l.b16 %v189
  %v780 = vunpack.c.h.b16 %v189
  %v781 = vunpack.c.l.b16 %v190
  %v782 = vunpack.c.h.b16 %v190
  %v783 = vunpack.c.l.b16 %v191
  %v784 = vunpack.c.h.b16 %v191
  %v785 = vunpack.c.l.b16 %v192
  %v786 = vunpack.c.h.b16 %v192
  %v787 = vunpack.c.l.b16 %v193
  %v788 = vunpack.c.h.b16 %v193
  %v789 = vunpack.c.l.b16 %v194
  %v790 = vunpack.c.h.b16 %v194
  %v791 = vunpack.c.l.b16 %v195
  %v792 = vunpack.c.h.b16 %v195
  %v793 = vunpack.c.l.b16 %v196
  %v794 = vunpack.c.h.b16 %v196
  %v795 = vunpack.c.l.b16 %v197
  %v796 = vunpack.c.h.b16 %v197
  %v797 = vunpack.c.l.b16 %v198
  %v798 = vunpack.c.h.b16 %v198
  %v799 = vunpack.c.l.b16 %v199
  %v800 = vunpack.c.h.b16 %v199
  %v801 = vunpack.c.l.b16 %v200
  %v802 = vunpack.c.h.b16 %v200
  %v803 = vunpack.c.l.b16 %v201
  %v804 = vunpack.c.h.b16 %v201
  %v805 = vunpack.c.l.b16 %v202
  %v806 = vunpack.c.h.b16 %v202
  %v807 = vunpack.c.l.b16 %v203
  %v808 = vunpack.c.h.b16 %v203
  %v809 = vunpack.c.l.b16 %v204
  %v810 = vunpack.c.h.b16 %v204
  %v811 = vunpack.c.l.b16 %v205
  %v812 = vunpack.c.h.b16 %v205
  %v813 = vunpack.c.l.b16 %v206
  %v814 = vunpack.c.h.b16 %v206
  %v815 = vpack.c.b16 %v433, %v431
  %v816 = vpack.c.b16 %v434, %v432
  %v817 = vpack.c.b16 %v437, %v435
  %v818 = vpack.c.b16 %v438, %v436
  %v819 = vpack.c.b16 %v441, %v439
  %v820 = vpack.c.b16 %v442, %v440
  %v821 = vpack.c.b16 %v445, %v443
  %v822 = vpack.c.b16 %v446, %v444
  %v823 = vpack.c.b16 %v449, %v447
  %v824 = vpack.c.b16 %v450, %v448
  %v825 = vpack.c.b16 %v453, %v451
  %v826 = vpack.c.b16 %v454, %v452
  %v827 = vpack.c.b16 %v457, %v455
  %v828 = vpack.c.b16 %v458, %v456
  %v829 = vpack.c.b16 %v461, %v459
  %v830 = vpack.c.b16 %v462, %v460
  %v831 = vpack.c.b16 %v465, %v463
  %v832 = vpack.c.b16 %v466, %v464
  %v833 = vpack.c.b16 %v469, %v467
  %v834 = vpack.c.b16 %v470, %v468
  %v835 = vpack.c.b16 %v473, %v471
  %v836 = vpack.c.b16 %v474, %v472
  %v837 = vpack.c.b16 %v477, %v475
  %v838 = vpack.c.b16 %v478, %v476
  %v839 = vpack.c.b16 %v481, %v479
  %v840 = vpack.c.b16 %v482, %v480
  %v841 = vpack.c.b16 %v485, %v483
  %v842 = vpack.c.b16 %v486, %v484
  %v843 = vpack.c.b16 %v489, %v487
  %v844 = vpack.c.b16 %v490, %v488
  %v845 = vpack.c.b16 %v493, %v491
  %v846 = vpack.c.b16 %v494, %v492
  %v847 = vpack.c.b16 %v497, %v495
  %v848 = vpack.c.b16 %v498, %v496
  %v849 = vpack.c.b16 %v501, %v499
  %v850 = vpack.c.b16 %v502, %v500
  %v851 = vpack.c.b16 %v505, %v503
  %v852 = vpack.c.b16 %v506, %v504
  %v853 = vpack.c.b16 %v509, %v507
  %v854 = vpack.c.b16 %v510, %v508
  %v855 = vpack.c.b16 %v513, %v511
  %v856 = vpack.c.b16 %v514, %v512
  %v857 = vpack.c.b16 %v517, %v515
  %v858 = vpack.c.b16 %v518, %v516
  %v859 = vpack.c.b16 %v521, %v519
  %v860 = vpack.c.b16 %v522, %v520
  %v861 = vpack.c.b16 %v525, %v523
  %v862 = vpack.c.b16 %v526, %v524
  %v863 = vpack.c.b16 %v529, %v527
  %v864 = vpack.c.b16 %v530, %v528
  %v865 = vpack.c.b16 %v533, %v531
  %v866 = vpack.c.b16 %v534, %v532
  %v867 = vpack.c.b16 %v537, %v535
  %v868 = vpack.c.b16 %v538, %v536
  %v869 = vpack.c.b16 %v541, %v539
  %v870 = vpack.c.b16 %v542, %v540
  %v871 = vpack.c.b16 %v545, %v543
  %v872 = vpack.c.b16 %v546, %v544
  %v873 = vpack.c.b16 %v549, %v547
  %v874 = vpack.c.b16 %v550, %v548
  %v875 = vpack.c.b16 %v553, %v551
  %v876 = vpack.c.b16 %v554, %v552
  %v877 = vpack.c.b16 %v557, %v555
  %v878 = vpack.c.b16 %v558, %v556
  %v879 = vpack.c.b16 %v561, %v559
  %v880 = vpack.c.b16 %v562, %v560
  %v881 = vpack.c.b16 %v565, %v563
  %v882 = vpack.c.b16 %v566, %v564
  %v883 = vpack.c.b16 %v569, %v567
  %v884 = vpack.c.b16 %v570, %v568
  %v885 = vpack.c.b16 %v573, %v571
  %v886 = vpack.c.b16 %v574, %v572
  %v887 = vpack.c.b16 %v577, %v575
  %v888 = vpack.c.b16 %v578, %v576
  %v889 = vpack.c.b16 %v581, %v579
  %v890 = vpack.c.b16 %v582, %v580
  %v891 = vpack.c.b16 %v585, %v583
  %v892 = vpack.c.b16 %v586, %v584
  %v893 = vpack.c.b16 %v589, %v587
  %v894 = vpack.c.b16 %v590, %v588
  %v895 = vpack.c.b16 %v593, %v591
  %v896 = vpack.c.b16 %v594, %v592
  %v897 = vpack.c.b16 %v597, %v595
  %v898 = vpack.c.b16 %v598, %v596
  %v899 = vpack.c.b16 %v601, %v599
  %v900 = vpack.c.b16 %v602, %v600
  %v901 = vpack.c.b16 %v605, %v603
  %v902 = vpack.c.b16 %v606, %v604
  %v903 = vpack.c.b16 %v609, %v607
  %v904 = vpack.c.b16 %v610, %v608
  %v905 = vpack.c.b16 %v613, %v611
  %v906 = vpack.c.b16 %v614, %v612
  %v907 = vpack.c.b16 %v617, %v615
  %v908 = vpack.c.b16 %v618, %v616
  %v909 = vpack.c.b16 %v621, %v619
  %v910 = vpack.c.b16 %v622, %v620
  %v911 = vpack.c.b16 %v625, %v623
  %v912 = vpack.c.b16 %v626, %v624
  %v913 = vpack.c.b16 %v629, %v627
  %v914 = vpack.c.b16 %v630, %v628
  %v915 = vpack.c.b16 %v633, %v631
  %v916 = vpack.c.b16 %v634, %v632
  %v917 = vpack.c.b16 %v637, %v635
  %v918 = vpack.c.b16 %v638, %v636
  %v919 = vpack.c.b16 %v641, %v639
  %v920 = vpack.c.b16 %v642, %v640
  %v921 = vpack.c.b16 %v645, %v643
  %v922 = vpack.c.b16 %v646, %v644
  %v923 = vpack.c.b16 %v649, %v647
  %v924 = vpack.c.b16 %v650, %v648
  %v925 = vpack.c.b16 %v653, %v651
  %v926 = vpack.c.b16 %v654, %v652
  %v927 = vpack.c.b16 %v657, %v655
  %v928 = vpack.c.b16 %v658, %v656
  %v929 = vpack.c.b16 %v661, %v659
  %v930 = vpack.c.b16 %v662, %v660
  %v931 = vpack.c.b16 %v665, %v663
  %v932 = vpack.c.b16 %v666, %v664
  %v933 = vpack.c.b16 %v669, %v667
  %v934 = vpack.c.b16 %v670, %v668
  %v935 = vpack.c.b16 %v673, %v671
  %v936 = vpack.c.b16 %v674, %v672
  %v937 = vpack.c.b16 %v677, %v675
  %v938 = vpack.c.b16 %v678, %v676
  %v939 = vpack.c.b16 %v681, %v679
  %v940 = vpack.c.b16 %v682, %v680
  %v941 = vpack.c.b16 %v685, %v683
  %v942 = vpack.c.b16 %v686, %v684
  %v943 = vpack.c.b16 %v689, %v687
  %v944 = vpack.c.b16 %v690, %v688
  %v945 = vpack.c.b16 %v693, %v691
  %v946 = vpack.c.b16 %v694, %v692
  %v947 = vpack.c.b16 %v697, %v695
  %v948 = vpack.c.b16 %v698, %v696
  %v949 = vpack.c.b16 %v701, %v699
  %v950 = vpack.c.b16 %v702, %v700
  %v951 = vpack.c.b16 %v705, %v703
  %v952 = vpack.c.b16 %v706, %v704
  %v953 = vpack.c.b16 %v709, %v707
  %v954 = vpack.c.b16 %v710, %v708
  %v955 = vpack.c.b16 %v713, %v711
  %v956 = vpack.c.b16 %v714, %v712
  %v957 = vpack.c.b16 %v717, %v715
  %v958 = vpack.c.b16 %v718, %v716
  %v959 = vpack.c.b16 %v721, %v719
  %v960 = vpack.c.b16 %v722, %v720
  %v961 = vpack.c.b16 %v725, %v723
  %v962 = vpack.c.b16 %v726, %v724
  %v963 = vpack.c.b16 %v729, %v727
  %v964 = vpack.c.b16 %v730, %v728
  %v965 = vpack.c.b16 %v733, %v731
  %v966 = vpack.c.b16 %v734, %v732
  %v967 = vpack.c.b16 %v737, %v735
  %v968 = vpack.c.b16 %v738, %v736
  %v969 = vpack.c.b16 %v741, %v739
  %v970 = vpack.c.b16 %v742, %v740
  %v971 = vpack.c.b16 %v745, %v743
  %v972 = vpack.c.b16 %v746, %v744
  %v973 = vpack.c.b16 %v749, %v747
  %v974 = vpack.c.b16 %v750, %v748
  %v975 = vpack.c.b16 %v753, %v751
  %v976 = vpack.c.b16 %v754, %v752
  %v977 = vpack.c.b16 %v757, %v755
  %v978 = vpack.c.b16 %v758, %v756
  %v979 = vpack.c.b16 %v761, %v759
  %v980 = vpack.c.b16 %v762, %v760
  %v981 = vpack.c.b16 %v765, %v763
  %v982 = vpack.c.b16 %v766, %v764
  %v983 = vpack.c.b16 %v769, %v767
  %v984 = vpack.c.b16 %v770, %v768
  %v985 = vpack.c.b16 %v773, %v771
  %v986 = vpack.c.b16 %v774, %v772
  %v987 = vpack.c.b16 %v777, %v775
  %v988 = vpack.c.b16 %v778, %v776
  %v989 = vpack.c.b16 %v781, %v779
  %v990 = vpack.c.b16 %v782, %v780
  %v991 = vpack.c.b16 %v785, %v783
  %v992 = vpack.c.b16 %v786, %v784
  %v993 = vpack.c.b16 %v789, %v787
  %v994 = vpack.c.b16 %v790, %v788
  %v995 = vpack.c.b16 %v793, %v791
  %v996 = vpack.c.b16 %v794, %v792
  %v997 = vpack.c.b16 %v797, %v795
  %v998 = vpack.c.b16 %v798, %v796
  %v999 = vpack.c.b16 %v801, %v799
  %v1000 = vpack.c.b16 %v802, %v800
  %v1001 = vpack.c.b16 %v805, %v803
  %v1002 = vpack.c.b16 %v806, %v804
  %v1003 = vpack.c.b16 %v809, %v807
  %v1004 = vpack.c.b16 %v810, %v808
  %v1005 = vpack.c.b16 %v813, %v811
  %v1006 = vpack.c.b16 %v814, %v812
  %v1231 = vunpack.c.l.b16 %v207
  %v1232 = vunpack.c.l.b16 %v208
  %v1233 = vunpack.c.l.b16 %v209
  %v1234 = vunpack.c.l.b16 %v210
  %v1235 = vunpack.c.l.b16 %v211
  %v1236 = vunpack.c.l.b16 %v212
  %v1237 = vunpack.c.l.b16 %v213
  %v1238 = vunpack.c.l.b16 %v214
  %v1239 = vunpack.c.l.b16 %v215
  %v1240 = vunpack.c.l.b16 %v216
  %v1241 = vunpack.c.l.b16 %v217
  %v1242 = vunpack.c.l.b16 %v218
  %v1243 = vunpack.c.l.b16 %v219
  %v1244 = vunpack.c.l.b16 %v220
  %v1245 = vunpack.c.l.b16 %v221
  %v1246 = vunpack.c.l.b16 %v222
  %v1247 = vunpack.c.l.b16 %v223
  %v1248 = vunpack.c.l.b16 %v224
  %v1249 = vunpack.c.l.b16 %v225
  %v1250 = vunpack.c.l.b16 %v226
  %v1251 = vunpack.c.l.b16 %v227
  %v1252 = vunpack.c.l.b16 %v228
  %v1253 = vunpack.c.l.b16 %v229
  %v1254 = vunpack.c.l.b16 %v230
  %v1255 = vunpack.c.l.b16 %v231
  %v1256 = vunpack.c.l.b16 %v232
  %v1257 = vunpack.c.l.b16 %v233
  %v1258 = vunpack.c.l.b16 %v234
  %v1259 = vunpack.c.l.b16 %v235
  %v1260 = vunpack.c.l.b16 %v236
  %v1261 = vunpack.c.l.b16 %v237
  %v1262 = vunpack.c.l.b16 %v238
  %v1263 = vpack.c.b16 %v1232, %v1231
  %v1264 = vpack.c.b16 %v1234, %v1233
  %v1265 = vpack.c.b16 %v1236, %v1235
  %v1266 = vpack.c.b16 %v1238, %v1237
  %v1267 = vpack.c.b16 %v1240, %v1239
  %v1268 = vpack.c.b16 %v1242, %v1241
  %v1269 = vpack.c.b16 %v1244, %v1243
  %v1270 = vpack.c.b16 %v1246, %v1245
  %v1271 = vpack.c.b16 %v1248, %v1247
  %v1272 = vpack.c.b16 %v1250, %v1249
  %v1273 = vpack.c.b16 %v1252, %v1251
  %v1274 = vpack.c.b16 %v1254, %v1253
  %v1275 = vpack.c.b16 %v1256, %v1255
  %v1276 = vpack.c.b16 %v1258, %v1257
  %v1277 = vpack.c.b16 %v1260, %v1259
  %v1278 = vpack.c.b16 %v1262, %v1261
  %1295 = vmatprep.subr.bf16.mxu0 0
  %1296 = vmatpush1.bf16.msra.mxu0 %v1270
  %1297 = vmatprep.subr.bf16.mxu0 0
  %1298 = vmatpush1.bf16.msra.mxu0 %v1269
  %1299 = vmatprep.subr.bf16.mxu0 0
  %1300 = vmatpush1.bf16.msra.mxu0 %v1268
  %1301 = vmatprep.subr.bf16.mxu0 0
  %1302 = vmatpush1.bf16.msra.mxu0 %v1267
  %1303 = vmatprep.subr.bf16.mxu0 0
  %1304 = vmatpush1.bf16.msra.mxu0 %v1266
  %1305 = vmatprep.subr.bf16.mxu0 0
  %1306 = vmatpush1.bf16.msra.mxu0 %v1265
  %1307 = vmatprep.subr.bf16.mxu0 0
  %1308 = vmatpush1.bf16.msra.mxu0 %v1264
  %1309 = vmatprep.subr.bf16.mxu0 0
  %1310 = vmatpush1.bf16.msra.mxu0 %v1263
  %1311 = vmatprep.subr.bf16.mxu0 0
  %1312 = vmatpush2.bf16.msra.mxu0 %v1278
  %1313 = vmatprep.subr.bf16.mxu0 0
  %1314 = vmatpush2.bf16.msra.mxu0 %v1277
  %1315 = vmatprep.subr.bf16.mxu0 0
  %1316 = vmatpush2.bf16.msra.mxu0 %v1276
  %1317 = vmatprep.subr.bf16.mxu0 0
  %1318 = vmatpush2.bf16.msra.mxu0 %v1275
  %1319 = vmatprep.subr.bf16.mxu0 0
  %1320 = vmatpush2.bf16.msra.mxu0 %v1274
  %1321 = vmatprep.subr.bf16.mxu0 0
  %1322 = vmatpush2.bf16.msra.mxu0 %v1273
  %1323 = vmatprep.subr.bf16.mxu0 0
  %1324 = vmatpush2.bf16.msra.mxu0 %v1272
  %1325 = vmatprep.subr.bf16.mxu0 0
  %1326 = vmatpush2.bf16.msra.mxu0 %v1271
  %1327 = vmatprep.mubr.bf16.mxu0 %v816
  %1328 = vmatmul.mubr.bf16.gmra.mxu0 %v815
  %v1329 = vpop.f32.mrf.mxu0
  %v1330 = vadd.f32 0.0, %v1329
  %v1331 = vpop.f32.mrf.mxu0
  %v1332 = vpop.f32.mrf.mxu0
  %v1333 = vadd.f32 0.0, %v1332
  %v1334 = vpop.f32.mrf.mxu0
  %1335 = vmatprep.mubr.bf16.mxu0 %v818
  %1336 = vmatmul.mubr.bf16.gmra.mxu0 %v817
  %v1337 = vpop.f32.mrf.mxu0
  %v1338 = vadd.f32 0.0, %v1337
  %v1339 = vpop.f32.mrf.mxu0
  %v1340 = vpop.f32.mrf.mxu0
  %v1341 = vadd.f32 0.0, %v1340
  %v1342 = vpop.f32.mrf.mxu0
  %1343 = vmatprep.mubr.bf16.mxu0 %v820
  %1344 = vmatmul.mubr.bf16.gmra.mxu0 %v819
  %v1345 = vpop.f32.mrf.mxu0
  %v1346 = vadd.f32 0.0, %v1345
  %v1347 = vpop.f32.mrf.mxu0
  %v1348 = vpop.f32.mrf.mxu0
  %v1349 = vadd.f32 0.0, %v1348
  %v1350 = vpop.f32.mrf.mxu0
  %1351 = vmatprep.mubr.bf16.mxu0 %v822
  %1352 = vmatmul.mubr.bf16.gmra.mxu0 %v821
  %v1353 = vpop.f32.mrf.mxu0
  %v1354 = vadd.f32 0.0, %v1353
  %v1355 = vpop.f32.mrf.mxu0
  %v1356 = vpop.f32.mrf.mxu0
  %v1357 = vadd.f32 0.0, %v1356
  %v1358 = vpop.f32.mrf.mxu0
  %1359 = vmatprep.mubr.bf16.mxu0 %v824
  %1360 = vmatmul.mubr.bf16.gmra.mxu0 %v823
  %v1361 = vpop.f32.mrf.mxu0
  %v1362 = vadd.f32 0.0, %v1361
  %v1363 = vpop.f32.mrf.mxu0
  %v1364 = vpop.f32.mrf.mxu0
  %v1365 = vadd.f32 0.0, %v1364
  %v1366 = vpop.f32.mrf.mxu0
  %1367 = vmatprep.mubr.bf16.mxu0 %v826
  %1368 = vmatmul.mubr.bf16.gmra.mxu0 %v825
  %v1369 = vpop.f32.mrf.mxu0
  %v1370 = vadd.f32 0.0, %v1369
  %v1371 = vpop.f32.mrf.mxu0
  %v1372 = vpop.f32.mrf.mxu0
  %v1373 = vadd.f32 0.0, %v1372
  %v1374 = vpop.f32.mrf.mxu0
  %1375 = vmatprep.mubr.bf16.mxu0 %v828
  %1376 = vmatmul.mubr.bf16.gmra.mxu0 %v827
  %v1377 = vpop.f32.mrf.mxu0
  %v1378 = vadd.f32 0.0, %v1377
  %v1379 = vpop.f32.mrf.mxu0
  %v1380 = vpop.f32.mrf.mxu0
  %v1381 = vadd.f32 0.0, %v1380
  %v1382 = vpop.f32.mrf.mxu0
  %1383 = vmatprep.mubr.bf16.mxu0 %v830
  %1384 = vmatmul.mubr.bf16.gmra.mxu0 %v829
  %v1385 = vpop.f32.mrf.mxu0
  %v1386 = vadd.f32 0.0, %v1385
  %v1387 = vpop.f32.mrf.mxu0
  %v1388 = vpop.f32.mrf.mxu0
  %v1389 = vadd.f32 0.0, %v1388
  %v1390 = vpop.f32.mrf.mxu0
  %1391 = vmatprep.mubr.bf16.mxu0 %v832
  %1392 = vmatmul.mubr.bf16.gmra.mxu0 %v831
  %v1393 = vpop.f32.mrf.mxu0
  %v1394 = vadd.f32 0.0, %v1393
  %v1395 = vpop.f32.mrf.mxu0
  %v1396 = vpop.f32.mrf.mxu0
  %v1397 = vadd.f32 0.0, %v1396
  %v1398 = vpop.f32.mrf.mxu0
  %1399 = vmatprep.mubr.bf16.mxu0 %v834
  %1400 = vmatmul.mubr.bf16.gmra.mxu0 %v833
  %v1401 = vpop.f32.mrf.mxu0
  %v1402 = vadd.f32 0.0, %v1401
  %v1403 = vpop.f32.mrf.mxu0
  %v1404 = vpop.f32.mrf.mxu0
  %v1405 = vadd.f32 0.0, %v1404
  %v1406 = vpop.f32.mrf.mxu0
  %1407 = vmatprep.mubr.bf16.mxu0 %v836
  %1408 = vmatmul.mubr.bf16.gmra.mxu0 %v835
  %v1409 = vpop.f32.mrf.mxu0
  %v1410 = vadd.f32 0.0, %v1409
  %v1411 = vpop.f32.mrf.mxu0
  %v1412 = vpop.f32.mrf.mxu0
  %v1413 = vadd.f32 0.0, %v1412
  %v1414 = vpop.f32.mrf.mxu0
  %1415 = vmatprep.mubr.bf16.mxu0 %v838
  %1416 = vmatmul.mubr.bf16.gmra.mxu0 %v837
  %v1417 = vpop.f32.mrf.mxu0
  %v1418 = vadd.f32 0.0, %v1417
  %v1419 = vpop.f32.mrf.mxu0
  %v1420 = vpop.f32.mrf.mxu0
  %v1421 = vadd.f32 0.0, %v1420
  %v1422 = vpop.f32.mrf.mxu0
  %1423 = vmatprep.mubr.bf16.mxu0 %v840
  %1424 = vmatmul.mubr.bf16.gmra.mxu0 %v839
  %v1425 = vpop.f32.mrf.mxu0
  %v1426 = vadd.f32 0.0, %v1425
  %v1427 = vpop.f32.mrf.mxu0
  %v1428 = vpop.f32.mrf.mxu0
  %v1429 = vadd.f32 0.0, %v1428
  %v1430 = vpop.f32.mrf.mxu0
  %1431 = vmatprep.mubr.bf16.mxu0 %v842
  %1432 = vmatmul.mubr.bf16.gmra.mxu0 %v841
  %v1433 = vpop.f32.mrf.mxu0
  %v1434 = vadd.f32 0.0, %v1433
  %v1435 = vpop.f32.mrf.mxu0
  %v1436 = vpop.f32.mrf.mxu0
  %v1437 = vadd.f32 0.0, %v1436
  %v1438 = vpop.f32.mrf.mxu0
  %1439 = vmatprep.mubr.bf16.mxu0 %v844
  %1440 = vmatmul.mubr.bf16.gmra.mxu0 %v843
  %v1441 = vpop.f32.mrf.mxu0
  %v1442 = vadd.f32 0.0, %v1441
  %v1443 = vpop.f32.mrf.mxu0
  %v1444 = vpop.f32.mrf.mxu0
  %v1445 = vadd.f32 0.0, %v1444
  %v1446 = vpop.f32.mrf.mxu0
  %1447 = vmatprep.mubr.bf16.mxu0 %v846
  %1448 = vmatmul.mubr.bf16.gmra.mxu0 %v845
  %v1449 = vpop.f32.mrf.mxu0
  %v1450 = vadd.f32 0.0, %v1449
  %v1451 = vpop.f32.mrf.mxu0
  %v1452 = vpop.f32.mrf.mxu0
  %v1453 = vadd.f32 0.0, %v1452
  %v1454 = vpop.f32.mrf.mxu0
  %1455 = vmatprep.mubr.bf16.mxu0 %v848
  %1456 = vmatmul.mubr.bf16.gmra.mxu0 %v847
  %v1457 = vpop.f32.mrf.mxu0
  %v1458 = vadd.f32 0.0, %v1457
  %v1459 = vpop.f32.mrf.mxu0
  %v1460 = vpop.f32.mrf.mxu0
  %v1461 = vadd.f32 0.0, %v1460
  %v1462 = vpop.f32.mrf.mxu0
  %1463 = vmatprep.mubr.bf16.mxu0 %v850
  %1464 = vmatmul.mubr.bf16.gmra.mxu0 %v849
  %v1465 = vpop.f32.mrf.mxu0
  %v1466 = vadd.f32 0.0, %v1465
  %v1467 = vpop.f32.mrf.mxu0
  %v1468 = vpop.f32.mrf.mxu0
  %v1469 = vadd.f32 0.0, %v1468
  %v1470 = vpop.f32.mrf.mxu0
  %1471 = vmatprep.mubr.bf16.mxu0 %v852
  %1472 = vmatmul.mubr.bf16.gmra.mxu0 %v851
  %v1473 = vpop.f32.mrf.mxu0
  %v1474 = vadd.f32 0.0, %v1473
  %v1475 = vpop.f32.mrf.mxu0
  %v1476 = vpop.f32.mrf.mxu0
  %v1477 = vadd.f32 0.0, %v1476
  %v1478 = vpop.f32.mrf.mxu0
  %1479 = vmatprep.mubr.bf16.mxu0 %v854
  %1480 = vmatmul.mubr.bf16.gmra.mxu0 %v853
  %v1481 = vpop.f32.mrf.mxu0
  %v1482 = vadd.f32 0.0, %v1481
  %v1483 = vpop.f32.mrf.mxu0
  %v1484 = vpop.f32.mrf.mxu0
  %v1485 = vadd.f32 0.0, %v1484
  %v1486 = vpop.f32.mrf.mxu0
  %1487 = vmatprep.mubr.bf16.mxu0 %v856
  %1488 = vmatmul.mubr.bf16.gmra.mxu0 %v855
  %v1489 = vpop.f32.mrf.mxu0
  %v1490 = vadd.f32 0.0, %v1489
  %v1491 = vpop.f32.mrf.mxu0
  %v1492 = vpop.f32.mrf.mxu0
  %v1493 = vadd.f32 0.0, %v1492
  %v1494 = vpop.f32.mrf.mxu0
  %1495 = vmatprep.mubr.bf16.mxu0 %v858
  %1496 = vmatmul.mubr.bf16.gmra.mxu0 %v857
  %v1497 = vpop.f32.mrf.mxu0
  %v1498 = vadd.f32 0.0, %v1497
  %v1499 = vpop.f32.mrf.mxu0
  %v1500 = vpop.f32.mrf.mxu0
  %v1501 = vadd.f32 0.0, %v1500
  %v1502 = vpop.f32.mrf.mxu0
  %1503 = vmatprep.mubr.bf16.mxu0 %v860
  %1504 = vmatmul.mubr.bf16.gmra.mxu0 %v859
  %v1505 = vpop.f32.mrf.mxu0
  %v1506 = vadd.f32 0.0, %v1505
  %v1507 = vpop.f32.mrf.mxu0
  %v1508 = vpop.f32.mrf.mxu0
  %v1509 = vadd.f32 0.0, %v1508
  %v1510 = vpop.f32.mrf.mxu0
  %1511 = vmatprep.mubr.bf16.mxu0 %v862
  %1512 = vmatmul.mubr.bf16.gmra.mxu0 %v861
  %v1513 = vpop.f32.mrf.mxu0
  %v1514 = vadd.f32 0.0, %v1513
  %v1515 = vpop.f32.mrf.mxu0
  %v1516 = vpop.f32.mrf.mxu0
  %v1517 = vadd.f32 0.0, %v1516
  %v1518 = vpop.f32.mrf.mxu0
  %1519 = vmatprep.mubr.bf16.mxu0 %v864
  %1520 = vmatmul.mubr.bf16.gmra.mxu0 %v863
  %v1521 = vpop.f32.mrf.mxu0
  %v1522 = vadd.f32 0.0, %v1521
  %v1523 = vpop.f32.mrf.mxu0
  %v1524 = vpop.f32.mrf.mxu0
  %v1525 = vadd.f32 0.0, %v1524
  %v1526 = vpop.f32.mrf.mxu0
  %1527 = vmatprep.mubr.bf16.mxu0 %v866
  %1528 = vmatmul.mubr.bf16.gmra.mxu0 %v865
  %v1529 = vpop.f32.mrf.mxu0
  %v1530 = vadd.f32 0.0, %v1529
  %v1531 = vpop.f32.mrf.mxu0
  %v1532 = vpop.f32.mrf.mxu0
  %v1533 = vadd.f32 0.0, %v1532
  %v1534 = vpop.f32.mrf.mxu0
  %1535 = vmatprep.mubr.bf16.mxu0 %v868
  %1536 = vmatmul.mubr.bf16.gmra.mxu0 %v867
  %v1537 = vpop.f32.mrf.mxu0
  %v1538 = vadd.f32 0.0, %v1537
  %v1539 = vpop.f32.mrf.mxu0
  %v1540 = vpop.f32.mrf.mxu0
  %v1541 = vadd.f32 0.0, %v1540
  %v1542 = vpop.f32.mrf.mxu0
  %1543 = vmatprep.mubr.bf16.mxu0 %v870
  %1544 = vmatmul.mubr.bf16.gmra.mxu0 %v869
  %v1545 = vpop.f32.mrf.mxu0
  %v1546 = vadd.f32 0.0, %v1545
  %v1547 = vpop.f32.mrf.mxu0
  %v1548 = vpop.f32.mrf.mxu0
  %v1549 = vadd.f32 0.0, %v1548
  %v1550 = vpop.f32.mrf.mxu0
  %1551 = vmatprep.mubr.bf16.mxu0 %v872
  %1552 = vmatmul.mubr.bf16.gmra.mxu0 %v871
  %v1553 = vpop.f32.mrf.mxu0
  %v1554 = vadd.f32 0.0, %v1553
  %v1555 = vpop.f32.mrf.mxu0
  %v1556 = vpop.f32.mrf.mxu0
  %v1557 = vadd.f32 0.0, %v1556
  %v1558 = vpop.f32.mrf.mxu0
  %1559 = vmatprep.mubr.bf16.mxu0 %v874
  %1560 = vmatmul.mubr.bf16.gmra.mxu0 %v873
  %v1561 = vpop.f32.mrf.mxu0
  %v1562 = vadd.f32 0.0, %v1561
  %v1563 = vpop.f32.mrf.mxu0
  %v1564 = vpop.f32.mrf.mxu0
  %v1565 = vadd.f32 0.0, %v1564
  %v1566 = vpop.f32.mrf.mxu0
  %1567 = vmatprep.mubr.bf16.mxu0 %v876
  %1568 = vmatmul.mubr.bf16.gmra.mxu0 %v875
  %v1569 = vpop.f32.mrf.mxu0
  %v1570 = vadd.f32 0.0, %v1569
  %v1571 = vpop.f32.mrf.mxu0
  %v1572 = vpop.f32.mrf.mxu0
  %v1573 = vadd.f32 0.0, %v1572
  %v1574 = vpop.f32.mrf.mxu0
  %1575 = vmatprep.mubr.bf16.mxu0 %v878
  %1576 = vmatmul.mubr.bf16.gmra.mxu0 %v877
  %v1577 = vpop.f32.mrf.mxu0
  %v1578 = vadd.f32 0.0, %v1577
  %v1579 = vpop.f32.mrf.mxu0
  %v1580 = vpop.f32.mrf.mxu0
  %v1581 = vadd.f32 0.0, %v1580
  %v1582 = vpop.f32.mrf.mxu0
  %1583 = vmatprep.mubr.bf16.mxu0 %v880
  %1584 = vmatmul.mubr.bf16.gmra.mxu0 %v879
  %v1585 = vpop.f32.mrf.mxu0
  %v1586 = vadd.f32 0.0, %v1585
  %v1587 = vpop.f32.mrf.mxu0
  %v1588 = vpop.f32.mrf.mxu0
  %v1589 = vadd.f32 0.0, %v1588
  %v1590 = vpop.f32.mrf.mxu0
  %1591 = vmatprep.mubr.bf16.mxu0 %v882
  %1592 = vmatmul.mubr.bf16.gmra.mxu0 %v881
  %v1593 = vpop.f32.mrf.mxu0
  %v1594 = vadd.f32 0.0, %v1593
  %v1595 = vpop.f32.mrf.mxu0
  %v1596 = vpop.f32.mrf.mxu0
  %v1597 = vadd.f32 0.0, %v1596
  %v1598 = vpop.f32.mrf.mxu0
  %1599 = vmatprep.mubr.bf16.mxu0 %v884
  %1600 = vmatmul.mubr.bf16.gmra.mxu0 %v883
  %v1601 = vpop.f32.mrf.mxu0
  %v1602 = vadd.f32 0.0, %v1601
  %v1603 = vpop.f32.mrf.mxu0
  %v1604 = vpop.f32.mrf.mxu0
  %v1605 = vadd.f32 0.0, %v1604
  %v1606 = vpop.f32.mrf.mxu0
  %1607 = vmatprep.mubr.bf16.mxu0 %v886
  %1608 = vmatmul.mubr.bf16.gmra.mxu0 %v885
  %v1609 = vpop.f32.mrf.mxu0
  %v1610 = vadd.f32 0.0, %v1609
  %v1611 = vpop.f32.mrf.mxu0
  %v1612 = vpop.f32.mrf.mxu0
  %v1613 = vadd.f32 0.0, %v1612
  %v1614 = vpop.f32.mrf.mxu0
  %1615 = vmatprep.mubr.bf16.mxu0 %v888
  %1616 = vmatmul.mubr.bf16.gmra.mxu0 %v887
  %v1617 = vpop.f32.mrf.mxu0
  %v1618 = vadd.f32 0.0, %v1617
  %v1619 = vpop.f32.mrf.mxu0
  %v1620 = vpop.f32.mrf.mxu0
  %v1621 = vadd.f32 0.0, %v1620
  %v1622 = vpop.f32.mrf.mxu0
  %1623 = vmatprep.mubr.bf16.mxu0 %v890
  %1624 = vmatmul.mubr.bf16.gmra.mxu0 %v889
  %v1625 = vpop.f32.mrf.mxu0
  %v1626 = vadd.f32 0.0, %v1625
  %v1627 = vpop.f32.mrf.mxu0
  %v1628 = vpop.f32.mrf.mxu0
  %v1629 = vadd.f32 0.0, %v1628
  %v1630 = vpop.f32.mrf.mxu0
  %1631 = vmatprep.mubr.bf16.mxu0 %v892
  %1632 = vmatmul.mubr.bf16.gmra.mxu0 %v891
  %v1633 = vpop.f32.mrf.mxu0
  %v1634 = vadd.f32 0.0, %v1633
  %v1635 = vpop.f32.mrf.mxu0
  %v1636 = vpop.f32.mrf.mxu0
  %v1637 = vadd.f32 0.0, %v1636
  %v1638 = vpop.f32.mrf.mxu0
  %1639 = vmatprep.mubr.bf16.mxu0 %v894
  %1640 = vmatmul.mubr.bf16.gmra.mxu0 %v893
  %v1641 = vpop.f32.mrf.mxu0
  %v1642 = vadd.f32 0.0, %v1641
  %v1643 = vpop.f32.mrf.mxu0
  %v1644 = vpop.f32.mrf.mxu0
  %v1645 = vadd.f32 0.0, %v1644
  %v1646 = vpop.f32.mrf.mxu0
  %1647 = vmatprep.mubr.bf16.mxu0 %v896
  %1648 = vmatmul.mubr.bf16.gmra.mxu0 %v895
  %v1649 = vpop.f32.mrf.mxu0
  %v1650 = vadd.f32 0.0, %v1649
  %v1651 = vpop.f32.mrf.mxu0
  %v1652 = vpop.f32.mrf.mxu0
  %v1653 = vadd.f32 0.0, %v1652
  %v1654 = vpop.f32.mrf.mxu0
  %1655 = vmatprep.mubr.bf16.mxu0 %v898
  %1656 = vmatmul.mubr.bf16.gmra.mxu0 %v897
  %v1657 = vpop.f32.mrf.mxu0
  %v1658 = vadd.f32 0.0, %v1657
  %v1659 = vpop.f32.mrf.mxu0
  %v1660 = vpop.f32.mrf.mxu0
  %v1661 = vadd.f32 0.0, %v1660
  %v1662 = vpop.f32.mrf.mxu0
  %1663 = vmatprep.mubr.bf16.mxu0 %v900
  %1664 = vmatmul.mubr.bf16.gmra.mxu0 %v899
  %v1665 = vpop.f32.mrf.mxu0
  %v1666 = vadd.f32 0.0, %v1665
  %v1667 = vpop.f32.mrf.mxu0
  %v1668 = vpop.f32.mrf.mxu0
  %v1669 = vadd.f32 0.0, %v1668
  %v1670 = vpop.f32.mrf.mxu0
  %1671 = vmatprep.mubr.bf16.mxu0 %v902
  %1672 = vmatmul.mubr.bf16.gmra.mxu0 %v901
  %v1673 = vpop.f32.mrf.mxu0
  %v1674 = vadd.f32 0.0, %v1673
  %v1675 = vpop.f32.mrf.mxu0
  %v1676 = vpop.f32.mrf.mxu0
  %v1677 = vadd.f32 0.0, %v1676
  %v1678 = vpop.f32.mrf.mxu0
  %1679 = vmatprep.mubr.bf16.mxu0 %v904
  %1680 = vmatmul.mubr.bf16.gmra.mxu0 %v903
  %v1681 = vpop.f32.mrf.mxu0
  %v1682 = vadd.f32 0.0, %v1681
  %v1683 = vpop.f32.mrf.mxu0
  %v1684 = vpop.f32.mrf.mxu0
  %v1685 = vadd.f32 0.0, %v1684
  %v1686 = vpop.f32.mrf.mxu0
  %1687 = vmatprep.mubr.bf16.mxu0 %v906
  %1688 = vmatmul.mubr.bf16.gmra.mxu0 %v905
  %v1689 = vpop.f32.mrf.mxu0
  %v1690 = vadd.f32 0.0, %v1689
  %v1691 = vpop.f32.mrf.mxu0
  %v1692 = vpop.f32.mrf.mxu0
  %v1693 = vadd.f32 0.0, %v1692
  %v1694 = vpop.f32.mrf.mxu0
  %1695 = vmatprep.mubr.bf16.mxu0 %v908
  %1696 = vmatmul.mubr.bf16.gmra.mxu0 %v907
  %v1697 = vpop.f32.mrf.mxu0
  %v1698 = vadd.f32 0.0, %v1697
  %v1699 = vpop.f32.mrf.mxu0
  %v1700 = vpop.f32.mrf.mxu0
  %v1701 = vadd.f32 0.0, %v1700
  %v1702 = vpop.f32.mrf.mxu0
  %1703 = vmatprep.mubr.bf16.mxu0 %v910
  %1704 = vmatmul.mubr.bf16.gmra.mxu0 %v909
  %v1705 = vpop.f32.mrf.mxu0
  %v1706 = vadd.f32 0.0, %v1705
  %v1707 = vpop.f32.mrf.mxu0
  %v1708 = vpop.f32.mrf.mxu0
  %v1709 = vadd.f32 0.0, %v1708
  %v1710 = vpop.f32.mrf.mxu0
  %1711 = vmatprep.mubr.bf16.mxu0 %v912
  %1712 = vmatmul.mubr.bf16.gmra.mxu0 %v911
  %v1713 = vpop.f32.mrf.mxu0
  %v1714 = vadd.f32 0.0, %v1713
  %v1715 = vpop.f32.mrf.mxu0
  %v1716 = vpop.f32.mrf.mxu0
  %v1717 = vadd.f32 0.0, %v1716
  %v1718 = vpop.f32.mrf.mxu0
  %1719 = vmatprep.mubr.bf16.mxu0 %v914
  %1720 = vmatmul.mubr.bf16.gmra.mxu0 %v913
  %v1721 = vpop.f32.mrf.mxu0
  %v1722 = vadd.f32 0.0, %v1721
  %v1723 = vpop.f32.mrf.mxu0
  %v1724 = vpop.f32.mrf.mxu0
  %v1725 = vadd.f32 0.0, %v1724
  %v1726 = vpop.f32.mrf.mxu0
  %1727 = vmatprep.mubr.bf16.mxu0 %v916
  %1728 = vmatmul.mubr.bf16.gmra.mxu0 %v915
  %v1729 = vpop.f32.mrf.mxu0
  %v1730 = vadd.f32 0.0, %v1729
  %v1731 = vpop.f32.mrf.mxu0
  %v1732 = vpop.f32.mrf.mxu0
  %v1733 = vadd.f32 0.0, %v1732
  %v1734 = vpop.f32.mrf.mxu0
  %1735 = vmatprep.mubr.bf16.mxu0 %v918
  %1736 = vmatmul.mubr.bf16.gmra.mxu0 %v917
  %v1737 = vpop.f32.mrf.mxu0
  %v1738 = vadd.f32 0.0, %v1737
  %v1739 = vpop.f32.mrf.mxu0
  %v1740 = vpop.f32.mrf.mxu0
  %v1741 = vadd.f32 0.0, %v1740
  %v1742 = vpop.f32.mrf.mxu0
  %1743 = vmatprep.mubr.bf16.mxu0 %v920
  %1744 = vmatmul.mubr.bf16.gmra.mxu0 %v919
  %v1745 = vpop.f32.mrf.mxu0
  %v1746 = vadd.f32 0.0, %v1745
  %v1747 = vpop.f32.mrf.mxu0
  %v1748 = vpop.f32.mrf.mxu0
  %v1749 = vadd.f32 0.0, %v1748
  %v1750 = vpop.f32.mrf.mxu0
  %1751 = vmatprep.mubr.bf16.mxu0 %v922
  %1752 = vmatmul.mubr.bf16.gmra.mxu0 %v921
  %v1753 = vpop.f32.mrf.mxu0
  %v1754 = vadd.f32 0.0, %v1753
  %v1755 = vpop.f32.mrf.mxu0
  %v1756 = vpop.f32.mrf.mxu0
  %v1757 = vadd.f32 0.0, %v1756
  %v1758 = vpop.f32.mrf.mxu0
  %1759 = vmatprep.mubr.bf16.mxu0 %v924
  %1760 = vmatmul.mubr.bf16.gmra.mxu0 %v923
  %v1761 = vpop.f32.mrf.mxu0
  %v1762 = vadd.f32 0.0, %v1761
  %v1763 = vpop.f32.mrf.mxu0
  %v1764 = vpop.f32.mrf.mxu0
  %v1765 = vadd.f32 0.0, %v1764
  %v1766 = vpop.f32.mrf.mxu0
  %1767 = vmatprep.mubr.bf16.mxu0 %v926
  %1768 = vmatmul.mubr.bf16.gmra.mxu0 %v925
  %v1769 = vpop.f32.mrf.mxu0
  %v1770 = vadd.f32 0.0, %v1769
  %v1771 = vpop.f32.mrf.mxu0
  %v1772 = vpop.f32.mrf.mxu0
  %v1773 = vadd.f32 0.0, %v1772
  %v1774 = vpop.f32.mrf.mxu0
  %1775 = vmatprep.mubr.bf16.mxu0 %v928
  %1776 = vmatmul.mubr.bf16.gmra.mxu0 %v927
  %v1777 = vpop.f32.mrf.mxu0
  %v1778 = vadd.f32 0.0, %v1777
  %v1779 = vpop.f32.mrf.mxu0
  %v1780 = vpop.f32.mrf.mxu0
  %v1781 = vadd.f32 0.0, %v1780
  %v1782 = vpop.f32.mrf.mxu0
  %1783 = vmatprep.mubr.bf16.mxu0 %v930
  %1784 = vmatmul.mubr.bf16.gmra.mxu0 %v929
  %v1785 = vpop.f32.mrf.mxu0
  %v1786 = vadd.f32 0.0, %v1785
  %v1787 = vpop.f32.mrf.mxu0
  %v1788 = vpop.f32.mrf.mxu0
  %v1789 = vadd.f32 0.0, %v1788
  %v1790 = vpop.f32.mrf.mxu0
  %1791 = vmatprep.mubr.bf16.mxu0 %v932
  %1792 = vmatmul.mubr.bf16.gmra.mxu0 %v931
  %v1793 = vpop.f32.mrf.mxu0
  %v1794 = vadd.f32 0.0, %v1793
  %v1795 = vpop.f32.mrf.mxu0
  %v1796 = vpop.f32.mrf.mxu0
  %v1797 = vadd.f32 0.0, %v1796
  %v1798 = vpop.f32.mrf.mxu0
  %1799 = vmatprep.mubr.bf16.mxu0 %v934
  %1800 = vmatmul.mubr.bf16.gmra.mxu0 %v933
  %v1801 = vpop.f32.mrf.mxu0
  %v1802 = vadd.f32 0.0, %v1801
  %v1803 = vpop.f32.mrf.mxu0
  %v1804 = vpop.f32.mrf.mxu0
  %v1805 = vadd.f32 0.0, %v1804
  %v1806 = vpop.f32.mrf.mxu0
  %1807 = vmatprep.mubr.bf16.mxu0 %v936
  %1808 = vmatmul.mubr.bf16.gmra.mxu0 %v935
  %v1809 = vpop.f32.mrf.mxu0
  %v1810 = vadd.f32 0.0, %v1809
  %v1811 = vpop.f32.mrf.mxu0
  %v1812 = vpop.f32.mrf.mxu0
  %v1813 = vadd.f32 0.0, %v1812
  %v1814 = vpop.f32.mrf.mxu0
  %1815 = vmatprep.mubr.bf16.mxu0 %v938
  %1816 = vmatmul.mubr.bf16.gmra.mxu0 %v937
  %v1817 = vpop.f32.mrf.mxu0
  %v1818 = vadd.f32 0.0, %v1817
  %v1819 = vpop.f32.mrf.mxu0
  %v1820 = vpop.f32.mrf.mxu0
  %v1821 = vadd.f32 0.0, %v1820
  %v1822 = vpop.f32.mrf.mxu0
  %1823 = vmatprep.mubr.bf16.mxu0 %v940
  %1824 = vmatmul.mubr.bf16.gmra.mxu0 %v939
  %v1825 = vpop.f32.mrf.mxu0
  %v1826 = vadd.f32 0.0, %v1825
  %v1827 = vpop.f32.mrf.mxu0
  %v1828 = vpop.f32.mrf.mxu0
  %v1829 = vadd.f32 0.0, %v1828
  %v1830 = vpop.f32.mrf.mxu0
  %1831 = vmatprep.mubr.bf16.mxu0 %v942
  %1832 = vmatmul.mubr.bf16.gmra.mxu0 %v941
  %v1833 = vpop.f32.mrf.mxu0
  %v1834 = vadd.f32 0.0, %v1833
  %v1835 = vpop.f32.mrf.mxu0
  %v1836 = vpop.f32.mrf.mxu0
  %v1837 = vadd.f32 0.0, %v1836
  %v1838 = vpop.f32.mrf.mxu0
  %1839 = vmatprep.mubr.bf16.mxu0 %v944
  %1840 = vmatmul.mubr.bf16.gmra.mxu0 %v943
  %v1841 = vpop.f32.mrf.mxu0
  %v1842 = vadd.f32 0.0, %v1841
  %v1843 = vpop.f32.mrf.mxu0
  %v1844 = vpop.f32.mrf.mxu0
  %v1845 = vadd.f32 0.0, %v1844
  %v1846 = vpop.f32.mrf.mxu0
  %1847 = vmatprep.mubr.bf16.mxu0 %v946
  %1848 = vmatmul.mubr.bf16.gmra.mxu0 %v945
  %v1849 = vpop.f32.mrf.mxu0
  %v1850 = vadd.f32 0.0, %v1849
  %v1851 = vpop.f32.mrf.mxu0
  %v1852 = vpop.f32.mrf.mxu0
  %v1853 = vadd.f32 0.0, %v1852
  %v1854 = vpop.f32.mrf.mxu0
  %1855 = vmatprep.mubr.bf16.mxu0 %v948
  %1856 = vmatmul.mubr.bf16.gmra.mxu0 %v947
  %v1857 = vpop.f32.mrf.mxu0
  %v1858 = vadd.f32 0.0, %v1857
  %v1859 = vpop.f32.mrf.mxu0
  %v1860 = vpop.f32.mrf.mxu0
  %v1861 = vadd.f32 0.0, %v1860
  %v1862 = vpop.f32.mrf.mxu0
  %1863 = vmatprep.mubr.bf16.mxu0 %v950
  %1864 = vmatmul.mubr.bf16.gmra.mxu0 %v949
  %v1865 = vpop.f32.mrf.mxu0
  %v1866 = vadd.f32 0.0, %v1865
  %v1867 = vpop.f32.mrf.mxu0
  %v1868 = vpop.f32.mrf.mxu0
  %v1869 = vadd.f32 0.0, %v1868
  %v1870 = vpop.f32.mrf.mxu0
  %1871 = vmatprep.mubr.bf16.mxu0 %v952
  %1872 = vmatmul.mubr.bf16.gmra.mxu0 %v951
  %v1873 = vpop.f32.mrf.mxu0
  %v1874 = vadd.f32 0.0, %v1873
  %v1875 = vpop.f32.mrf.mxu0
  %v1876 = vpop.f32.mrf.mxu0
  %v1877 = vadd.f32 0.0, %v1876
  %v1878 = vpop.f32.mrf.mxu0
  %1879 = vmatprep.mubr.bf16.mxu0 %v954
  %1880 = vmatmul.mubr.bf16.gmra.mxu0 %v953
  %v1881 = vpop.f32.mrf.mxu0
  %v1882 = vadd.f32 0.0, %v1881
  %v1883 = vpop.f32.mrf.mxu0
  %v1884 = vpop.f32.mrf.mxu0
  %v1885 = vadd.f32 0.0, %v1884
  %v1886 = vpop.f32.mrf.mxu0
  %1887 = vmatprep.mubr.bf16.mxu0 %v956
  %1888 = vmatmul.mubr.bf16.gmra.mxu0 %v955
  %v1889 = vpop.f32.mrf.mxu0
  %v1890 = vadd.f32 0.0, %v1889
  %v1891 = vpop.f32.mrf.mxu0
  %v1892 = vpop.f32.mrf.mxu0
  %v1893 = vadd.f32 0.0, %v1892
  %v1894 = vpop.f32.mrf.mxu0
  %1895 = vmatprep.mubr.bf16.mxu0 %v958
  %1896 = vmatmul.mubr.bf16.gmra.mxu0 %v957
  %v1897 = vpop.f32.mrf.mxu0
  %v1898 = vadd.f32 0.0, %v1897
  %v1899 = vpop.f32.mrf.mxu0
  %v1900 = vpop.f32.mrf.mxu0
  %v1901 = vadd.f32 0.0, %v1900
  %v1902 = vpop.f32.mrf.mxu0
  %1903 = vmatprep.mubr.bf16.mxu0 %v960
  %1904 = vmatmul.mubr.bf16.gmra.mxu0 %v959
  %v1905 = vpop.f32.mrf.mxu0
  %v1906 = vadd.f32 0.0, %v1905
  %v1907 = vpop.f32.mrf.mxu0
  %v1908 = vpop.f32.mrf.mxu0
  %v1909 = vadd.f32 0.0, %v1908
  %v1910 = vpop.f32.mrf.mxu0
  %1911 = vmatprep.mubr.bf16.mxu0 %v962
  %1912 = vmatmul.mubr.bf16.gmra.mxu0 %v961
  %v1913 = vpop.f32.mrf.mxu0
  %v1914 = vadd.f32 0.0, %v1913
  %v1915 = vpop.f32.mrf.mxu0
  %v1916 = vpop.f32.mrf.mxu0
  %v1917 = vadd.f32 0.0, %v1916
  %v1918 = vpop.f32.mrf.mxu0
  %1919 = vmatprep.mubr.bf16.mxu0 %v964
  %1920 = vmatmul.mubr.bf16.gmra.mxu0 %v963
  %v1921 = vpop.f32.mrf.mxu0
  %v1922 = vadd.f32 0.0, %v1921
  %v1923 = vpop.f32.mrf.mxu0
  %v1924 = vpop.f32.mrf.mxu0
  %v1925 = vadd.f32 0.0, %v1924
  %v1926 = vpop.f32.mrf.mxu0
  %1927 = vmatprep.mubr.bf16.mxu0 %v966
  %1928 = vmatmul.mubr.bf16.gmra.mxu0 %v965
  %v1929 = vpop.f32.mrf.mxu0
  %v1930 = vadd.f32 0.0, %v1929
  %v1931 = vpop.f32.mrf.mxu0
  %v1932 = vpop.f32.mrf.mxu0
  %v1933 = vadd.f32 0.0, %v1932
  %v1934 = vpop.f32.mrf.mxu0
  %1935 = vmatprep.mubr.bf16.mxu0 %v968
  %1936 = vmatmul.mubr.bf16.gmra.mxu0 %v967
  %v1937 = vpop.f32.mrf.mxu0
  %v1938 = vadd.f32 0.0, %v1937
  %v1939 = vpop.f32.mrf.mxu0
  %v1940 = vpop.f32.mrf.mxu0
  %v1941 = vadd.f32 0.0, %v1940
  %v1942 = vpop.f32.mrf.mxu0
  %1943 = vmatprep.mubr.bf16.mxu0 %v970
  %1944 = vmatmul.mubr.bf16.gmra.mxu0 %v969
  %v1945 = vpop.f32.mrf.mxu0
  %v1946 = vadd.f32 0.0, %v1945
  %v1947 = vpop.f32.mrf.mxu0
  %v1948 = vpop.f32.mrf.mxu0
  %v1949 = vadd.f32 0.0, %v1948
  %v1950 = vpop.f32.mrf.mxu0
  %1951 = vmatprep.mubr.bf16.mxu0 %v972
  %1952 = vmatmul.mubr.bf16.gmra.mxu0 %v971
  %v1953 = vpop.f32.mrf.mxu0
  %v1954 = vadd.f32 0.0, %v1953
  %v1955 = vpop.f32.mrf.mxu0
  %v1956 = vpop.f32.mrf.mxu0
  %v1957 = vadd.f32 0.0, %v1956
  %v1958 = vpop.f32.mrf.mxu0
  %1959 = vmatprep.mubr.bf16.mxu0 %v974
  %1960 = vmatmul.mubr.bf16.gmra.mxu0 %v973
  %v1961 = vpop.f32.mrf.mxu0
  %v1962 = vadd.f32 0.0, %v1961
  %v1963 = vpop.f32.mrf.mxu0
  %v1964 = vpop.f32.mrf.mxu0
  %v1965 = vadd.f32 0.0, %v1964
  %v1966 = vpop.f32.mrf.mxu0
  %1967 = vmatprep.mubr.bf16.mxu0 %v976
  %1968 = vmatmul.mubr.bf16.gmra.mxu0 %v975
  %v1969 = vpop.f32.mrf.mxu0
  %v1970 = vadd.f32 0.0, %v1969
  %v1971 = vpop.f32.mrf.mxu0
  %v1972 = vpop.f32.mrf.mxu0
  %v1973 = vadd.f32 0.0, %v1972
  %v1974 = vpop.f32.mrf.mxu0
  %1975 = vmatprep.mubr.bf16.mxu0 %v978
  %1976 = vmatmul.mubr.bf16.gmra.mxu0 %v977
  %v1977 = vpop.f32.mrf.mxu0
  %v1978 = vadd.f32 0.0, %v1977
  %v1979 = vpop.f32.mrf.mxu0
  %v1980 = vpop.f32.mrf.mxu0
  %v1981 = vadd.f32 0.0, %v1980
  %v1982 = vpop.f32.mrf.mxu0
  %1983 = vmatprep.mubr.bf16.mxu0 %v980
  %1984 = vmatmul.mubr.bf16.gmra.mxu0 %v979
  %v1985 = vpop.f32.mrf.mxu0
  %v1986 = vadd.f32 0.0, %v1985
  %v1987 = vpop.f32.mrf.mxu0
  %v1988 = vpop.f32.mrf.mxu0
  %v1989 = vadd.f32 0.0, %v1988
  %v1990 = vpop.f32.mrf.mxu0
  %1991 = vmatprep.mubr.bf16.mxu0 %v982
  %1992 = vmatmul.mubr.bf16.gmra.mxu0 %v981
  %v1993 = vpop.f32.mrf.mxu0
  %v1994 = vadd.f32 0.0, %v1993
  %v1995 = vpop.f32.mrf.mxu0
  %v1996 = vpop.f32.mrf.mxu0
  %v1997 = vadd.f32 0.0, %v1996
  %v1998 = vpop.f32.mrf.mxu0
  %1999 = vmatprep.mubr.bf16.mxu0 %v984
  %2000 = vmatmul.mubr.bf16.gmra.mxu0 %v983
  %v2001 = vpop.f32.mrf.mxu0
  %v2002 = vadd.f32 0.0, %v2001
  %v2003 = vpop.f32.mrf.mxu0
  %v2004 = vpop.f32.mrf.mxu0
  %v2005 = vadd.f32 0.0, %v2004
  %v2006 = vpop.f32.mrf.mxu0
  %2007 = vmatprep.mubr.bf16.mxu0 %v986
  %2008 = vmatmul.mubr.bf16.gmra.mxu0 %v985
  %v2009 = vpop.f32.mrf.mxu0
  %v2010 = vadd.f32 0.0, %v2009
  %v2011 = vpop.f32.mrf.mxu0
  %v2012 = vpop.f32.mrf.mxu0
  %v2013 = vadd.f32 0.0, %v2012
  %v2014 = vpop.f32.mrf.mxu0
  %2015 = vmatprep.mubr.bf16.mxu0 %v988
  %2016 = vmatmul.mubr.bf16.gmra.mxu0 %v987
  %v2017 = vpop.f32.mrf.mxu0
  %v2018 = vadd.f32 0.0, %v2017
  %v2019 = vpop.f32.mrf.mxu0
  %v2020 = vpop.f32.mrf.mxu0
  %v2021 = vadd.f32 0.0, %v2020
  %v2022 = vpop.f32.mrf.mxu0
  %2023 = vmatprep.mubr.bf16.mxu0 %v990
  %2024 = vmatmul.mubr.bf16.gmra.mxu0 %v989
  %v2025 = vpop.f32.mrf.mxu0
  %v2026 = vadd.f32 0.0, %v2025
  %v2027 = vpop.f32.mrf.mxu0
  %v2028 = vpop.f32.mrf.mxu0
  %v2029 = vadd.f32 0.0, %v2028
  %v2030 = vpop.f32.mrf.mxu0
  %2031 = vmatprep.mubr.bf16.mxu0 %v992
  %2032 = vmatmul.mubr.bf16.gmra.mxu0 %v991
  %v2033 = vpop.f32.mrf.mxu0
  %v2034 = vadd.f32 0.0, %v2033
  %v2035 = vpop.f32.mrf.mxu0
  %v2036 = vpop.f32.mrf.mxu0
  %v2037 = vadd.f32 0.0, %v2036
  %v2038 = vpop.f32.mrf.mxu0
  %2039 = vmatprep.mubr.bf16.mxu0 %v994
  %2040 = vmatmul.mubr.bf16.gmra.mxu0 %v993
  %v2041 = vpop.f32.mrf.mxu0
  %v2042 = vadd.f32 0.0, %v2041
  %v2043 = vpop.f32.mrf.mxu0
  %v2044 = vpop.f32.mrf.mxu0
  %v2045 = vadd.f32 0.0, %v2044
  %v2046 = vpop.f32.mrf.mxu0
  %2047 = vmatprep.mubr.bf16.mxu0 %v996
  %2048 = vmatmul.mubr.bf16.gmra.mxu0 %v995
  %v2049 = vpop.f32.mrf.mxu0
  %v2050 = vadd.f32 0.0, %v2049
  %v2051 = vpop.f32.mrf.mxu0
  %v2052 = vpop.f32.mrf.mxu0
  %v2053 = vadd.f32 0.0, %v2052
  %v2054 = vpop.f32.mrf.mxu0
  %2055 = vmatprep.mubr.bf16.mxu0 %v998
  %2056 = vmatmul.mubr.bf16.gmra.mxu0 %v997
  %v2057 = vpop.f32.mrf.mxu0
  %v2058 = vadd.f32 0.0, %v2057
  %v2059 = vpop.f32.mrf.mxu0
  %v2060 = vpop.f32.mrf.mxu0
  %v2061 = vadd.f32 0.0, %v2060
  %v2062 = vpop.f32.mrf.mxu0
  %2063 = vmatprep.mubr.bf16.mxu0 %v1000
  %2064 = vmatmul.mubr.bf16.gmra.mxu0 %v999
  %v2065 = vpop.f32.mrf.mxu0
  %v2066 = vadd.f32 0.0, %v2065
  %v2067 = vpop.f32.mrf.mxu0
  %v2068 = vpop.f32.mrf.mxu0
  %v2069 = vadd.f32 0.0, %v2068
  %v2070 = vpop.f32.mrf.mxu0
  %2071 = vmatprep.mubr.bf16.mxu0 %v1002
  %2072 = vmatmul.mubr.bf16.gmra.mxu0 %v1001
  %v2073 = vpop.f32.mrf.mxu0
  %v2074 = vadd.f32 0.0, %v2073
  %v2075 = vpop.f32.mrf.mxu0
  %v2076 = vpop.f32.mrf.mxu0
  %v2077 = vadd.f32 0.0, %v2076
  %v2078 = vpop.f32.mrf.mxu0
  %2079 = vmatprep.mubr.bf16.mxu0 %v1004
  %2080 = vmatmul.mubr.bf16.gmra.mxu0 %v1003
  %v2081 = vpop.f32.mrf.mxu0
  %v2082 = vadd.f32 0.0, %v2081
  %v2083 = vpop.f32.mrf.mxu0
  %v2084 = vpop.f32.mrf.mxu0
  %v2085 = vadd.f32 0.0, %v2084
  %v2086 = vpop.f32.mrf.mxu0
  %2087 = vmatprep.mubr.bf16.mxu0 %v1006
  %2088 = vmatmul.mubr.bf16.gmra.mxu0 %v1005
  %v2089 = vpop.f32.mrf.mxu0
  %v2090 = vadd.f32 0.0, %v2089
  %v2091 = vpop.f32.mrf.mxu0
  %v2092 = vpop.f32.mrf.mxu0
  %v2093 = vadd.f32 0.0, %v2092
  %v2094 = vpop.f32.mrf.mxu0
  %2095 = vdwg.mxu0
  %v2096 = vmax.f32 %v1330, %v1522
  %v2097 = vmax.f32 %v1333, %v1525
  %v2098 = vmax.f32 %v1338, %v1530
  %v2099 = vmax.f32 %v1341, %v1533
  %v2100 = vmax.f32 %v1346, %v1538
  %v2101 = vmax.f32 %v1349, %v1541
  %v2102 = vmax.f32 %v1354, %v1546
  %v2103 = vmax.f32 %v1357, %v1549
  %v2104 = vmax.f32 %v1362, %v1554
  %v2105 = vmax.f32 %v1365, %v1557
  %v2106 = vmax.f32 %v1370, %v1562
  %v2107 = vmax.f32 %v1373, %v1565
  %v2108 = vmax.f32 %v1378, %v1570
  %v2109 = vmax.f32 %v1381, %v1573
  %v2110 = vmax.f32 %v1386, %v1578
  %v2111 = vmax.f32 %v1389, %v1581
  %v2112 = vmax.f32 %v1394, %v1586
  %v2113 = vmax.f32 %v1397, %v1589
  %v2114 = vmax.f32 %v1402, %v1594
  %v2115 = vmax.f32 %v1405, %v1597
  %v2116 = vmax.f32 %v1410, %v1602
  %v2117 = vmax.f32 %v1413, %v1605
  %v2118 = vmax.f32 %v1418, %v1610
  %v2119 = vmax.f32 %v1421, %v1613
  %v2120 = vmax.f32 %v1426, %v1618
  %v2121 = vmax.f32 %v1429, %v1621
  %v2122 = vmax.f32 %v1434, %v1626
  %v2123 = vmax.f32 %v1437, %v1629
  %v2124 = vmax.f32 %v1442, %v1634
  %v2125 = vmax.f32 %v1445, %v1637
  %v2126 = vmax.f32 %v1450, %v1642
  %v2127 = vmax.f32 %v1453, %v1645
  %v2128 = vmax.f32 %v1458, %v1650
  %v2129 = vmax.f32 %v1461, %v1653
  %v2130 = vmax.f32 %v1466, %v1658
  %v2131 = vmax.f32 %v1469, %v1661
  %v2132 = vmax.f32 %v1474, %v1666
  %v2133 = vmax.f32 %v1477, %v1669
  %v2134 = vmax.f32 %v1482, %v1674
  %v2135 = vmax.f32 %v1485, %v1677
  %v2136 = vmax.f32 %v1490, %v1682
  %v2137 = vmax.f32 %v1493, %v1685
  %v2138 = vmax.f32 %v1498, %v1690
  %v2139 = vmax.f32 %v1501, %v1693
  %v2140 = vmax.f32 %v1506, %v1698
  %v2141 = vmax.f32 %v1509, %v1701
  %v2142 = vmax.f32 %v1514, %v1706
  %v2143 = vmax.f32 %v1517, %v1709
  %v2144 = vmax.f32 %v1714, %v1906
  %v2145 = vmax.f32 %v1717, %v1909
  %v2146 = vmax.f32 %v1722, %v1914
  %v2147 = vmax.f32 %v1725, %v1917
  %v2148 = vmax.f32 %v1730, %v1922
  %v2149 = vmax.f32 %v1733, %v1925
  %v2150 = vmax.f32 %v1738, %v1930
  %v2151 = vmax.f32 %v1741, %v1933
  %v2152 = vmax.f32 %v1746, %v1938
  %v2153 = vmax.f32 %v1749, %v1941
  %v2154 = vmax.f32 %v1754, %v1946
  %v2155 = vmax.f32 %v1757, %v1949
  %v2156 = vmax.f32 %v1762, %v1954
  %v2157 = vmax.f32 %v1765, %v1957
  %v2158 = vmax.f32 %v1770, %v1962
  %v2159 = vmax.f32 %v1773, %v1965
  %v2160 = vmax.f32 %v1778, %v1970
  %v2161 = vmax.f32 %v1781, %v1973
  %v2162 = vmax.f32 %v1786, %v1978
  %v2163 = vmax.f32 %v1789, %v1981
  %v2164 = vmax.f32 %v1794, %v1986
  %v2165 = vmax.f32 %v1797, %v1989
  %v2166 = vmax.f32 %v1802, %v1994
  %v2167 = vmax.f32 %v1805, %v1997
  %v2168 = vmax.f32 %v1810, %v2002
  %v2169 = vmax.f32 %v1813, %v2005
  %v2170 = vmax.f32 %v1818, %v2010
  %v2171 = vmax.f32 %v1821, %v2013
  %v2172 = vmax.f32 %v1826, %v2018
  %v2173 = vmax.f32 %v1829, %v2021
  %v2174 = vmax.f32 %v1834, %v2026
  %v2175 = vmax.f32 %v1837, %v2029
  %v2176 = vmax.f32 %v1842, %v2034
  %v2177 = vmax.f32 %v1845, %v2037
  %v2178 = vmax.f32 %v1850, %v2042
  %v2179 = vmax.f32 %v1853, %v2045
  %v2180 = vmax.f32 %v1858, %v2050
  %v2181 = vmax.f32 %v1861, %v2053
  %v2182 = vmax.f32 %v1866, %v2058
  %v2183 = vmax.f32 %v1869, %v2061
  %v2184 = vmax.f32 %v1874, %v2066
  %v2185 = vmax.f32 %v1877, %v2069
  %v2186 = vmax.f32 %v1882, %v2074
  %v2187 = vmax.f32 %v1885, %v2077
  %v2188 = vmax.f32 %v1890, %v2082
  %v2189 = vmax.f32 %v1893, %v2085
  %v2190 = vmax.f32 %v1898, %v2090
  %v2191 = vmax.f32 %v1901, %v2093
  %v2192 = vmax.f32 %v2096, %v2144
  %v2193 = vmax.f32 %v2097, %v2145
  %v2194 = vmax.f32 %v2098, %v2146
  %v2195 = vmax.f32 %v2099, %v2147
  %v2196 = vmax.f32 %v2100, %v2148
  %v2197 = vmax.f32 %v2101, %v2149
  %v2198 = vmax.f32 %v2102, %v2150
  %v2199 = vmax.f32 %v2103, %v2151
  %v2200 = vmax.f32 %v2104, %v2152
  %v2201 = vmax.f32 %v2105, %v2153
  %v2202 = vmax.f32 %v2106, %v2154
  %v2203 = vmax.f32 %v2107, %v2155
  %v2204 = vmax.f32 %v2108, %v2156
  %v2205 = vmax.f32 %v2109, %v2157
  %v2206 = vmax.f32 %v2110, %v2158
  %v2207 = vmax.f32 %v2111, %v2159
  %v2208 = vmax.f32 %v2112, %v2160
  %v2209 = vmax.f32 %v2113, %v2161
  %v2210 = vmax.f32 %v2114, %v2162
  %v2211 = vmax.f32 %v2115, %v2163
  %v2212 = vmax.f32 %v2116, %v2164
  %v2213 = vmax.f32 %v2117, %v2165
  %v2214 = vmax.f32 %v2118, %v2166
  %v2215 = vmax.f32 %v2119, %v2167
  %v2216 = vmax.f32 %v2120, %v2168
  %v2217 = vmax.f32 %v2121, %v2169
  %v2218 = vmax.f32 %v2122, %v2170
  %v2219 = vmax.f32 %v2123, %v2171
  %v2220 = vmax.f32 %v2124, %v2172
  %v2221 = vmax.f32 %v2125, %v2173
  %v2222 = vmax.f32 %v2126, %v2174
  %v2223 = vmax.f32 %v2127, %v2175
  %v2224 = vmax.f32 %v2128, %v2176
  %v2225 = vmax.f32 %v2129, %v2177
  %v2226 = vmax.f32 %v2130, %v2178
  %v2227 = vmax.f32 %v2131, %v2179
  %v2228 = vmax.f32 %v2132, %v2180
  %v2229 = vmax.f32 %v2133, %v2181
  %v2230 = vmax.f32 %v2134, %v2182
  %v2231 = vmax.f32 %v2135, %v2183
  %v2232 = vmax.f32 %v2136, %v2184
  %v2233 = vmax.f32 %v2137, %v2185
  %v2234 = vmax.f32 %v2138, %v2186
  %v2235 = vmax.f32 %v2139, %v2187
  %v2236 = vmax.f32 %v2140, %v2188
  %v2237 = vmax.f32 %v2141, %v2189
  %v2238 = vmax.f32 %v2142, %v2190
  %v2239 = vmax.f32 %v2143, %v2191
  %v2240 = vld [vmem:[%s2] sm:$0x1]
  %v2242 = vlaneseq
  %v2243 = vshrl.u32 %v2242, 7
  %v2244 = vsub.s32 0, %v2243
  %v2245 = vrot.slane %v2240, %v2244
  %v2247 = vadd.f32 %v2192, %v2245
  %v2248 = vadd.f32 %v2193, %v2245
  %v2249 = vadd.f32 %v2194, %v2245
  %v2250 = vadd.f32 %v2195, %v2245
  %v2251 = vadd.f32 %v2196, %v2245
  %v2252 = vadd.f32 %v2197, %v2245
  %v2253 = vadd.f32 %v2198, %v2245
  %v2254 = vadd.f32 %v2199, %v2245
  %v2255 = vadd.f32 %v2200, %v2245
  %v2256 = vadd.f32 %v2201, %v2245
  %v2257 = vadd.f32 %v2202, %v2245
  %v2258 = vadd.f32 %v2203, %v2245
  %v2259 = vadd.f32 %v2204, %v2245
  %v2260 = vadd.f32 %v2205, %v2245
  %v2261 = vadd.f32 %v2206, %v2245
  %v2262 = vadd.f32 %v2207, %v2245
  %v2263 = vadd.f32 %v2208, %v2245
  %v2264 = vadd.f32 %v2209, %v2245
  %v2265 = vadd.f32 %v2210, %v2245
  %v2266 = vadd.f32 %v2211, %v2245
  %v2267 = vadd.f32 %v2212, %v2245
  %v2268 = vadd.f32 %v2213, %v2245
  %v2269 = vadd.f32 %v2214, %v2245
  %v2270 = vadd.f32 %v2215, %v2245
  %v2271 = vadd.f32 %v2216, %v2245
  %v2272 = vadd.f32 %v2217, %v2245
  %v2273 = vadd.f32 %v2218, %v2245
  %v2274 = vadd.f32 %v2219, %v2245
  %v2275 = vadd.f32 %v2220, %v2245
  %v2276 = vadd.f32 %v2221, %v2245
  %v2277 = vadd.f32 %v2222, %v2245
  %v2278 = vadd.f32 %v2223, %v2245
  %v2279 = vadd.f32 %v2224, %v2245
  %v2280 = vadd.f32 %v2225, %v2245
  %v2281 = vadd.f32 %v2226, %v2245
  %v2282 = vadd.f32 %v2227, %v2245
  %v2283 = vadd.f32 %v2228, %v2245
  %v2284 = vadd.f32 %v2229, %v2245
  %v2285 = vadd.f32 %v2230, %v2245
  %v2286 = vadd.f32 %v2231, %v2245
  %v2287 = vadd.f32 %v2232, %v2245
  %v2288 = vadd.f32 %v2233, %v2245
  %v2289 = vadd.f32 %v2234, %v2245
  %v2290 = vadd.f32 %v2235, %v2245
  %v2291 = vadd.f32 %v2236, %v2245
  %v2292 = vadd.f32 %v2237, %v2245
  %v2293 = vadd.f32 %v2238, %v2245
  %v2294 = vadd.f32 %v2239, %v2245
  %v2295 = vmax.f32 %v2247, 0.0
  %v2296 = vmax.f32 %v2248, 0.0
  %v2297 = vmax.f32 %v2249, 0.0
  %v2298 = vmax.f32 %v2250, 0.0
  %v2299 = vmax.f32 %v2251, 0.0
  %v2300 = vmax.f32 %v2252, 0.0
  %v2301 = vmax.f32 %v2253, 0.0
  %v2302 = vmax.f32 %v2254, 0.0
  %v2303 = vmax.f32 %v2255, 0.0
  %v2304 = vmax.f32 %v2256, 0.0
  %v2305 = vmax.f32 %v2257, 0.0
  %v2306 = vmax.f32 %v2258, 0.0
  %v2307 = vmax.f32 %v2259, 0.0
  %v2308 = vmax.f32 %v2260, 0.0
  %v2309 = vmax.f32 %v2261, 0.0
  %v2310 = vmax.f32 %v2262, 0.0
  %v2311 = vmax.f32 %v2263, 0.0
  %v2312 = vmax.f32 %v2264, 0.0
  %v2313 = vmax.f32 %v2265, 0.0
  %v2314 = vmax.f32 %v2266, 0.0
  %v2315 = vmax.f32 %v2267, 0.0
  %v2316 = vmax.f32 %v2268, 0.0
  %v2317 = vmax.f32 %v2269, 0.0
  %v2318 = vmax.f32 %v2270, 0.0
  %v2319 = vmax.f32 %v2271, 0.0
  %v2320 = vmax.f32 %v2272, 0.0
  %v2321 = vmax.f32 %v2273, 0.0
  %v2322 = vmax.f32 %v2274, 0.0
  %v2323 = vmax.f32 %v2275, 0.0
  %v2324 = vmax.f32 %v2276, 0.0
  %v2325 = vmax.f32 %v2277, 0.0
  %v2326 = vmax.f32 %v2278, 0.0
  %v2327 = vmax.f32 %v2279, 0.0
  %v2328 = vmax.f32 %v2280, 0.0
  %v2329 = vmax.f32 %v2281, 0.0
  %v2330 = vmax.f32 %v2282, 0.0
  %v2331 = vmax.f32 %v2283, 0.0
  %v2332 = vmax.f32 %v2284, 0.0
  %v2333 = vmax.f32 %v2285, 0.0
  %v2334 = vmax.f32 %v2286, 0.0
  %v2335 = vmax.f32 %v2287, 0.0
  %v2336 = vmax.f32 %v2288, 0.0
  %v2337 = vmax.f32 %v2289, 0.0
  %v2338 = vmax.f32 %v2290, 0.0
  %v2339 = vmax.f32 %v2291, 0.0
  %v2340 = vmax.f32 %v2292, 0.0
  %v2341 = vmax.f32 %v2293, 0.0
  %v2342 = vmax.f32 %v2294, 0.0
  %v2343 = vpack.c.bf16 %v2296, %v2295
  %v2344 = vpack.c.bf16 %v2298, %v2297
  %v2345 = vpack.c.bf16 %v2300, %v2299
  %v2346 = vpack.c.bf16 %v2302, %v2301
  %v2347 = vpack.c.bf16 %v2304, %v2303
  %v2348 = vpack.c.bf16 %v2306, %v2305
  %v2349 = vpack.c.bf16 %v2308, %v2307
  %v2350 = vpack.c.bf16 %v2310, %v2309
  %v2351 = vpack.c.bf16 %v2312, %v2311
  %v2352 = vpack.c.bf16 %v2314, %v2313
  %v2353 = vpack.c.bf16 %v2316, %v2315
  %v2354 = vpack.c.bf16 %v2318, %v2317
  %v2355 = vpack.c.bf16 %v2320, %v2319
  %v2356 = vpack.c.bf16 %v2322, %v2321
  %v2357 = vpack.c.bf16 %v2324, %v2323
  %v2358 = vpack.c.bf16 %v2326, %v2325
  %v2359 = vpack.c.bf16 %v2328, %v2327
  %v2360 = vpack.c.bf16 %v2330, %v2329
  %v2361 = vpack.c.bf16 %v2332, %v2331
  %v2362 = vpack.c.bf16 %v2334, %v2333
  %v2363 = vpack.c.bf16 %v2336, %v2335
  %v2364 = vpack.c.bf16 %v2338, %v2337
  %v2365 = vpack.c.bf16 %v2340, %v2339
  %v2366 = vpack.c.bf16 %v2342, %v2341
  %v2391 = vunpack.c.l.b16 %v2343
  %v2392 = vunpack.c.h.b16 %v2343
  %v2393 = vunpack.c.l.b16 %v2344
  %v2394 = vunpack.c.h.b16 %v2344
  %v2395 = vunpack.c.l.b16 %v2345
  %v2396 = vunpack.c.h.b16 %v2345
  %v2397 = vunpack.c.l.b16 %v2346
  %v2398 = vunpack.c.h.b16 %v2346
  %v2399 = vunpack.c.l.b16 %v2347
  %v2400 = vunpack.c.h.b16 %v2347
  %v2401 = vunpack.c.l.b16 %v2348
  %v2402 = vunpack.c.h.b16 %v2348
  %v2403 = vunpack.c.l.b16 %v2349
  %v2404 = vunpack.c.h.b16 %v2349
  %v2405 = vunpack.c.l.b16 %v2350
  %v2406 = vunpack.c.h.b16 %v2350
  %v2407 = vunpack.c.l.b16 %v2351
  %v2408 = vunpack.c.h.b16 %v2351
  %v2409 = vunpack.c.l.b16 %v2352
  %v2410 = vunpack.c.h.b16 %v2352
  %v2411 = vunpack.c.l.b16 %v2353
  %v2412 = vunpack.c.h.b16 %v2353
  %v2413 = vunpack.c.l.b16 %v2354
  %v2414 = vunpack.c.h.b16 %v2354
  %v2415 = vunpack.c.l.b16 %v2355
  %v2416 = vunpack.c.h.b16 %v2355
  %v2417 = vunpack.c.l.b16 %v2356
  %v2418 = vunpack.c.h.b16 %v2356
  %v2419 = vunpack.c.l.b16 %v2357
  %v2420 = vunpack.c.h.b16 %v2357
  %v2421 = vunpack.c.l.b16 %v2358
  %v2422 = vunpack.c.h.b16 %v2358
  %v2423 = vunpack.c.l.b16 %v2359
  %v2424 = vunpack.c.h.b16 %v2359
  %v2425 = vunpack.c.l.b16 %v2360
  %v2426 = vunpack.c.h.b16 %v2360
  %v2427 = vunpack.c.l.b16 %v2361
  %v2428 = vunpack.c.h.b16 %v2361
  %v2429 = vunpack.c.l.b16 %v2362
  %v2430 = vunpack.c.h.b16 %v2362
  %v2431 = vunpack.c.l.b16 %v2363
  %v2432 = vunpack.c.h.b16 %v2363
  %v2433 = vunpack.c.l.b16 %v2364
  %v2434 = vunpack.c.h.b16 %v2364
  %v2435 = vunpack.c.l.b16 %v2365
  %v2436 = vunpack.c.h.b16 %v2365
  %v2437 = vunpack.c.l.b16 %v2366
  %v2438 = vunpack.c.h.b16 %v2366
  %v2439 = vpack.c.b16 %v2391, %v2391
  %v2440 = vpack.c.b16 %v2392, %v2392
  %v2441 = vpack.c.b16 %v2393, %v2393
  %v2442 = vpack.c.b16 %v2394, %v2394
  %v2443 = vpack.c.b16 %v2395, %v2395
  %v2444 = vpack.c.b16 %v2396, %v2396
  %v2445 = vpack.c.b16 %v2397, %v2397
  %v2446 = vpack.c.b16 %v2398, %v2398
  %v2447 = vpack.c.b16 %v2399, %v2399
  %v2448 = vpack.c.b16 %v2400, %v2400
  %v2449 = vpack.c.b16 %v2401, %v2401
  %v2450 = vpack.c.b16 %v2402, %v2402
  %v2451 = vpack.c.b16 %v2403, %v2403
  %v2452 = vpack.c.b16 %v2404, %v2404
  %v2453 = vpack.c.b16 %v2405, %v2405
  %v2454 = vpack.c.b16 %v2406, %v2406
  %v2455 = vpack.c.b16 %v2407, %v2407
  %v2456 = vpack.c.b16 %v2408, %v2408
  %v2457 = vpack.c.b16 %v2409, %v2409
  %v2458 = vpack.c.b16 %v2410, %v2410
  %v2459 = vpack.c.b16 %v2411, %v2411
  %v2460 = vpack.c.b16 %v2412, %v2412
  %v2461 = vpack.c.b16 %v2413, %v2413
  %v2462 = vpack.c.b16 %v2414, %v2414
  %v2463 = vpack.c.b16 %v2415, %v2415
  %v2464 = vpack.c.b16 %v2416, %v2416
  %v2465 = vpack.c.b16 %v2417, %v2417
  %v2466 = vpack.c.b16 %v2418, %v2418
  %v2467 = vpack.c.b16 %v2419, %v2419
  %v2468 = vpack.c.b16 %v2420, %v2420
  %v2469 = vpack.c.b16 %v2421, %v2421
  %v2470 = vpack.c.b16 %v2422, %v2422
  %v2471 = vpack.c.b16 %v2423, %v2423
  %v2472 = vpack.c.b16 %v2424, %v2424
  %v2473 = vpack.c.b16 %v2425, %v2425
  %v2474 = vpack.c.b16 %v2426, %v2426
  %v2475 = vpack.c.b16 %v2427, %v2427
  %v2476 = vpack.c.b16 %v2428, %v2428
  %v2477 = vpack.c.b16 %v2429, %v2429
  %v2478 = vpack.c.b16 %v2430, %v2430
  %v2479 = vpack.c.b16 %v2431, %v2431
  %v2480 = vpack.c.b16 %v2432, %v2432
  %v2481 = vpack.c.b16 %v2433, %v2433
  %v2482 = vpack.c.b16 %v2434, %v2434
  %v2483 = vpack.c.b16 %v2435, %v2435
  %v2484 = vpack.c.b16 %v2436, %v2436
  %v2485 = vpack.c.b16 %v2437, %v2437
  %v2486 = vpack.c.b16 %v2438, %v2438
  %2535 = vst [vmem:[%s3] sm:$0xf] %v2439
  %2536 = vst [vmem:[%s3 + $0x4] sm:$0xf] %v2440
  %2537 = vst [vmem:[%s3 + $0x8] sm:$0xf] %v2441
  %2538 = vst [vmem:[%s3 + $0xc] sm:$0xf] %v2442
  %2539 = vst [vmem:[%s3 + $0x10] sm:$0xf] %v2443
  %2540 = vst [vmem:[%s3 + $0x14] sm:$0xf] %v2444
  %2541 = vst [vmem:[%s3 + $0x18] sm:$0xf] %v2445
  %2542 = vst [vmem:[%s3 + $0x1c] sm:$0xf] %v2446
  %2543 = vst [vmem:[%s3 + $0x20] sm:$0xf] %v2447
  %2544 = vst [vmem:[%s3 + $0x24] sm:$0xf] %v2448
  %2545 = vst [vmem:[%s3 + $0x28] sm:$0xf] %v2449
  %2546 = vst [vmem:[%s3 + $0x2c] sm:$0xf] %v2450
  %2547 = vst [vmem:[%s3 + $0x30] sm:$0xf] %v2451
  %2548 = vst [vmem:[%s3 + $0x34] sm:$0xf] %v2452
  %2549 = vst [vmem:[%s3 + $0x38] sm:$0xf] %v2453
  %2550 = vst [vmem:[%s3 + $0x3c] sm:$0xf] %v2454
  %2551 = vst [vmem:[%s3 + $0x40] sm:$0xf] %v2455
  %2552 = vst [vmem:[%s3 + $0x44] sm:$0xf] %v2456
  %2553 = vst [vmem:[%s3 + $0x48] sm:$0xf] %v2457
  %2554 = vst [vmem:[%s3 + $0x4c] sm:$0xf] %v2458
  %2555 = vst [vmem:[%s3 + $0x50] sm:$0xf] %v2459
  %2556 = vst [vmem:[%s3 + $0x54] sm:$0xf] %v2460
  %2557 = vst [vmem:[%s3 + $0x58] sm:$0xf] %v2461
  %2558 = vst [vmem:[%s3 + $0x5c] sm:$0xf] %v2462
  %2559 = vst [vmem:[%s3 + $0x60] sm:$0xf] %v2463
  %2560 = vst [vmem:[%s3 + $0x64] sm:$0xf] %v2464
  %2561 = vst [vmem:[%s3 + $0x68] sm:$0xf] %v2465
  %2562 = vst [vmem:[%s3 + $0x6c] sm:$0xf] %v2466
  %2563 = vst [vmem:[%s3 + $0x70] sm:$0xf] %v2467
  %2564 = vst [vmem:[%s3 + $0x74] sm:$0xf] %v2468
  %2565 = vst [vmem:[%s3 + $0x78] sm:$0xf] %v2469
  %2566 = vst [vmem:[%s3 + $0x7c] sm:$0xf] %v2470
  %2567 = vst [vmem:[%s3 + $0x80] sm:$0xf] %v2471
  %2568 = vst [vmem:[%s3 + $0x84] sm:$0xf] %v2472
  %2569 = vst [vmem:[%s3 + $0x88] sm:$0xf] %v2473
  %2570 = vst [vmem:[%s3 + $0x8c] sm:$0xf] %v2474
  %2571 = vst [vmem:[%s3 + $0x90] sm:$0xf] %v2475
  %2572 = vst [vmem:[%s3 + $0x94] sm:$0xf] %v2476
  %2573 = vst [vmem:[%s3 + $0x98] sm:$0xf] %v2477
  %2574 = vst [vmem:[%s3 + $0x9c] sm:$0xf] %v2478
  %2575 = vst [vmem:[%s3 + $0xa0] sm:$0xf] %v2479
  %2576 = vst [vmem:[%s3 + $0xa4] sm:$0xf] %v2480
  %2577 = vst [vmem:[%s3 + $0xa8] sm:$0xf] %v2481
  %2578 = vst [vmem:[%s3 + $0xac] sm:$0xf] %v2482
  %2579 = vst [vmem:[%s3 + $0xb0] sm:$0xf] %v2483
  %2580 = vst [vmem:[%s3 + $0xb4] sm:$0xf] %v2484
  %2581 = vst [vmem:[%s3 + $0xb8] sm:$0xf] %v2485
  %2582 = vst [vmem:[%s3 + $0xbc] sm:$0xf] %v2486
  // Predicated region
  $region14: #{forward.5} parent=0 // pred_check
    _
  $region15: #{forward.5} parent=0 // pred_check_branch
    %2584 = sbr.rel (0) target = $region17
  $region16: #{forward.5} parent=0 // pred_region
    _
  $region17: #{forward.5} parent=0 // pred_fallthru
    _
  // Predicated region
  $region18: #{forward.5} parent=0 // pred_check
    _
  $region19: #{forward.5} parent=0 // pred_check_branch
    %2586 = sbr.rel (0) target = $region21
  $region20: #{forward.5} parent=0 // pred_region
    _
  $region21: #{forward.5} parent=0 // pred_fallthru
    _

// kernel: forward.6
$region0: #{forward.6}
  #allocation0 [shape = 'u32[]', space=smem, size = 0x4, offset = 0x4, fixed_abs, tag = 'smem constant byte address 0x4 - core index']
  #allocation1 [shape = 'u32[144,128]{1,0:T(1,128)}', space=vmem, size = 0x12000, scoped, tag = 'internal scratch']
  %s0 = inlined_call_operand.vmem [shape: bf16[4,64,640], index: 0, kind: input, shape index: {}]
  %s1 = inlined_call_operand.vmem [shape: bf16[640,128], index: 1, kind: input, shape index: {}]
  %s2 = inlined_call_operand.vmem [shape: f32[1,128], index: 2, kind: input, shape index: {}]
  %s3 = inlined_call_operand.vmem [shape: bf16[64,128], index: 3, kind: output, shape index: {}]
  %s4 = sld [smem:[#allocation0]]
  $region22: #{forward.6} parent=0
    _
  %s6 = ssub.s32 1, %s4
  %s7 = scalar_select 0, %s6, %s4
  // Predicated region
  $region2: #{forward.6} parent=0 // pred_check
    _
  $region3: #{forward.6} parent=0 // pred_check_branch
    %9 = sbr.rel (0) target = $region5
  $region4: #{forward.6} parent=0 // pred_region
    _
  $region5: #{forward.6} parent=0 // pred_fallthru
    _
  // Predicated region
  $region6: #{forward.6} parent=0 // pred_check
    _
  $region7: #{forward.6} parent=0 // pred_check_branch
    %11 = sbr.rel (0) target = $region9
  $region8: #{forward.6} parent=0 // pred_region
    _
  $region9: #{forward.6} parent=0 // pred_fallthru
    _
  // Predicated region
  $region10: #{forward.6} parent=0 // pred_check
    _
  $region11: #{forward.6} parent=0 // pred_check_branch
    %13 = sbr.rel (0) target = $region13
  $region12: #{forward.6} parent=0 // pred_region
    _
  $region13: #{forward.6} parent=0 // pred_fallthru
    _
  %v15 = vld [vmem:[%s0] sm:$0xff]
  %v16 = vld [vmem:[%s0 + $0x8] sm:$0xff]
  %v17 = vld [vmem:[%s0 + $0x10] sm:$0xf]
  %v18 = vld [vmem:[%s0 + $0x14] sm:$0xff]
  %v19 = vld [vmem:[%s0 + $0x1c] sm:$0xff]
  %v20 = vld [vmem:[%s0 + $0x24] sm:$0xf]
  %v21 = vld [vmem:[%s0 + $0x28] sm:$0xff]
  %v22 = vld [vmem:[%s0 + $0x30] sm:$0xff]
  %v23 = vld [vmem:[%s0 + $0x38] sm:$0xf]
  %v24 = vld [vmem:[%s0 + $0x3c] sm:$0xff]
  %v25 = vld [vmem:[%s0 + $0x44] sm:$0xff]
  %v26 = vld [vmem:[%s0 + $0x4c] sm:$0xf]
  %v27 = vld [vmem:[%s0 + $0x50] sm:$0xff]
  %v28 = vld [vmem:[%s0 + $0x58] sm:$0xff]
  %v29 = vld [vmem:[%s0 + $0x60] sm:$0xf]
  %v30 = vld [vmem:[%s0 + $0x64] sm:$0xff]
  %v31 = vld [vmem:[%s0 + $0x6c] sm:$0xff]
  %v32 = vld [vmem:[%s0 + $0x74] sm:$0xf]
  %v33 = vld [vmem:[%s0 + $0x78] sm:$0xff]
  %v34 = vld [vmem:[%s0 + $0x80] sm:$0xff]
  %v35 = vld [vmem:[%s0 + $0x88] sm:$0xf]
  %v36 = vld [vmem:[%s0 + $0x8c] sm:$0xff]
  %v37 = vld [vmem:[%s0 + $0x94] sm:$0xff]
  %v38 = vld [vmem:[%s0 + $0x9c] sm:$0xf]
  %v39 = vld [vmem:[%s0 + $0xa0] sm:$0xff]
  %v40 = vld [vmem:[%s0 + $0xa8] sm:$0xff]
  %v41 = vld [vmem:[%s0 + $0xb0] sm:$0xf]
  %v42 = vld [vmem:[%s0 + $0xb4] sm:$0xff]
  %v43 = vld [vmem:[%s0 + $0xbc] sm:$0xff]
  %v44 = vld [vmem:[%s0 + $0xc4] sm:$0xf]
  %v45 = vld [vmem:[%s0 + $0xc8] sm:$0xff]
  %v46 = vld [vmem:[%s0 + $0xd0] sm:$0xff]
  %v47 = vld [vmem:[%s0 + $0xd8] sm:$0xf]
  %v48 = vld [vmem:[%s0 + $0xdc] sm:$0xff]
  %v49 = vld [vmem:[%s0 + $0xe4] sm:$0xff]
  %v50 = vld [vmem:[%s0 + $0xec] sm:$0xf]
  %v51 = vld [vmem:[%s0 + $0xf0] sm:$0xff]
  %v52 = vld [vmem:[%s0 + $0xf8] sm:$0xff]
  %v53 = vld [vmem:[%s0 + $0x100] sm:$0xf]
  %v54 = vld [vmem:[%s0 + $0x104] sm:$0xff]
  %v55 = vld [vmem:[%s0 + $0x10c] sm:$0xff]
  %v56 = vld [vmem:[%s0 + $0x114] sm:$0xf]
  %v57 = vld [vmem:[%s0 + $0x118] sm:$0xff]
  %v58 = vld [vmem:[%s0 + $0x120] sm:$0xff]
  %v59 = vld [vmem:[%s0 + $0x128] sm:$0xf]
  %v60 = vld [vmem:[%s0 + $0x12c] sm:$0xff]
  %v61 = vld [vmem:[%s0 + $0x134] sm:$0xff]
  %v62 = vld [vmem:[%s0 + $0x13c] sm:$0xf]
  %v63 = vld [vmem:[%s0 + $0x140] sm:$0xff]
  %v64 = vld [vmem:[%s0 + $0x148] sm:$0xff]
  %v65 = vld [vmem:[%s0 + $0x150] sm:$0xf]
  %v66 = vld [vmem:[%s0 + $0x154] sm:$0xff]
  %v67 = vld [vmem:[%s0 + $0x15c] sm:$0xff]
  %v68 = vld [vmem:[%s0 + $0x164] sm:$0xf]
  %v69 = vld [vmem:[%s0 + $0x168] sm:$0xff]
  %v70 = vld [vmem:[%s0 + $0x170] sm:$0xff]
  %v71 = vld [vmem:[%s0 + $0x178] sm:$0xf]
  %v72 = vld [vmem:[%s0 + $0x17c] sm:$0xff]
  %v73 = vld [vmem:[%s0 + $0x184] sm:$0xff]
  %v74 = vld [vmem:[%s0 + $0x18c] sm:$0xf]
  %v75 = vld [vmem:[%s0 + $0x190] sm:$0xff]
  %v76 = vld [vmem:[%s0 + $0x198] sm:$0xff]
  %v77 = vld [vmem:[%s0 + $0x1a0] sm:$0xf]
  %v78 = vld [vmem:[%s0 + $0x1a4] sm:$0xff]
  %v79 = vld [vmem:[%s0 + $0x1ac] sm:$0xff]
  %v80 = vld [vmem:[%s0 + $0x1b4] sm:$0xf]
  %v81 = vld [vmem:[%s0 + $0x1b8] sm:$0xff]
  %v82 = vld [vmem:[%s0 + $0x1c0] sm:$0xff]
  %v83 = vld [vmem:[%s0 + $0x1c8] sm:$0xf]
  %v84 = vld [vmem:[%s0 + $0x1cc] sm:$0xff]
  %v85 = vld [vmem:[%s0 + $0x1d4] sm:$0xff]
  %v86 = vld [vmem:[%s0 + $0x1dc] sm:$0xf]
  %v87 = vld [vmem:[%s0 + $0x1e0] sm:$0xff]
  %v88 = vld [vmem:[%s0 + $0x1e8] sm:$0xff]
  %v89 = vld [vmem:[%s0 + $0x1f0] sm:$0xf]
  %v90 = vld [vmem:[%s0 + $0x1f4] sm:$0xff]
  %v91 = vld [vmem:[%s0 + $0x1fc] sm:$0xff]
  %v92 = vld [vmem:[%s0 + $0x204] sm:$0xf]
  %v93 = vld [vmem:[%s0 + $0x208] sm:$0xff]
  %v94 = vld [vmem:[%s0 + $0x210] sm:$0xff]
  %v95 = vld [vmem:[%s0 + $0x218] sm:$0xf]
  %v96 = vld [vmem:[%s0 + $0x21c] sm:$0xff]
  %v97 = vld [vmem:[%s0 + $0x224] sm:$0xff]
  %v98 = vld [vmem:[%s0 + $0x22c] sm:$0xf]
  %v99 = vld [vmem:[%s0 + $0x230] sm:$0xff]
  %v100 = vld [vmem:[%s0 + $0x238] sm:$0xff]
  %v101 = vld [vmem:[%s0 + $0x240] sm:$0xf]
  %v102 = vld [vmem:[%s0 + $0x244] sm:$0xff]
  %v103 = vld [vmem:[%s0 + $0x24c] sm:$0xff]
  %v104 = vld [vmem:[%s0 + $0x254] sm:$0xf]
  %v105 = vld [vmem:[%s0 + $0x258] sm:$0xff]
  %v106 = vld [vmem:[%s0 + $0x260] sm:$0xff]
  %v107 = vld [vmem:[%s0 + $0x268] sm:$0xf]
  %v108 = vld [vmem:[%s0 + $0x26c] sm:$0xff]
  %v109 = vld [vmem:[%s0 + $0x274] sm:$0xff]
  %v110 = vld [vmem:[%s0 + $0x27c] sm:$0xf]
  %v111 = vld [vmem:[%s1] sm:$0xf]
  %v112 = vld [vmem:[%s1 + $0x4] sm:$0xf]
  %v113 = vld [vmem:[%s1 + $0x8] sm:$0xf]
  %v114 = vld [vmem:[%s1 + $0xc] sm:$0xf]
  %v115 = vld [vmem:[%s1 + $0x10] sm:$0xf]
  %v116 = vld [vmem:[%s1 + $0x14] sm:$0xf]
  %v117 = vld [vmem:[%s1 + $0x18] sm:$0xf]
  %v118 = vld [vmem:[%s1 + $0x1c] sm:$0xf]
  %v119 = vld [vmem:[%s1 + $0x20] sm:$0xf]
  %v120 = vld [vmem:[%s1 + $0x24] sm:$0xf]
  %v121 = vld [vmem:[%s1 + $0x28] sm:$0xf]
  %v122 = vld [vmem:[%s1 + $0x2c] sm:$0xf]
  %v123 = vld [vmem:[%s1 + $0x30] sm:$0xf]
  %v124 = vld [vmem:[%s1 + $0x34] sm:$0xf]
  %v125 = vld [vmem:[%s1 + $0x38] sm:$0xf]
  %v126 = vld [vmem:[%s1 + $0x3c] sm:$0xf]
  %v127 = vld [vmem:[%s1 + $0x40] sm:$0xf]
  %v128 = vld [vmem:[%s1 + $0x44] sm:$0xf]
  %v129 = vld [vmem:[%s1 + $0x48] sm:$0xf]
  %v130 = vld [vmem:[%s1 + $0x4c] sm:$0xf]
  %v131 = vld [vmem:[%s1 + $0x50] sm:$0xf]
  %v132 = vld [vmem:[%s1 + $0x54] sm:$0xf]
  %v133 = vld [vmem:[%s1 + $0x58] sm:$0xf]
  %v134 = vld [vmem:[%s1 + $0x5c] sm:$0xf]
  %v135 = vld [vmem:[%s1 + $0x60] sm:$0xf]
  %v136 = vld [vmem:[%s1 + $0x64] sm:$0xf]
  %v137 = vld [vmem:[%s1 + $0x68] sm:$0xf]
  %v138 = vld [vmem:[%s1 + $0x6c] sm:$0xf]
  %v139 = vld [vmem:[%s1 + $0x70] sm:$0xf]
  %v140 = vld [vmem:[%s1 + $0x74] sm:$0xf]
  %v141 = vld [vmem:[%s1 + $0x78] sm:$0xf]
  %v142 = vld [vmem:[%s1 + $0x7c] sm:$0xf]
  %v143 = vld [vmem:[%s1 + $0x80] sm:$0xf]
  %v144 = vld [vmem:[%s1 + $0x84] sm:$0xf]
  %v145 = vld [vmem:[%s1 + $0x88] sm:$0xf]
  %v146 = vld [vmem:[%s1 + $0x8c] sm:$0xf]
  %v147 = vld [vmem:[%s1 + $0x90] sm:$0xf]
  %v148 = vld [vmem:[%s1 + $0x94] sm:$0xf]
  %v149 = vld [vmem:[%s1 + $0x98] sm:$0xf]
  %v150 = vld [vmem:[%s1 + $0x9c] sm:$0xf]
  %v151 = vld [vmem:[%s1 + $0xa0] sm:$0xf]
  %v152 = vld [vmem:[%s1 + $0xa4] sm:$0xf]
  %v153 = vld [vmem:[%s1 + $0xa8] sm:$0xf]
  %v154 = vld [vmem:[%s1 + $0xac] sm:$0xf]
  %v155 = vld [vmem:[%s1 + $0xb0] sm:$0xf]
  %v156 = vld [vmem:[%s1 + $0xb4] sm:$0xf]
  %v157 = vld [vmem:[%s1 + $0xb8] sm:$0xf]
  %v158 = vld [vmem:[%s1 + $0xbc] sm:$0xf]
  %v159 = vld [vmem:[%s1 + $0xc0] sm:$0xf]
  %v160 = vld [vmem:[%s1 + $0xc4] sm:$0xf]
  %v161 = vld [vmem:[%s1 + $0xc8] sm:$0xf]
  %v162 = vld [vmem:[%s1 + $0xcc] sm:$0xf]
  %v163 = vld [vmem:[%s1 + $0xd0] sm:$0xf]
  %v164 = vld [vmem:[%s1 + $0xd4] sm:$0xf]
  %v165 = vld [vmem:[%s1 + $0xd8] sm:$0xf]
  %v166 = vld [vmem:[%s1 + $0xdc] sm:$0xf]
  %v167 = vld [vmem:[%s1 + $0xe0] sm:$0xf]
  %v168 = vld [vmem:[%s1 + $0xe4] sm:$0xf]
  %v169 = vld [vmem:[%s1 + $0xe8] sm:$0xf]
  %v170 = vld [vmem:[%s1 + $0xec] sm:$0xf]
  %v171 = vld [vmem:[%s1 + $0xf0] sm:$0xf]
  %v172 = vld [vmem:[%s1 + $0xf4] sm:$0xf]
  %v173 = vld [vmem:[%s1 + $0xf8] sm:$0xf]
  %v174 = vld [vmem:[%s1 + $0xfc] sm:$0xf]
  %v175 = vld [vmem:[%s1 + $0x100] sm:$0xf]
  %v176 = vld [vmem:[%s1 + $0x104] sm:$0xf]
  %v177 = vld [vmem:[%s1 + $0x108] sm:$0xf]
  %v178 = vld [vmem:[%s1 + $0x10c] sm:$0xf]
  %v179 = vld [vmem:[%s1 + $0x110] sm:$0xf]
  %v180 = vld [vmem:[%s1 + $0x114] sm:$0xf]
  %v181 = vld [vmem:[%s1 + $0x118] sm:$0xf]
  %v182 = vld [vmem:[%s1 + $0x11c] sm:$0xf]
  %v183 = vld [vmem:[%s1 + $0x120] sm:$0xf]
  %v184 = vld [vmem:[%s1 + $0x124] sm:$0xf]
  %v185 = vld [vmem:[%s1 + $0x128] sm:$0xf]
  %v186 = vld [vmem:[%s1 + $0x12c] sm:$0xf]
  %v187 = vld [vmem:[%s1 + $0x130] sm:$0xf]
  %v188 = vld [vmem:[%s1 + $0x134] sm:$0xf]
  %v189 = vld [vmem:[%s1 + $0x138] sm:$0xf]
  %v190 = vld [vmem:[%s1 + $0x13c] sm:$0xf]
  %v287 = vunpack.c.l.b16 %v15
  %v288 = vunpack.c.h.b16 %v15
  %v289 = vunpack.c.l.b16 %v16
  %v290 = vunpack.c.h.b16 %v16
  %v291 = vunpack.c.l.b16 %v17
  %v292 = vunpack.c.l.b16 %v18
  %v293 = vunpack.c.h.b16 %v18
  %v294 = vunpack.c.l.b16 %v19
  %v295 = vunpack.c.h.b16 %v19
  %v296 = vunpack.c.l.b16 %v20
  %v297 = vunpack.c.l.b16 %v21
  %v298 = vunpack.c.h.b16 %v21
  %v299 = vunpack.c.l.b16 %v22
  %v300 = vunpack.c.h.b16 %v22
  %v301 = vunpack.c.l.b16 %v23
  %v302 = vunpack.c.l.b16 %v24
  %v303 = vunpack.c.h.b16 %v24
  %v304 = vunpack.c.l.b16 %v25
  %v305 = vunpack.c.h.b16 %v25
  %v306 = vunpack.c.l.b16 %v26
  %v307 = vunpack.c.l.b16 %v27
  %v308 = vunpack.c.h.b16 %v27
  %v309 = vunpack.c.l.b16 %v28
  %v310 = vunpack.c.h.b16 %v28
  %v311 = vunpack.c.l.b16 %v29
  %v312 = vunpack.c.l.b16 %v30
  %v313 = vunpack.c.h.b16 %v30
  %v314 = vunpack.c.l.b16 %v31
  %v315 = vunpack.c.h.b16 %v31
  %v316 = vunpack.c.l.b16 %v32
  %v317 = vunpack.c.l.b16 %v33
  %v318 = vunpack.c.h.b16 %v33
  %v319 = vunpack.c.l.b16 %v34
  %v320 = vunpack.c.h.b16 %v34
  %v321 = vunpack.c.l.b16 %v35
  %v322 = vunpack.c.l.b16 %v36
  %v323 = vunpack.c.h.b16 %v36
  %v324 = vunpack.c.l.b16 %v37
  %v325 = vunpack.c.h.b16 %v37
  %v326 = vunpack.c.l.b16 %v38
  %v327 = vunpack.c.l.b16 %v39
  %v328 = vunpack.c.h.b16 %v39
  %v329 = vunpack.c.l.b16 %v40
  %v330 = vunpack.c.h.b16 %v40
  %v331 = vunpack.c.l.b16 %v41
  %v332 = vunpack.c.l.b16 %v42
  %v333 = vunpack.c.h.b16 %v42
  %v334 = vunpack.c.l.b16 %v43
  %v335 = vunpack.c.h.b16 %v43
  %v336 = vunpack.c.l.b16 %v44
  %v337 = vunpack.c.l.b16 %v45
  %v338 = vunpack.c.h.b16 %v45
  %v339 = vunpack.c.l.b16 %v46
  %v340 = vunpack.c.h.b16 %v46
  %v341 = vunpack.c.l.b16 %v47
  %v342 = vunpack.c.l.b16 %v48
  %v343 = vunpack.c.h.b16 %v48
  %v344 = vunpack.c.l.b16 %v49
  %v345 = vunpack.c.h.b16 %v49
  %v346 = vunpack.c.l.b16 %v50
  %v347 = vunpack.c.l.b16 %v51
  %v348 = vunpack.c.h.b16 %v51
  %v349 = vunpack.c.l.b16 %v52
  %v350 = vunpack.c.h.b16 %v52
  %v351 = vunpack.c.l.b16 %v53
  %v352 = vunpack.c.l.b16 %v54
  %v353 = vunpack.c.h.b16 %v54
  %v354 = vunpack.c.l.b16 %v55
  %v355 = vunpack.c.h.b16 %v55
  %v356 = vunpack.c.l.b16 %v56
  %v357 = vunpack.c.l.b16 %v57
  %v358 = vunpack.c.h.b16 %v57
  %v359 = vunpack.c.l.b16 %v58
  %v360 = vunpack.c.h.b16 %v58
  %v361 = vunpack.c.l.b16 %v59
  %v362 = vunpack.c.l.b16 %v60
  %v363 = vunpack.c.h.b16 %v60
  %v364 = vunpack.c.l.b16 %v61
  %v365 = vunpack.c.h.b16 %v61
  %v366 = vunpack.c.l.b16 %v62
  %v367 = vunpack.c.l.b16 %v63
  %v368 = vunpack.c.h.b16 %v63
  %v369 = vunpack.c.l.b16 %v64
  %v370 = vunpack.c.h.b16 %v64
  %v371 = vunpack.c.l.b16 %v65
  %v372 = vunpack.c.l.b16 %v66
  %v373 = vunpack.c.h.b16 %v66
  %v374 = vunpack.c.l.b16 %v67
  %v375 = vunpack.c.h.b16 %v67
  %v376 = vunpack.c.l.b16 %v68
  %v377 = vunpack.c.l.b16 %v69
  %v378 = vunpack.c.h.b16 %v69
  %v379 = vunpack.c.l.b16 %v70
  %v380 = vunpack.c.h.b16 %v70
  %v381 = vunpack.c.l.b16 %v71
  %v382 = vunpack.c.l.b16 %v72
  %v383 = vunpack.c.h.b16 %v72
  %v384 = vunpack.c.l.b16 %v73
  %v385 = vunpack.c.h.b16 %v73
  %v386 = vunpack.c.l.b16 %v74
  %v387 = vunpack.c.l.b16 %v75
  %v388 = vunpack.c.h.b16 %v75
  %v389 = vunpack.c.l.b16 %v76
  %v390 = vunpack.c.h.b16 %v76
  %v391 = vunpack.c.l.b16 %v77
  %v392 = vunpack.c.l.b16 %v78
  %v393 = vunpack.c.h.b16 %v78
  %v394 = vunpack.c.l.b16 %v79
  %v395 = vunpack.c.h.b16 %v79
  %v396 = vunpack.c.l.b16 %v80
  %v397 = vunpack.c.l.b16 %v81
  %v398 = vunpack.c.h.b16 %v81
  %v399 = vunpack.c.l.b16 %v82
  %v400 = vunpack.c.h.b16 %v82
  %v401 = vunpack.c.l.b16 %v83
  %v402 = vunpack.c.l.b16 %v84
  %v403 = vunpack.c.h.b16 %v84
  %v404 = vunpack.c.l.b16 %v85
  %v405 = vunpack.c.h.b16 %v85
  %v406 = vunpack.c.l.b16 %v86
  %v407 = vunpack.c.l.b16 %v87
  %v408 = vunpack.c.h.b16 %v87
  %v409 = vunpack.c.l.b16 %v88
  %v410 = vunpack.c.h.b16 %v88
  %v411 = vunpack.c.l.b16 %v89
  %v412 = vunpack.c.l.b16 %v90
  %v413 = vunpack.c.h.b16 %v90
  %v414 = vunpack.c.l.b16 %v91
  %v415 = vunpack.c.h.b16 %v91
  %v416 = vunpack.c.l.b16 %v92
  %v417 = vunpack.c.l.b16 %v93
  %v418 = vunpack.c.h.b16 %v93
  %v419 = vunpack.c.l.b16 %v94
  %v420 = vunpack.c.h.b16 %v94
  %v421 = vunpack.c.l.b16 %v95
  %v422 = vunpack.c.l.b16 %v96
  %v423 = vunpack.c.h.b16 %v96
  %v424 = vunpack.c.l.b16 %v97
  %v425 = vunpack.c.h.b16 %v97
  %v426 = vunpack.c.l.b16 %v98
  %v427 = vunpack.c.l.b16 %v99
  %v428 = vunpack.c.h.b16 %v99
  %v429 = vunpack.c.l.b16 %v100
  %v430 = vunpack.c.h.b16 %v100
  %v431 = vunpack.c.l.b16 %v101
  %v432 = vunpack.c.l.b16 %v102
  %v433 = vunpack.c.h.b16 %v102
  %v434 = vunpack.c.l.b16 %v103
  %v435 = vunpack.c.h.b16 %v103
  %v436 = vunpack.c.l.b16 %v104
  %v437 = vunpack.c.l.b16 %v105
  %v438 = vunpack.c.h.b16 %v105
  %v439 = vunpack.c.l.b16 %v106
  %v440 = vunpack.c.h.b16 %v106
  %v441 = vunpack.c.l.b16 %v107
  %v442 = vunpack.c.l.b16 %v108
  %v443 = vunpack.c.h.b16 %v108
  %v444 = vunpack.c.l.b16 %v109
  %v445 = vunpack.c.h.b16 %v109
  %v446 = vunpack.c.l.b16 %v110
  %v447 = vpack.c.b16 %v292, %v287
  %v448 = vpack.c.b16 %v293, %v288
  %v449 = vpack.c.b16 %v294, %v289
  %v450 = vpack.c.b16 %v295, %v290
  %v451 = vpack.c.b16 %v296, %v291
  %v452 = vpack.c.b16 %v302, %v297
  %v453 = vpack.c.b16 %v303, %v298
  %v454 = vpack.c.b16 %v304, %v299
  %v455 = vpack.c.b16 %v305, %v300
  %v456 = vpack.c.b16 %v306, %v301
  %v457 = vpack.c.b16 %v312, %v307
  %v458 = vpack.c.b16 %v313, %v308
  %v459 = vpack.c.b16 %v314, %v309
  %v460 = vpack.c.b16 %v315, %v310
  %v461 = vpack.c.b16 %v316, %v311
  %v462 = vpack.c.b16 %v322, %v317
  %v463 = vpack.c.b16 %v323, %v318
  %v464 = vpack.c.b16 %v324, %v319
  %v465 = vpack.c.b16 %v325, %v320
  %v466 = vpack.c.b16 %v326, %v321
  %v467 = vpack.c.b16 %v332, %v327
  %v468 = vpack.c.b16 %v333, %v328
  %v469 = vpack.c.b16 %v334, %v329
  %v470 = vpack.c.b16 %v335, %v330
  %v471 = vpack.c.b16 %v336, %v331
  %v472 = vpack.c.b16 %v342, %v337
  %v473 = vpack.c.b16 %v343, %v338
  %v474 = vpack.c.b16 %v344, %v339
  %v475 = vpack.c.b16 %v345, %v340
  %v476 = vpack.c.b16 %v346, %v341
  %v477 = vpack.c.b16 %v352, %v347
  %v478 = vpack.c.b16 %v353, %v348
  %v479 = vpack.c.b16 %v354, %v349
  %v480 = vpack.c.b16 %v355, %v350
  %v481 = vpack.c.b16 %v356, %v351
  %v482 = vpack.c.b16 %v362, %v357
  %v483 = vpack.c.b16 %v363, %v358
  %v484 = vpack.c.b16 %v364, %v359
  %v485 = vpack.c.b16 %v365, %v360
  %v486 = vpack.c.b16 %v366, %v361
  %v487 = vpack.c.b16 %v372, %v367
  %v488 = vpack.c.b16 %v373, %v368
  %v489 = vpack.c.b16 %v374, %v369
  %v490 = vpack.c.b16 %v375, %v370
  %v491 = vpack.c.b16 %v376, %v371
  %v492 = vpack.c.b16 %v382, %v377
  %v493 = vpack.c.b16 %v383, %v378
  %v494 = vpack.c.b16 %v384, %v379
  %v495 = vpack.c.b16 %v385, %v380
  %v496 = vpack.c.b16 %v386, %v381
  %v497 = vpack.c.b16 %v392, %v387
  %v498 = vpack.c.b16 %v393, %v388
  %v499 = vpack.c.b16 %v394, %v389
  %v500 = vpack.c.b16 %v395, %v390
  %v501 = vpack.c.b16 %v396, %v391
  %v502 = vpack.c.b16 %v402, %v397
  %v503 = vpack.c.b16 %v403, %v398
  %v504 = vpack.c.b16 %v404, %v399
  %v505 = vpack.c.b16 %v405, %v400
  %v506 = vpack.c.b16 %v406, %v401
  %v507 = vpack.c.b16 %v412, %v407
  %v508 = vpack.c.b16 %v413, %v408
  %v509 = vpack.c.b16 %v414, %v409
  %v510 = vpack.c.b16 %v415, %v410
  %v511 = vpack.c.b16 %v416, %v411
  %v512 = vpack.c.b16 %v422, %v417
  %v513 = vpack.c.b16 %v423, %v418
  %v514 = vpack.c.b16 %v424, %v419
  %v515 = vpack.c.b16 %v425, %v420
  %v516 = vpack.c.b16 %v426, %v421
  %v517 = vpack.c.b16 %v432, %v427
  %v518 = vpack.c.b16 %v433, %v428
  %v519 = vpack.c.b16 %v434, %v429
  %v520 = vpack.c.b16 %v435, %v430
  %v521 = vpack.c.b16 %v436, %v431
  %v522 = vpack.c.b16 %v442, %v437
  %v523 = vpack.c.b16 %v443, %v438
  %v524 = vpack.c.b16 %v444, %v439
  %v525 = vpack.c.b16 %v445, %v440
  %v526 = vpack.c.b16 %v446, %v441
  %v687 = vunpack.c.l.b16 %v111
  %v688 = vunpack.c.l.b16 %v112
  %v689 = vunpack.c.l.b16 %v113
  %v690 = vunpack.c.l.b16 %v114
  %v691 = vunpack.c.l.b16 %v115
  %v692 = vunpack.c.l.b16 %v116
  %v693 = vunpack.c.l.b16 %v117
  %v694 = vunpack.c.l.b16 %v118
  %v695 = vunpack.c.l.b16 %v119
  %v696 = vunpack.c.l.b16 %v120
  %v697 = vunpack.c.l.b16 %v121
  %v698 = vunpack.c.l.b16 %v122
  %v699 = vunpack.c.l.b16 %v123
  %v700 = vunpack.c.l.b16 %v124
  %v701 = vunpack.c.l.b16 %v125
  %v702 = vunpack.c.l.b16 %v126
  %v703 = vunpack.c.l.b16 %v127
  %v704 = vunpack.c.l.b16 %v128
  %v705 = vunpack.c.l.b16 %v129
  %v706 = vunpack.c.l.b16 %v130
  %v707 = vunpack.c.l.b16 %v131
  %v708 = vunpack.c.l.b16 %v132
  %v709 = vunpack.c.l.b16 %v133
  %v710 = vunpack.c.l.b16 %v134
  %v711 = vunpack.c.l.b16 %v135
  %v712 = vunpack.c.l.b16 %v136
  %v713 = vunpack.c.l.b16 %v137
  %v714 = vunpack.c.l.b16 %v138
  %v715 = vunpack.c.l.b16 %v139
  %v716 = vunpack.c.l.b16 %v140
  %v717 = vunpack.c.l.b16 %v141
  %v718 = vunpack.c.l.b16 %v142
  %v719 = vunpack.c.l.b16 %v143
  %v720 = vunpack.c.l.b16 %v144
  %v721 = vunpack.c.l.b16 %v145
  %v722 = vunpack.c.l.b16 %v146
  %v723 = vunpack.c.l.b16 %v147
  %v724 = vunpack.c.l.b16 %v148
  %v725 = vunpack.c.l.b16 %v149
  %v726 = vunpack.c.l.b16 %v150
  %v727 = vunpack.c.l.b16 %v151
  %v728 = vunpack.c.l.b16 %v152
  %v729 = vunpack.c.l.b16 %v153
  %v730 = vunpack.c.l.b16 %v154
  %v731 = vunpack.c.l.b16 %v155
  %v732 = vunpack.c.l.b16 %v156
  %v733 = vunpack.c.l.b16 %v157
  %v734 = vunpack.c.l.b16 %v158
  %v735 = vunpack.c.l.b16 %v159
  %v736 = vunpack.c.l.b16 %v160
  %v737 = vunpack.c.l.b16 %v161
  %v738 = vunpack.c.l.b16 %v162
  %v739 = vunpack.c.l.b16 %v163
  %v740 = vunpack.c.l.b16 %v164
  %v741 = vunpack.c.l.b16 %v165
  %v742 = vunpack.c.l.b16 %v166
  %v743 = vunpack.c.l.b16 %v167
  %v744 = vunpack.c.l.b16 %v168
  %v745 = vunpack.c.l.b16 %v169
  %v746 = vunpack.c.l.b16 %v170
  %v747 = vunpack.c.l.b16 %v171
  %v748 = vunpack.c.l.b16 %v172
  %v749 = vunpack.c.l.b16 %v173
  %v750 = vunpack.c.l.b16 %v174
  %v751 = vunpack.c.l.b16 %v175
  %v752 = vunpack.c.l.b16 %v176
  %v753 = vunpack.c.l.b16 %v177
  %v754 = vunpack.c.l.b16 %v178
  %v755 = vunpack.c.l.b16 %v179
  %v756 = vunpack.c.l.b16 %v180
  %v757 = vunpack.c.l.b16 %v181
  %v758 = vunpack.c.l.b16 %v182
  %v759 = vunpack.c.l.b16 %v183
  %v760 = vunpack.c.l.b16 %v184
  %v761 = vunpack.c.l.b16 %v185
  %v762 = vunpack.c.l.b16 %v186
  %v763 = vunpack.c.l.b16 %v187
  %v764 = vunpack.c.l.b16 %v188
  %v765 = vunpack.c.l.b16 %v189
  %v766 = vunpack.c.l.b16 %v190
  %v767 = vpack.c.b16 %v688, %v687
  %v768 = vpack.c.b16 %v690, %v689
  %v769 = vpack.c.b16 %v692, %v691
  %v770 = vpack.c.b16 %v694, %v693
  %v771 = vpack.c.b16 %v696, %v695
  %v772 = vpack.c.b16 %v698, %v697
  %v773 = vpack.c.b16 %v700, %v699
  %v774 = vpack.c.b16 %v702, %v701
  %v775 = vpack.c.b16 %v704, %v703
  %v776 = vpack.c.b16 %v706, %v705
  %v777 = vpack.c.b16 %v708, %v707
  %v778 = vpack.c.b16 %v710, %v709
  %v779 = vpack.c.b16 %v712, %v711
  %v780 = vpack.c.b16 %v714, %v713
  %v781 = vpack.c.b16 %v716, %v715
  %v782 = vpack.c.b16 %v718, %v717
  %v783 = vpack.c.b16 %v720, %v719
  %v784 = vpack.c.b16 %v722, %v721
  %v785 = vpack.c.b16 %v724, %v723
  %v786 = vpack.c.b16 %v726, %v725
  %v787 = vpack.c.b16 %v728, %v727
  %v788 = vpack.c.b16 %v730, %v729
  %v789 = vpack.c.b16 %v732, %v731
  %v790 = vpack.c.b16 %v734, %v733
  %v791 = vpack.c.b16 %v736, %v735
  %v792 = vpack.c.b16 %v738, %v737
  %v793 = vpack.c.b16 %v740, %v739
  %v794 = vpack.c.b16 %v742, %v741
  %v795 = vpack.c.b16 %v744, %v743
  %v796 = vpack.c.b16 %v746, %v745
  %v797 = vpack.c.b16 %v748, %v747
  %v798 = vpack.c.b16 %v750, %v749
  %v799 = vpack.c.b16 %v752, %v751
  %v800 = vpack.c.b16 %v754, %v753
  %v801 = vpack.c.b16 %v756, %v755
  %v802 = vpack.c.b16 %v758, %v757
  %v803 = vpack.c.b16 %v760, %v759
  %v804 = vpack.c.b16 %v762, %v761
  %v805 = vpack.c.b16 %v764, %v763
  %v806 = vpack.c.b16 %v766, %v765
  %847 = vmatprep.subr.bf16.mxu0 0
  %848 = vmatpush1.bf16.msra.mxu0 %v774
  %849 = vmatprep.subr.bf16.mxu0 0
  %850 = vmatpush1.bf16.msra.mxu0 %v773
  %851 = vmatprep.subr.bf16.mxu0 0
  %852 = vmatpush1.bf16.msra.mxu0 %v772
  %853 = vmatprep.subr.bf16.mxu0 0
  %854 = vmatpush1.bf16.msra.mxu0 %v771
  %855 = vmatprep.subr.bf16.mxu0 0
  %856 = vmatpush1.bf16.msra.mxu0 %v770
  %857 = vmatprep.subr.bf16.mxu0 0
  %858 = vmatpush1.bf16.msra.mxu0 %v769
  %859 = vmatprep.subr.bf16.mxu0 0
  %860 = vmatpush1.bf16.msra.mxu0 %v768
  %861 = vmatprep.subr.bf16.mxu0 0
  %862 = vmatpush1.bf16.msra.mxu0 %v767
  %863 = vmatprep.subr.bf16.mxu0 0
  %864 = vmatpush2.bf16.msra.mxu0 %v782
  %865 = vmatprep.subr.bf16.mxu0 0
  %866 = vmatpush2.bf16.msra.mxu0 %v781
  %867 = vmatprep.subr.bf16.mxu0 0
  %868 = vmatpush2.bf16.msra.mxu0 %v780
  %869 = vmatprep.subr.bf16.mxu0 0
  %870 = vmatpush2.bf16.msra.mxu0 %v779
  %871 = vmatprep.subr.bf16.mxu0 0
  %872 = vmatpush2.bf16.msra.mxu0 %v778
  %873 = vmatprep.subr.bf16.mxu0 0
  %874 = vmatpush2.bf16.msra.mxu0 %v777
  %875 = vmatprep.subr.bf16.mxu0 0
  %876 = vmatpush2.bf16.msra.mxu0 %v776
  %877 = vmatprep.subr.bf16.mxu0 0
  %878 = vmatpush2.bf16.msra.mxu0 %v775
  %879 = vmatprep.mubr.bf16.mxu0 %v448
  %880 = vmatmul.mubr.bf16.gmra.mxu0 %v447
  %v881 = vpop.f32.mrf.mxu0
  %v882 = vadd.f32 0.0, %v881
  %v883 = vpop.f32.mrf.mxu0
  %v884 = vpop.f32.mrf.mxu0
  %v885 = vadd.f32 0.0, %v884
  %v886 = vpop.f32.mrf.mxu0
  %887 = vmatprep.mubr.bf16.mxu0 %v453
  %888 = vmatmul.mubr.bf16.gmra.mxu0 %v452
  %v889 = vpop.f32.mrf.mxu0
  %v890 = vadd.f32 0.0, %v889
  %v891 = vpop.f32.mrf.mxu0
  %v892 = vpop.f32.mrf.mxu0
  %v893 = vadd.f32 0.0, %v892
  %v894 = vpop.f32.mrf.mxu0
  %895 = vmatprep.mubr.bf16.mxu0 %v458
  %896 = vmatmul.mubr.bf16.gmra.mxu0 %v457
  %v897 = vpop.f32.mrf.mxu0
  %v898 = vadd.f32 0.0, %v897
  %v899 = vpop.f32.mrf.mxu0
  %v900 = vpop.f32.mrf.mxu0
  %v901 = vadd.f32 0.0, %v900
  %v902 = vpop.f32.mrf.mxu0
  %903 = vmatprep.mubr.bf16.mxu0 %v463
  %904 = vmatmul.mubr.bf16.gmra.mxu0 %v462
  %v905 = vpop.f32.mrf.mxu0
  %v906 = vadd.f32 0.0, %v905
  %v907 = vpop.f32.mrf.mxu0
  %v908 = vpop.f32.mrf.mxu0
  %v909 = vadd.f32 0.0, %v908
  %v910 = vpop.f32.mrf.mxu0
  %911 = vmatprep.mubr.bf16.mxu0 %v468
  %912 = vmatmul.mubr.bf16.gmra.mxu0 %v467
  %v913 = vpop.f32.mrf.mxu0
  %v914 = vadd.f32 0.0, %v913
  %v915 = vpop.f32.mrf.mxu0
  %v916 = vpop.f32.mrf.mxu0
  %v917 = vadd.f32 0.0, %v916
  %v918 = vpop.f32.mrf.mxu0
  %919 = vmatprep.mubr.bf16.mxu0 %v473
  %920 = vmatmul.mubr.bf16.gmra.mxu0 %v472
  %v921 = vpop.f32.mrf.mxu0
  %v922 = vadd.f32 0.0, %v921
  %v923 = vpop.f32.mrf.mxu0
  %v924 = vpop.f32.mrf.mxu0
  %v925 = vadd.f32 0.0, %v924
  %v926 = vpop.f32.mrf.mxu0
  %927 = vmatprep.mubr.bf16.mxu0 %v478
  %928 = vmatmul.mubr.bf16.gmra.mxu0 %v477
  %v929 = vpop.f32.mrf.mxu0
  %v930 = vadd.f32 0.0, %v929
  %v931 = vpop.f32.mrf.mxu0
  %v932 = vpop.f32.mrf.mxu0
  %v933 = vadd.f32 0.0, %v932
  %v934 = vpop.f32.mrf.mxu0
  %935 = vmatprep.mubr.bf16.mxu0 %v483
  %936 = vmatmul.mubr.bf16.gmra.mxu0 %v482
  %v937 = vpop.f32.mrf.mxu0
  %v938 = vadd.f32 0.0, %v937
  %v939 = vpop.f32.mrf.mxu0
  %v940 = vpop.f32.mrf.mxu0
  %v941 = vadd.f32 0.0, %v940
  %v942 = vpop.f32.mrf.mxu0
  %943 = vmatprep.mubr.bf16.mxu0 %v488
  %944 = vmatmul.mubr.bf16.gmra.mxu0 %v487
  %v945 = vpop.f32.mrf.mxu0
  %v946 = vadd.f32 0.0, %v945
  %v947 = vpop.f32.mrf.mxu0
  %v948 = vpop.f32.mrf.mxu0
  %v949 = vadd.f32 0.0, %v948
  %v950 = vpop.f32.mrf.mxu0
  %951 = vmatprep.mubr.bf16.mxu0 %v493
  %952 = vmatmul.mubr.bf16.gmra.mxu0 %v492
  %v953 = vpop.f32.mrf.mxu0
  %v954 = vadd.f32 0.0, %v953
  %v955 = vpop.f32.mrf.mxu0
  %v956 = vpop.f32.mrf.mxu0
  %v957 = vadd.f32 0.0, %v956
  %v958 = vpop.f32.mrf.mxu0
  %959 = vmatprep.mubr.bf16.mxu0 %v498
  %960 = vmatmul.mubr.bf16.gmra.mxu0 %v497
  %v961 = vpop.f32.mrf.mxu0
  %v962 = vadd.f32 0.0, %v961
  %v963 = vpop.f32.mrf.mxu0
  %v964 = vpop.f32.mrf.mxu0
  %v965 = vadd.f32 0.0, %v964
  %v966 = vpop.f32.mrf.mxu0
  %967 = vmatprep.mubr.bf16.mxu0 %v503
  %968 = vmatmul.mubr.bf16.gmra.mxu0 %v502
  %v969 = vpop.f32.mrf.mxu0
  %v970 = vadd.f32 0.0, %v969
  %v971 = vpop.f32.mrf.mxu0
  %v972 = vpop.f32.mrf.mxu0
  %v973 = vadd.f32 0.0, %v972
  %v974 = vpop.f32.mrf.mxu0
  %975 = vmatprep.mubr.bf16.mxu0 %v508
  %976 = vmatmul.mubr.bf16.gmra.mxu0 %v507
  %v977 = vpop.f32.mrf.mxu0
  %v978 = vadd.f32 0.0, %v977
  %v979 = vpop.f32.mrf.mxu0
  %v980 = vpop.f32.mrf.mxu0
  %v981 = vadd.f32 0.0, %v980
  %v982 = vpop.f32.mrf.mxu0
  %983 = vmatprep.mubr.bf16.mxu0 %v513
  %984 = vmatmul.mubr.bf16.gmra.mxu0 %v512
  %v985 = vpop.f32.mrf.mxu0
  %v986 = vadd.f32 0.0, %v985
  %v987 = vpop.f32.mrf.mxu0
  %v988 = vpop.f32.mrf.mxu0
  %v989 = vadd.f32 0.0, %v988
  %v990 = vpop.f32.mrf.mxu0
  %991 = vmatprep.mubr.bf16.mxu0 %v518
  %992 = vmatmul.mubr.bf16.gmra.mxu0 %v517
  %v993 = vpop.f32.mrf.mxu0
  %v994 = vadd.f32 0.0, %v993
  %v995 = vpop.f32.mrf.mxu0
  %v996 = vpop.f32.mrf.mxu0
  %v997 = vadd.f32 0.0, %v996
  %v998 = vpop.f32.mrf.mxu0
  %999 = vmatprep.mubr.bf16.mxu0 %v523
  %1000 = vmatmul.mubr.bf16.gmra.mxu0 %v522
  %v1001 = vpop.f32.mrf.mxu0
  %v1002 = vadd.f32 0.0, %v1001
  %v1003 = vpop.f32.mrf.mxu0
  %v1004 = vpop.f32.mrf.mxu0
  %v1005 = vadd.f32 0.0, %v1004
  %v1006 = vpop.f32.mrf.mxu0
  %1007 = vdwg.mxu0
  %1008 = vmatprep.subr.bf16.mxu0 0
  %1009 = vmatpush1.bf16.msra.mxu0 %v790
  %1010 = vmatprep.subr.bf16.mxu0 0
  %1011 = vmatpush1.bf16.msra.mxu0 %v789
  %1012 = vmatprep.subr.bf16.mxu0 0
  %1013 = vmatpush1.bf16.msra.mxu0 %v788
  %1014 = vmatprep.subr.bf16.mxu0 0
  %1015 = vmatpush1.bf16.msra.mxu0 %v787
  %1016 = vmatprep.subr.bf16.mxu0 0
  %1017 = vmatpush1.bf16.msra.mxu0 %v786
  %1018 = vmatprep.subr.bf16.mxu0 0
  %1019 = vmatpush1.bf16.msra.mxu0 %v785
  %1020 = vmatprep.subr.bf16.mxu0 0
  %1021 = vmatpush1.bf16.msra.mxu0 %v784
  %1022 = vmatprep.subr.bf16.mxu0 0
  %1023 = vmatpush1.bf16.msra.mxu0 %v783
  %1024 = vmatprep.subr.bf16.mxu0 0
  %1025 = vmatpush2.bf16.msra.mxu0 %v798
  %1026 = vmatprep.subr.bf16.mxu0 0
  %1027 = vmatpush2.bf16.msra.mxu0 %v797
  %1028 = vmatprep.subr.bf16.mxu0 0
  %1029 = vmatpush2.bf16.msra.mxu0 %v796
  %1030 = vmatprep.subr.bf16.mxu0 0
  %1031 = vmatpush2.bf16.msra.mxu0 %v795
  %1032 = vmatprep.subr.bf16.mxu0 0
  %1033 = vmatpush2.bf16.msra.mxu0 %v794
  %1034 = vmatprep.subr.bf16.mxu0 0
  %1035 = vmatpush2.bf16.msra.mxu0 %v793
  %1036 = vmatprep.subr.bf16.mxu0 0
  %1037 = vmatpush2.bf16.msra.mxu0 %v792
  %1038 = vmatprep.subr.bf16.mxu0 0
  %1039 = vmatpush2.bf16.msra.mxu0 %v791
  %1040 = vmatprep.mubr.bf16.mxu0 %v450
  %1041 = vmatmul.mubr.bf16.gmra.mxu0 %v449
  %v1042 = vpop.f32.mrf.mxu0
  %v1043 = vadd.f32 %v882, %v1042
  %v1044 = vpop.f32.mrf.mxu0
  %v1045 = vpop.f32.mrf.mxu0
  %v1046 = vadd.f32 %v885, %v1045
  %v1047 = vpop.f32.mrf.mxu0
  %1048 = vmatprep.mubr.bf16.mxu0 %v455
  %1049 = vmatmul.mubr.bf16.gmra.mxu0 %v454
  %v1050 = vpop.f32.mrf.mxu0
  %v1051 = vadd.f32 %v890, %v1050
  %v1052 = vpop.f32.mrf.mxu0
  %v1053 = vpop.f32.mrf.mxu0
  %v1054 = vadd.f32 %v893, %v1053
  %v1055 = vpop.f32.mrf.mxu0
  %1056 = vmatprep.mubr.bf16.mxu0 %v460
  %1057 = vmatmul.mubr.bf16.gmra.mxu0 %v459
  %v1058 = vpop.f32.mrf.mxu0
  %v1059 = vadd.f32 %v898, %v1058
  %v1060 = vpop.f32.mrf.mxu0
  %v1061 = vpop.f32.mrf.mxu0
  %v1062 = vadd.f32 %v901, %v1061
  %v1063 = vpop.f32.mrf.mxu0
  %1064 = vmatprep.mubr.bf16.mxu0 %v465
  %1065 = vmatmul.mubr.bf16.gmra.mxu0 %v464
  %v1066 = vpop.f32.mrf.mxu0
  %v1067 = vadd.f32 %v906, %v1066
  %v1068 = vpop.f32.mrf.mxu0
  %v1069 = vpop.f32.mrf.mxu0
  %v1070 = vadd.f32 %v909, %v1069
  %v1071 = vpop.f32.mrf.mxu0
  %1072 = vmatprep.mubr.bf16.mxu0 %v470
  %1073 = vmatmul.mubr.bf16.gmra.mxu0 %v469
  %v1074 = vpop.f32.mrf.mxu0
  %v1075 = vadd.f32 %v914, %v1074
  %v1076 = vpop.f32.mrf.mxu0
  %v1077 = vpop.f32.mrf.mxu0
  %v1078 = vadd.f32 %v917, %v1077
  %v1079 = vpop.f32.mrf.mxu0
  %1080 = vmatprep.mubr.bf16.mxu0 %v475
  %1081 = vmatmul.mubr.bf16.gmra.mxu0 %v474
  %v1082 = vpop.f32.mrf.mxu0
  %v1083 = vadd.f32 %v922, %v1082
  %v1084 = vpop.f32.mrf.mxu0
  %v1085 = vpop.f32.mrf.mxu0
  %v1086 = vadd.f32 %v925, %v1085
  %v1087 = vpop.f32.mrf.mxu0
  %1088 = vmatprep.mubr.bf16.mxu0 %v480
  %1089 = vmatmul.mubr.bf16.gmra.mxu0 %v479
  %v1090 = vpop.f32.mrf.mxu0
  %v1091 = vadd.f32 %v930, %v1090
  %v1092 = vpop.f32.mrf.mxu0
  %v1093 = vpop.f32.mrf.mxu0
  %v1094 = vadd.f32 %v933, %v1093
  %v1095 = vpop.f32.mrf.mxu0
  %1096 = vmatprep.mubr.bf16.mxu0 %v485
  %1097 = vmatmul.mubr.bf16.gmra.mxu0 %v484
  %v1098 = vpop.f32.mrf.mxu0
  %v1099 = vadd.f32 %v938, %v1098
  %v1100 = vpop.f32.mrf.mxu0
  %v1101 = vpop.f32.mrf.mxu0
  %v1102 = vadd.f32 %v941, %v1101
  %v1103 = vpop.f32.mrf.mxu0
  %1104 = vmatprep.mubr.bf16.mxu0 %v490
  %1105 = vmatmul.mubr.bf16.gmra.mxu0 %v489
  %v1106 = vpop.f32.mrf.mxu0
  %v1107 = vadd.f32 %v946, %v1106
  %v1108 = vpop.f32.mrf.mxu0
  %v1109 = vpop.f32.mrf.mxu0
  %v1110 = vadd.f32 %v949, %v1109
  %v1111 = vpop.f32.mrf.mxu0
  %1112 = vmatprep.mubr.bf16.mxu0 %v495
  %1113 = vmatmul.mubr.bf16.gmra.mxu0 %v494
  %v1114 = vpop.f32.mrf.mxu0
  %v1115 = vadd.f32 %v954, %v1114
  %v1116 = vpop.f32.mrf.mxu0
  %v1117 = vpop.f32.mrf.mxu0
  %v1118 = vadd.f32 %v957, %v1117
  %v1119 = vpop.f32.mrf.mxu0
  %1120 = vmatprep.mubr.bf16.mxu0 %v500
  %1121 = vmatmul.mubr.bf16.gmra.mxu0 %v499
  %v1122 = vpop.f32.mrf.mxu0
  %v1123 = vadd.f32 %v962, %v1122
  %v1124 = vpop.f32.mrf.mxu0
  %v1125 = vpop.f32.mrf.mxu0
  %v1126 = vadd.f32 %v965, %v1125
  %v1127 = vpop.f32.mrf.mxu0
  %1128 = vmatprep.mubr.bf16.mxu0 %v505
  %1129 = vmatmul.mubr.bf16.gmra.mxu0 %v504
  %v1130 = vpop.f32.mrf.mxu0
  %v1131 = vadd.f32 %v970, %v1130
  %v1132 = vpop.f32.mrf.mxu0
  %v1133 = vpop.f32.mrf.mxu0
  %v1134 = vadd.f32 %v973, %v1133
  %v1135 = vpop.f32.mrf.mxu0
  %1136 = vmatprep.mubr.bf16.mxu0 %v510
  %1137 = vmatmul.mubr.bf16.gmra.mxu0 %v509
  %v1138 = vpop.f32.mrf.mxu0
  %v1139 = vadd.f32 %v978, %v1138
  %v1140 = vpop.f32.mrf.mxu0
  %v1141 = vpop.f32.mrf.mxu0
  %v1142 = vadd.f32 %v981, %v1141
  %v1143 = vpop.f32.mrf.mxu0
  %1144 = vmatprep.mubr.bf16.mxu0 %v515
  %1145 = vmatmul.mubr.bf16.gmra.mxu0 %v514
  %v1146 = vpop.f32.mrf.mxu0
  %v1147 = vadd.f32 %v986, %v1146
  %v1148 = vpop.f32.mrf.mxu0
  %v1149 = vpop.f32.mrf.mxu0
  %v1150 = vadd.f32 %v989, %v1149
  %v1151 = vpop.f32.mrf.mxu0
  %1152 = vmatprep.mubr.bf16.mxu0 %v520
  %1153 = vmatmul.mubr.bf16.gmra.mxu0 %v519
  %v1154 = vpop.f32.mrf.mxu0
  %v1155 = vadd.f32 %v994, %v1154
  %v1156 = vpop.f32.mrf.mxu0
  %v1157 = vpop.f32.mrf.mxu0
  %v1158 = vadd.f32 %v997, %v1157
  %v1159 = vpop.f32.mrf.mxu0
  %1160 = vmatprep.mubr.bf16.mxu0 %v525
  %1161 = vmatmul.mubr.bf16.gmra.mxu0 %v524
  %v1162 = vpop.f32.mrf.mxu0
  %v1163 = vadd.f32 %v1002, %v1162
  %v1164 = vpop.f32.mrf.mxu0
  %v1165 = vpop.f32.mrf.mxu0
  %v1166 = vadd.f32 %v1005, %v1165
  %v1167 = vpop.f32.mrf.mxu0
  %1168 = vdwg.mxu0
  %1169 = vmatprep.subr.bf16.mxu0 0
  %1170 = vmatpush1.bf16.msra.mxu0 %v806
  %1171 = vmatprep.subr.bf16.mxu0 0
  %1172 = vmatpush1.bf16.msra.mxu0 %v805
  %1173 = vmatprep.subr.bf16.mxu0 0
  %1174 = vmatpush1.bf16.msra.mxu0 %v804
  %1175 = vmatprep.subr.bf16.mxu0 0
  %1176 = vmatpush1.bf16.msra.mxu0 %v803
  %1177 = vmatprep.subr.bf16.mxu0 0
  %1178 = vmatpush1.bf16.msra.mxu0 %v802
  %1179 = vmatprep.subr.bf16.mxu0 0
  %1180 = vmatpush1.bf16.msra.mxu0 %v801
  %1181 = vmatprep.subr.bf16.mxu0 0
  %1182 = vmatpush1.bf16.msra.mxu0 %v800
  %1183 = vmatprep.subr.bf16.mxu0 0
  %1184 = vmatpush1.bf16.msra.mxu0 %v799
  %1185 = vmatprep.subr.bf16.mxu0 0
  %1186 = vmatpush2.bf16.msra.mxu0 0
  %1187 = vmatprep.subr.bf16.mxu0 0
  %1188 = vmatpush2.bf16.msra.mxu0 0
  %1189 = vmatprep.subr.bf16.mxu0 0
  %1190 = vmatpush2.bf16.msra.mxu0 0
  %1191 = vmatprep.subr.bf16.mxu0 0
  %1192 = vmatpush2.bf16.msra.mxu0 0
  %1193 = vmatprep.subr.bf16.mxu0 0
  %1194 = vmatpush2.bf16.msra.mxu0 0
  %1195 = vmatprep.subr.bf16.mxu0 0
  %1196 = vmatpush2.bf16.msra.mxu0 0
  %1197 = vmatprep.subr.bf16.mxu0 0
  %1198 = vmatpush2.bf16.msra.mxu0 0
  %1199 = vmatprep.subr.bf16.mxu0 0
  %1200 = vmatpush2.bf16.msra.mxu0 0
  %1201 = vmatprep.mubr.bf16.mxu0 0
  %1202 = vmatmul.mubr.bf16.gmra.mxu0 %v451
  %v1203 = vpop.f32.mrf.mxu0
  %v1204 = vadd.f32 %v1043, %v1203
  %v1205 = vpop.f32.mrf.mxu0
  %v1206 = vpop.f32.mrf.mxu0
  %v1207 = vadd.f32 %v1046, %v1206
  %v1208 = vpop.f32.mrf.mxu0
  %1209 = vmatprep.mubr.bf16.mxu0 0
  %1210 = vmatmul.mubr.bf16.gmra.mxu0 %v456
  %v1211 = vpop.f32.mrf.mxu0
  %v1212 = vadd.f32 %v1051, %v1211
  %v1213 = vpop.f32.mrf.mxu0
  %v1214 = vpop.f32.mrf.mxu0
  %v1215 = vadd.f32 %v1054, %v1214
  %v1216 = vpop.f32.mrf.mxu0
  %1217 = vmatprep.mubr.bf16.mxu0 0
  %1218 = vmatmul.mubr.bf16.gmra.mxu0 %v461
  %v1219 = vpop.f32.mrf.mxu0
  %v1220 = vadd.f32 %v1059, %v1219
  %v1221 = vpop.f32.mrf.mxu0
  %v1222 = vpop.f32.mrf.mxu0
  %v1223 = vadd.f32 %v1062, %v1222
  %v1224 = vpop.f32.mrf.mxu0
  %1225 = vmatprep.mubr.bf16.mxu0 0
  %1226 = vmatmul.mubr.bf16.gmra.mxu0 %v466
  %v1227 = vpop.f32.mrf.mxu0
  %v1228 = vadd.f32 %v1067, %v1227
  %v1229 = vpop.f32.mrf.mxu0
  %v1230 = vpop.f32.mrf.mxu0
  %v1231 = vadd.f32 %v1070, %v1230
  %v1232 = vpop.f32.mrf.mxu0
  %1233 = vmatprep.mubr.bf16.mxu0 0
  %1234 = vmatmul.mubr.bf16.gmra.mxu0 %v471
  %v1235 = vpop.f32.mrf.mxu0
  %v1236 = vadd.f32 %v1075, %v1235
  %v1237 = vpop.f32.mrf.mxu0
  %v1238 = vpop.f32.mrf.mxu0
  %v1239 = vadd.f32 %v1078, %v1238
  %v1240 = vpop.f32.mrf.mxu0
  %1241 = vmatprep.mubr.bf16.mxu0 0
  %1242 = vmatmul.mubr.bf16.gmra.mxu0 %v476
  %v1243 = vpop.f32.mrf.mxu0
  %v1244 = vadd.f32 %v1083, %v1243
  %v1245 = vpop.f32.mrf.mxu0
  %v1246 = vpop.f32.mrf.mxu0
  %v1247 = vadd.f32 %v1086, %v1246
  %v1248 = vpop.f32.mrf.mxu0
  %1249 = vmatprep.mubr.bf16.mxu0 0
  %1250 = vmatmul.mubr.bf16.gmra.mxu0 %v481
  %v1251 = vpop.f32.mrf.mxu0
  %v1252 = vadd.f32 %v1091, %v1251
  %v1253 = vpop.f32.mrf.mxu0
  %v1254 = vpop.f32.mrf.mxu0
  %v1255 = vadd.f32 %v1094, %v1254
  %v1256 = vpop.f32.mrf.mxu0
  %1257 = vmatprep.mubr.bf16.mxu0 0
  %1258 = vmatmul.mubr.bf16.gmra.mxu0 %v486
  %v1259 = vpop.f32.mrf.mxu0
  %v1260 = vadd.f32 %v1099, %v1259
  %v1261 = vpop.f32.mrf.mxu0
  %v1262 = vpop.f32.mrf.mxu0
  %v1263 = vadd.f32 %v1102, %v1262
  %v1264 = vpop.f32.mrf.mxu0
  %1265 = vmatprep.mubr.bf16.mxu0 0
  %1266 = vmatmul.mubr.bf16.gmra.mxu0 %v491
  %v1267 = vpop.f32.mrf.mxu0
  %v1268 = vadd.f32 %v1107, %v1267
  %v1269 = vpop.f32.mrf.mxu0
  %v1270 = vpop.f32.mrf.mxu0
  %v1271 = vadd.f32 %v1110, %v1270
  %v1272 = vpop.f32.mrf.mxu0
  %1273 = vmatprep.mubr.bf16.mxu0 0
  %1274 = vmatmul.mubr.bf16.gmra.mxu0 %v496
  %v1275 = vpop.f32.mrf.mxu0
  %v1276 = vadd.f32 %v1115, %v1275
  %v1277 = vpop.f32.mrf.mxu0
  %v1278 = vpop.f32.mrf.mxu0
  %v1279 = vadd.f32 %v1118, %v1278
  %v1280 = vpop.f32.mrf.mxu0
  %1281 = vmatprep.mubr.bf16.mxu0 0
  %1282 = vmatmul.mubr.bf16.gmra.mxu0 %v501
  %v1283 = vpop.f32.mrf.mxu0
  %v1284 = vadd.f32 %v1123, %v1283
  %v1285 = vpop.f32.mrf.mxu0
  %v1286 = vpop.f32.mrf.mxu0
  %v1287 = vadd.f32 %v1126, %v1286
  %v1288 = vpop.f32.mrf.mxu0
  %1289 = vmatprep.mubr.bf16.mxu0 0
  %1290 = vmatmul.mubr.bf16.gmra.mxu0 %v506
  %v1291 = vpop.f32.mrf.mxu0
  %v1292 = vadd.f32 %v1131, %v1291
  %v1293 = vpop.f32.mrf.mxu0
  %v1294 = vpop.f32.mrf.mxu0
  %v1295 = vadd.f32 %v1134, %v1294
  %v1296 = vpop.f32.mrf.mxu0
  %1297 = vmatprep.mubr.bf16.mxu0 0
  %1298 = vmatmul.mubr.bf16.gmra.mxu0 %v511
  %v1299 = vpop.f32.mrf.mxu0
  %v1300 = vadd.f32 %v1139, %v1299
  %v1301 = vpop.f32.mrf.mxu0
  %v1302 = vpop.f32.mrf.mxu0
  %v1303 = vadd.f32 %v1142, %v1302
  %v1304 = vpop.f32.mrf.mxu0
  %1305 = vmatprep.mubr.bf16.mxu0 0
  %1306 = vmatmul.mubr.bf16.gmra.mxu0 %v516
  %v1307 = vpop.f32.mrf.mxu0
  %v1308 = vadd.f32 %v1147, %v1307
  %v1309 = vpop.f32.mrf.mxu0
  %v1310 = vpop.f32.mrf.mxu0
  %v1311 = vadd.f32 %v1150, %v1310
  %v1312 = vpop.f32.mrf.mxu0
  %1313 = vmatprep.mubr.bf16.mxu0 0
  %1314 = vmatmul.mubr.bf16.gmra.mxu0 %v521
  %v1315 = vpop.f32.mrf.mxu0
  %v1316 = vadd.f32 %v1155, %v1315
  %v1317 = vpop.f32.mrf.mxu0
  %v1318 = vpop.f32.mrf.mxu0
  %v1319 = vadd.f32 %v1158, %v1318
  %v1320 = vpop.f32.mrf.mxu0
  %1321 = vmatprep.mubr.bf16.mxu0 0
  %1322 = vmatmul.mubr.bf16.gmra.mxu0 %v526
  %v1323 = vpop.f32.mrf.mxu0
  %v1324 = vadd.f32 %v1163, %v1323
  %v1325 = vpop.f32.mrf.mxu0
  %v1326 = vpop.f32.mrf.mxu0
  %v1327 = vadd.f32 %v1166, %v1326
  %v1328 = vpop.f32.mrf.mxu0
  %1329 = vdwg.mxu0
  %v1330 = vmax.f32 %v1204, %v1236
  %v1331 = vmax.f32 %v1207, %v1239
  %v1332 = vmax.f32 %v1212, %v1244
  %v1333 = vmax.f32 %v1215, %v1247
  %v1334 = vmax.f32 %v1220, %v1252
  %v1335 = vmax.f32 %v1223, %v1255
  %v1336 = vmax.f32 %v1228, %v1260
  %v1337 = vmax.f32 %v1231, %v1263
  %v1338 = vmax.f32 %v1268, %v1300
  %v1339 = vmax.f32 %v1271, %v1303
  %v1340 = vmax.f32 %v1276, %v1308
  %v1341 = vmax.f32 %v1279, %v1311
  %v1342 = vmax.f32 %v1284, %v1316
  %v1343 = vmax.f32 %v1287, %v1319
  %v1344 = vmax.f32 %v1292, %v1324
  %v1345 = vmax.f32 %v1295, %v1327
  %v1346 = vmax.f32 %v1330, %v1338
  %v1347 = vmax.f32 %v1331, %v1339
  %v1348 = vmax.f32 %v1332, %v1340
  %v1349 = vmax.f32 %v1333, %v1341
  %v1350 = vmax.f32 %v1334, %v1342
  %v1351 = vmax.f32 %v1335, %v1343
  %v1352 = vmax.f32 %v1336, %v1344
  %v1353 = vmax.f32 %v1337, %v1345
  %v1354 = vld [vmem:[%s2] sm:$0x1]
  %v1356 = vlaneseq
  %v1357 = vshrl.u32 %v1356, 7
  %v1358 = vsub.s32 0, %v1357
  %v1359 = vrot.slane %v1354, %v1358
  %v1361 = vadd.f32 %v1346, %v1359
  %v1362 = vadd.f32 %v1347, %v1359
  %v1363 = vadd.f32 %v1348, %v1359
  %v1364 = vadd.f32 %v1349, %v1359
  %v1365 = vadd.f32 %v1350, %v1359
  %v1366 = vadd.f32 %v1351, %v1359
  %v1367 = vadd.f32 %v1352, %v1359
  %v1368 = vadd.f32 %v1353, %v1359
  %v1369 = vmax.f32 %v1361, 0.0
  %v1370 = vmax.f32 %v1362, 0.0
  %v1371 = vmax.f32 %v1363, 0.0
  %v1372 = vmax.f32 %v1364, 0.0
  %v1373 = vmax.f32 %v1365, 0.0
  %v1374 = vmax.f32 %v1366, 0.0
  %v1375 = vmax.f32 %v1367, 0.0
  %v1376 = vmax.f32 %v1368, 0.0
  %v1377 = vpack.c.bf16 %v1370, %v1369
  %v1378 = vpack.c.bf16 %v1372, %v1371
  %v1379 = vpack.c.bf16 %v1374, %v1373
  %v1380 = vpack.c.bf16 %v1376, %v1375
  %v1385 = vunpack.c.l.b16 %v1377
  %v1386 = vunpack.c.h.b16 %v1377
  %v1387 = vunpack.c.l.b16 %v1378
  %v1388 = vunpack.c.h.b16 %v1378
  %v1389 = vunpack.c.l.b16 %v1379
  %v1390 = vunpack.c.h.b16 %v1379
  %v1391 = vunpack.c.l.b16 %v1380
  %v1392 = vunpack.c.h.b16 %v1380
  %v1393 = vpack.c.b16 %v1385, %v1385
  %v1394 = vpack.c.b16 %v1386, %v1386
  %v1395 = vpack.c.b16 %v1387, %v1387
  %v1396 = vpack.c.b16 %v1388, %v1388
  %v1397 = vpack.c.b16 %v1389, %v1389
  %v1398 = vpack.c.b16 %v1390, %v1390
  %v1399 = vpack.c.b16 %v1391, %v1391
  %v1400 = vpack.c.b16 %v1392, %v1392
  %1409 = vst [vmem:[%s3] sm:$0xf] %v1393
  %1410 = vst [vmem:[%s3 + $0x4] sm:$0xf] %v1394
  %1411 = vst [vmem:[%s3 + $0x8] sm:$0xf] %v1395
  %1412 = vst [vmem:[%s3 + $0xc] sm:$0xf] %v1396
  %1413 = vst [vmem:[%s3 + $0x10] sm:$0xf] %v1397
  %1414 = vst [vmem:[%s3 + $0x14] sm:$0xf] %v1398
  %1415 = vst [vmem:[%s3 + $0x18] sm:$0xf] %v1399
  %1416 = vst [vmem:[%s3 + $0x1c] sm:$0xf] %v1400
  // Predicated region
  $region14: #{forward.6} parent=0 // pred_check
    _
  $region15: #{forward.6} parent=0 // pred_check_branch
    %1418 = sbr.rel (0) target = $region17
  $region16: #{forward.6} parent=0 // pred_region
    _
  $region17: #{forward.6} parent=0 // pred_fallthru
    _
  // Predicated region
  $region18: #{forward.6} parent=0 // pred_check
    _
  $region19: #{forward.6} parent=0 // pred_check_branch
    %1420 = sbr.rel (0) target = $region21
  $region20: #{forward.6} parent=0 // pred_region
    _
  $region21: #{forward.6} parent=0 // pred_fallthru
    _

// kernel: forward.7
$region0: #{forward.7}
  #allocation0 [shape = 'u32[]', space=smem, size = 0x4, offset = 0x4, fixed_abs, tag = 'smem constant byte address 0x4 - core index']
  #allocation1 [shape = 'u32[144,128]{1,0:T(1,128)}', space=vmem, size = 0x12000, scoped, tag = 'internal scratch']
  %s0 = inlined_call_operand.vmem [shape: bf16[2,256], index: 0, kind: input, shape index: {}]
  %s1 = inlined_call_operand.vmem [shape: bf16[256,128], index: 1, kind: input, shape index: {}]
  %s2 = inlined_call_operand.vmem [shape: f32[1,128], index: 2, kind: input, shape index: {}]
  %s3 = inlined_call_operand.vmem [shape: bf16[128,128], index: 3, kind: input, shape index: {}]
  %s4 = inlined_call_operand.vmem [shape: f32[1,128], index: 4, kind: input, shape index: {}]
  %s5 = inlined_call_operand.hbm [shape: f32[2,128], index: 5, kind: output, shape index: {}]
  %s6 = sld [smem:[#allocation0]]
  $region30: #{forward.7} parent=0
    _
  %s8 = ssub.s32 1, %s6
  %s9 = scalar_select 0, %s8, %s6
  $region1: #{forward.7} parent=0
    #allocation2 [shape = 'u8[1024]{0}', space=vmem, size = 0x400, scoped, tag = 'output window, operand 0, single buffered']
    #allocation3 [shape = 's32[1]{0}', space=sflag, size = 0x4, scoped, tag = 'scoped memory for forward.7']
    %10 = vsyncpa [#allocation3], 0
    // Predicated region
    $region2: #{forward.7} parent=1 // pred_check
      _
    $region3: #{forward.7} parent=1 // pred_check_branch
      %12 = sbr.rel (0) target = $region5
    $region4: #{forward.7} parent=1 // pred_region
      _
    $region5: #{forward.7} parent=1 // pred_fallthru
      _
    // Predicated region
    $region6: #{forward.7} parent=1 // pred_check
      _
    $region7: #{forward.7} parent=1 // pred_check_branch
      %14 = sbr.rel (0) target = $region9
    $region8: #{forward.7} parent=1 // pred_region
      _
    $region9: #{forward.7} parent=1 // pred_fallthru
      _
    // Predicated region
    $region10: #{forward.7} parent=1 // pred_check
      _
    $region11: #{forward.7} parent=1 // pred_check_branch
      %16 = sbr.rel (0) target = $region13
    $region12: #{forward.7} parent=1 // pred_region
      _
    $region13: #{forward.7} parent=1 // pred_fallthru
      _
    // Predicated region
    $region14: #{forward.7} parent=1 // pred_check
      _
    $region15: #{forward.7} parent=1 // pred_check_branch
      %18 = sbr.rel (0) target = $region17
    $region16: #{forward.7} parent=1 // pred_region
      _
    $region17: #{forward.7} parent=1 // pred_fallthru
      _
    // Predicated region
    $region18: #{forward.7} parent=1 // pred_check
      _
    $region19: #{forward.7} parent=1 // pred_check_branch
      %20 = sbr.rel (0) target = $region21
    $region20: #{forward.7} parent=1 // pred_region
      _
    $region21: #{forward.7} parent=1 // pred_fallthru
      _
    %v22 = vld [vmem:[%s0] sm:$0x3]
    %v23 = vld [vmem:[%s1] sm:$0xf]
    %v24 = vld [vmem:[%s1 + $0x4] sm:$0xf]
    %v25 = vld [vmem:[%s1 + $0x8] sm:$0xf]
    %v26 = vld [vmem:[%s1 + $0xc] sm:$0xf]
    %v27 = vld [vmem:[%s1 + $0x10] sm:$0xf]
    %v28 = vld [vmem:[%s1 + $0x14] sm:$0xf]
    %v29 = vld [vmem:[%s1 + $0x18] sm:$0xf]
    %v30 = vld [vmem:[%s1 + $0x1c] sm:$0xf]
    %v31 = vld [vmem:[%s1 + $0x20] sm:$0xf]
    %v32 = vld [vmem:[%s1 + $0x24] sm:$0xf]
    %v33 = vld [vmem:[%s1 + $0x28] sm:$0xf]
    %v34 = vld [vmem:[%s1 + $0x2c] sm:$0xf]
    %v35 = vld [vmem:[%s1 + $0x30] sm:$0xf]
    %v36 = vld [vmem:[%s1 + $0x34] sm:$0xf]
    %v37 = vld [vmem:[%s1 + $0x38] sm:$0xf]
    %v38 = vld [vmem:[%s1 + $0x3c] sm:$0xf]
    %v39 = vld [vmem:[%s1 + $0x40] sm:$0xf]
    %v40 = vld [vmem:[%s1 + $0x44] sm:$0xf]
    %v41 = vld [vmem:[%s1 + $0x48] sm:$0xf]
    %v42 = vld [vmem:[%s1 + $0x4c] sm:$0xf]
    %v43 = vld [vmem:[%s1 + $0x50] sm:$0xf]
    %v44 = vld [vmem:[%s1 + $0x54] sm:$0xf]
    %v45 = vld [vmem:[%s1 + $0x58] sm:$0xf]
    %v46 = vld [vmem:[%s1 + $0x5c] sm:$0xf]
    %v47 = vld [vmem:[%s1 + $0x60] sm:$0xf]
    %v48 = vld [vmem:[%s1 + $0x64] sm:$0xf]
    %v49 = vld [vmem:[%s1 + $0x68] sm:$0xf]
    %v50 = vld [vmem:[%s1 + $0x6c] sm:$0xf]
    %v51 = vld [vmem:[%s1 + $0x70] sm:$0xf]
    %v52 = vld [vmem:[%s1 + $0x74] sm:$0xf]
    %v53 = vld [vmem:[%s1 + $0x78] sm:$0xf]
    %v54 = vld [vmem:[%s1 + $0x7c] sm:$0xf]
    %v55 = vld [vmem:[%s2] sm:$0x1]
    %v57 = vlaneseq
    %v58 = vshrl.u32 %v57, 7
    %v59 = vsub.s32 0, %v58
    %v60 = vrot.slane %v55, %v59
    %v64 = vunpack.c.l.s4 1966171168
    %v65 = vunpack.c.0.s8 %v64
    %v66 = vlaneseq
    %v67 = vshrl.u32 %v66, 7
    %v68 = vsub.s32 %v65, %v67
    %v69 = vrot.slane %v22, %v68
    %v70 = vcombine.high %v69, %v69
    %v72 = vunpack.c.l.s4 1966171168
    %v73 = vunpack.c.0.s8 %v72
    %v74 = vlaneseq
    %v75 = vshrl.u32 %v74, 7
    %v76 = vsub.s32 %v73, %v75
    %v77 = vrot.slane %v69, %v76
    %v79 = vunpack.c.l.s4 1966171168
    %v80 = vunpack.c.0.s8 %v79
    %v81 = vlaneseq
    %v82 = vshrl.u32 %v81, 7
    %v83 = vsub.s32 %v80, %v82
    %v84 = vrot.slane %v70, %v83
    %v119 = vunpack.c.l.b16 %v23
    %v120 = vunpack.c.l.b16 %v24
    %v121 = vunpack.c.l.b16 %v25
    %v122 = vunpack.c.l.b16 %v26
    %v123 = vunpack.c.l.b16 %v27
    %v124 = vunpack.c.l.b16 %v28
    %v125 = vunpack.c.l.b16 %v29
    %v126 = vunpack.c.l.b16 %v30
    %v127 = vunpack.c.l.b16 %v31
    %v128 = vunpack.c.l.b16 %v32
    %v129 = vunpack.c.l.b16 %v33
    %v130 = vunpack.c.l.b16 %v34
    %v131 = vunpack.c.l.b16 %v35
    %v132 = vunpack.c.l.b16 %v36
    %v133 = vunpack.c.l.b16 %v37
    %v134 = vunpack.c.l.b16 %v38
    %v135 = vunpack.c.l.b16 %v39
    %v136 = vunpack.c.l.b16 %v40
    %v137 = vunpack.c.l.b16 %v41
    %v138 = vunpack.c.l.b16 %v42
    %v139 = vunpack.c.l.b16 %v43
    %v140 = vunpack.c.l.b16 %v44
    %v141 = vunpack.c.l.b16 %v45
    %v142 = vunpack.c.l.b16 %v46
    %v143 = vunpack.c.l.b16 %v47
    %v144 = vunpack.c.l.b16 %v48
    %v145 = vunpack.c.l.b16 %v49
    %v146 = vunpack.c.l.b16 %v50
    %v147 = vunpack.c.l.b16 %v51
    %v148 = vunpack.c.l.b16 %v52
    %v149 = vunpack.c.l.b16 %v53
    %v150 = vunpack.c.l.b16 %v54
    %v151 = vpack.c.b16 %v120, %v119
    %v152 = vpack.c.b16 %v122, %v121
    %v153 = vpack.c.b16 %v124, %v123
    %v154 = vpack.c.b16 %v126, %v125
    %v155 = vpack.c.b16 %v128, %v127
    %v156 = vpack.c.b16 %v130, %v129
    %v157 = vpack.c.b16 %v132, %v131
    %v158 = vpack.c.b16 %v134, %v133
    %v159 = vpack.c.b16 %v136, %v135
    %v160 = vpack.c.b16 %v138, %v137
    %v161 = vpack.c.b16 %v140, %v139
    %v162 = vpack.c.b16 %v142, %v141
    %v163 = vpack.c.b16 %v144, %v143
    %v164 = vpack.c.b16 %v146, %v145
    %v165 = vpack.c.b16 %v148, %v147
    %v166 = vpack.c.b16 %v150, %v149
    %183 = vmatprep.subr.bf16.mxu0 0
    %184 = vmatpush1.bf16.msra.mxu0 %v158
    %185 = vmatprep.subr.bf16.mxu0 0
    %186 = vmatpush1.bf16.msra.mxu0 %v157
    %187 = vmatprep.subr.bf16.mxu0 0
    %188 = vmatpush1.bf16.msra.mxu0 %v156
    %189 = vmatprep.subr.bf16.mxu0 0
    %190 = vmatpush1.bf16.msra.mxu0 %v155
    %191 = vmatprep.subr.bf16.mxu0 0
    %192 = vmatpush1.bf16.msra.mxu0 %v154
    %193 = vmatprep.subr.bf16.mxu0 0
    %194 = vmatpush1.bf16.msra.mxu0 %v153
    %195 = vmatprep.subr.bf16.mxu0 0
    %196 = vmatpush1.bf16.msra.mxu0 %v152
    %197 = vmatprep.subr.bf16.mxu0 0
    %198 = vmatpush1.bf16.msra.mxu0 %v151
    %199 = vmatprep.subr.bf16.mxu0 0
    %200 = vmatpush2.bf16.msra.mxu0 %v166
    %201 = vmatprep.subr.bf16.mxu0 0
    %202 = vmatpush2.bf16.msra.mxu0 %v165
    %203 = vmatprep.subr.bf16.mxu0 0
    %204 = vmatpush2.bf16.msra.mxu0 %v164
    %205 = vmatprep.subr.bf16.mxu0 0
    %206 = vmatpush2.bf16.msra.mxu0 %v163
    %207 = vmatprep.subr.bf16.mxu0 0
    %208 = vmatpush2.bf16.msra.mxu0 %v162
    %209 = vmatprep.subr.bf16.mxu0 0
    %210 = vmatpush2.bf16.msra.mxu0 %v161
    %211 = vmatprep.subr.bf16.mxu0 0
    %212 = vmatpush2.bf16.msra.mxu0 %v160
    %213 = vmatprep.subr.bf16.mxu0 0
    %214 = vmatpush2.bf16.msra.mxu0 %v159
    %215 = vmatprep.mubr.bf16.mxu0 %v84
    %216 = vmatmul.mubr.bf16.gmra.mxu0 %v77
    %v217 = vpop.f32.mrf.mxu0
    %v218 = vadd.f32 %v60, %v217
    %v219 = vpop.f32.mrf.mxu0
    %v220 = vpop.f32.mrf.mxu0
    %v221 = vpop.f32.mrf.mxu0
    %222 = vdwg.mxu0
    %v223 = vmax.f32 %v218, 0.0
    %v224 = vpack.c.bf16 %v223, %v223
    %v225 = vld [vmem:[%s3] sm:$0xf]
    %v226 = vld [vmem:[%s3 + $0x4] sm:$0xf]
    %v227 = vld [vmem:[%s3 + $0x8] sm:$0xf]
    %v228 = vld [vmem:[%s3 + $0xc] sm:$0xf]
    %v229 = vld [vmem:[%s3 + $0x10] sm:$0xf]
    %v230 = vld [vmem:[%s3 + $0x14] sm:$0xf]
    %v231 = vld [vmem:[%s3 + $0x18] sm:$0xf]
    %v232 = vld [vmem:[%s3 + $0x1c] sm:$0xf]
    %v233 = vld [vmem:[%s3 + $0x20] sm:$0xf]
    %v234 = vld [vmem:[%s3 + $0x24] sm:$0xf]
    %v235 = vld [vmem:[%s3 + $0x28] sm:$0xf]
    %v236 = vld [vmem:[%s3 + $0x2c] sm:$0xf]
    %v237 = vld [vmem:[%s3 + $0x30] sm:$0xf]
    %v238 = vld [vmem:[%s3 + $0x34] sm:$0xf]
    %v239 = vld [vmem:[%s3 + $0x38] sm:$0xf]
    %v240 = vld [vmem:[%s3 + $0x3c] sm:$0xf]
    %v241 = vld [vmem:[%s4] sm:$0x1]
    %v243 = vlaneseq
    %v244 = vshrl.u32 %v243, 7
    %v245 = vsub.s32 0, %v244
    %v246 = vrot.slane %v241, %v245
    %v264 = vunpack.c.l.b16 %v225
    %v265 = vunpack.c.l.b16 %v226
    %v266 = vunpack.c.l.b16 %v227
    %v267 = vunpack.c.l.b16 %v228
    %v268 = vunpack.c.l.b16 %v229
    %v269 = vunpack.c.l.b16 %v230
    %v270 = vunpack.c.l.b16 %v231
    %v271 = vunpack.c.l.b16 %v232
    %v272 = vunpack.c.l.b16 %v233
    %v273 = vunpack.c.l.b16 %v234
    %v274 = vunpack.c.l.b16 %v235
    %v275 = vunpack.c.l.b16 %v236
    %v276 = vunpack.c.l.b16 %v237
    %v277 = vunpack.c.l.b16 %v238
    %v278 = vunpack.c.l.b16 %v239
    %v279 = vunpack.c.l.b16 %v240
    %v280 = vpack.c.b16 %v265, %v264
    %v281 = vpack.c.b16 %v267, %v266
    %v282 = vpack.c.b16 %v269, %v268
    %v283 = vpack.c.b16 %v271, %v270
    %v284 = vpack.c.b16 %v273, %v272
    %v285 = vpack.c.b16 %v275, %v274
    %v286 = vpack.c.b16 %v277, %v276
    %v287 = vpack.c.b16 %v279, %v278
    %296 = vmatprep.subr.bf16.mxu0 0
    %297 = vmatpush1.bf16.msra.mxu0 %v287
    %298 = vmatprep.subr.bf16.mxu0 0
    %299 = vmatpush1.bf16.msra.mxu0 %v286
    %300 = vmatprep.subr.bf16.mxu0 0
    %301 = vmatpush1.bf16.msra.mxu0 %v285
    %302 = vmatprep.subr.bf16.mxu0 0
    %303 = vmatpush1.bf16.msra.mxu0 %v284
    %304 = vmatprep.subr.bf16.mxu0 0
    %305 = vmatpush1.bf16.msra.mxu0 %v283
    %306 = vmatprep.subr.bf16.mxu0 0
    %307 = vmatpush1.bf16.msra.mxu0 %v282
    %308 = vmatprep.subr.bf16.mxu0 0
    %309 = vmatpush1.bf16.msra.mxu0 %v281
    %310 = vmatprep.subr.bf16.mxu0 0
    %311 = vmatpush1.bf16.msra.mxu0 %v280
    %312 = vmatprep.subr.bf16.mxu0 0
    %313 = vmatpush2.bf16.msra.mxu0 0
    %314 = vmatprep.subr.bf16.mxu0 0
    %315 = vmatpush2.bf16.msra.mxu0 0
    %316 = vmatprep.subr.bf16.mxu0 0
    %317 = vmatpush2.bf16.msra.mxu0 0
    %318 = vmatprep.subr.bf16.mxu0 0
    %319 = vmatpush2.bf16.msra.mxu0 0
    %320 = vmatprep.subr.bf16.mxu0 0
    %321 = vmatpush2.bf16.msra.mxu0 0
    %322 = vmatprep.subr.bf16.mxu0 0
    %323 = vmatpush2.bf16.msra.mxu0 0
    %324 = vmatprep.subr.bf16.mxu0 0
    %325 = vmatpush2.bf16.msra.mxu0 0
    %326 = vmatprep.subr.bf16.mxu0 0
    %327 = vmatpush2.bf16.msra.mxu0 0
    %328 = vmatprep.mubr.bf16.mxu0 0
    %329 = vmatmul.mubr.bf16.gmra.mxu0 %v224
    %v330 = vpop.f32.mrf.mxu0
    %v331 = vadd.f32 %v246, %v330
    %v332 = vpop.f32.mrf.mxu0
    %v333 = vpop.f32.mrf.mxu0
    %v334 = vpop.f32.mrf.mxu0
    %335 = vdwg.mxu0
    %336 = vst [vmem:[#allocation2] sm:$0x3] %v331
    // Predicated region
    $region22: #{forward.7} parent=1 // pred_check
      _
    $region23: #{forward.7} parent=1 // pred_check_branch
      %338 = sbr.rel (0) target = $region25
    $region24: #{forward.7} parent=1 // pred_region
      %s340 = ssub.s32 32, 32
      %341 = vsyncadd [#allocation3], %s340
      %s343 = sshll.u32 [#allocation2], 4
      %s344 = int_to_ptr.vmem [resolvable:$true] %s343
      %346 = dma.vmem_to_hbm [thread:$0]  %s344, 32, %s5, [#allocation3]
    $region25: #{forward.7} parent=1 // pred_fallthru
      _
    // Predicated region
    $region26: #{forward.7} parent=1 // pred_check
      _
    $region27: #{forward.7} parent=1 // pred_check_branch
      %348 = sbr.rel (0) target = $region29
    $region28: #{forward.7} parent=1 // pred_region
      %349 = dma.done [#allocation3], 32
    $region29: #{forward.7} parent=1 // pred_fallthru
      _
    %350 = vsyncpa [#allocation3], 1

</llo_original>
